<compile_context>
chip_gen: v5e
topology: v5e:2x2
jax: 0.10.0
libtpu: 0.0.40
codegen_flags: <defaults>
</compile_context>

<pallas_src>
import functools

import jax
import jax.numpy as jnp
import numpy as np
from jax.experimental import pallas as pl
from jax.experimental.pallas import tpu as pltpu

LEAKY_SLOPE = 0.1
BN_EPS = 1e-5
LANE = 128
VMEM_LIMIT = 64 * 1024 * 1024   # <= physical VMEM on v5e/v6e/v7x


def _round_up(v, m):
    return (v + m - 1) // m * m


# --------------------------------------------------------------------------
# In-kernel helpers
# --------------------------------------------------------------------------

def _fill_cat(cat_ref, xb, *, H, W, PADT):
    """Fill the dx-concatenated, dy-haloed conv scratch.

    cat_ref: (PADT + H*W + PADT, 3*C) bf16.  For image-flat row q and dx-block
    j (j = 0,1,2 <-> dx = -1,0,+1):
        cat[PADT + q, j*C:(j+1)*C] = x[q + (j-1)]   (0 when crossing a row edge)
    Halo rows (top/bottom PADT) are zero -> h-direction zero padding.
    """
    M = H * W
    C = xb.shape[-1]
    # dx = 0 (center block).
    cat_ref[PADT:PADT + M, C:2 * C] = xb
    # dx = -1 block: cat[PADT+q] holds x[q-1]  -> x shifted down one row.
    cat_ref[PADT + 1:PADT + 1 + M, 0:C] = xb
    # dx = +1 block: cat[PADT+q] holds x[q+1]  -> x shifted up one row.
    cat_ref[PADT - 1:PADT - 1 + M, 2 * C:3 * C] = xb
    # Zero halos (also wipes the one-row spill of the two shifted writes).
    zeros_halo = jnp.zeros((PADT, 3 * C), cat_ref.dtype)
    cat_ref[0:PADT, :] = zeros_halo
    cat_ref[PADT + M:PADT + M + PADT, :] = zeros_halo
    # Zero the row-edge wrap entries of the shifted blocks (w-direction pad).
    zrow = jnp.zeros((1, C), cat_ref.dtype)
    for h in range(H):
        base = PADT + h * W
        cat_ref[base:base + 1, 0:C] = zrow                    # w == 0, dx = -1
        cat_ref[base + W - 1:base + W, 2 * C:3 * C] = zrow    # w == W-1, dx = +1


def _conv3x3_from_cat(cat_ref, w_ref, *, M, W, PADT):
    """3 accumulating matmuls (one per dy), K = 3*C, f32 accumulation."""
    acc = jnp.dot(cat_ref[PADT - W:PADT - W + M, :], w_ref[0],
                  preferred_element_type=jnp.float32)
    acc = acc + jnp.dot(cat_ref[PADT:PADT + M, :], w_ref[1],
                        preferred_element_type=jnp.float32)
    acc = acc + jnp.dot(cat_ref[PADT + W:PADT + W + M, :], w_ref[2],
                        preferred_element_type=jnp.float32)
    return acc


# --------------------------------------------------------------------------
# Pallas kernels (one image per grid step)
# --------------------------------------------------------------------------

def _conv1_ds_kernel(x_ref, w_ref, wd_ref,
                     o_ref, od_ref, s_ref, sq_ref, sd_ref, sqd_ref,
                     cat_ref, *, H, W, PADT):
    """conv3x3(x) + fused 1x1 downsample conv (shared input read)."""
    M = H * W
    xb = x_ref[0]                                       # (M, C1) bf16
    _fill_cat(cat_ref, xb, H=H, W=W, PADT=PADT)

    acc = _conv3x3_from_cat(cat_ref, w_ref, M=M, W=W, PADT=PADT)
    s_ref[0] = jnp.sum(acc, axis=0, keepdims=True)
    sq_ref[0] = jnp.sum(acc * acc, axis=0, keepdims=True)
    o_ref[0] = acc.astype(o_ref.dtype)

    accd = jnp.dot(xb, wd_ref[...], preferred_element_type=jnp.float32)
    sd_ref[0] = jnp.sum(accd, axis=0, keepdims=True)
    sqd_ref[0] = jnp.sum(accd * accd, axis=0, keepdims=True)
    od_ref[0] = accd.astype(od_ref.dtype)


def _conv_bn_act_kernel(x_ref, w_ref, scale_ref, shift_ref,
                        o_ref, s_ref, sq_ref, cat_ref, *, H, W, PADT):
    """Fused prologue (previous BN affine + LeakyReLU) + conv3x3."""
    M = H * W
    y = x_ref[0].astype(jnp.float32) * scale_ref[...] + shift_ref[...]
    y = jnp.where(y >= 0, y, LEAKY_SLOPE * y)
    _fill_cat(cat_ref, y.astype(jnp.bfloat16), H=H, W=W, PADT=PADT)

    acc = _conv3x3_from_cat(cat_ref, w_ref, M=M, W=W, PADT=PADT)
    s_ref[0] = jnp.sum(acc, axis=0, keepdims=True)
    sq_ref[0] = jnp.sum(acc * acc, axis=0, keepdims=True)
    o_ref[0] = acc.astype(o_ref.dtype)


def _tail_kernel(c_ref, d_ref, s3_ref, b3_ref, sd_ref, bd_ref,
                 o_ref, act_ref, m1_ref, *, H, W):
    """Fused bn3 + bn_ds + residual add + LeakyReLU + 2x2 maxpool."""
    Ho, Wo = H // 2, W // 2
    M = H * W
    Mh = M // 2
    y = (c_ref[0].astype(jnp.float32) * s3_ref[...] + b3_ref[...]
         + d_ref[0].astype(jnp.float32) * sd_ref[...] + bd_ref[...])
    act_ref[...] = jnp.where(y >= 0, y, LEAKY_SLOPE * y)

    # w-pair max: m1[h*Wo + wo] = max(act[h*W + 2wo], act[h*W + 2wo + 1]).
    m1_ref[...] = jnp.maximum(act_ref[pl.ds(0, Mh, stride=2), :],
                              act_ref[pl.ds(1, Mh, stride=2), :])
    # row-pair max: contiguous slices of m1.
    for r in range(Ho):
        top = m1_ref[2 * r * Wo:(2 * r + 1) * Wo, :]
        bot = m1_ref[(2 * r + 1) * Wo:(2 * r + 2) * Wo, :]
        o_ref[0, r * Wo:(r + 1) * Wo, :] = jnp.maximum(top, bot)


# --------------------------------------------------------------------------
# pallas_call wrappers
# --------------------------------------------------------------------------

def _conv1_and_downsample(x, w9, wd, H, W):
    N, M, C1 = x.shape
    C2 = w9.shape[-1]
    PADT = _round_up(W, 8)
    kernel = functools.partial(_conv1_ds_kernel, H=H, W=W, PADT=PADT)
    big = jax.ShapeDtypeStruct((N, M, C2), jnp.bfloat16)
    small = jax.ShapeDtypeStruct((N, 1, C2), jnp.float32)
    big_spec = pl.BlockSpec((1, M, C2), lambda n: (n, 0, 0))
    small_spec = pl.BlockSpec((1, 1, C2), lambda n: (n, 0, 0))
    return pl.pallas_call(
        kernel,
        out_shape=(big, big, small, small, small, small),
        grid=(N,),
        in_specs=[pl.BlockSpec((1, M, C1), lambda n: (n, 0, 0)),
                  pl.BlockSpec((3, 3 * C1, C2), lambda n: (0, 0, 0)),
                  pl.BlockSpec((C1, C2), lambda n: (0, 0))],
        out_specs=(big_spec, big_spec, small_spec, small_spec, small_spec,
                   small_spec),
        scratch_shapes=[pltpu.VMEM((PADT + M + PADT, 3 * C1), jnp.bfloat16)],
        compiler_params=pltpu.CompilerParams(
            dimension_semantics=("parallel",),
            vmem_limit_bytes=VMEM_LIMIT),
    )(x, w9, wd)


def _conv_bn_act(x, w9, scale, shift, H, W):
    N, M, C1 = x.shape
    C2 = w9.shape[-1]
    PADT = _round_up(W, 8)
    kernel = functools.partial(_conv_bn_act_kernel, H=H, W=W, PADT=PADT)
    big = jax.ShapeDtypeStruct((N, M, C2), jnp.bfloat16)
    small = jax.ShapeDtypeStruct((N, 1, C2), jnp.float32)
    return pl.pallas_call(
        kernel,
        out_shape=(big, small, small),
        grid=(N,),
        in_specs=[pl.BlockSpec((1, M, C1), lambda n: (n, 0, 0)),
                  pl.BlockSpec((3, 3 * C1, C2), lambda n: (0, 0, 0)),
                  pl.BlockSpec((1, C1), lambda n: (0, 0)),
                  pl.BlockSpec((1, C1), lambda n: (0, 0))],
        out_specs=(pl.BlockSpec((1, M, C2), lambda n: (n, 0, 0)),
                   pl.BlockSpec((1, 1, C2), lambda n: (n, 0, 0)),
                   pl.BlockSpec((1, 1, C2), lambda n: (n, 0, 0))),
        scratch_shapes=[pltpu.VMEM((PADT + M + PADT, 3 * C1), jnp.bfloat16)],
        compiler_params=pltpu.CompilerParams(
            dimension_semantics=("parallel",),
            vmem_limit_bytes=VMEM_LIMIT),
    )(x, w9, scale, shift)


def _bn_add_lrelu_pool(o3, od, s3, b3, sd, bd, H, W):
    N, M, C2 = o3.shape
    Ho, Wo = H // 2, W // 2
    kernel = functools.partial(_tail_kernel, H=H, W=W)
    big_spec = pl.BlockSpec((1, M, C2), lambda n: (n, 0, 0))
    vec_spec = pl.BlockSpec((1, C2), lambda n: (0, 0))
    return pl.pallas_call(
        kernel,
        out_shape=jax.ShapeDtypeStruct((N, Ho * Wo, C2), jnp.float32),
        grid=(N,),
        in_specs=[big_spec, big_spec, vec_spec, vec_spec, vec_spec, vec_spec],
        out_specs=pl.BlockSpec((1, Ho * Wo, C2), lambda n: (n, 0, 0)),
        scratch_shapes=[pltpu.VMEM((M, C2), jnp.float32),
                        pltpu.VMEM((M // 2, C2), jnp.float32)],
        compiler_params=pltpu.CompilerParams(
            dimension_semantics=("parallel",),
            vmem_limit_bytes=VMEM_LIMIT),
    )(o3, od, s3, b3, sd, bd)


# --------------------------------------------------------------------------
# JAX glue (layout plumbing, parameter prep, tiny per-channel math)
# --------------------------------------------------------------------------

def _bn_affine(s_parts, sq_parts, count, gamma, beta):
    """BatchNorm batch-stat affine (scale, shift) from per-image partial sums."""
    s = jnp.sum(s_parts, axis=(0, 1))
    sq = jnp.sum(sq_parts, axis=(0, 1))
    mean = s / count
    # E[x^2]-E[x]^2 biased variance (BN training mode).  TODO(synk): a shifted
    # two-pass variance would be safer for very large N*H*W.
    var = jnp.maximum(sq / count - mean * mean, 0.0)
    scale = gamma * jax.lax.rsqrt(var + BN_EPS)
    shift = beta - mean * scale
    return scale.reshape(1, -1), shift.reshape(1, -1)


def _prep_w3x3(w, cin_p, cout_p):
    """OIHW 3x3 weight -> (3, 3*cin_p, cout_p) bf16, rows = ky, cols = kx*cin+ci."""
    cout, cin = w.shape[0], w.shape[1]
    wk = jnp.transpose(w, (2, 3, 1, 0))                       # (ky, kx, cin, cout)
    wk = jnp.pad(wk, ((0, 0), (0, 0), (0, cin_p - cin), (0, cout_p - cout)))
    wk = wk.reshape(3, 3 * cin_p, cout_p)
    return wk.astype(jnp.bfloat16)


def _prep_w1x1(w, cin_p, cout_p):
    cout, cin = w.shape[0], w.shape[1]
    wk = jnp.transpose(w[:, :, 0, 0], (1, 0))
    wk = jnp.pad(wk, ((0, cin_p - cin), (0, cout_p - cout)))
    return wk.astype(jnp.bfloat16)


def block_forward(x_nchw, params):
    N, Cin, H, W = x_nchw.shape
    planes = params["conv1_w"].shape[0]
    # TODO(synk): MaxPool2d(2) with odd spatial dims (floor mode) not handled.
    assert H % 2 == 0 and W % 2 == 0, "pool path assumes even H, W"
    M = H * W
    C1 = _round_up(Cin, LANE)
    C2 = _round_up(planes, LANE)

    # NCHW -> (N, H*W, C) channels-last, channels zero-padded, bf16 MXU operand.
    x = jnp.transpose(x_nchw, (0, 2, 3, 1)).reshape(N, M, Cin)
    x = jnp.pad(x, ((0, 0), (0, 0), (0, C1 - Cin))).astype(jnp.bfloat16)

    pad_c = lambda v: jnp.pad(v, (0, C2 - planes))
    w1 = _prep_w3x3(params["conv1_w"], C1, C2)
    w2 = _prep_w3x3(params["conv2_w"], C2, C2)
    w3 = _prep_w3x3(params["conv3_w"], C2, C2)
    wd = _prep_w1x1(params["ds_w"], C1, C2)

    count = jnp.float32(N * M)

    # conv1 + 1x1 downsample (share the input read), plus BN partial stats.
    o1, od, s1, sq1, sds, sqds = _conv1_and_downsample(x, w1, wd, H, W)
    sc1, sh1 = _bn_affine(s1, sq1, count, pad_c(params["bn1_g"]), pad_c(params["bn1_b"]))

    # conv2 with fused bn1-affine + LeakyReLU prologue.
    o2, s2, sq2 = _conv_bn_act(o1, w2, sc1, sh1, H, W)
    sc2, sh2 = _bn_affine(s2, sq2, count, pad_c(params["bn2_g"]), pad_c(params["bn2_b"]))

    # conv3 with fused bn2-affine + LeakyReLU prologue.
    o3, s3, sq3 = _conv_bn_act(o2, w3, sc2, sh2, H, W)
    sc3, sh3 = _bn_affine(s3, sq3, count, pad_c(params["bn3_g"]), pad_c(params["bn3_b"]))
    scd, shd = _bn_affine(sds, sqds, count, pad_c(params["ds_g"]), pad_c(params["ds_b"]))

    # fused bn3 + bn_ds + residual add + LeakyReLU + 2x2 maxpool.
    pooled = _bn_add_lrelu_pool(o3, od, sc3, sh3, scd, shd, H, W)
    out = pooled.reshape(N, H // 2, W // 2, C2)[..., :planes]
    return jnp.transpose(out, (0, 3, 1, 2))                    # back to NCHW


# --------------------------------------------------------------------------
# Pure-JAX reference (for verification)
# --------------------------------------------------------------------------

def reference_forward(x_nchw, params):
    x = jnp.transpose(x_nchw, (0, 2, 3, 1))

    def conv2d(inp, w_torch, pad):
        w = jnp.transpose(w_torch, (2, 3, 1, 0))   # OIHW -> HWIO
        return jax.lax.conv_general_dilated(
            inp, w, window_strides=(1, 1), padding=[(pad, pad), (pad, pad)],
            dimension_numbers=("NHWC", "HWIO", "NHWC"),
            precision=jax.lax.Precision.HIGHEST)

    def bn(inp, gamma, beta):
        mean = jnp.mean(inp, axis=(0, 1, 2))
        var = jnp.mean((inp - mean) ** 2, axis=(0, 1, 2))
        return (inp - mean) / jnp.sqrt(var + BN_EPS) * gamma + beta

    lrelu = lambda v: jnp.where(v >= 0, v, LEAKY_SLOPE * v)

    out = lrelu(bn(conv2d(x, params["conv1_w"], 1), params["bn1_g"], params["bn1_b"]))
    out = lrelu(bn(conv2d(out, params["conv2_w"], 1), params["bn2_g"], params["bn2_b"]))
    out = bn(conv2d(out, params["conv3_w"], 1), params["bn3_g"], params["bn3_b"])
    idn = bn(conv2d(x, params["ds_w"], 0), params["ds_g"], params["ds_b"])
    out = lrelu(out + idn)
    N, H, W, C = out.shape
    out = out.reshape(N, H // 2, 2, W // 2, 2, C).max(axis=(2, 4))
    return jnp.transpose(out, (0, 3, 1, 2))


# --------------------------------------------------------------------------
# Deterministic parameter construction + smoke test
# --------------------------------------------------------------------------

def make_params(keys, inplanes, planes):
    def conv_init(k, cout, cin, ksz):
        fan_in = cin * ksz * ksz
        return (jax.random.normal(k, (cout, cin, ksz, ksz), jnp.float32)
                * jnp.sqrt(2.0 / fan_in))

    p = {
        "conv1_w": conv_init(keys[0], planes, inplanes, 3),
        "conv2_w": conv_init(keys[1], planes, planes, 3),
        "conv3_w": conv_init(keys[2], planes, planes, 3),
        "ds_w":    conv_init(keys[3], planes, inplanes, 1),
    }
    for i, name in enumerate(["bn1", "bn2", "bn3", "ds"]):
        p[f"{name}_g"] = 1.0 + 0.1 * jax.random.normal(keys[4 + 2 * i], (planes,), jnp.float32)
        p[f"{name}_b"] = 0.1 * jax.random.normal(keys[5 + 2 * i], (planes,), jnp.float32)
    return p


if __name__ == "__main__":
    N, Cin, H, W = 2, 4, 16, 16      # x: NCHW, like the PyTorch module
    planes = 8

    key = jax.random.PRNGKey(0)
    kx, *wkeys = jax.random.split(key, 14)
    x = jax.random.normal(kx, (N, Cin, H, W), jnp.float32)
    params = make_params(wkeys, Cin, planes)

    fwd = jax.jit(block_forward)
    out = jax.block_until_ready(fwd(x, params))
    ref = jax.block_until_ready(reference_forward(x, params))

    assert out.shape == (N, planes, H // 2, W // 2), out.shape
    # bf16 matmul operands + bf16 inter-kernel hand-offs -> relaxed tolerance.
    np.testing.assert_allclose(np.asarray(out), np.asarray(ref), rtol=5e-2, atol=5e-2)
    print("KERNEL_OK")
</pallas_src>

<mosaic_0001>
module attributes {stable_mosaic.version = 11 : i64} {
  func.func @_conv1_ds_kernel(%arg0: i32, %arg1: memref<1x256x128xbf16, #tpu.memory_space<vmem>>, %arg2: memref<3x384x128xbf16, #tpu.memory_space<vmem>>, %arg3: memref<128x128xbf16, #tpu.memory_space<vmem>>, %arg4: memref<1x256x128xbf16, #tpu.memory_space<vmem>>, %arg5: memref<1x256x128xbf16, #tpu.memory_space<vmem>>, %arg6: memref<1x1x128xf32, #tpu.memory_space<vmem>>, %arg7: memref<1x1x128xf32, #tpu.memory_space<vmem>>, %arg8: memref<1x1x128xf32, #tpu.memory_space<vmem>>, %arg9: memref<1x1x128xf32, #tpu.memory_space<vmem>>, %arg10: memref<288x384xbf16, #tpu.memory_space<vmem>>) attributes {dimension_semantics = [#tpu.dimension_semantics<parallel>], iteration_bounds = array<i64: 2>, scalar_prefetch = 0 : i64, scratch_operands = 1 : i64, tpu.core_type = #tpu.core_type<tc>, window_params = [{transform_indices = @transform_0, window_bounds = array<i64: 1, 256, 128>}, {pipeline_mode = #tpu.pipeline_mode<synchronous>, transform_indices = @transform_1, window_bounds = array<i64: 3, 384, 128>}, {pipeline_mode = #tpu.pipeline_mode<synchronous>, transform_indices = @transform_2, window_bounds = array<i64: 128, 128>}, {transform_indices = @transform_3, window_bounds = array<i64: 1, 256, 128>}, {transform_indices = @transform_4, window_bounds = array<i64: 1, 256, 128>}, {transform_indices = @transform_5, window_bounds = array<i64: 1, 1, 128>}, {transform_indices = @transform_6, window_bounds = array<i64: 1, 1, 128>}, {transform_indices = @transform_7, window_bounds = array<i64: 1, 1, 128>}, {transform_indices = @transform_8, window_bounds = array<i64: 1, 1, 128>}]} {
    %c0 = arith.constant 0 : index
    %c0_0 = arith.constant 0 : index
    %c0_1 = arith.constant 0 : index
    %0 = vector.load %arg1[%c0, %c0_0, %c0_1] : memref<1x256x128xbf16, #tpu.memory_space<vmem>>, vector<1x256x128xbf16>
    %1 = vector.shape_cast %0 : vector<1x256x128xbf16> to vector<256x128xbf16>
    %c16 = arith.constant 16 : index
    %c128 = arith.constant 128 : index
    %2 = vector.load %arg10[%c16, %c128] : memref<288x384xbf16, #tpu.memory_space<vmem>>, vector<256x128xbf16>
    tpu.vector_store %arg10[%c16, %c128], %1 {strides = array<i32>} : memref<288x384xbf16, #tpu.memory_space<vmem>>, vector<256x128xbf16>,
    %c17 = arith.constant 17 : index
    %c0_2 = arith.constant 0 : index
    %3 = vector.load %arg10[%c17, %c0_2] : memref<288x384xbf16, #tpu.memory_space<vmem>>, vector<256x128xbf16>
    tpu.vector_store %arg10[%c17, %c0_2], %1 {strides = array<i32>} : memref<288x384xbf16, #tpu.memory_space<vmem>>, vector<256x128xbf16>,
    %c15 = arith.constant 15 : index
    %c256 = arith.constant 256 : index
    %4 = vector.load %arg10[%c15, %c256] : memref<288x384xbf16, #tpu.memory_space<vmem>>, vector<256x128xbf16>
    tpu.vector_store %arg10[%c15, %c256], %1 {strides = array<i32>} : memref<288x384xbf16, #tpu.memory_space<vmem>>, vector<256x128xbf16>,
    %cst = arith.constant 0.000000e+00 : bf16
    %5 = vector.broadcast %cst : bf16 to vector<16x384xbf16>
    %c0_3 = arith.constant 0 : index
    %c0_4 = arith.constant 0 : index
    %6 = vector.load %arg10[%c0_3, %c0_4] : memref<288x384xbf16, #tpu.memory_space<vmem>>, vector<16x384xbf16>
    tpu.vector_store %arg10[%c0_3, %c0_4], %5 {strides = array<i32>} : memref<288x384xbf16, #tpu.memory_space<vmem>>, vector<16x384xbf16>,
    %c272 = arith.constant 272 : index
    %c0_5 = arith.constant 0 : index
    %7 = vector.load %arg10[%c272, %c0_5] : memref<288x384xbf16, #tpu.memory_space<vmem>>, vector<16x384xbf16>
    tpu.vector_store %arg10[%c272, %c0_5], %5 {strides = array<i32>} : memref<288x384xbf16, #tpu.memory_space<vmem>>, vector<16x384xbf16>,
    %cst_6 = arith.constant 0.000000e+00 : bf16
    %8 = vector.broadcast %cst_6 : bf16 to vector<1x128xbf16>
    %c16_7 = arith.constant 16 : index
    %c0_8 = arith.constant 0 : index
    %9 = vector.load %arg10[%c16_7, %c0_8] : memref<288x384xbf16, #tpu.memory_space<vmem>>, vector<1x128xbf16>
    tpu.vector_store %arg10[%c16_7, %c0_8], %8 {strides = array<i32>} : memref<288x384xbf16, #tpu.memory_space<vmem>>, vector<1x128xbf16>,
    %c31 = arith.constant 31 : index
    %c256_9 = arith.constant 256 : index
    %10 = vector.load %arg10[%c31, %c256_9] : memref<288x384xbf16, #tpu.memory_space<vmem>>, vector<1x128xbf16>
    tpu.vector_store %arg10[%c31, %c256_9], %8 {strides = array<i32>} : memref<288x384xbf16, #tpu.memory_space<vmem>>, vector<1x128xbf16>,
    %c32 = arith.constant 32 : index
    %c0_10 = arith.constant 0 : index
    %11 = vector.load %arg10[%c32, %c0_10] : memref<288x384xbf16, #tpu.memory_space<vmem>>, vector<1x128xbf16>
    tpu.vector_store %arg10[%c32, %c0_10], %8 {strides = array<i32>} : memref<288x384xbf16, #tpu.memory_space<vmem>>, vector<1x128xbf16>,
    %c47 = arith.constant 47 : index
    %c256_11 = arith.constant 256 : index
    %12 = vector.load %arg10[%c47, %c256_11] : memref<288x384xbf16, #tpu.memory_space<vmem>>, vector<1x128xbf16>
    tpu.vector_store %arg10[%c47, %c256_11], %8 {strides = array<i32>} : memref<288x384xbf16, #tpu.memory_space<vmem>>, vector<1x128xbf16>,
    %c48 = arith.constant 48 : index
    %c0_12 = arith.constant 0 : index
    %13 = vector.load %arg10[%c48, %c0_12] : memref<288x384xbf16, #tpu.memory_space<vmem>>, vector<1x128xbf16>
    tpu.vector_store %arg10[%c48, %c0_12], %8 {strides = array<i32>} : memref<288x384xbf16, #tpu.memory_space<vmem>>, vector<1x128xbf16>,
    %c63 = arith.constant 63 : index
    %c256_13 = arith.constant 256 : index
    %14 = vector.load %arg10[%c63, %c256_13] : memref<288x384xbf16, #tpu.memory_space<vmem>>, vector<1x128xbf16>
    tpu.vector_store %arg10[%c63, %c256_13], %8 {strides = array<i32>} : memref<288x384xbf16, #tpu.memory_space<vmem>>, vector<1x128xbf16>,
    %c64 = arith.constant 64 : index
    %c0_14 = arith.constant 0 : index
    %15 = vector.load %arg10[%c64, %c0_14] : memref<288x384xbf16, #tpu.memory_space<vmem>>, vector<1x128xbf16>
    tpu.vector_store %arg10[%c64, %c0_14], %8 {strides = array<i32>} : memref<288x384xbf16, #tpu.memory_space<vmem>>, vector<1x128xbf16>,
    %c79 = arith.constant 79 : index
    %c256_15 = arith.constant 256 : index
    %16 = vector.load %arg10[%c79, %c256_15] : memref<288x384xbf16, #tpu.memory_space<vmem>>, vector<1x128xbf16>
    tpu.vector_store %arg10[%c79, %c256_15], %8 {strides = array<i32>} : memref<288x384xbf16, #tpu.memory_space<vmem>>, vector<1x128xbf16>,
    %c80 = arith.constant 80 : index
    %c0_16 = arith.constant 0 : index
    %17 = vector.load %arg10[%c80, %c0_16] : memref<288x384xbf16, #tpu.memory_space<vmem>>, vector<1x128xbf16>
    tpu.vector_store %arg10[%c80, %c0_16], %8 {strides = array<i32>} : memref<288x384xbf16, #tpu.memory_space<vmem>>, vector<1x128xbf16>,
    %c95 = arith.constant 95 : index
    %c256_17 = arith.constant 256 : index
    %18 = vector.load %arg10[%c95, %c256_17] : memref<288x384xbf16, #tpu.memory_space<vmem>>, vector<1x128xbf16>
    tpu.vector_store %arg10[%c95, %c256_17], %8 {strides = array<i32>} : memref<288x384xbf16, #tpu.memory_space<vmem>>, vector<1x128xbf16>,
    %c96 = arith.constant 96 : index
    %c0_18 = arith.constant 0 : index
    %19 = vector.load %arg10[%c96, %c0_18] : memref<288x384xbf16, #tpu.memory_space<vmem>>, vector<1x128xbf16>
    tpu.vector_store %arg10[%c96, %c0_18], %8 {strides = array<i32>} : memref<288x384xbf16, #tpu.memory_space<vmem>>, vector<1x128xbf16>,
    %c111 = arith.constant 111 : index
    %c256_19 = arith.constant 256 : index
    %20 = vector.load %arg10[%c111, %c256_19] : memref<288x384xbf16, #tpu.memory_space<vmem>>, vector<1x128xbf16>
    tpu.vector_store %arg10[%c111, %c256_19], %8 {strides = array<i32>} : memref<288x384xbf16, #tpu.memory_space<vmem>>, vector<1x128xbf16>,
    %c112 = arith.constant 112 : index
    %c0_20 = arith.constant 0 : index
    %21 = vector.load %arg10[%c112, %c0_20] : memref<288x384xbf16, #tpu.memory_space<vmem>>, vector<1x128xbf16>
    tpu.vector_store %arg10[%c112, %c0_20], %8 {strides = array<i32>} : memref<288x384xbf16, #tpu.memory_space<vmem>>, vector<1x128xbf16>,
    %c127 = arith.constant 127 : index
    %c256_21 = arith.constant 256 : index
    %22 = vector.load %arg10[%c127, %c256_21] : memref<288x384xbf16, #tpu.memory_space<vmem>>, vector<1x128xbf16>
    tpu.vector_store %arg10[%c127, %c256_21], %8 {strides = array<i32>} : memref<288x384xbf16, #tpu.memory_space<vmem>>, vector<1x128xbf16>,
    %c128_22 = arith.constant 128 : index
    %c0_23 = arith.constant 0 : index
    %23 = vector.load %arg10[%c128_22, %c0_23] : memref<288x384xbf16, #tpu.memory_space<vmem>>, vector<1x128xbf16>
    tpu.vector_store %arg10[%c128_22, %c0_23], %8 {strides = array<i32>} : memref<288x384xbf16, #tpu.memory_space<vmem>>, vector<1x128xbf16>,
    %c143 = arith.constant 143 : index
    %c256_24 = arith.constant 256 : index
    %24 = vector.load %arg10[%c143, %c256_24] : memref<288x384xbf16, #tpu.memory_space<vmem>>, vector<1x128xbf16>
    tpu.vector_store %arg10[%c143, %c256_24], %8 {strides = array<i32>} : memref<288x384xbf16, #tpu.memory_space<vmem>>, vector<1x128xbf16>,
    %c144 = arith.constant 144 : index
    %c0_25 = arith.constant 0 : index
    %25 = vector.load %arg10[%c144, %c0_25] : memref<288x384xbf16, #tpu.memory_space<vmem>>, vector<1x128xbf16>
    tpu.vector_store %arg10[%c144, %c0_25], %8 {strides = array<i32>} : memref<288x384xbf16, #tpu.memory_space<vmem>>, vector<1x128xbf16>,
    %c159 = arith.constant 159 : index
    %c256_26 = arith.constant 256 : index
    %26 = vector.load %arg10[%c159, %c256_26] : memref<288x384xbf16, #tpu.memory_space<vmem>>, vector<1x128xbf16>
    tpu.vector_store %arg10[%c159, %c256_26], %8 {strides = array<i32>} : memref<288x384xbf16, #tpu.memory_space<vmem>>, vector<1x128xbf16>,
    %c160 = arith.constant 160 : index
    %c0_27 = arith.constant 0 : index
    %27 = vector.load %arg10[%c160, %c0_27] : memref<288x384xbf16, #tpu.memory_space<vmem>>, vector<1x128xbf16>
    tpu.vector_store %arg10[%c160, %c0_27], %8 {strides = array<i32>} : memref<288x384xbf16, #tpu.memory_space<vmem>>, vector<1x128xbf16>,
    %c175 = arith.constant 175 : index
    %c256_28 = arith.constant 256 : index
    %28 = vector.load %arg10[%c175, %c256_28] : memref<288x384xbf16, #tpu.memory_space<vmem>>, vector<1x128xbf16>
    tpu.vector_store %arg10[%c175, %c256_28], %8 {strides = array<i32>} : memref<288x384xbf16, #tpu.memory_space<vmem>>, vector<1x128xbf16>,
    %c176 = arith.constant 176 : index
    %c0_29 = arith.constant 0 : index
    %29 = vector.load %arg10[%c176, %c0_29] : memref<288x384xbf16, #tpu.memory_space<vmem>>, vector<1x128xbf16>
    tpu.vector_store %arg10[%c176, %c0_29], %8 {strides = array<i32>} : memref<288x384xbf16, #tpu.memory_space<vmem>>, vector<1x128xbf16>,
    %c191 = arith.constant 191 : index
    %c256_30 = arith.constant 256 : index
    %30 = vector.load %arg10[%c191, %c256_30] : memref<288x384xbf16, #tpu.memory_space<vmem>>, vector<1x128xbf16>
    tpu.vector_store %arg10[%c191, %c256_30], %8 {strides = array<i32>} : memref<288x384xbf16, #tpu.memory_space<vmem>>, vector<1x128xbf16>,
    %c192 = arith.constant 192 : index
    %c0_31 = arith.constant 0 : index
    %31 = vector.load %arg10[%c192, %c0_31] : memref<288x384xbf16, #tpu.memory_space<vmem>>, vector<1x128xbf16>
    tpu.vector_store %arg10[%c192, %c0_31], %8 {strides = array<i32>} : memref<288x384xbf16, #tpu.memory_space<vmem>>, vector<1x128xbf16>,
    %c207 = arith.constant 207 : index
    %c256_32 = arith.constant 256 : index
    %32 = vector.load %arg10[%c207, %c256_32] : memref<288x384xbf16, #tpu.memory_space<vmem>>, vector<1x128xbf16>
    tpu.vector_store %arg10[%c207, %c256_32], %8 {strides = array<i32>} : memref<288x384xbf16, #tpu.memory_space<vmem>>, vector<1x128xbf16>,
    %c208 = arith.constant 208 : index
    %c0_33 = arith.constant 0 : index
    %33 = vector.load %arg10[%c208, %c0_33] : memref<288x384xbf16, #tpu.memory_space<vmem>>, vector<1x128xbf16>
    tpu.vector_store %arg10[%c208, %c0_33], %8 {strides = array<i32>} : memref<288x384xbf16, #tpu.memory_space<vmem>>, vector<1x128xbf16>,
    %c223 = arith.constant 223 : index
    %c256_34 = arith.constant 256 : index
    %34 = vector.load %arg10[%c223, %c256_34] : memref<288x384xbf16, #tpu.memory_space<vmem>>, vector<1x128xbf16>
    tpu.vector_store %arg10[%c223, %c256_34], %8 {strides = array<i32>} : memref<288x384xbf16, #tpu.memory_space<vmem>>, vector<1x128xbf16>,
    %c224 = arith.constant 224 : index
    %c0_35 = arith.constant 0 : index
    %35 = vector.load %arg10[%c224, %c0_35] : memref<288x384xbf16, #tpu.memory_space<vmem>>, vector<1x128xbf16>
    tpu.vector_store %arg10[%c224, %c0_35], %8 {strides = array<i32>} : memref<288x384xbf16, #tpu.memory_space<vmem>>, vector<1x128xbf16>,
    %c239 = arith.constant 239 : index
    %c256_36 = arith.constant 256 : index
    %36 = vector.load %arg10[%c239, %c256_36] : memref<288x384xbf16, #tpu.memory_space<vmem>>, vector<1x128xbf16>
    tpu.vector_store %arg10[%c239, %c256_36], %8 {strides = array<i32>} : memref<288x384xbf16, #tpu.memory_space<vmem>>, vector<1x128xbf16>,
    %c240 = arith.constant 240 : index
    %c0_37 = arith.constant 0 : index
    %37 = vector.load %arg10[%c240, %c0_37] : memref<288x384xbf16, #tpu.memory_space<vmem>>, vector<1x128xbf16>
    tpu.vector_store %arg10[%c240, %c0_37], %8 {strides = array<i32>} : memref<288x384xbf16, #tpu.memory_space<vmem>>, vector<1x128xbf16>,
    %c255 = arith.constant 255 : index
    %c256_38 = arith.constant 256 : index
    %38 = vector.load %arg10[%c255, %c256_38] : memref<288x384xbf16, #tpu.memory_space<vmem>>, vector<1x128xbf16>
    tpu.vector_store %arg10[%c255, %c256_38], %8 {strides = array<i32>} : memref<288x384xbf16, #tpu.memory_space<vmem>>, vector<1x128xbf16>,
    %c256_39 = arith.constant 256 : index
    %c0_40 = arith.constant 0 : index
    %39 = vector.load %arg10[%c256_39, %c0_40] : memref<288x384xbf16, #tpu.memory_space<vmem>>, vector<1x128xbf16>
    tpu.vector_store %arg10[%c256_39, %c0_40], %8 {strides = array<i32>} : memref<288x384xbf16, #tpu.memory_space<vmem>>, vector<1x128xbf16>,
    %c271 = arith.constant 271 : index
    %c256_41 = arith.constant 256 : index
    %40 = vector.load %arg10[%c271, %c256_41] : memref<288x384xbf16, #tpu.memory_space<vmem>>, vector<1x128xbf16>
    tpu.vector_store %arg10[%c271, %c256_41], %8 {strides = array<i32>} : memref<288x384xbf16, #tpu.memory_space<vmem>>, vector<1x128xbf16>,
    %c0_42 = arith.constant 0 : index
    %c0_43 = arith.constant 0 : index
    %41 = vector.load %arg10[%c0_42, %c0_43] : memref<288x384xbf16, #tpu.memory_space<vmem>>, vector<256x384xbf16>
    %c0_44 = arith.constant 0 : index
    %c0_45 = arith.constant 0 : index
    %c0_46 = arith.constant 0 : index
    %42 = vector.load %arg2[%c0_44, %c0_45, %c0_46] : memref<3x384x128xbf16, #tpu.memory_space<vmem>>, vector<1x384x128xbf16>
    %43 = vector.shape_cast %42 : vector<1x384x128xbf16> to vector<384x128xbf16>
    %cst_47 = arith.constant dense<0.000000e+00> : vector<256x128xf32>
    %44 = tpu.matmul %41, %43, %cst_47 {dimension_numbers = #tpu.dot_dimension_numbers<[1], [0], [0], [1], [0, 0, 1, 1], [], []>} : vector<256x384xbf16>, vector<384x128xbf16>, vector<256x128xf32> -> vector<256x128xf32>
    %c16_48 = arith.constant 16 : index
    %c0_49 = arith.constant 0 : index
    %45 = vector.load %arg10[%c16_48, %c0_49] : memref<288x384xbf16, #tpu.memory_space<vmem>>, vector<256x384xbf16>
    %c1 = arith.constant 1 : index
    %c0_50 = arith.constant 0 : index
    %c0_51 = arith.constant 0 : index
    %46 = vector.load %arg2[%c1, %c0_50, %c0_51] : memref<3x384x128xbf16, #tpu.memory_space<vmem>>, vector<1x384x128xbf16>
    %47 = vector.shape_cast %46 : vector<1x384x128xbf16> to vector<384x128xbf16>
    %cst_52 = arith.constant dense<0.000000e+00> : vector<256x128xf32>
    %48 = tpu.matmul %45, %47, %cst_52 {dimension_numbers = #tpu.dot_dimension_numbers<[1], [0], [0], [1], [0, 0, 1, 1], [], []>} : vector<256x384xbf16>, vector<384x128xbf16>, vector<256x128xf32> -> vector<256x128xf32>
    %49 = arith.addf %44, %48 : vector<256x128xf32>
    %c32_53 = arith.constant 32 : index
    %c0_54 = arith.constant 0 : index
    %50 = vector.load %arg10[%c32_53, %c0_54] : memref<288x384xbf16, #tpu.memory_space<vmem>>, vector<256x384xbf16>
    %c2 = arith.constant 2 : index
    %c0_55 = arith.constant 0 : index
    %c0_56 = arith.constant 0 : index
    %51 = vector.load %arg2[%c2, %c0_55, %c0_56] : memref<3x384x128xbf16, #tpu.memory_space<vmem>>, vector<1x384x128xbf16>
    %52 = vector.shape_cast %51 : vector<1x384x128xbf16> to vector<384x128xbf16>
    %cst_57 = arith.constant dense<0.000000e+00> : vector<256x128xf32>
    %53 = tpu.matmul %50, %52, %cst_57 {dimension_numbers = #tpu.dot_dimension_numbers<[1], [0], [0], [1], [0, 0, 1, 1], [], []>} : vector<256x384xbf16>, vector<384x128xbf16>, vector<256x128xf32> -> vector<256x128xf32>
    %54 = arith.addf %49, %53 : vector<256x128xf32>
    %cst_58 = arith.constant dense<0.000000e+00> : vector<128xf32>
    %55 = vector.multi_reduction <add>, %54, %cst_58 [0] : vector<256x128xf32> to vector<128xf32>
    %56 = vector.shape_cast %55 : vector<128xf32> to vector<1x128xf32>
    %c0_59 = arith.constant 0 : index
    %c0_60 = arith.constant 0 : index
    %c0_61 = arith.constant 0 : index
    %57 = vector.load %arg6[%c0_59, %c0_60, %c0_61] : memref<1x1x128xf32, #tpu.memory_space<vmem>>, vector<1x1x128xf32>
    %58 = vector.shape_cast %57 : vector<1x1x128xf32> to vector<1x128xf32>
    %59 = vector.shape_cast %56 : vector<1x128xf32> to vector<1x1x128xf32>
    tpu.vector_store %arg6[%c0_59, %c0_60, %c0_61], %59 {strides = array<i32>} : memref<1x1x128xf32, #tpu.memory_space<vmem>>, vector<1x1x128xf32>,
    %60 = arith.mulf %54, %54 : vector<256x128xf32>
    %cst_62 = arith.constant dense<0.000000e+00> : vector<128xf32>
    %61 = vector.multi_reduction <add>, %60, %cst_62 [0] : vector<256x128xf32> to vector<128xf32>
    %62 = vector.shape_cast %61 : vector<128xf32> to vector<1x128xf32>
    %c0_63 = arith.constant 0 : index
    %c0_64 = arith.constant 0 : index
    %c0_65 = arith.constant 0 : index
    %63 = vector.load %arg7[%c0_63, %c0_64, %c0_65] : memref<1x1x128xf32, #tpu.memory_space<vmem>>, vector<1x1x128xf32>
    %64 = vector.shape_cast %63 : vector<1x1x128xf32> to vector<1x128xf32>
    %65 = vector.shape_cast %62 : vector<1x128xf32> to vector<1x1x128xf32>
    tpu.vector_store %arg7[%c0_63, %c0_64, %c0_65], %65 {strides = array<i32>} : memref<1x1x128xf32, #tpu.memory_space<vmem>>, vector<1x1x128xf32>,
    %66 = arith.truncf %54 : vector<256x128xf32> to vector<256x128xbf16>
    %c0_66 = arith.constant 0 : index
    %c0_67 = arith.constant 0 : index
    %c0_68 = arith.constant 0 : index
    %67 = vector.load %arg4[%c0_66, %c0_67, %c0_68] : memref<1x256x128xbf16, #tpu.memory_space<vmem>>, vector<1x256x128xbf16>
    %68 = vector.shape_cast %67 : vector<1x256x128xbf16> to vector<256x128xbf16>
    %69 = vector.shape_cast %66 : vector<256x128xbf16> to vector<1x256x128xbf16>
    tpu.vector_store %arg4[%c0_66, %c0_67, %c0_68], %69 {strides = array<i32>} : memref<1x256x128xbf16, #tpu.memory_space<vmem>>, vector<1x256x128xbf16>,
    %c0_69 = arith.constant 0 : index
    %c0_70 = arith.constant 0 : index
    %70 = vector.load %arg3[%c0_69, %c0_70] : memref<128x128xbf16, #tpu.memory_space<vmem>>, vector<128x128xbf16>
    %cst_71 = arith.constant dense<0.000000e+00> : vector<256x128xf32>
    %71 = tpu.matmul %1, %70, %cst_71 {dimension_numbers = #tpu.dot_dimension_numbers<[1], [0], [0], [1], [0, 0, 1, 1], [], []>} : vector<256x128xbf16>, vector<128x128xbf16>, vector<256x128xf32> -> vector<256x128xf32>
    %cst_72 = arith.constant dense<0.000000e+00> : vector<128xf32>
    %72 = vector.multi_reduction <add>, %71, %cst_72 [0] : vector<256x128xf32> to vector<128xf32>
    %73 = vector.shape_cast %72 : vector<128xf32> to vector<1x128xf32>
    %c0_73 = arith.constant 0 : index
    %c0_74 = arith.constant 0 : index
    %c0_75 = arith.constant 0 : index
    %74 = vector.load %arg8[%c0_73, %c0_74, %c0_75] : memref<1x1x128xf32, #tpu.memory_space<vmem>>, vector<1x1x128xf32>
    %75 = vector.shape_cast %74 : vector<1x1x128xf32> to vector<1x128xf32>
    %76 = vector.shape_cast %73 : vector<1x128xf32> to vector<1x1x128xf32>
    tpu.vector_store %arg8[%c0_73, %c0_74, %c0_75], %76 {strides = array<i32>} : memref<1x1x128xf32, #tpu.memory_space<vmem>>, vector<1x1x128xf32>,
    %77 = arith.mulf %71, %71 : vector<256x128xf32>
    %cst_76 = arith.constant dense<0.000000e+00> : vector<128xf32>
    %78 = vector.multi_reduction <add>, %77, %cst_76 [0] : vector<256x128xf32> to vector<128xf32>
    %79 = vector.shape_cast %78 : vector<128xf32> to vector<1x128xf32>
    %c0_77 = arith.constant 0 : index
    %c0_78 = arith.constant 0 : index
    %c0_79 = arith.constant 0 : index
    %80 = vector.load %arg9[%c0_77, %c0_78, %c0_79] : memref<1x1x128xf32, #tpu.memory_space<vmem>>, vector<1x1x128xf32>
    %81 = vector.shape_cast %80 : vector<1x1x128xf32> to vector<1x128xf32>
    %82 = vector.shape_cast %79 : vector<1x128xf32> to vector<1x1x128xf32>
    tpu.vector_store %arg9[%c0_77, %c0_78, %c0_79], %82 {strides = array<i32>} : memref<1x1x128xf32, #tpu.memory_space<vmem>>, vector<1x1x128xf32>,
    %83 = arith.truncf %71 : vector<256x128xf32> to vector<256x128xbf16>
    %c0_80 = arith.constant 0 : index
    %c0_81 = arith.constant 0 : index
    %c0_82 = arith.constant 0 : index
    %84 = vector.load %arg5[%c0_80, %c0_81, %c0_82] : memref<1x256x128xbf16, #tpu.memory_space<vmem>>, vector<1x256x128xbf16>
    %85 = vector.shape_cast %84 : vector<1x256x128xbf16> to vector<256x128xbf16>
    %86 = vector.shape_cast %83 : vector<256x128xbf16> to vector<1x256x128xbf16>
    tpu.vector_store %arg5[%c0_80, %c0_81, %c0_82], %86 {strides = array<i32>} : memref<1x256x128xbf16, #tpu.memory_space<vmem>>, vector<1x256x128xbf16>,
    return
  }
  func.func @transform_0(%arg0: i32) -> (i32, i32, i32) {
    %c0_i32 = arith.constant 0 : i32
    %c0_i32_0 = arith.constant 0 : i32
    %c0_i32_1 = arith.constant 0 : i32
    return %arg0, %c0_i32, %c0_i32_0 : i32, i32, i32
  }
  func.func @transform_1(%arg0: i32) -> (i32, i32, i32) {
    %c0_i32 = arith.constant 0 : i32
    %c0_i32_0 = arith.constant 0 : i32
    %c0_i32_1 = arith.constant 0 : i32
    %c0_i32_2 = arith.constant 0 : i32
    return %c0_i32, %c0_i32_0, %c0_i32_1 : i32, i32, i32
  }
  func.func @transform_2(%arg0: i32) -> (i32, i32) {
    %c0_i32 = arith.constant 0 : i32
    %c0_i32_0 = arith.constant 0 : i32
    %c0_i32_1 = arith.constant 0 : i32
    return %c0_i32, %c0_i32_0 : i32, i32
  }
  func.func @transform_3(%arg0: i32) -> (i32, i32, i32) {
    %c0_i32 = arith.constant 0 : i32
    %c0_i32_0 = arith.constant 0 : i32
    %c0_i32_1 = arith.constant 0 : i32
    return %arg0, %c0_i32, %c0_i32_0 : i32, i32, i32
  }
  func.func @transform_4(%arg0: i32) -> (i32, i32, i32) {
    %c0_i32 = arith.constant 0 : i32
    %c0_i32_0 = arith.constant 0 : i32
    %c0_i32_1 = arith.constant 0 : i32
    return %arg0, %c0_i32, %c0_i32_0 : i32, i32, i32
  }
  func.func @transform_5(%arg0: i32) -> (i32, i32, i32) {
    %c0_i32 = arith.constant 0 : i32
    %c0_i32_0 = arith.constant 0 : i32
    %c0_i32_1 = arith.constant 0 : i32
    return %arg0, %c0_i32, %c0_i32_0 : i32, i32, i32
  }
  func.func @transform_6(%arg0: i32) -> (i32, i32, i32) {
    %c0_i32 = arith.constant 0 : i32
    %c0_i32_0 = arith.constant 0 : i32
    %c0_i32_1 = arith.constant 0 : i32
    return %arg0, %c0_i32, %c0_i32_0 : i32, i32, i32
  }
  func.func @transform_7(%arg0: i32) -> (i32, i32, i32) {
    %c0_i32 = arith.constant 0 : i32
    %c0_i32_0 = arith.constant 0 : i32
    %c0_i32_1 = arith.constant 0 : i32
    return %arg0, %c0_i32, %c0_i32_0 : i32, i32, i32
  }
  func.func @transform_8(%arg0: i32) -> (i32, i32, i32) {
    %c0_i32 = arith.constant 0 : i32
    %c0_i32_0 = arith.constant 0 : i32
    %c0_i32_1 = arith.constant 0 : i32
    return %arg0, %c0_i32, %c0_i32_0 : i32, i32, i32
  }
}

module attributes {stable_mosaic.version = 11 : i64} {
  func.func @_conv_bn_act_kernel(%arg0: i32, %arg1: memref<1x256x128xbf16, #tpu.memory_space<vmem>>, %arg2: memref<3x384x128xbf16, #tpu.memory_space<vmem>>, %arg3: memref<1x128xf32, #tpu.memory_space<vmem>>, %arg4: memref<1x128xf32, #tpu.memory_space<vmem>>, %arg5: memref<1x256x128xbf16, #tpu.memory_space<vmem>>, %arg6: memref<1x1x128xf32, #tpu.memory_space<vmem>>, %arg7: memref<1x1x128xf32, #tpu.memory_space<vmem>>, %arg8: memref<288x384xbf16, #tpu.memory_space<vmem>>) attributes {dimension_semantics = [#tpu.dimension_semantics<parallel>], iteration_bounds = array<i64: 2>, scalar_prefetch = 0 : i64, scratch_operands = 1 : i64, tpu.core_type = #tpu.core_type<tc>, window_params = [{transform_indices = @transform_0, window_bounds = array<i64: 1, 256, 128>}, {pipeline_mode = #tpu.pipeline_mode<synchronous>, transform_indices = @transform_1, window_bounds = array<i64: 3, 384, 128>}, {pipeline_mode = #tpu.pipeline_mode<synchronous>, transform_indices = @transform_2, window_bounds = array<i64: 1, 128>}, {pipeline_mode = #tpu.pipeline_mode<synchronous>, transform_indices = @transform_3, window_bounds = array<i64: 1, 128>}, {transform_indices = @transform_4, window_bounds = array<i64: 1, 256, 128>}, {transform_indices = @transform_5, window_bounds = array<i64: 1, 1, 128>}, {transform_indices = @transform_6, window_bounds = array<i64: 1, 1, 128>}]} {
    %c0 = arith.constant 0 : index
    %c0_0 = arith.constant 0 : index
    %c0_1 = arith.constant 0 : index
    %0 = vector.load %arg1[%c0, %c0_0, %c0_1] : memref<1x256x128xbf16, #tpu.memory_space<vmem>>, vector<1x256x128xbf16>
    %1 = vector.shape_cast %0 : vector<1x256x128xbf16> to vector<256x128xbf16>
    %2 = arith.extf %1 : vector<256x128xbf16> to vector<256x128xf32>
    %c0_2 = arith.constant 0 : index
    %c0_3 = arith.constant 0 : index
    %3 = vector.load %arg3[%c0_2, %c0_3] : memref<1x128xf32, #tpu.memory_space<vmem>>, vector<1x128xf32>
    %4 = vector.broadcast %3 : vector<1x128xf32> to vector<256x128xf32>
    %5 = arith.mulf %2, %4 : vector<256x128xf32>
    %c0_4 = arith.constant 0 : index
    %c0_5 = arith.constant 0 : index
    %6 = vector.load %arg4[%c0_4, %c0_5] : memref<1x128xf32, #tpu.memory_space<vmem>>, vector<1x128xf32>
    %7 = vector.broadcast %6 : vector<1x128xf32> to vector<256x128xf32>
    %8 = arith.addf %5, %7 : vector<256x128xf32>
    %cst = arith.constant 0.000000e+00 : f32
    %9 = vector.broadcast %cst : f32 to vector<256x128xf32>
    %10 = arith.cmpf oge, %8, %9 : vector<256x128xf32>
    %cst_6 = arith.constant 1.000000e-01 : f32
    %11 = vector.broadcast %cst_6 : f32 to vector<256x128xf32>
    %12 = arith.mulf %11, %8 : vector<256x128xf32>
    %13 = arith.select %10, %8, %12 : vector<256x128xi1>, vector<256x128xf32>
    %14 = arith.truncf %13 : vector<256x128xf32> to vector<256x128xbf16>
    %c16 = arith.constant 16 : index
    %c128 = arith.constant 128 : index
    %15 = vector.load %arg8[%c16, %c128] : memref<288x384xbf16, #tpu.memory_space<vmem>>, vector<256x128xbf16>
    tpu.vector_store %arg8[%c16, %c128], %14 {strides = array<i32>} : memref<288x384xbf16, #tpu.memory_space<vmem>>, vector<256x128xbf16>,
    %c17 = arith.constant 17 : index
    %c0_7 = arith.constant 0 : index
    %16 = vector.load %arg8[%c17, %c0_7] : memref<288x384xbf16, #tpu.memory_space<vmem>>, vector<256x128xbf16>
    tpu.vector_store %arg8[%c17, %c0_7], %14 {strides = array<i32>} : memref<288x384xbf16, #tpu.memory_space<vmem>>, vector<256x128xbf16>,
    %c15 = arith.constant 15 : index
    %c256 = arith.constant 256 : index
    %17 = vector.load %arg8[%c15, %c256] : memref<288x384xbf16, #tpu.memory_space<vmem>>, vector<256x128xbf16>
    tpu.vector_store %arg8[%c15, %c256], %14 {strides = array<i32>} : memref<288x384xbf16, #tpu.memory_space<vmem>>, vector<256x128xbf16>,
    %cst_8 = arith.constant 0.000000e+00 : bf16
    %18 = vector.broadcast %cst_8 : bf16 to vector<16x384xbf16>
    %c0_9 = arith.constant 0 : index
    %c0_10 = arith.constant 0 : index
    %19 = vector.load %arg8[%c0_9, %c0_10] : memref<288x384xbf16, #tpu.memory_space<vmem>>, vector<16x384xbf16>
    tpu.vector_store %arg8[%c0_9, %c0_10], %18 {strides = array<i32>} : memref<288x384xbf16, #tpu.memory_space<vmem>>, vector<16x384xbf16>,
    %c272 = arith.constant 272 : index
    %c0_11 = arith.constant 0 : index
    %20 = vector.load %arg8[%c272, %c0_11] : memref<288x384xbf16, #tpu.memory_space<vmem>>, vector<16x384xbf16>
    tpu.vector_store %arg8[%c272, %c0_11], %18 {strides = array<i32>} : memref<288x384xbf16, #tpu.memory_space<vmem>>, vector<16x384xbf16>,
    %cst_12 = arith.constant 0.000000e+00 : bf16
    %21 = vector.broadcast %cst_12 : bf16 to vector<1x128xbf16>
    %c16_13 = arith.constant 16 : index
    %c0_14 = arith.constant 0 : index
    %22 = vector.load %arg8[%c16_13, %c0_14] : memref<288x384xbf16, #tpu.memory_space<vmem>>, vector<1x128xbf16>
    tpu.vector_store %arg8[%c16_13, %c0_14], %21 {strides = array<i32>} : memref<288x384xbf16, #tpu.memory_space<vmem>>, vector<1x128xbf16>,
    %c31 = arith.constant 31 : index
    %c256_15 = arith.constant 256 : index
    %23 = vector.load %arg8[%c31, %c256_15] : memref<288x384xbf16, #tpu.memory_space<vmem>>, vector<1x128xbf16>
    tpu.vector_store %arg8[%c31, %c256_15], %21 {strides = array<i32>} : memref<288x384xbf16, #tpu.memory_space<vmem>>, vector<1x128xbf16>,
    %c32 = arith.constant 32 : index
    %c0_16 = arith.constant 0 : index
    %24 = vector.load %arg8[%c32, %c0_16] : memref<288x384xbf16, #tpu.memory_space<vmem>>, vector<1x128xbf16>
    tpu.vector_store %arg8[%c32, %c0_16], %21 {strides = array<i32>} : memref<288x384xbf16, #tpu.memory_space<vmem>>, vector<1x128xbf16>,
    %c47 = arith.constant 47 : index
    %c256_17 = arith.constant 256 : index
    %25 = vector.load %arg8[%c47, %c256_17] : memref<288x384xbf16, #tpu.memory_space<vmem>>, vector<1x128xbf16>
    tpu.vector_store %arg8[%c47, %c256_17], %21 {strides = array<i32>} : memref<288x384xbf16, #tpu.memory_space<vmem>>, vector<1x128xbf16>,
    %c48 = arith.constant 48 : index
    %c0_18 = arith.constant 0 : index
    %26 = vector.load %arg8[%c48, %c0_18] : memref<288x384xbf16, #tpu.memory_space<vmem>>, vector<1x128xbf16>
    tpu.vector_store %arg8[%c48, %c0_18], %21 {strides = array<i32>} : memref<288x384xbf16, #tpu.memory_space<vmem>>, vector<1x128xbf16>,
    %c63 = arith.constant 63 : index
    %c256_19 = arith.constant 256 : index
    %27 = vector.load %arg8[%c63, %c256_19] : memref<288x384xbf16, #tpu.memory_space<vmem>>, vector<1x128xbf16>
    tpu.vector_store %arg8[%c63, %c256_19], %21 {strides = array<i32>} : memref<288x384xbf16, #tpu.memory_space<vmem>>, vector<1x128xbf16>,
    %c64 = arith.constant 64 : index
    %c0_20 = arith.constant 0 : index
    %28 = vector.load %arg8[%c64, %c0_20] : memref<288x384xbf16, #tpu.memory_space<vmem>>, vector<1x128xbf16>
    tpu.vector_store %arg8[%c64, %c0_20], %21 {strides = array<i32>} : memref<288x384xbf16, #tpu.memory_space<vmem>>, vector<1x128xbf16>,
    %c79 = arith.constant 79 : index
    %c256_21 = arith.constant 256 : index
    %29 = vector.load %arg8[%c79, %c256_21] : memref<288x384xbf16, #tpu.memory_space<vmem>>, vector<1x128xbf16>
    tpu.vector_store %arg8[%c79, %c256_21], %21 {strides = array<i32>} : memref<288x384xbf16, #tpu.memory_space<vmem>>, vector<1x128xbf16>,
    %c80 = arith.constant 80 : index
    %c0_22 = arith.constant 0 : index
    %30 = vector.load %arg8[%c80, %c0_22] : memref<288x384xbf16, #tpu.memory_space<vmem>>, vector<1x128xbf16>
    tpu.vector_store %arg8[%c80, %c0_22], %21 {strides = array<i32>} : memref<288x384xbf16, #tpu.memory_space<vmem>>, vector<1x128xbf16>,
    %c95 = arith.constant 95 : index
    %c256_23 = arith.constant 256 : index
    %31 = vector.load %arg8[%c95, %c256_23] : memref<288x384xbf16, #tpu.memory_space<vmem>>, vector<1x128xbf16>
    tpu.vector_store %arg8[%c95, %c256_23], %21 {strides = array<i32>} : memref<288x384xbf16, #tpu.memory_space<vmem>>, vector<1x128xbf16>,
    %c96 = arith.constant 96 : index
    %c0_24 = arith.constant 0 : index
    %32 = vector.load %arg8[%c96, %c0_24] : memref<288x384xbf16, #tpu.memory_space<vmem>>, vector<1x128xbf16>
    tpu.vector_store %arg8[%c96, %c0_24], %21 {strides = array<i32>} : memref<288x384xbf16, #tpu.memory_space<vmem>>, vector<1x128xbf16>,
    %c111 = arith.constant 111 : index
    %c256_25 = arith.constant 256 : index
    %33 = vector.load %arg8[%c111, %c256_25] : memref<288x384xbf16, #tpu.memory_space<vmem>>, vector<1x128xbf16>
    tpu.vector_store %arg8[%c111, %c256_25], %21 {strides = array<i32>} : memref<288x384xbf16, #tpu.memory_space<vmem>>, vector<1x128xbf16>,
    %c112 = arith.constant 112 : index
    %c0_26 = arith.constant 0 : index
    %34 = vector.load %arg8[%c112, %c0_26] : memref<288x384xbf16, #tpu.memory_space<vmem>>, vector<1x128xbf16>
    tpu.vector_store %arg8[%c112, %c0_26], %21 {strides = array<i32>} : memref<288x384xbf16, #tpu.memory_space<vmem>>, vector<1x128xbf16>,
    %c127 = arith.constant 127 : index
    %c256_27 = arith.constant 256 : index
    %35 = vector.load %arg8[%c127, %c256_27] : memref<288x384xbf16, #tpu.memory_space<vmem>>, vector<1x128xbf16>
    tpu.vector_store %arg8[%c127, %c256_27], %21 {strides = array<i32>} : memref<288x384xbf16, #tpu.memory_space<vmem>>, vector<1x128xbf16>,
    %c128_28 = arith.constant 128 : index
    %c0_29 = arith.constant 0 : index
    %36 = vector.load %arg8[%c128_28, %c0_29] : memref<288x384xbf16, #tpu.memory_space<vmem>>, vector<1x128xbf16>
    tpu.vector_store %arg8[%c128_28, %c0_29], %21 {strides = array<i32>} : memref<288x384xbf16, #tpu.memory_space<vmem>>, vector<1x128xbf16>,
    %c143 = arith.constant 143 : index
    %c256_30 = arith.constant 256 : index
    %37 = vector.load %arg8[%c143, %c256_30] : memref<288x384xbf16, #tpu.memory_space<vmem>>, vector<1x128xbf16>
    tpu.vector_store %arg8[%c143, %c256_30], %21 {strides = array<i32>} : memref<288x384xbf16, #tpu.memory_space<vmem>>, vector<1x128xbf16>,
    %c144 = arith.constant 144 : index
    %c0_31 = arith.constant 0 : index
    %38 = vector.load %arg8[%c144, %c0_31] : memref<288x384xbf16, #tpu.memory_space<vmem>>, vector<1x128xbf16>
    tpu.vector_store %arg8[%c144, %c0_31], %21 {strides = array<i32>} : memref<288x384xbf16, #tpu.memory_space<vmem>>, vector<1x128xbf16>,
    %c159 = arith.constant 159 : index
    %c256_32 = arith.constant 256 : index
    %39 = vector.load %arg8[%c159, %c256_32] : memref<288x384xbf16, #tpu.memory_space<vmem>>, vector<1x128xbf16>
    tpu.vector_store %arg8[%c159, %c256_32], %21 {strides = array<i32>} : memref<288x384xbf16, #tpu.memory_space<vmem>>, vector<1x128xbf16>,
    %c160 = arith.constant 160 : index
    %c0_33 = arith.constant 0 : index
    %40 = vector.load %arg8[%c160, %c0_33] : memref<288x384xbf16, #tpu.memory_space<vmem>>, vector<1x128xbf16>
    tpu.vector_store %arg8[%c160, %c0_33], %21 {strides = array<i32>} : memref<288x384xbf16, #tpu.memory_space<vmem>>, vector<1x128xbf16>,
    %c175 = arith.constant 175 : index
    %c256_34 = arith.constant 256 : index
    %41 = vector.load %arg8[%c175, %c256_34] : memref<288x384xbf16, #tpu.memory_space<vmem>>, vector<1x128xbf16>
    tpu.vector_store %arg8[%c175, %c256_34], %21 {strides = array<i32>} : memref<288x384xbf16, #tpu.memory_space<vmem>>, vector<1x128xbf16>,
    %c176 = arith.constant 176 : index
    %c0_35 = arith.constant 0 : index
    %42 = vector.load %arg8[%c176, %c0_35] : memref<288x384xbf16, #tpu.memory_space<vmem>>, vector<1x128xbf16>
    tpu.vector_store %arg8[%c176, %c0_35], %21 {strides = array<i32>} : memref<288x384xbf16, #tpu.memory_space<vmem>>, vector<1x128xbf16>,
    %c191 = arith.constant 191 : index
    %c256_36 = arith.constant 256 : index
    %43 = vector.load %arg8[%c191, %c256_36] : memref<288x384xbf16, #tpu.memory_space<vmem>>, vector<1x128xbf16>
    tpu.vector_store %arg8[%c191, %c256_36], %21 {strides = array<i32>} : memref<288x384xbf16, #tpu.memory_space<vmem>>, vector<1x128xbf16>,
    %c192 = arith.constant 192 : index
    %c0_37 = arith.constant 0 : index
    %44 = vector.load %arg8[%c192, %c0_37] : memref<288x384xbf16, #tpu.memory_space<vmem>>, vector<1x128xbf16>
    tpu.vector_store %arg8[%c192, %c0_37], %21 {strides = array<i32>} : memref<288x384xbf16, #tpu.memory_space<vmem>>, vector<1x128xbf16>,
    %c207 = arith.constant 207 : index
    %c256_38 = arith.constant 256 : index
    %45 = vector.load %arg8[%c207, %c256_38] : memref<288x384xbf16, #tpu.memory_space<vmem>>, vector<1x128xbf16>
    tpu.vector_store %arg8[%c207, %c256_38], %21 {strides = array<i32>} : memref<288x384xbf16, #tpu.memory_space<vmem>>, vector<1x128xbf16>,
    %c208 = arith.constant 208 : index
    %c0_39 = arith.constant 0 : index
    %46 = vector.load %arg8[%c208, %c0_39] : memref<288x384xbf16, #tpu.memory_space<vmem>>, vector<1x128xbf16>
    tpu.vector_store %arg8[%c208, %c0_39], %21 {strides = array<i32>} : memref<288x384xbf16, #tpu.memory_space<vmem>>, vector<1x128xbf16>,
    %c223 = arith.constant 223 : index
    %c256_40 = arith.constant 256 : index
    %47 = vector.load %arg8[%c223, %c256_40] : memref<288x384xbf16, #tpu.memory_space<vmem>>, vector<1x128xbf16>
    tpu.vector_store %arg8[%c223, %c256_40], %21 {strides = array<i32>} : memref<288x384xbf16, #tpu.memory_space<vmem>>, vector<1x128xbf16>,
    %c224 = arith.constant 224 : index
    %c0_41 = arith.constant 0 : index
    %48 = vector.load %arg8[%c224, %c0_41] : memref<288x384xbf16, #tpu.memory_space<vmem>>, vector<1x128xbf16>
    tpu.vector_store %arg8[%c224, %c0_41], %21 {strides = array<i32>} : memref<288x384xbf16, #tpu.memory_space<vmem>>, vector<1x128xbf16>,
    %c239 = arith.constant 239 : index
    %c256_42 = arith.constant 256 : index
    %49 = vector.load %arg8[%c239, %c256_42] : memref<288x384xbf16, #tpu.memory_space<vmem>>, vector<1x128xbf16>
    tpu.vector_store %arg8[%c239, %c256_42], %21 {strides = array<i32>} : memref<288x384xbf16, #tpu.memory_space<vmem>>, vector<1x128xbf16>,
    %c240 = arith.constant 240 : index
    %c0_43 = arith.constant 0 : index
    %50 = vector.load %arg8[%c240, %c0_43] : memref<288x384xbf16, #tpu.memory_space<vmem>>, vector<1x128xbf16>
    tpu.vector_store %arg8[%c240, %c0_43], %21 {strides = array<i32>} : memref<288x384xbf16, #tpu.memory_space<vmem>>, vector<1x128xbf16>,
    %c255 = arith.constant 255 : index
    %c256_44 = arith.constant 256 : index
    %51 = vector.load %arg8[%c255, %c256_44] : memref<288x384xbf16, #tpu.memory_space<vmem>>, vector<1x128xbf16>
    tpu.vector_store %arg8[%c255, %c256_44], %21 {strides = array<i32>} : memref<288x384xbf16, #tpu.memory_space<vmem>>, vector<1x128xbf16>,
    %c256_45 = arith.constant 256 : index
    %c0_46 = arith.constant 0 : index
    %52 = vector.load %arg8[%c256_45, %c0_46] : memref<288x384xbf16, #tpu.memory_space<vmem>>, vector<1x128xbf16>
    tpu.vector_store %arg8[%c256_45, %c0_46], %21 {strides = array<i32>} : memref<288x384xbf16, #tpu.memory_space<vmem>>, vector<1x128xbf16>,
    %c271 = arith.constant 271 : index
    %c256_47 = arith.constant 256 : index
    %53 = vector.load %arg8[%c271, %c256_47] : memref<288x384xbf16, #tpu.memory_space<vmem>>, vector<1x128xbf16>
    tpu.vector_store %arg8[%c271, %c256_47], %21 {strides = array<i32>} : memref<288x384xbf16, #tpu.memory_space<vmem>>, vector<1x128xbf16>,
    %c0_48 = arith.constant 0 : index
    %c0_49 = arith.constant 0 : index
    %54 = vector.load %arg8[%c0_48, %c0_49] : memref<288x384xbf16, #tpu.memory_space<vmem>>, vector<256x384xbf16>
    %c0_50 = arith.constant 0 : index
    %c0_51 = arith.constant 0 : index
    %c0_52 = arith.constant 0 : index
    %55 = vector.load %arg2[%c0_50, %c0_51, %c0_52] : memref<3x384x128xbf16, #tpu.memory_space<vmem>>, vector<1x384x128xbf16>
    %56 = vector.shape_cast %55 : vector<1x384x128xbf16> to vector<384x128xbf16>
    %cst_53 = arith.constant dense<0.000000e+00> : vector<256x128xf32>
    %57 = tpu.matmul %54, %56, %cst_53 {dimension_numbers = #tpu.dot_dimension_numbers<[1], [0], [0], [1], [0, 0, 1, 1], [], []>} : vector<256x384xbf16>, vector<384x128xbf16>, vector<256x128xf32> -> vector<256x128xf32>
    %c16_54 = arith.constant 16 : index
    %c0_55 = arith.constant 0 : index
    %58 = vector.load %arg8[%c16_54, %c0_55] : memref<288x384xbf16, #tpu.memory_space<vmem>>, vector<256x384xbf16>
    %c1 = arith.constant 1 : index
    %c0_56 = arith.constant 0 : index
    %c0_57 = arith.constant 0 : index
    %59 = vector.load %arg2[%c1, %c0_56, %c0_57] : memref<3x384x128xbf16, #tpu.memory_space<vmem>>, vector<1x384x128xbf16>
    %60 = vector.shape_cast %59 : vector<1x384x128xbf16> to vector<384x128xbf16>
    %cst_58 = arith.constant dense<0.000000e+00> : vector<256x128xf32>
    %61 = tpu.matmul %58, %60, %cst_58 {dimension_numbers = #tpu.dot_dimension_numbers<[1], [0], [0], [1], [0, 0, 1, 1], [], []>} : vector<256x384xbf16>, vector<384x128xbf16>, vector<256x128xf32> -> vector<256x128xf32>
    %62 = arith.addf %57, %61 : vector<256x128xf32>
    %c32_59 = arith.constant 32 : index
    %c0_60 = arith.constant 0 : index
    %63 = vector.load %arg8[%c32_59, %c0_60] : memref<288x384xbf16, #tpu.memory_space<vmem>>, vector<256x384xbf16>
    %c2 = arith.constant 2 : index
    %c0_61 = arith.constant 0 : index
    %c0_62 = arith.constant 0 : index
    %64 = vector.load %arg2[%c2, %c0_61, %c0_62] : memref<3x384x128xbf16, #tpu.memory_space<vmem>>, vector<1x384x128xbf16>
    %65 = vector.shape_cast %64 : vector<1x384x128xbf16> to vector<384x128xbf16>
    %cst_63 = arith.constant dense<0.000000e+00> : vector<256x128xf32>
    %66 = tpu.matmul %63, %65, %cst_63 {dimension_numbers = #tpu.dot_dimension_numbers<[1], [0], [0], [1], [0, 0, 1, 1], [], []>} : vector<256x384xbf16>, vector<384x128xbf16>, vector<256x128xf32> -> vector<256x128xf32>
    %67 = arith.addf %62, %66 : vector<256x128xf32>
    %cst_64 = arith.constant dense<0.000000e+00> : vector<128xf32>
    %68 = vector.multi_reduction <add>, %67, %cst_64 [0] : vector<256x128xf32> to vector<128xf32>
    %69 = vector.shape_cast %68 : vector<128xf32> to vector<1x128xf32>
    %c0_65 = arith.constant 0 : index
    %c0_66 = arith.constant 0 : index
    %c0_67 = arith.constant 0 : index
    %70 = vector.load %arg6[%c0_65, %c0_66, %c0_67] : memref<1x1x128xf32, #tpu.memory_space<vmem>>, vector<1x1x128xf32>
    %71 = vector.shape_cast %70 : vector<1x1x128xf32> to vector<1x128xf32>
    %72 = vector.shape_cast %69 : vector<1x128xf32> to vector<1x1x128xf32>
    tpu.vector_store %arg6[%c0_65, %c0_66, %c0_67], %72 {strides = array<i32>} : memref<1x1x128xf32, #tpu.memory_space<vmem>>, vector<1x1x128xf32>,
    %73 = arith.mulf %67, %67 : vector<256x128xf32>
    %cst_68 = arith.constant dense<0.000000e+00> : vector<128xf32>
    %74 = vector.multi_reduction <add>, %73, %cst_68 [0] : vector<256x128xf32> to vector<128xf32>
    %75 = vector.shape_cast %74 : vector<128xf32> to vector<1x128xf32>
    %c0_69 = arith.constant 0 : index
    %c0_70 = arith.constant 0 : index
    %c0_71 = arith.constant 0 : index
    %76 = vector.load %arg7[%c0_69, %c0_70, %c0_71] : memref<1x1x128xf32, #tpu.memory_space<vmem>>, vector<1x1x128xf32>
    %77 = vector.shape_cast %76 : vector<1x1x128xf32> to vector<1x128xf32>
    %78 = vector.shape_cast %75 : vector<1x128xf32> to vector<1x1x128xf32>
    tpu.vector_store %arg7[%c0_69, %c0_70, %c0_71], %78 {strides = array<i32>} : memref<1x1x128xf32, #tpu.memory_space<vmem>>, vector<1x1x128xf32>,
    %79 = arith.truncf %67 : vector<256x128xf32> to vector<256x128xbf16>
    %c0_72 = arith.constant 0 : index
    %c0_73 = arith.constant 0 : index
    %c0_74 = arith.constant 0 : index
    %80 = vector.load %arg5[%c0_72, %c0_73, %c0_74] : memref<1x256x128xbf16, #tpu.memory_space<vmem>>, vector<1x256x128xbf16>
    %81 = vector.shape_cast %80 : vector<1x256x128xbf16> to vector<256x128xbf16>
    %82 = vector.shape_cast %79 : vector<256x128xbf16> to vector<1x256x128xbf16>
    tpu.vector_store %arg5[%c0_72, %c0_73, %c0_74], %82 {strides = array<i32>} : memref<1x256x128xbf16, #tpu.memory_space<vmem>>, vector<1x256x128xbf16>,
    return
  }
  func.func @transform_0(%arg0: i32) -> (i32, i32, i32) {
    %c0_i32 = arith.constant 0 : i32
    %c0_i32_0 = arith.constant 0 : i32
    %c0_i32_1 = arith.constant 0 : i32
    return %arg0, %c0_i32, %c0_i32_0 : i32, i32, i32
  }
  func.func @transform_1(%arg0: i32) -> (i32, i32, i32) {
    %c0_i32 = arith.constant 0 : i32
    %c0_i32_0 = arith.constant 0 : i32
    %c0_i32_1 = arith.constant 0 : i32
    %c0_i32_2 = arith.constant 0 : i32
    return %c0_i32, %c0_i32_0, %c0_i32_1 : i32, i32, i32
  }
  func.func @transform_2(%arg0: i32) -> (i32, i32) {
    %c0_i32 = arith.constant 0 : i32
    %c0_i32_0 = arith.constant 0 : i32
    %c0_i32_1 = arith.constant 0 : i32
    return %c0_i32, %c0_i32_0 : i32, i32
  }
  func.func @transform_3(%arg0: i32) -> (i32, i32) {
    %c0_i32 = arith.constant 0 : i32
    %c0_i32_0 = arith.constant 0 : i32
    %c0_i32_1 = arith.constant 0 : i32
    return %c0_i32, %c0_i32_0 : i32, i32
  }
  func.func @transform_4(%arg0: i32) -> (i32, i32, i32) {
    %c0_i32 = arith.constant 0 : i32
    %c0_i32_0 = arith.constant 0 : i32
    %c0_i32_1 = arith.constant 0 : i32
    return %arg0, %c0_i32, %c0_i32_0 : i32, i32, i32
  }
  func.func @transform_5(%arg0: i32) -> (i32, i32, i32) {
    %c0_i32 = arith.constant 0 : i32
    %c0_i32_0 = arith.constant 0 : i32
    %c0_i32_1 = arith.constant 0 : i32
    return %arg0, %c0_i32, %c0_i32_0 : i32, i32, i32
  }
  func.func @transform_6(%arg0: i32) -> (i32, i32, i32) {
    %c0_i32 = arith.constant 0 : i32
    %c0_i32_0 = arith.constant 0 : i32
    %c0_i32_1 = arith.constant 0 : i32
    return %arg0, %c0_i32, %c0_i32_0 : i32, i32, i32
  }
}

module attributes {stable_mosaic.version = 11 : i64} {
  func.func @_tail_kernel(%arg0: i32, %arg1: memref<1x256x128xbf16, #tpu.memory_space<vmem>>, %arg2: memref<1x256x128xbf16, #tpu.memory_space<vmem>>, %arg3: memref<1x128xf32, #tpu.memory_space<vmem>>, %arg4: memref<1x128xf32, #tpu.memory_space<vmem>>, %arg5: memref<1x128xf32, #tpu.memory_space<vmem>>, %arg6: memref<1x128xf32, #tpu.memory_space<vmem>>, %arg7: memref<1x64x128xf32, #tpu.memory_space<vmem>>, %arg8: memref<256x128xf32, #tpu.memory_space<vmem>>, %arg9: memref<128x128xf32, #tpu.memory_space<vmem>>) attributes {dimension_semantics = [#tpu.dimension_semantics<parallel>], iteration_bounds = array<i64: 2>, scalar_prefetch = 0 : i64, scratch_operands = 2 : i64, tpu.core_type = #tpu.core_type<tc>, window_params = [{transform_indices = @transform_0, window_bounds = array<i64: 1, 256, 128>}, {transform_indices = @transform_1, window_bounds = array<i64: 1, 256, 128>}, {pipeline_mode = #tpu.pipeline_mode<synchronous>, transform_indices = @transform_2, window_bounds = array<i64: 1, 128>}, {pipeline_mode = #tpu.pipeline_mode<synchronous>, transform_indices = @transform_3, window_bounds = array<i64: 1, 128>}, {pipeline_mode = #tpu.pipeline_mode<synchronous>, transform_indices = @transform_4, window_bounds = array<i64: 1, 128>}, {pipeline_mode = #tpu.pipeline_mode<synchronous>, transform_indices = @transform_5, window_bounds = array<i64: 1, 128>}, {transform_indices = @transform_6, window_bounds = array<i64: 1, 64, 128>}]} {
    %c0 = arith.constant 0 : index
    %c0_0 = arith.constant 0 : index
    %c0_1 = arith.constant 0 : index
    %0 = vector.load %arg1[%c0, %c0_0, %c0_1] : memref<1x256x128xbf16, #tpu.memory_space<vmem>>, vector<1x256x128xbf16>
    %1 = vector.shape_cast %0 : vector<1x256x128xbf16> to vector<256x128xbf16>
    %2 = arith.extf %1 : vector<256x128xbf16> to vector<256x128xf32>
    %c0_2 = arith.constant 0 : index
    %c0_3 = arith.constant 0 : index
    %3 = vector.load %arg3[%c0_2, %c0_3] : memref<1x128xf32, #tpu.memory_space<vmem>>, vector<1x128xf32>
    %4 = vector.broadcast %3 : vector<1x128xf32> to vector<256x128xf32>
    %5 = arith.mulf %2, %4 : vector<256x128xf32>
    %c0_4 = arith.constant 0 : index
    %c0_5 = arith.constant 0 : index
    %6 = vector.load %arg4[%c0_4, %c0_5] : memref<1x128xf32, #tpu.memory_space<vmem>>, vector<1x128xf32>
    %7 = vector.broadcast %6 : vector<1x128xf32> to vector<256x128xf32>
    %8 = arith.addf %5, %7 : vector<256x128xf32>
    %c0_6 = arith.constant 0 : index
    %c0_7 = arith.constant 0 : index
    %c0_8 = arith.constant 0 : index
    %9 = vector.load %arg2[%c0_6, %c0_7, %c0_8] : memref<1x256x128xbf16, #tpu.memory_space<vmem>>, vector<1x256x128xbf16>
    %10 = vector.shape_cast %9 : vector<1x256x128xbf16> to vector<256x128xbf16>
    %11 = arith.extf %10 : vector<256x128xbf16> to vector<256x128xf32>
    %c0_9 = arith.constant 0 : index
    %c0_10 = arith.constant 0 : index
    %12 = vector.load %arg5[%c0_9, %c0_10] : memref<1x128xf32, #tpu.memory_space<vmem>>, vector<1x128xf32>
    %13 = vector.broadcast %12 : vector<1x128xf32> to vector<256x128xf32>
    %14 = arith.mulf %11, %13 : vector<256x128xf32>
    %15 = arith.addf %8, %14 : vector<256x128xf32>
    %c0_11 = arith.constant 0 : index
    %c0_12 = arith.constant 0 : index
    %16 = vector.load %arg6[%c0_11, %c0_12] : memref<1x128xf32, #tpu.memory_space<vmem>>, vector<1x128xf32>
    %17 = vector.broadcast %16 : vector<1x128xf32> to vector<256x128xf32>
    %18 = arith.addf %15, %17 : vector<256x128xf32>
    %cst = arith.constant 0.000000e+00 : f32
    %19 = vector.broadcast %cst : f32 to vector<256x128xf32>
    %20 = arith.cmpf oge, %18, %19 : vector<256x128xf32>
    %cst_13 = arith.constant 1.000000e-01 : f32
    %21 = vector.broadcast %cst_13 : f32 to vector<256x128xf32>
    %22 = arith.mulf %21, %18 : vector<256x128xf32>
    %23 = arith.select %20, %18, %22 : vector<256x128xi1>, vector<256x128xf32>
    %c0_14 = arith.constant 0 : index
    %c0_15 = arith.constant 0 : index
    %24 = vector.load %arg8[%c0_14, %c0_15] : memref<256x128xf32, #tpu.memory_space<vmem>>, vector<256x128xf32>
    tpu.vector_store %arg8[%c0_14, %c0_15], %23 {strides = array<i32>} : memref<256x128xf32, #tpu.memory_space<vmem>>, vector<256x128xf32>,
    %c0_16 = arith.constant 0 : index
    %c0_17 = arith.constant 0 : index
    %25 = tpu.strided_load %arg8[%c0_16, %c0_17] {strides = array<i32: 2, 1>} : memref<256x128xf32, #tpu.memory_space<vmem>>, vector<128x128xf32>
    %c1 = arith.constant 1 : index
    %c0_18 = arith.constant 0 : index
    %26 = tpu.strided_load %arg8[%c1, %c0_18] {strides = array<i32: 2, 1>} : memref<256x128xf32, #tpu.memory_space<vmem>>, vector<128x128xf32>
    %27 = arith.maximumf %25, %26 : vector<128x128xf32>
    %c0_19 = arith.constant 0 : index
    %c0_20 = arith.constant 0 : index
    %28 = vector.load %arg9[%c0_19, %c0_20] : memref<128x128xf32, #tpu.memory_space<vmem>>, vector<128x128xf32>
    tpu.vector_store %arg9[%c0_19, %c0_20], %27 {strides = array<i32>} : memref<128x128xf32, #tpu.memory_space<vmem>>, vector<128x128xf32>,
    %c0_21 = arith.constant 0 : index
    %c0_22 = arith.constant 0 : index
    %29 = vector.load %arg9[%c0_21, %c0_22] : memref<128x128xf32, #tpu.memory_space<vmem>>, vector<8x128xf32>
    %c8 = arith.constant 8 : index
    %c0_23 = arith.constant 0 : index
    %30 = vector.load %arg9[%c8, %c0_23] : memref<128x128xf32, #tpu.memory_space<vmem>>, vector<8x128xf32>
    %31 = arith.maximumf %29, %30 : vector<8x128xf32>
    %c0_24 = arith.constant 0 : index
    %c0_25 = arith.constant 0 : index
    %c0_26 = arith.constant 0 : index
    %32 = vector.load %arg7[%c0_24, %c0_25, %c0_26] : memref<1x64x128xf32, #tpu.memory_space<vmem>>, vector<1x8x128xf32>
    %33 = vector.shape_cast %32 : vector<1x8x128xf32> to vector<8x128xf32>
    %34 = vector.shape_cast %31 : vector<8x128xf32> to vector<1x8x128xf32>
    tpu.vector_store %arg7[%c0_24, %c0_25, %c0_26], %34 {strides = array<i32>} : memref<1x64x128xf32, #tpu.memory_space<vmem>>, vector<1x8x128xf32>,
    %c16 = arith.constant 16 : index
    %c0_27 = arith.constant 0 : index
    %35 = vector.load %arg9[%c16, %c0_27] : memref<128x128xf32, #tpu.memory_space<vmem>>, vector<8x128xf32>
    %c24 = arith.constant 24 : index
    %c0_28 = arith.constant 0 : index
    %36 = vector.load %arg9[%c24, %c0_28] : memref<128x128xf32, #tpu.memory_space<vmem>>, vector<8x128xf32>
    %37 = arith.maximumf %35, %36 : vector<8x128xf32>
    %c0_29 = arith.constant 0 : index
    %c8_30 = arith.constant 8 : index
    %c0_31 = arith.constant 0 : index
    %38 = vector.load %arg7[%c0_29, %c8_30, %c0_31] : memref<1x64x128xf32, #tpu.memory_space<vmem>>, vector<1x8x128xf32>
    %39 = vector.shape_cast %38 : vector<1x8x128xf32> to vector<8x128xf32>
    %40 = vector.shape_cast %37 : vector<8x128xf32> to vector<1x8x128xf32>
    tpu.vector_store %arg7[%c0_29, %c8_30, %c0_31], %40 {strides = array<i32>} : memref<1x64x128xf32, #tpu.memory_space<vmem>>, vector<1x8x128xf32>,
    %c32 = arith.constant 32 : index
    %c0_32 = arith.constant 0 : index
    %41 = vector.load %arg9[%c32, %c0_32] : memref<128x128xf32, #tpu.memory_space<vmem>>, vector<8x128xf32>
    %c40 = arith.constant 40 : index
    %c0_33 = arith.constant 0 : index
    %42 = vector.load %arg9[%c40, %c0_33] : memref<128x128xf32, #tpu.memory_space<vmem>>, vector<8x128xf32>
    %43 = arith.maximumf %41, %42 : vector<8x128xf32>
    %c0_34 = arith.constant 0 : index
    %c16_35 = arith.constant 16 : index
    %c0_36 = arith.constant 0 : index
    %44 = vector.load %arg7[%c0_34, %c16_35, %c0_36] : memref<1x64x128xf32, #tpu.memory_space<vmem>>, vector<1x8x128xf32>
    %45 = vector.shape_cast %44 : vector<1x8x128xf32> to vector<8x128xf32>
    %46 = vector.shape_cast %43 : vector<8x128xf32> to vector<1x8x128xf32>
    tpu.vector_store %arg7[%c0_34, %c16_35, %c0_36], %46 {strides = array<i32>} : memref<1x64x128xf32, #tpu.memory_space<vmem>>, vector<1x8x128xf32>,
    %c48 = arith.constant 48 : index
    %c0_37 = arith.constant 0 : index
    %47 = vector.load %arg9[%c48, %c0_37] : memref<128x128xf32, #tpu.memory_space<vmem>>, vector<8x128xf32>
    %c56 = arith.constant 56 : index
    %c0_38 = arith.constant 0 : index
    %48 = vector.load %arg9[%c56, %c0_38] : memref<128x128xf32, #tpu.memory_space<vmem>>, vector<8x128xf32>
    %49 = arith.maximumf %47, %48 : vector<8x128xf32>
    %c0_39 = arith.constant 0 : index
    %c24_40 = arith.constant 24 : index
    %c0_41 = arith.constant 0 : index
    %50 = vector.load %arg7[%c0_39, %c24_40, %c0_41] : memref<1x64x128xf32, #tpu.memory_space<vmem>>, vector<1x8x128xf32>
    %51 = vector.shape_cast %50 : vector<1x8x128xf32> to vector<8x128xf32>
    %52 = vector.shape_cast %49 : vector<8x128xf32> to vector<1x8x128xf32>
    tpu.vector_store %arg7[%c0_39, %c24_40, %c0_41], %52 {strides = array<i32>} : memref<1x64x128xf32, #tpu.memory_space<vmem>>, vector<1x8x128xf32>,
    %c64 = arith.constant 64 : index
    %c0_42 = arith.constant 0 : index
    %53 = vector.load %arg9[%c64, %c0_42] : memref<128x128xf32, #tpu.memory_space<vmem>>, vector<8x128xf32>
    %c72 = arith.constant 72 : index
    %c0_43 = arith.constant 0 : index
    %54 = vector.load %arg9[%c72, %c0_43] : memref<128x128xf32, #tpu.memory_space<vmem>>, vector<8x128xf32>
    %55 = arith.maximumf %53, %54 : vector<8x128xf32>
    %c0_44 = arith.constant 0 : index
    %c32_45 = arith.constant 32 : index
    %c0_46 = arith.constant 0 : index
    %56 = vector.load %arg7[%c0_44, %c32_45, %c0_46] : memref<1x64x128xf32, #tpu.memory_space<vmem>>, vector<1x8x128xf32>
    %57 = vector.shape_cast %56 : vector<1x8x128xf32> to vector<8x128xf32>
    %58 = vector.shape_cast %55 : vector<8x128xf32> to vector<1x8x128xf32>
    tpu.vector_store %arg7[%c0_44, %c32_45, %c0_46], %58 {strides = array<i32>} : memref<1x64x128xf32, #tpu.memory_space<vmem>>, vector<1x8x128xf32>,
    %c80 = arith.constant 80 : index
    %c0_47 = arith.constant 0 : index
    %59 = vector.load %arg9[%c80, %c0_47] : memref<128x128xf32, #tpu.memory_space<vmem>>, vector<8x128xf32>
    %c88 = arith.constant 88 : index
    %c0_48 = arith.constant 0 : index
    %60 = vector.load %arg9[%c88, %c0_48] : memref<128x128xf32, #tpu.memory_space<vmem>>, vector<8x128xf32>
    %61 = arith.maximumf %59, %60 : vector<8x128xf32>
    %c0_49 = arith.constant 0 : index
    %c40_50 = arith.constant 40 : index
    %c0_51 = arith.constant 0 : index
    %62 = vector.load %arg7[%c0_49, %c40_50, %c0_51] : memref<1x64x128xf32, #tpu.memory_space<vmem>>, vector<1x8x128xf32>
    %63 = vector.shape_cast %62 : vector<1x8x128xf32> to vector<8x128xf32>
    %64 = vector.shape_cast %61 : vector<8x128xf32> to vector<1x8x128xf32>
    tpu.vector_store %arg7[%c0_49, %c40_50, %c0_51], %64 {strides = array<i32>} : memref<1x64x128xf32, #tpu.memory_space<vmem>>, vector<1x8x128xf32>,
    %c96 = arith.constant 96 : index
    %c0_52 = arith.constant 0 : index
    %65 = vector.load %arg9[%c96, %c0_52] : memref<128x128xf32, #tpu.memory_space<vmem>>, vector<8x128xf32>
    %c104 = arith.constant 104 : index
    %c0_53 = arith.constant 0 : index
    %66 = vector.load %arg9[%c104, %c0_53] : memref<128x128xf32, #tpu.memory_space<vmem>>, vector<8x128xf32>
    %67 = arith.maximumf %65, %66 : vector<8x128xf32>
    %c0_54 = arith.constant 0 : index
    %c48_55 = arith.constant 48 : index
    %c0_56 = arith.constant 0 : index
    %68 = vector.load %arg7[%c0_54, %c48_55, %c0_56] : memref<1x64x128xf32, #tpu.memory_space<vmem>>, vector<1x8x128xf32>
    %69 = vector.shape_cast %68 : vector<1x8x128xf32> to vector<8x128xf32>
    %70 = vector.shape_cast %67 : vector<8x128xf32> to vector<1x8x128xf32>
    tpu.vector_store %arg7[%c0_54, %c48_55, %c0_56], %70 {strides = array<i32>} : memref<1x64x128xf32, #tpu.memory_space<vmem>>, vector<1x8x128xf32>,
    %c112 = arith.constant 112 : index
    %c0_57 = arith.constant 0 : index
    %71 = vector.load %arg9[%c112, %c0_57] : memref<128x128xf32, #tpu.memory_space<vmem>>, vector<8x128xf32>
    %c120 = arith.constant 120 : index
    %c0_58 = arith.constant 0 : index
    %72 = vector.load %arg9[%c120, %c0_58] : memref<128x128xf32, #tpu.memory_space<vmem>>, vector<8x128xf32>
    %73 = arith.maximumf %71, %72 : vector<8x128xf32>
    %c0_59 = arith.constant 0 : index
    %c56_60 = arith.constant 56 : index
    %c0_61 = arith.constant 0 : index
    %74 = vector.load %arg7[%c0_59, %c56_60, %c0_61] : memref<1x64x128xf32, #tpu.memory_space<vmem>>, vector<1x8x128xf32>
    %75 = vector.shape_cast %74 : vector<1x8x128xf32> to vector<8x128xf32>
    %76 = vector.shape_cast %73 : vector<8x128xf32> to vector<1x8x128xf32>
    tpu.vector_store %arg7[%c0_59, %c56_60, %c0_61], %76 {strides = array<i32>} : memref<1x64x128xf32, #tpu.memory_space<vmem>>, vector<1x8x128xf32>,
    return
  }
  func.func @transform_0(%arg0: i32) -> (i32, i32, i32) {
    %c0_i32 = arith.constant 0 : i32
    %c0_i32_0 = arith.constant 0 : i32
    %c0_i32_1 = arith.constant 0 : i32
    return %arg0, %c0_i32, %c0_i32_0 : i32, i32, i32
  }
  func.func @transform_1(%arg0: i32) -> (i32, i32, i32) {
    %c0_i32 = arith.constant 0 : i32
    %c0_i32_0 = arith.constant 0 : i32
    %c0_i32_1 = arith.constant 0 : i32
    return %arg0, %c0_i32, %c0_i32_0 : i32, i32, i32
  }
  func.func @transform_2(%arg0: i32) -> (i32, i32) {
    %c0_i32 = arith.constant 0 : i32
    %c0_i32_0 = arith.constant 0 : i32
    %c0_i32_1 = arith.constant 0 : i32
    return %c0_i32, %c0_i32_0 : i32, i32
  }
  func.func @transform_3(%arg0: i32) -> (i32, i32) {
    %c0_i32 = arith.constant 0 : i32
    %c0_i32_0 = arith.constant 0 : i32
    %c0_i32_1 = arith.constant 0 : i32
    return %c0_i32, %c0_i32_0 : i32, i32
  }
  func.func @transform_4(%arg0: i32) -> (i32, i32) {
    %c0_i32 = arith.constant 0 : i32
    %c0_i32_0 = arith.constant 0 : i32
    %c0_i32_1 = arith.constant 0 : i32
    return %c0_i32, %c0_i32_0 : i32, i32
  }
  func.func @transform_5(%arg0: i32) -> (i32, i32) {
    %c0_i32 = arith.constant 0 : i32
    %c0_i32_0 = arith.constant 0 : i32
    %c0_i32_1 = arith.constant 0 : i32
    return %c0_i32, %c0_i32_0 : i32, i32
  }
  func.func @transform_6(%arg0: i32) -> (i32, i32, i32) {
    %c0_i32 = arith.constant 0 : i32
    %c0_i32_0 = arith.constant 0 : i32
    %c0_i32_1 = arith.constant 0 : i32
    return %arg0, %c0_i32, %c0_i32_0 : i32, i32, i32
  }
}

</mosaic_0001>

<llo_original>
// kernel: block_forward.7
$region0: #{block_forward.7}
  #allocation0 [shape = 'u32[]', space=smem, size = 0x4, offset = 0x4, fixed_abs, tag = 'smem constant byte address 0x4 - core index']
  #allocation1 [shape = 'u32[72,128]{1,0:T(1,128)}', space=vmem, size = 0x9000, scoped, tag = 'internal scratch']
  #allocation2 [shape = 'f32[256,128]{1,0:T(8,128)}', space=vmem, size = 0x20000, scoped, tag = 'scratch operand']
  #allocation3 [shape = 'f32[128,128]{1,0:T(8,128)}', space=vmem, size = 0x10000, scoped, tag = 'scratch operand']
  %s0 = inlined_call_operand.vmem [shape: bf16[2,256,128], index: 0, kind: input, shape index: {}]
  %s1 = inlined_call_operand.vmem [shape: bf16[2,256,128], index: 1, kind: input, shape index: {}]
  %s2 = inlined_call_operand.vmem [shape: f32[1,128], index: 2, kind: input, shape index: {}]
  %s3 = inlined_call_operand.vmem [shape: f32[1,128], index: 3, kind: input, shape index: {}]
  %s4 = inlined_call_operand.vmem [shape: f32[1,128], index: 4, kind: input, shape index: {}]
  %s5 = inlined_call_operand.vmem [shape: f32[1,128], index: 5, kind: input, shape index: {}]
  %s6 = inlined_call_operand.vmem [shape: f32[2,64,128], index: 6, kind: output, shape index: {}]
  %s7 = sld [smem:[#allocation0]]
  $region57: #{block_forward.7} parent=0
    _
  %s9 = ssub.s32 1, %s7
  %s10 = scalar_select 0, %s9, %s7
  loop: start=0, step=1, limit=4
  $region2: #{block_forward.7} parent=0 // loop_pre_header
    _
  $region3: #{block_forward.7} parent=0 // loop_header
    %s12 = sphi 0, %s16
    %p13 = scmp.ge.s32.totalorder %s12, 4
    %s22 = sphi 0, %s24
    %s25 = sphi 0, %s22
    %s26 = sphi 0, %s25
    %s42 = sphi 0, %s26
    %s48 = sphi 0, %s50
    %s51 = sphi 0, %s48
    %s52 = sphi 0, %s51
    %s68 = sphi 0, %s52
    %s72 = sphi 0, %s72
    %s74 = sphi 0, %s72
    %s75 = sphi 0, %s74
    %s89 = sphi 0, %s75
    %s93 = sphi 0, %s93
    %s95 = sphi 0, %s93
    %s96 = sphi 0, %s95
    %s110 = sphi 0, %s96
    %s114 = sphi 0, %s114
    %s116 = sphi 0, %s114
    %s117 = sphi 0, %s116
    %s131 = sphi 0, %s117
    %s135 = sphi 0, %s135
    %s137 = sphi 0, %s135
    %s138 = sphi 0, %s137
    %s152 = sphi 0, %s138
    %s158 = sphi 0, %s160
    %s161 = sphi 0, %s158
    %s162 = sphi 0, %s161
    %s178 = sphi 0, %s162
  $region4: #{block_forward.7} parent=0 // loop_header_branch
    %15 = sbr.rel (%p13) target = $region8
  $region5: #{block_forward.7} parent=0 // loop_body
    %s17 = ssub.s32 %s12, 1
    %s18 = ssub.s32 %s12, 2
    %s19 = sadd.s32 %s12, 1
    %s20 = ssub.s32 %s12, %s19
    %p21 = scmp.eq.s32.totalorder %s20, 0
    %s23 = sadd.s32 %s22, 1
    %s24 = scalar_select %p21, %s22, %s23
    %p27 = pneg %p21
    %p28 = scmp.eq.s32.totalorder %s12, 1
    %p29 = por %p27, %p28
    %p30 = scmp.ne.s32.totalorder %s22, %s25
    %p31 = scmp.eq.s32.totalorder %s12, 0
    %p32 = por %p30, %p31
    %p33 = scmp.ne.s32.totalorder %s22, %s25
    %p34 = scmp.eq.s32.totalorder %s17, 1
    %p35 = por %p33, %p34
    %p36 = scmp.ne.s32.totalorder %s25, %s26
    %p37 = scmp.eq.s32.totalorder %s17, 0
    %p38 = por %p36, %p37
    %p39 = scmp.ne.s32.totalorder %s25, %s26
    %p40 = scmp.eq.s32.totalorder %s18, 1
    %p41 = por %p39, %p40
    %p43 = scmp.ne.s32.totalorder %s26, %s42
    %p44 = scmp.eq.s32.totalorder %s18, 0
    %p45 = por %p43, %p44
    %s46 = ssub.s32 %s12, %s19
    %p47 = scmp.eq.s32.totalorder %s46, 0
    %s49 = sadd.s32 %s48, 1
    %s50 = scalar_select %p47, %s48, %s49
    %p53 = pneg %p47
    %p54 = scmp.eq.s32.totalorder %s12, 1
    %p55 = por %p53, %p54
    %p56 = scmp.ne.s32.totalorder %s48, %s51
    %p57 = scmp.eq.s32.totalorder %s12, 0
    %p58 = por %p56, %p57
    %p59 = scmp.ne.s32.totalorder %s48, %s51
    %p60 = scmp.eq.s32.totalorder %s17, 1
    %p61 = por %p59, %p60
    %p62 = scmp.ne.s32.totalorder %s51, %s52
    %p63 = scmp.eq.s32.totalorder %s17, 0
    %p64 = por %p62, %p63
    %p65 = scmp.ne.s32.totalorder %s51, %s52
    %p66 = scmp.eq.s32.totalorder %s18, 1
    %p67 = por %p65, %p66
    %p69 = scmp.ne.s32.totalorder %s52, %s68
    %p70 = scmp.eq.s32.totalorder %s18, 0
    %p71 = por %p69, %p70
    %s73 = sadd.s32 %s72, 1
    %p76 = scmp.eq.s32.totalorder %s12, 1
    %p77 = scmp.ne.s32.totalorder %s72, %s74
    %p78 = scmp.eq.s32.totalorder %s12, 0
    %p79 = por %p77, %p78
    %p80 = scmp.ne.s32.totalorder %s72, %s74
    %p81 = scmp.eq.s32.totalorder %s17, 1
    %p82 = por %p80, %p81
    %p83 = scmp.ne.s32.totalorder %s74, %s75
    %p84 = scmp.eq.s32.totalorder %s17, 0
    %p85 = por %p83, %p84
    %p86 = scmp.ne.s32.totalorder %s74, %s75
    %p87 = scmp.eq.s32.totalorder %s18, 1
    %p88 = por %p86, %p87
    %p90 = scmp.ne.s32.totalorder %s75, %s89
    %p91 = scmp.eq.s32.totalorder %s18, 0
    %p92 = por %p90, %p91
    %s94 = sadd.s32 %s93, 1
    %p97 = scmp.eq.s32.totalorder %s12, 1
    %p98 = scmp.ne.s32.totalorder %s93, %s95
    %p99 = scmp.eq.s32.totalorder %s12, 0
    %p100 = por %p98, %p99
    %p101 = scmp.ne.s32.totalorder %s93, %s95
    %p102 = scmp.eq.s32.totalorder %s17, 1
    %p103 = por %p101, %p102
    %p104 = scmp.ne.s32.totalorder %s95, %s96
    %p105 = scmp.eq.s32.totalorder %s17, 0
    %p106 = por %p104, %p105
    %p107 = scmp.ne.s32.totalorder %s95, %s96
    %p108 = scmp.eq.s32.totalorder %s18, 1
    %p109 = por %p107, %p108
    %p111 = scmp.ne.s32.totalorder %s96, %s110
    %p112 = scmp.eq.s32.totalorder %s18, 0
    %p113 = por %p111, %p112
    %s115 = sadd.s32 %s114, 1
    %p118 = scmp.eq.s32.totalorder %s12, 1
    %p119 = scmp.ne.s32.totalorder %s114, %s116
    %p120 = scmp.eq.s32.totalorder %s12, 0
    %p121 = por %p119, %p120
    %p122 = scmp.ne.s32.totalorder %s114, %s116
    %p123 = scmp.eq.s32.totalorder %s17, 1
    %p124 = por %p122, %p123
    %p125 = scmp.ne.s32.totalorder %s116, %s117
    %p126 = scmp.eq.s32.totalorder %s17, 0
    %p127 = por %p125, %p126
    %p128 = scmp.ne.s32.totalorder %s116, %s117
    %p129 = scmp.eq.s32.totalorder %s18, 1
    %p130 = por %p128, %p129
    %p132 = scmp.ne.s32.totalorder %s117, %s131
    %p133 = scmp.eq.s32.totalorder %s18, 0
    %p134 = por %p132, %p133
    %s136 = sadd.s32 %s135, 1
    %p139 = scmp.eq.s32.totalorder %s12, 1
    %p140 = scmp.ne.s32.totalorder %s135, %s137
    %p141 = scmp.eq.s32.totalorder %s12, 0
    %p142 = por %p140, %p141
    %p143 = scmp.ne.s32.totalorder %s135, %s137
    %p144 = scmp.eq.s32.totalorder %s17, 1
    %p145 = por %p143, %p144
    %p146 = scmp.ne.s32.totalorder %s137, %s138
    %p147 = scmp.eq.s32.totalorder %s17, 0
    %p148 = por %p146, %p147
    %p149 = scmp.ne.s32.totalorder %s137, %s138
    %p150 = scmp.eq.s32.totalorder %s18, 1
    %p151 = por %p149, %p150
    %p153 = scmp.ne.s32.totalorder %s138, %s152
    %p154 = scmp.eq.s32.totalorder %s18, 0
    %p155 = por %p153, %p154
    %s156 = ssub.s32 %s12, %s19
    %p157 = scmp.eq.s32.totalorder %s156, 0
    %s159 = sadd.s32 %s158, 1
    %s160 = scalar_select %p157, %s158, %s159
    %p163 = pneg %p157
    %p164 = scmp.eq.s32.totalorder %s12, 1
    %p165 = por %p163, %p164
    %p166 = scmp.ne.s32.totalorder %s158, %s161
    %p167 = scmp.eq.s32.totalorder %s12, 0
    %p168 = por %p166, %p167
    %p169 = scmp.ne.s32.totalorder %s158, %s161
    %p170 = scmp.eq.s32.totalorder %s17, 1
    %p171 = por %p169, %p170
    %p172 = scmp.ne.s32.totalorder %s161, %s162
    %p173 = scmp.eq.s32.totalorder %s17, 0
    %p174 = por %p172, %p173
    %p175 = scmp.ne.s32.totalorder %s161, %s162
    %p176 = scmp.eq.s32.totalorder %s18, 1
    %p177 = por %p175, %p176
    %p179 = scmp.ne.s32.totalorder %s162, %s178
    %p180 = scmp.eq.s32.totalorder %s18, 0
    %p181 = por %p179, %p180
    %p182 = scmp.le.s32.totalorder 1, %s12
    %p183 = scmp.lt.s32.totalorder %s12, 3
    %p184 = pnand %p182, %p183
    %p185 = pneg %p184
    // Predicated region
    $region9: #{block_forward.7} parent=5 // pred_check
      _
    $region10: #{block_forward.7} parent=5 // pred_check_branch
      %187 = sbr.rel (%p184) target = $region12
    $region11: #{block_forward.7} parent=5 // pred_region
      %s188 = ssub.s32 %s12, 1
      // Predicated region
      $region13: #{block_forward.7} parent=11 // pred_check
        %p189 = pneg %p85
      $region14: #{block_forward.7} parent=11 // pred_check_branch
        %191 = sbr.rel (%p189) target = $region16
      $region15: #{block_forward.7} parent=11 // pred_region
        _
      $region16: #{block_forward.7} parent=11 // pred_fallthru
        _
      // Predicated region
      $region17: #{block_forward.7} parent=11 // pred_check
        %p192 = pneg %p106
      $region18: #{block_forward.7} parent=11 // pred_check_branch
        %194 = sbr.rel (%p192) target = $region20
      $region19: #{block_forward.7} parent=11 // pred_region
        _
      $region20: #{block_forward.7} parent=11 // pred_fallthru
        _
      // Predicated region
      $region21: #{block_forward.7} parent=11 // pred_check
        %p195 = pneg %p127
      $region22: #{block_forward.7} parent=11 // pred_check_branch
        %197 = sbr.rel (%p195) target = $region24
      $region23: #{block_forward.7} parent=11 // pred_region
        _
      $region24: #{block_forward.7} parent=11 // pred_fallthru
        _
      // Predicated region
      $region25: #{block_forward.7} parent=11 // pred_check
        %p198 = pneg %p148
      $region26: #{block_forward.7} parent=11 // pred_check_branch
        %200 = sbr.rel (%p198) target = $region28
      $region27: #{block_forward.7} parent=11 // pred_region
        _
      $region28: #{block_forward.7} parent=11 // pred_fallthru
        _
    $region12: #{block_forward.7} parent=5 // pred_fallthru
      _
    %p201 = scmp.lt.s32.totalorder %s12, 2
    // Predicated region
    $region29: #{block_forward.7} parent=5 // pred_check
      %p202 = pneg %p201
    $region30: #{block_forward.7} parent=5 // pred_check_branch
      %204 = sbr.rel (%p202) target = $region32
    $region31: #{block_forward.7} parent=5 // pred_region
      // Predicated region
      $region33: #{block_forward.7} parent=31 // pred_check
        %p205 = pneg %p32
      $region34: #{block_forward.7} parent=31 // pred_check_branch
        %207 = sbr.rel (%p205) target = $region36
      $region35: #{block_forward.7} parent=31 // pred_region
        %p208 = scmp.lt.s32.totalorder %s12, 1
        %s209 = scalar_select %p208, %s12, 1
        %s210 = smul.addr %s209, 32
        %s211 = smul.addr %s210, 4
        %s212 = scalar_lea.vmem %s0, %s211
      $region36: #{block_forward.7} parent=31 // pred_fallthru
        _
      // Predicated region
      $region37: #{block_forward.7} parent=31 // pred_check
        %p213 = pneg %p58
      $region38: #{block_forward.7} parent=31 // pred_check_branch
        %215 = sbr.rel (%p213) target = $region40
      $region39: #{block_forward.7} parent=31 // pred_region
        %p216 = scmp.lt.s32.totalorder %s12, 1
        %s217 = scalar_select %p216, %s12, 1
        %s218 = smul.addr %s217, 32
        %s219 = smul.addr %s218, 4
        %s220 = scalar_lea.vmem %s1, %s219
      $region40: #{block_forward.7} parent=31 // pred_fallthru
        _
    $region32: #{block_forward.7} parent=5 // pred_fallthru
      _
    %p221 = scmp.le.s32.totalorder 1, %s12
    %p222 = scmp.lt.s32.totalorder %s12, 3
    %p223 = pnand %p221, %p222
    %p224 = pneg %p223
    // Predicated region
    $region41: #{block_forward.7} parent=5 // pred_check
      _
    $region42: #{block_forward.7} parent=5 // pred_check_branch
      %226 = sbr.rel (%p223) target = $region44
    $region43: #{block_forward.7} parent=5 // pred_region
      %s227 = ssub.s32 %s12, 1
      %p228 = scmp.lt.s32.totalorder %s17, 1
      %s229 = scalar_select %p228, %s17, 1
      %s230 = smul.addr %s229, 32
      %s231 = smul.addr %s230, 4
      %s232 = scalar_lea.vmem %s0, %s231
      %p233 = pneg %p38
      %p234 = pneg %p35
      %p235 = scmp.lt.s32.totalorder %s17, 1
      %s236 = scalar_select %p235, %s17, 1
      %s237 = smul.addr %s236, 32
      %s238 = smul.addr %s237, 4
      %s239 = scalar_lea.vmem %s1, %s238
      %p240 = pneg %p64
      %p241 = pneg %p61
      %p242 = pneg %p85
      %p243 = pneg %p82
      %p244 = pneg %p106
      %p245 = pneg %p103
      %p246 = pneg %p127
      %p247 = pneg %p124
      %p248 = pneg %p148
      %p249 = pneg %p145
      %p250 = pneg %p174
      %p251 = pneg %p171
      %p252 = scmp.lt.s32.totalorder %s17, 1
      %s253 = scalar_select %p252, %s17, 1
      %s254 = smul.addr %s253, 8
      %s255 = smul.addr %s254, 8
      %s256 = scalar_lea.vmem %s6, %s255
      %p257 = scmp.lt.s32.totalorder %s17, 1
      %s258 = scalar_select %p257, %s17, 1
      %s259 = smul.addr %s258, 32
      %s260 = smul.addr %s259, 4
      %s261 = scalar_lea.vmem %s0, %s260
      %p262 = scmp.lt.s32.totalorder %s17, 1
      %s263 = scalar_select %p262, %s17, 1
      %s264 = smul.addr %s263, 32
      %s265 = smul.addr %s264, 4
      %s266 = scalar_lea.vmem %s1, %s265
      %p267 = scmp.lt.s32.totalorder %s17, 1
      %s268 = scalar_select %p267, %s17, 1
      %s269 = smul.addr %s268, 8
      %s270 = smul.addr %s269, 8
      %s271 = scalar_lea.vmem %s6, %s270
      %v272 = vld [vmem:[%s261] sm:$0xf]
      %v273 = vld [vmem:[%s261 + $0x4] sm:$0xf]
      %v274 = vld [vmem:[%s261 + $0x8] sm:$0xf]
      %v275 = vld [vmem:[%s261 + $0xc] sm:$0xf]
      %v276 = vld [vmem:[%s261 + $0x10] sm:$0xf]
      %v277 = vld [vmem:[%s261 + $0x14] sm:$0xf]
      %v278 = vld [vmem:[%s261 + $0x18] sm:$0xf]
      %v279 = vld [vmem:[%s261 + $0x1c] sm:$0xf]
      %v280 = vld [vmem:[%s261 + $0x20] sm:$0xf]
      %v281 = vld [vmem:[%s261 + $0x24] sm:$0xf]
      %v282 = vld [vmem:[%s261 + $0x28] sm:$0xf]
      %v283 = vld [vmem:[%s261 + $0x2c] sm:$0xf]
      %v284 = vld [vmem:[%s261 + $0x30] sm:$0xf]
      %v285 = vld [vmem:[%s261 + $0x34] sm:$0xf]
      %v286 = vld [vmem:[%s261 + $0x38] sm:$0xf]
      %v287 = vld [vmem:[%s261 + $0x3c] sm:$0xf]
      %v288 = vld [vmem:[%s261 + $0x40] sm:$0xf]
      %v289 = vld [vmem:[%s261 + $0x44] sm:$0xf]
      %v290 = vld [vmem:[%s261 + $0x48] sm:$0xf]
      %v291 = vld [vmem:[%s261 + $0x4c] sm:$0xf]
      %v292 = vld [vmem:[%s261 + $0x50] sm:$0xf]
      %v293 = vld [vmem:[%s261 + $0x54] sm:$0xf]
      %v294 = vld [vmem:[%s261 + $0x58] sm:$0xf]
      %v295 = vld [vmem:[%s261 + $0x5c] sm:$0xf]
      %v296 = vld [vmem:[%s261 + $0x60] sm:$0xf]
      %v297 = vld [vmem:[%s261 + $0x64] sm:$0xf]
      %v298 = vld [vmem:[%s261 + $0x68] sm:$0xf]
      %v299 = vld [vmem:[%s261 + $0x6c] sm:$0xf]
      %v300 = vld [vmem:[%s261 + $0x70] sm:$0xf]
      %v301 = vld [vmem:[%s261 + $0x74] sm:$0xf]
      %v302 = vld [vmem:[%s261 + $0x78] sm:$0xf]
      %v303 = vld [vmem:[%s261 + $0x7c] sm:$0xf]
      %v304 = vunpack.c.l.bf16 %v272
      %v305 = vunpack.c.l.bf16 %v273
      %v306 = vunpack.c.l.bf16 %v274
      %v307 = vunpack.c.l.bf16 %v275
      %v308 = vunpack.c.l.bf16 %v276
      %v309 = vunpack.c.l.bf16 %v277
      %v310 = vunpack.c.l.bf16 %v278
      %v311 = vunpack.c.l.bf16 %v279
      %v312 = vunpack.c.l.bf16 %v280
      %v313 = vunpack.c.l.bf16 %v281
      %v314 = vunpack.c.l.bf16 %v282
      %v315 = vunpack.c.l.bf16 %v283
      %v316 = vunpack.c.l.bf16 %v284
      %v317 = vunpack.c.l.bf16 %v285
      %v318 = vunpack.c.l.bf16 %v286
      %v319 = vunpack.c.l.bf16 %v287
      %v320 = vunpack.c.l.bf16 %v288
      %v321 = vunpack.c.l.bf16 %v289
      %v322 = vunpack.c.l.bf16 %v290
      %v323 = vunpack.c.l.bf16 %v291
      %v324 = vunpack.c.l.bf16 %v292
      %v325 = vunpack.c.l.bf16 %v293
      %v326 = vunpack.c.l.bf16 %v294
      %v327 = vunpack.c.l.bf16 %v295
      %v328 = vunpack.c.l.bf16 %v296
      %v329 = vunpack.c.l.bf16 %v297
      %v330 = vunpack.c.l.bf16 %v298
      %v331 = vunpack.c.l.bf16 %v299
      %v332 = vunpack.c.l.bf16 %v300
      %v333 = vunpack.c.l.bf16 %v301
      %v334 = vunpack.c.l.bf16 %v302
      %v335 = vunpack.c.l.bf16 %v303
      %v336 = vld [vmem:[%s2] sm:$0x1]
      %v338 = vperm.slane %v336, 0
      %v340 = vmul.f32 %v304, %v338
      %v341 = vmul.f32 %v305, %v338
      %v342 = vmul.f32 %v306, %v338
      %v343 = vmul.f32 %v307, %v338
      %v344 = vmul.f32 %v308, %v338
      %v345 = vmul.f32 %v309, %v338
      %v346 = vmul.f32 %v310, %v338
      %v347 = vmul.f32 %v311, %v338
      %v348 = vmul.f32 %v312, %v338
      %v349 = vmul.f32 %v313, %v338
      %v350 = vmul.f32 %v314, %v338
      %v351 = vmul.f32 %v315, %v338
      %v352 = vmul.f32 %v316, %v338
      %v353 = vmul.f32 %v317, %v338
      %v354 = vmul.f32 %v318, %v338
      %v355 = vmul.f32 %v319, %v338
      %v356 = vmul.f32 %v320, %v338
      %v357 = vmul.f32 %v321, %v338
      %v358 = vmul.f32 %v322, %v338
      %v359 = vmul.f32 %v323, %v338
      %v360 = vmul.f32 %v324, %v338
      %v361 = vmul.f32 %v325, %v338
      %v362 = vmul.f32 %v326, %v338
      %v363 = vmul.f32 %v327, %v338
      %v364 = vmul.f32 %v328, %v338
      %v365 = vmul.f32 %v329, %v338
      %v366 = vmul.f32 %v330, %v338
      %v367 = vmul.f32 %v331, %v338
      %v368 = vmul.f32 %v332, %v338
      %v369 = vmul.f32 %v333, %v338
      %v370 = vmul.f32 %v334, %v338
      %v371 = vmul.f32 %v335, %v338
      %v372 = vld [vmem:[%s3] sm:$0x1]
      %v374 = vperm.slane %v372, 0
      %v376 = vadd.f32 %v340, %v374
      %v377 = vadd.f32 %v341, %v374
      %v378 = vadd.f32 %v342, %v374
      %v379 = vadd.f32 %v343, %v374
      %v380 = vadd.f32 %v344, %v374
      %v381 = vadd.f32 %v345, %v374
      %v382 = vadd.f32 %v346, %v374
      %v383 = vadd.f32 %v347, %v374
      %v384 = vadd.f32 %v348, %v374
      %v385 = vadd.f32 %v349, %v374
      %v386 = vadd.f32 %v350, %v374
      %v387 = vadd.f32 %v351, %v374
      %v388 = vadd.f32 %v352, %v374
      %v389 = vadd.f32 %v353, %v374
      %v390 = vadd.f32 %v354, %v374
      %v391 = vadd.f32 %v355, %v374
      %v392 = vadd.f32 %v356, %v374
      %v393 = vadd.f32 %v357, %v374
      %v394 = vadd.f32 %v358, %v374
      %v395 = vadd.f32 %v359, %v374
      %v396 = vadd.f32 %v360, %v374
      %v397 = vadd.f32 %v361, %v374
      %v398 = vadd.f32 %v362, %v374
      %v399 = vadd.f32 %v363, %v374
      %v400 = vadd.f32 %v364, %v374
      %v401 = vadd.f32 %v365, %v374
      %v402 = vadd.f32 %v366, %v374
      %v403 = vadd.f32 %v367, %v374
      %v404 = vadd.f32 %v368, %v374
      %v405 = vadd.f32 %v369, %v374
      %v406 = vadd.f32 %v370, %v374
      %v407 = vadd.f32 %v371, %v374
      %v408 = vld [vmem:[%s266] sm:$0xf]
      %v409 = vld [vmem:[%s266 + $0x4] sm:$0xf]
      %v410 = vld [vmem:[%s266 + $0x8] sm:$0xf]
      %v411 = vld [vmem:[%s266 + $0xc] sm:$0xf]
      %v412 = vld [vmem:[%s266 + $0x10] sm:$0xf]
      %v413 = vld [vmem:[%s266 + $0x14] sm:$0xf]
      %v414 = vld [vmem:[%s266 + $0x18] sm:$0xf]
      %v415 = vld [vmem:[%s266 + $0x1c] sm:$0xf]
      %v416 = vld [vmem:[%s266 + $0x20] sm:$0xf]
      %v417 = vld [vmem:[%s266 + $0x24] sm:$0xf]
      %v418 = vld [vmem:[%s266 + $0x28] sm:$0xf]
      %v419 = vld [vmem:[%s266 + $0x2c] sm:$0xf]
      %v420 = vld [vmem:[%s266 + $0x30] sm:$0xf]
      %v421 = vld [vmem:[%s266 + $0x34] sm:$0xf]
      %v422 = vld [vmem:[%s266 + $0x38] sm:$0xf]
      %v423 = vld [vmem:[%s266 + $0x3c] sm:$0xf]
      %v424 = vld [vmem:[%s266 + $0x40] sm:$0xf]
      %v425 = vld [vmem:[%s266 + $0x44] sm:$0xf]
      %v426 = vld [vmem:[%s266 + $0x48] sm:$0xf]
      %v427 = vld [vmem:[%s266 + $0x4c] sm:$0xf]
      %v428 = vld [vmem:[%s266 + $0x50] sm:$0xf]
      %v429 = vld [vmem:[%s266 + $0x54] sm:$0xf]
      %v430 = vld [vmem:[%s266 + $0x58] sm:$0xf]
      %v431 = vld [vmem:[%s266 + $0x5c] sm:$0xf]
      %v432 = vld [vmem:[%s266 + $0x60] sm:$0xf]
      %v433 = vld [vmem:[%s266 + $0x64] sm:$0xf]
      %v434 = vld [vmem:[%s266 + $0x68] sm:$0xf]
      %v435 = vld [vmem:[%s266 + $0x6c] sm:$0xf]
      %v436 = vld [vmem:[%s266 + $0x70] sm:$0xf]
      %v437 = vld [vmem:[%s266 + $0x74] sm:$0xf]
      %v438 = vld [vmem:[%s266 + $0x78] sm:$0xf]
      %v439 = vld [vmem:[%s266 + $0x7c] sm:$0xf]
      %v440 = vunpack.c.l.bf16 %v408
      %v441 = vunpack.c.l.bf16 %v409
      %v442 = vunpack.c.l.bf16 %v410
      %v443 = vunpack.c.l.bf16 %v411
      %v444 = vunpack.c.l.bf16 %v412
      %v445 = vunpack.c.l.bf16 %v413
      %v446 = vunpack.c.l.bf16 %v414
      %v447 = vunpack.c.l.bf16 %v415
      %v448 = vunpack.c.l.bf16 %v416
      %v449 = vunpack.c.l.bf16 %v417
      %v450 = vunpack.c.l.bf16 %v418
      %v451 = vunpack.c.l.bf16 %v419
      %v452 = vunpack.c.l.bf16 %v420
      %v453 = vunpack.c.l.bf16 %v421
      %v454 = vunpack.c.l.bf16 %v422
      %v455 = vunpack.c.l.bf16 %v423
      %v456 = vunpack.c.l.bf16 %v424
      %v457 = vunpack.c.l.bf16 %v425
      %v458 = vunpack.c.l.bf16 %v426
      %v459 = vunpack.c.l.bf16 %v427
      %v460 = vunpack.c.l.bf16 %v428
      %v461 = vunpack.c.l.bf16 %v429
      %v462 = vunpack.c.l.bf16 %v430
      %v463 = vunpack.c.l.bf16 %v431
      %v464 = vunpack.c.l.bf16 %v432
      %v465 = vunpack.c.l.bf16 %v433
      %v466 = vunpack.c.l.bf16 %v434
      %v467 = vunpack.c.l.bf16 %v435
      %v468 = vunpack.c.l.bf16 %v436
      %v469 = vunpack.c.l.bf16 %v437
      %v470 = vunpack.c.l.bf16 %v438
      %v471 = vunpack.c.l.bf16 %v439
      %v472 = vld [vmem:[%s4] sm:$0x1]
      %v474 = vperm.slane %v472, 0
      %v476 = vmul.f32 %v440, %v474
      %v477 = vmul.f32 %v441, %v474
      %v478 = vmul.f32 %v442, %v474
      %v479 = vmul.f32 %v443, %v474
      %v480 = vmul.f32 %v444, %v474
      %v481 = vmul.f32 %v445, %v474
      %v482 = vmul.f32 %v446, %v474
      %v483 = vmul.f32 %v447, %v474
      %v484 = vmul.f32 %v448, %v474
      %v485 = vmul.f32 %v449, %v474
      %v486 = vmul.f32 %v450, %v474
      %v487 = vmul.f32 %v451, %v474
      %v488 = vmul.f32 %v452, %v474
      %v489 = vmul.f32 %v453, %v474
      %v490 = vmul.f32 %v454, %v474
      %v491 = vmul.f32 %v455, %v474
      %v492 = vmul.f32 %v456, %v474
      %v493 = vmul.f32 %v457, %v474
      %v494 = vmul.f32 %v458, %v474
      %v495 = vmul.f32 %v459, %v474
      %v496 = vmul.f32 %v460, %v474
      %v497 = vmul.f32 %v461, %v474
      %v498 = vmul.f32 %v462, %v474
      %v499 = vmul.f32 %v463, %v474
      %v500 = vmul.f32 %v464, %v474
      %v501 = vmul.f32 %v465, %v474
      %v502 = vmul.f32 %v466, %v474
      %v503 = vmul.f32 %v467, %v474
      %v504 = vmul.f32 %v468, %v474
      %v505 = vmul.f32 %v469, %v474
      %v506 = vmul.f32 %v470, %v474
      %v507 = vmul.f32 %v471, %v474
      %v508 = vadd.f32 %v376, %v476
      %v509 = vadd.f32 %v377, %v477
      %v510 = vadd.f32 %v378, %v478
      %v511 = vadd.f32 %v379, %v479
      %v512 = vadd.f32 %v380, %v480
      %v513 = vadd.f32 %v381, %v481
      %v514 = vadd.f32 %v382, %v482
      %v515 = vadd.f32 %v383, %v483
      %v516 = vadd.f32 %v384, %v484
      %v517 = vadd.f32 %v385, %v485
      %v518 = vadd.f32 %v386, %v486
      %v519 = vadd.f32 %v387, %v487
      %v520 = vadd.f32 %v388, %v488
      %v521 = vadd.f32 %v389, %v489
      %v522 = vadd.f32 %v390, %v490
      %v523 = vadd.f32 %v391, %v491
      %v524 = vadd.f32 %v392, %v492
      %v525 = vadd.f32 %v393, %v493
      %v526 = vadd.f32 %v394, %v494
      %v527 = vadd.f32 %v395, %v495
      %v528 = vadd.f32 %v396, %v496
      %v529 = vadd.f32 %v397, %v497
      %v530 = vadd.f32 %v398, %v498
      %v531 = vadd.f32 %v399, %v499
      %v532 = vadd.f32 %v400, %v500
      %v533 = vadd.f32 %v401, %v501
      %v534 = vadd.f32 %v402, %v502
      %v535 = vadd.f32 %v403, %v503
      %v536 = vadd.f32 %v404, %v504
      %v537 = vadd.f32 %v405, %v505
      %v538 = vadd.f32 %v406, %v506
      %v539 = vadd.f32 %v407, %v507
      %v540 = vld [vmem:[%s5] sm:$0x1]
      %v542 = vperm.slane %v540, 0
      %v544 = vadd.f32 %v508, %v542
      %v545 = vadd.f32 %v509, %v542
      %v546 = vadd.f32 %v510, %v542
      %v547 = vadd.f32 %v511, %v542
      %v548 = vadd.f32 %v512, %v542
      %v549 = vadd.f32 %v513, %v542
      %v550 = vadd.f32 %v514, %v542
      %v551 = vadd.f32 %v515, %v542
      %v552 = vadd.f32 %v516, %v542
      %v553 = vadd.f32 %v517, %v542
      %v554 = vadd.f32 %v518, %v542
      %v555 = vadd.f32 %v519, %v542
      %v556 = vadd.f32 %v520, %v542
      %v557 = vadd.f32 %v521, %v542
      %v558 = vadd.f32 %v522, %v542
      %v559 = vadd.f32 %v523, %v542
      %v560 = vadd.f32 %v524, %v542
      %v561 = vadd.f32 %v525, %v542
      %v562 = vadd.f32 %v526, %v542
      %v563 = vadd.f32 %v527, %v542
      %v564 = vadd.f32 %v528, %v542
      %v565 = vadd.f32 %v529, %v542
      %v566 = vadd.f32 %v530, %v542
      %v567 = vadd.f32 %v531, %v542
      %v568 = vadd.f32 %v532, %v542
      %v569 = vadd.f32 %v533, %v542
      %v570 = vadd.f32 %v534, %v542
      %v571 = vadd.f32 %v535, %v542
      %v572 = vadd.f32 %v536, %v542
      %v573 = vadd.f32 %v537, %v542
      %v574 = vadd.f32 %v538, %v542
      %v575 = vadd.f32 %v539, %v542
      %vm576 = vcmp.ge.f32.partialorder %v544, 0.0
      %vm577 = vcmp.ge.f32.partialorder %v545, 0.0
      %vm578 = vcmp.ge.f32.partialorder %v546, 0.0
      %vm579 = vcmp.ge.f32.partialorder %v547, 0.0
      %vm580 = vcmp.ge.f32.partialorder %v548, 0.0
      %vm581 = vcmp.ge.f32.partialorder %v549, 0.0
      %vm582 = vcmp.ge.f32.partialorder %v550, 0.0
      %vm583 = vcmp.ge.f32.partialorder %v551, 0.0
      %vm584 = vcmp.ge.f32.partialorder %v552, 0.0
      %vm585 = vcmp.ge.f32.partialorder %v553, 0.0
      %vm586 = vcmp.ge.f32.partialorder %v554, 0.0
      %vm587 = vcmp.ge.f32.partialorder %v555, 0.0
      %vm588 = vcmp.ge.f32.partialorder %v556, 0.0
      %vm589 = vcmp.ge.f32.partialorder %v557, 0.0
      %vm590 = vcmp.ge.f32.partialorder %v558, 0.0
      %vm591 = vcmp.ge.f32.partialorder %v559, 0.0
      %vm592 = vcmp.ge.f32.partialorder %v560, 0.0
      %vm593 = vcmp.ge.f32.partialorder %v561, 0.0
      %vm594 = vcmp.ge.f32.partialorder %v562, 0.0
      %vm595 = vcmp.ge.f32.partialorder %v563, 0.0
      %vm596 = vcmp.ge.f32.partialorder %v564, 0.0
      %vm597 = vcmp.ge.f32.partialorder %v565, 0.0
      %vm598 = vcmp.ge.f32.partialorder %v566, 0.0
      %vm599 = vcmp.ge.f32.partialorder %v567, 0.0
      %vm600 = vcmp.ge.f32.partialorder %v568, 0.0
      %vm601 = vcmp.ge.f32.partialorder %v569, 0.0
      %vm602 = vcmp.ge.f32.partialorder %v570, 0.0
      %vm603 = vcmp.ge.f32.partialorder %v571, 0.0
      %vm604 = vcmp.ge.f32.partialorder %v572, 0.0
      %vm605 = vcmp.ge.f32.partialorder %v573, 0.0
      %vm606 = vcmp.ge.f32.partialorder %v574, 0.0
      %vm607 = vcmp.ge.f32.partialorder %v575, 0.0
      %v608 = vmul.f32 %v544, 0.1
      %v609 = vmul.f32 %v545, 0.1
      %v610 = vmul.f32 %v546, 0.1
      %v611 = vmul.f32 %v547, 0.1
      %v612 = vmul.f32 %v548, 0.1
      %v613 = vmul.f32 %v549, 0.1
      %v614 = vmul.f32 %v550, 0.1
      %v615 = vmul.f32 %v551, 0.1
      %v616 = vmul.f32 %v552, 0.1
      %v617 = vmul.f32 %v553, 0.1
      %v618 = vmul.f32 %v554, 0.1
      %v619 = vmul.f32 %v555, 0.1
      %v620 = vmul.f32 %v556, 0.1
      %v621 = vmul.f32 %v557, 0.1
      %v622 = vmul.f32 %v558, 0.1
      %v623 = vmul.f32 %v559, 0.1
      %v624 = vmul.f32 %v560, 0.1
      %v625 = vmul.f32 %v561, 0.1
      %v626 = vmul.f32 %v562, 0.1
      %v627 = vmul.f32 %v563, 0.1
      %v628 = vmul.f32 %v564, 0.1
      %v629 = vmul.f32 %v565, 0.1
      %v630 = vmul.f32 %v566, 0.1
      %v631 = vmul.f32 %v567, 0.1
      %v632 = vmul.f32 %v568, 0.1
      %v633 = vmul.f32 %v569, 0.1
      %v634 = vmul.f32 %v570, 0.1
      %v635 = vmul.f32 %v571, 0.1
      %v636 = vmul.f32 %v572, 0.1
      %v637 = vmul.f32 %v573, 0.1
      %v638 = vmul.f32 %v574, 0.1
      %v639 = vmul.f32 %v575, 0.1
      %v640 = vsel %vm576, %v544, %v608
      %v641 = vsel %vm577, %v545, %v609
      %v642 = vsel %vm578, %v546, %v610
      %v643 = vsel %vm579, %v547, %v611
      %v644 = vsel %vm580, %v548, %v612
      %v645 = vsel %vm581, %v549, %v613
      %v646 = vsel %vm582, %v550, %v614
      %v647 = vsel %vm583, %v551, %v615
      %v648 = vsel %vm584, %v552, %v616
      %v649 = vsel %vm585, %v553, %v617
      %v650 = vsel %vm586, %v554, %v618
      %v651 = vsel %vm587, %v555, %v619
      %v652 = vsel %vm588, %v556, %v620
      %v653 = vsel %vm589, %v557, %v621
      %v654 = vsel %vm590, %v558, %v622
      %v655 = vsel %vm591, %v559, %v623
      %v656 = vsel %vm592, %v560, %v624
      %v657 = vsel %vm593, %v561, %v625
      %v658 = vsel %vm594, %v562, %v626
      %v659 = vsel %vm595, %v563, %v627
      %v660 = vsel %vm596, %v564, %v628
      %v661 = vsel %vm597, %v565, %v629
      %v662 = vsel %vm598, %v566, %v630
      %v663 = vsel %vm599, %v567, %v631
      %v664 = vsel %vm600, %v568, %v632
      %v665 = vsel %vm601, %v569, %v633
      %v666 = vsel %vm602, %v570, %v634
      %v667 = vsel %vm603, %v571, %v635
      %v668 = vsel %vm604, %v572, %v636
      %v669 = vsel %vm605, %v573, %v637
      %v670 = vsel %vm606, %v574, %v638
      %v671 = vsel %vm607, %v575, %v639
      %672 = vst [vmem:[#allocation2] sm:$0xff] %v640
      %673 = vst [vmem:[#allocation2 + $0x8] sm:$0xff] %v641
      %674 = vst [vmem:[#allocation2 + $0x10] sm:$0xff] %v642
      %675 = vst [vmem:[#allocation2 + $0x18] sm:$0xff] %v643
      %676 = vst [vmem:[#allocation2 + $0x20] sm:$0xff] %v644
      %677 = vst [vmem:[#allocation2 + $0x28] sm:$0xff] %v645
      %678 = vst [vmem:[#allocation2 + $0x30] sm:$0xff] %v646
      %679 = vst [vmem:[#allocation2 + $0x38] sm:$0xff] %v647
      %680 = vst [vmem:[#allocation2 + $0x40] sm:$0xff] %v648
      %681 = vst [vmem:[#allocation2 + $0x48] sm:$0xff] %v649
      %682 = vst [vmem:[#allocation2 + $0x50] sm:$0xff] %v650
      %683 = vst [vmem:[#allocation2 + $0x58] sm:$0xff] %v651
      %684 = vst [vmem:[#allocation2 + $0x60] sm:$0xff] %v652
      %685 = vst [vmem:[#allocation2 + $0x68] sm:$0xff] %v653
      %686 = vst [vmem:[#allocation2 + $0x70] sm:$0xff] %v654
      %687 = vst [vmem:[#allocation2 + $0x78] sm:$0xff] %v655
      %688 = vst [vmem:[#allocation2 + $0x80] sm:$0xff] %v656
      %689 = vst [vmem:[#allocation2 + $0x88] sm:$0xff] %v657
      %690 = vst [vmem:[#allocation2 + $0x90] sm:$0xff] %v658
      %691 = vst [vmem:[#allocation2 + $0x98] sm:$0xff] %v659
      %692 = vst [vmem:[#allocation2 + $0xa0] sm:$0xff] %v660
      %693 = vst [vmem:[#allocation2 + $0xa8] sm:$0xff] %v661
      %694 = vst [vmem:[#allocation2 + $0xb0] sm:$0xff] %v662
      %695 = vst [vmem:[#allocation2 + $0xb8] sm:$0xff] %v663
      %696 = vst [vmem:[#allocation2 + $0xc0] sm:$0xff] %v664
      %697 = vst [vmem:[#allocation2 + $0xc8] sm:$0xff] %v665
      %698 = vst [vmem:[#allocation2 + $0xd0] sm:$0xff] %v666
      %699 = vst [vmem:[#allocation2 + $0xd8] sm:$0xff] %v667
      %700 = vst [vmem:[#allocation2 + $0xe0] sm:$0xff] %v668
      %701 = vst [vmem:[#allocation2 + $0xe8] sm:$0xff] %v669
      %702 = vst [vmem:[#allocation2 + $0xf0] sm:$0xff] %v670
      %703 = vst [vmem:[#allocation2 + $0xf8] sm:$0xff] %v671
      %v704 = vld [vmem:[#allocation2] ss:$2 sm:$0xff]
      %s705 = scalar_lea.vmem [#allocation2], 16
      %v706 = vld [vmem:[%s705] ss:$2 sm:$0xff]
      %s707 = scalar_lea.vmem [#allocation2], 32
      %v708 = vld [vmem:[%s707] ss:$2 sm:$0xff]
      %s709 = scalar_lea.vmem [#allocation2], 48
      %v710 = vld [vmem:[%s709] ss:$2 sm:$0xff]
      %s711 = scalar_lea.vmem [#allocation2], 64
      %v712 = vld [vmem:[%s711] ss:$2 sm:$0xff]
      %s713 = scalar_lea.vmem [#allocation2], 80
      %v714 = vld [vmem:[%s713] ss:$2 sm:$0xff]
      %s715 = scalar_lea.vmem [#allocation2], 96
      %v716 = vld [vmem:[%s715] ss:$2 sm:$0xff]
      %s717 = scalar_lea.vmem [#allocation2], 112
      %v718 = vld [vmem:[%s717] ss:$2 sm:$0xff]
      %s719 = scalar_lea.vmem [#allocation2], 128
      %v720 = vld [vmem:[%s719] ss:$2 sm:$0xff]
      %s721 = scalar_lea.vmem [#allocation2], 144
      %v722 = vld [vmem:[%s721] ss:$2 sm:$0xff]
      %s723 = scalar_lea.vmem [#allocation2], 160
      %v724 = vld [vmem:[%s723] ss:$2 sm:$0xff]
      %s725 = scalar_lea.vmem [#allocation2], 176
      %v726 = vld [vmem:[%s725] ss:$2 sm:$0xff]
      %s727 = scalar_lea.vmem [#allocation2], 192
      %v728 = vld [vmem:[%s727] ss:$2 sm:$0xff]
      %s729 = scalar_lea.vmem [#allocation2], 208
      %v730 = vld [vmem:[%s729] ss:$2 sm:$0xff]
      %s731 = scalar_lea.vmem [#allocation2], 224
      %v732 = vld [vmem:[%s731] ss:$2 sm:$0xff]
      %s733 = scalar_lea.vmem [#allocation2], 240
      %v734 = vld [vmem:[%s733] ss:$2 sm:$0xff]
      %s735 = scalar_lea.vmem [#allocation2], 1
      %v736 = vld [vmem:[%s735] ss:$2 sm:$0xff]
      %s737 = scalar_lea.vmem [#allocation2], 17
      %v738 = vld [vmem:[%s737] ss:$2 sm:$0xff]
      %s739 = scalar_lea.vmem [#allocation2], 33
      %v740 = vld [vmem:[%s739] ss:$2 sm:$0xff]
      %s741 = scalar_lea.vmem [#allocation2], 49
      %v742 = vld [vmem:[%s741] ss:$2 sm:$0xff]
      %s743 = scalar_lea.vmem [#allocation2], 65
      %v744 = vld [vmem:[%s743] ss:$2 sm:$0xff]
      %s745 = scalar_lea.vmem [#allocation2], 81
      %v746 = vld [vmem:[%s745] ss:$2 sm:$0xff]
      %s747 = scalar_lea.vmem [#allocation2], 97
      %v748 = vld [vmem:[%s747] ss:$2 sm:$0xff]
      %s749 = scalar_lea.vmem [#allocation2], 113
      %v750 = vld [vmem:[%s749] ss:$2 sm:$0xff]
      %s751 = scalar_lea.vmem [#allocation2], 129
      %v752 = vld [vmem:[%s751] ss:$2 sm:$0xff]
      %s753 = scalar_lea.vmem [#allocation2], 145
      %v754 = vld [vmem:[%s753] ss:$2 sm:$0xff]
      %s755 = scalar_lea.vmem [#allocation2], 161
      %v756 = vld [vmem:[%s755] ss:$2 sm:$0xff]
      %s757 = scalar_lea.vmem [#allocation2], 177
      %v758 = vld [vmem:[%s757] ss:$2 sm:$0xff]
      %s759 = scalar_lea.vmem [#allocation2], 193
      %v760 = vld [vmem:[%s759] ss:$2 sm:$0xff]
      %s761 = scalar_lea.vmem [#allocation2], 209
      %v762 = vld [vmem:[%s761] ss:$2 sm:$0xff]
      %s763 = scalar_lea.vmem [#allocation2], 225
      %v764 = vld [vmem:[%s763] ss:$2 sm:$0xff]
      %s765 = scalar_lea.vmem [#allocation2], 241
      %v766 = vld [vmem:[%s765] ss:$2 sm:$0xff]
      %v767 = vmax.f32 %v704, %v736
      %v768 = vmax.f32 %v706, %v738
      %v769 = vmax.f32 %v708, %v740
      %v770 = vmax.f32 %v710, %v742
      %v771 = vmax.f32 %v712, %v744
      %v772 = vmax.f32 %v714, %v746
      %v773 = vmax.f32 %v716, %v748
      %v774 = vmax.f32 %v718, %v750
      %v775 = vmax.f32 %v720, %v752
      %v776 = vmax.f32 %v722, %v754
      %v777 = vmax.f32 %v724, %v756
      %v778 = vmax.f32 %v726, %v758
      %v779 = vmax.f32 %v728, %v760
      %v780 = vmax.f32 %v730, %v762
      %v781 = vmax.f32 %v732, %v764
      %v782 = vmax.f32 %v734, %v766
      %783 = vst [vmem:[#allocation3] sm:$0xff] %v767
      %784 = vst [vmem:[#allocation3 + $0x8] sm:$0xff] %v768
      %785 = vst [vmem:[#allocation3 + $0x10] sm:$0xff] %v769
      %786 = vst [vmem:[#allocation3 + $0x18] sm:$0xff] %v770
      %787 = vst [vmem:[#allocation3 + $0x20] sm:$0xff] %v771
      %788 = vst [vmem:[#allocation3 + $0x28] sm:$0xff] %v772
      %789 = vst [vmem:[#allocation3 + $0x30] sm:$0xff] %v773
      %790 = vst [vmem:[#allocation3 + $0x38] sm:$0xff] %v774
      %791 = vst [vmem:[#allocation3 + $0x40] sm:$0xff] %v775
      %792 = vst [vmem:[#allocation3 + $0x48] sm:$0xff] %v776
      %793 = vst [vmem:[#allocation3 + $0x50] sm:$0xff] %v777
      %794 = vst [vmem:[#allocation3 + $0x58] sm:$0xff] %v778
      %795 = vst [vmem:[#allocation3 + $0x60] sm:$0xff] %v779
      %796 = vst [vmem:[#allocation3 + $0x68] sm:$0xff] %v780
      %797 = vst [vmem:[#allocation3 + $0x70] sm:$0xff] %v781
      %798 = vst [vmem:[#allocation3 + $0x78] sm:$0xff] %v782
      %v799 = vld [vmem:[#allocation3] sm:$0xff]
      %v800 = vld [vmem:[#allocation3 + $0x8] sm:$0xff]
      %v801 = vmax.f32 %v799, %v800
      %802 = vst [vmem:[%s271] sm:$0xff] %v801
      %v803 = vld [vmem:[#allocation3 + $0x10] sm:$0xff]
      %v804 = vld [vmem:[#allocation3 + $0x18] sm:$0xff]
      %v805 = vmax.f32 %v803, %v804
      %806 = vst [vmem:[%s271 + $0x8] sm:$0xff] %v805
      %v807 = vld [vmem:[#allocation3 + $0x20] sm:$0xff]
      %v808 = vld [vmem:[#allocation3 + $0x28] sm:$0xff]
      %v809 = vmax.f32 %v807, %v808
      %810 = vst [vmem:[%s271 + $0x10] sm:$0xff] %v809
      %v811 = vld [vmem:[#allocation3 + $0x30] sm:$0xff]
      %v812 = vld [vmem:[#allocation3 + $0x38] sm:$0xff]
      %v813 = vmax.f32 %v811, %v812
      %814 = vst [vmem:[%s271 + $0x18] sm:$0xff] %v813
      %v815 = vld [vmem:[#allocation3 + $0x40] sm:$0xff]
      %v816 = vld [vmem:[#allocation3 + $0x48] sm:$0xff]
      %v817 = vmax.f32 %v815, %v816
      %818 = vst [vmem:[%s271 + $0x20] sm:$0xff] %v817
      %v819 = vld [vmem:[#allocation3 + $0x50] sm:$0xff]
      %v820 = vld [vmem:[#allocation3 + $0x58] sm:$0xff]
      %v821 = vmax.f32 %v819, %v820
      %822 = vst [vmem:[%s271 + $0x28] sm:$0xff] %v821
      %v823 = vld [vmem:[#allocation3 + $0x60] sm:$0xff]
      %v824 = vld [vmem:[#allocation3 + $0x68] sm:$0xff]
      %v825 = vmax.f32 %v823, %v824
      %826 = vst [vmem:[%s271 + $0x30] sm:$0xff] %v825
      %v827 = vld [vmem:[#allocation3 + $0x70] sm:$0xff]
      %v828 = vld [vmem:[#allocation3 + $0x78] sm:$0xff]
      %v829 = vmax.f32 %v827, %v828
      %830 = vst [vmem:[%s271 + $0x38] sm:$0xff] %v829
      %p831 = scmp.lt.s32.totalorder %s17, 1
      %s832 = scalar_select %p831, %s17, 1
      %s833 = smul.addr %s832, 8
      %s834 = smul.addr %s833, 8
      %s835 = scalar_lea.vmem %s6, %s834
      // Predicated region
      $region45: #{block_forward.7} parent=43 // pred_check
        %p836 = pneg %p171
      $region46: #{block_forward.7} parent=43 // pred_check_branch
        %838 = sbr.rel (%p836) target = $region48
      $region47: #{block_forward.7} parent=43 // pred_region
        _
      $region48: #{block_forward.7} parent=43 // pred_fallthru
        _
    $region44: #{block_forward.7} parent=5 // pred_fallthru
      _
    %p839 = scmp.le.s32.totalorder 2, %s12
    // Predicated region
    $region49: #{block_forward.7} parent=5 // pred_check
      %p840 = pneg %p839
    $region50: #{block_forward.7} parent=5 // pred_check_branch
      %842 = sbr.rel (%p840) target = $region52
    $region51: #{block_forward.7} parent=5 // pred_region
      %s843 = ssub.s32 %s12, 2
      // Predicated region
      $region53: #{block_forward.7} parent=51 // pred_check
        %p844 = pneg %p177
      $region54: #{block_forward.7} parent=51 // pred_check_branch
        %846 = sbr.rel (%p844) target = $region56
      $region55: #{block_forward.7} parent=51 // pred_region
        %p847 = scmp.lt.s32.totalorder %s18, 1
        %s848 = scalar_select %p847, %s18, 1
        %s849 = smul.addr %s848, 8
        %s850 = smul.addr %s849, 8
        %s851 = scalar_lea.vmem %s6, %s850
      $region56: #{block_forward.7} parent=51 // pred_fallthru
        _
    $region52: #{block_forward.7} parent=5 // pred_fallthru
      _
  $region6: #{block_forward.7} parent=0 // loop_footer
    %s16 = sadd.s32 1, %s12
  $region7: #{block_forward.7} parent=0 // loop_footer_branch
    %11 = sbr.rel target = $region3
  $region8: #{block_forward.7} parent=0 // loop_exit
    _

// kernel: block_forward.5
$region0: #{block_forward.5}
  #allocation0 [shape = 'u32[]', space=smem, size = 0x4, offset = 0x4, fixed_abs, tag = 'smem constant byte address 0x4 - core index']
  #allocation1 [shape = 'u32[72,128]{1,0:T(1,128)}', space=vmem, size = 0x9000, scoped, tag = 'internal scratch']
  #allocation2 [shape = 'bf16[288,384]{1,0:T(8,128)(2,1)}', space=vmem, size = 0x36000, scoped, tag = 'scratch operand']
  %s0 = inlined_call_operand.vmem [shape: bf16[2,256,128], index: 0, kind: input, shape index: {}]
  %s1 = inlined_call_operand.vmem [shape: bf16[3,384,128], index: 1, kind: input, shape index: {}]
  %s2 = inlined_call_operand.vmem [shape: f32[1,128], index: 2, kind: input, shape index: {}]
  %s3 = inlined_call_operand.vmem [shape: f32[1,128], index: 3, kind: input, shape index: {}]
  %s4 = inlined_call_operand.vmem [shape: bf16[2,256,128], index: 4, kind: output, shape index: {0}]
  %s5 = inlined_call_operand.vmem [shape: f32[2,1,128], index: 5, kind: output, shape index: {1}]
  %s6 = inlined_call_operand.vmem [shape: f32[2,1,128], index: 6, kind: output, shape index: {2}]
  %7 = xla_tuple %s4, %s5, %s6
  %s8 = sld [smem:[#allocation0]]
  $region65: #{block_forward.5} parent=0
    _
  %s10 = ssub.s32 1, %s8
  %s11 = scalar_select 0, %s10, %s8
  loop: start=0, step=1, limit=4
  $region2: #{block_forward.5} parent=0 // loop_pre_header
    _
  $region3: #{block_forward.5} parent=0 // loop_header
    %s13 = sphi 0, %s17
    %p14 = scmp.ge.s32.totalorder %s13, 4
    %s23 = sphi 0, %s25
    %s26 = sphi 0, %s23
    %s27 = sphi 0, %s26
    %s43 = sphi 0, %s27
    %s47 = sphi 0, %s47
    %s49 = sphi 0, %s47
    %s50 = sphi 0, %s49
    %s64 = sphi 0, %s50
    %s68 = sphi 0, %s68
    %s70 = sphi 0, %s68
    %s71 = sphi 0, %s70
    %s85 = sphi 0, %s71
    %s89 = sphi 0, %s89
    %s91 = sphi 0, %s89
    %s92 = sphi 0, %s91
    %s106 = sphi 0, %s92
    %s112 = sphi 0, %s114
    %s115 = sphi 0, %s112
    %s116 = sphi 0, %s115
    %s132 = sphi 0, %s116
    %s138 = sphi 0, %s140
    %s141 = sphi 0, %s138
    %s142 = sphi 0, %s141
    %s158 = sphi 0, %s142
    %s164 = sphi 0, %s166
    %s167 = sphi 0, %s164
    %s168 = sphi 0, %s167
    %s184 = sphi 0, %s168
  $region4: #{block_forward.5} parent=0 // loop_header_branch
    %16 = sbr.rel (%p14) target = $region8
  $region5: #{block_forward.5} parent=0 // loop_body
    %s18 = ssub.s32 %s13, 1
    %s19 = ssub.s32 %s13, 2
    %s20 = sadd.s32 %s13, 1
    %s21 = ssub.s32 %s13, %s20
    %p22 = scmp.eq.s32.totalorder %s21, 0
    %s24 = sadd.s32 %s23, 1
    %s25 = scalar_select %p22, %s23, %s24
    %p28 = pneg %p22
    %p29 = scmp.eq.s32.totalorder %s13, 1
    %p30 = por %p28, %p29
    %p31 = scmp.ne.s32.totalorder %s23, %s26
    %p32 = scmp.eq.s32.totalorder %s13, 0
    %p33 = por %p31, %p32
    %p34 = scmp.ne.s32.totalorder %s23, %s26
    %p35 = scmp.eq.s32.totalorder %s18, 1
    %p36 = por %p34, %p35
    %p37 = scmp.ne.s32.totalorder %s26, %s27
    %p38 = scmp.eq.s32.totalorder %s18, 0
    %p39 = por %p37, %p38
    %p40 = scmp.ne.s32.totalorder %s26, %s27
    %p41 = scmp.eq.s32.totalorder %s19, 1
    %p42 = por %p40, %p41
    %p44 = scmp.ne.s32.totalorder %s27, %s43
    %p45 = scmp.eq.s32.totalorder %s19, 0
    %p46 = por %p44, %p45
    %s48 = sadd.s32 %s47, 1
    %p51 = scmp.eq.s32.totalorder %s13, 1
    %p52 = scmp.ne.s32.totalorder %s47, %s49
    %p53 = scmp.eq.s32.totalorder %s13, 0
    %p54 = por %p52, %p53
    %p55 = scmp.ne.s32.totalorder %s47, %s49
    %p56 = scmp.eq.s32.totalorder %s18, 1
    %p57 = por %p55, %p56
    %p58 = scmp.ne.s32.totalorder %s49, %s50
    %p59 = scmp.eq.s32.totalorder %s18, 0
    %p60 = por %p58, %p59
    %p61 = scmp.ne.s32.totalorder %s49, %s50
    %p62 = scmp.eq.s32.totalorder %s19, 1
    %p63 = por %p61, %p62
    %p65 = scmp.ne.s32.totalorder %s50, %s64
    %p66 = scmp.eq.s32.totalorder %s19, 0
    %p67 = por %p65, %p66
    %s69 = sadd.s32 %s68, 1
    %p72 = scmp.eq.s32.totalorder %s13, 1
    %p73 = scmp.ne.s32.totalorder %s68, %s70
    %p74 = scmp.eq.s32.totalorder %s13, 0
    %p75 = por %p73, %p74
    %p76 = scmp.ne.s32.totalorder %s68, %s70
    %p77 = scmp.eq.s32.totalorder %s18, 1
    %p78 = por %p76, %p77
    %p79 = scmp.ne.s32.totalorder %s70, %s71
    %p80 = scmp.eq.s32.totalorder %s18, 0
    %p81 = por %p79, %p80
    %p82 = scmp.ne.s32.totalorder %s70, %s71
    %p83 = scmp.eq.s32.totalorder %s19, 1
    %p84 = por %p82, %p83
    %p86 = scmp.ne.s32.totalorder %s71, %s85
    %p87 = scmp.eq.s32.totalorder %s19, 0
    %p88 = por %p86, %p87
    %s90 = sadd.s32 %s89, 1
    %p93 = scmp.eq.s32.totalorder %s13, 1
    %p94 = scmp.ne.s32.totalorder %s89, %s91
    %p95 = scmp.eq.s32.totalorder %s13, 0
    %p96 = por %p94, %p95
    %p97 = scmp.ne.s32.totalorder %s89, %s91
    %p98 = scmp.eq.s32.totalorder %s18, 1
    %p99 = por %p97, %p98
    %p100 = scmp.ne.s32.totalorder %s91, %s92
    %p101 = scmp.eq.s32.totalorder %s18, 0
    %p102 = por %p100, %p101
    %p103 = scmp.ne.s32.totalorder %s91, %s92
    %p104 = scmp.eq.s32.totalorder %s19, 1
    %p105 = por %p103, %p104
    %p107 = scmp.ne.s32.totalorder %s92, %s106
    %p108 = scmp.eq.s32.totalorder %s19, 0
    %p109 = por %p107, %p108
    %s110 = ssub.s32 %s13, %s20
    %p111 = scmp.eq.s32.totalorder %s110, 0
    %s113 = sadd.s32 %s112, 1
    %s114 = scalar_select %p111, %s112, %s113
    %p117 = pneg %p111
    %p118 = scmp.eq.s32.totalorder %s13, 1
    %p119 = por %p117, %p118
    %p120 = scmp.ne.s32.totalorder %s112, %s115
    %p121 = scmp.eq.s32.totalorder %s13, 0
    %p122 = por %p120, %p121
    %p123 = scmp.ne.s32.totalorder %s112, %s115
    %p124 = scmp.eq.s32.totalorder %s18, 1
    %p125 = por %p123, %p124
    %p126 = scmp.ne.s32.totalorder %s115, %s116
    %p127 = scmp.eq.s32.totalorder %s18, 0
    %p128 = por %p126, %p127
    %p129 = scmp.ne.s32.totalorder %s115, %s116
    %p130 = scmp.eq.s32.totalorder %s19, 1
    %p131 = por %p129, %p130
    %p133 = scmp.ne.s32.totalorder %s116, %s132
    %p134 = scmp.eq.s32.totalorder %s19, 0
    %p135 = por %p133, %p134
    %s136 = ssub.s32 %s13, %s20
    %p137 = scmp.eq.s32.totalorder %s136, 0
    %s139 = sadd.s32 %s138, 1
    %s140 = scalar_select %p137, %s138, %s139
    %p143 = pneg %p137
    %p144 = scmp.eq.s32.totalorder %s13, 1
    %p145 = por %p143, %p144
    %p146 = scmp.ne.s32.totalorder %s138, %s141
    %p147 = scmp.eq.s32.totalorder %s13, 0
    %p148 = por %p146, %p147
    %p149 = scmp.ne.s32.totalorder %s138, %s141
    %p150 = scmp.eq.s32.totalorder %s18, 1
    %p151 = por %p149, %p150
    %p152 = scmp.ne.s32.totalorder %s141, %s142
    %p153 = scmp.eq.s32.totalorder %s18, 0
    %p154 = por %p152, %p153
    %p155 = scmp.ne.s32.totalorder %s141, %s142
    %p156 = scmp.eq.s32.totalorder %s19, 1
    %p157 = por %p155, %p156
    %p159 = scmp.ne.s32.totalorder %s142, %s158
    %p160 = scmp.eq.s32.totalorder %s19, 0
    %p161 = por %p159, %p160
    %s162 = ssub.s32 %s13, %s20
    %p163 = scmp.eq.s32.totalorder %s162, 0
    %s165 = sadd.s32 %s164, 1
    %s166 = scalar_select %p163, %s164, %s165
    %p169 = pneg %p163
    %p170 = scmp.eq.s32.totalorder %s13, 1
    %p171 = por %p169, %p170
    %p172 = scmp.ne.s32.totalorder %s164, %s167
    %p173 = scmp.eq.s32.totalorder %s13, 0
    %p174 = por %p172, %p173
    %p175 = scmp.ne.s32.totalorder %s164, %s167
    %p176 = scmp.eq.s32.totalorder %s18, 1
    %p177 = por %p175, %p176
    %p178 = scmp.ne.s32.totalorder %s167, %s168
    %p179 = scmp.eq.s32.totalorder %s18, 0
    %p180 = por %p178, %p179
    %p181 = scmp.ne.s32.totalorder %s167, %s168
    %p182 = scmp.eq.s32.totalorder %s19, 1
    %p183 = por %p181, %p182
    %p185 = scmp.ne.s32.totalorder %s168, %s184
    %p186 = scmp.eq.s32.totalorder %s19, 0
    %p187 = por %p185, %p186
    %p188 = scmp.le.s32.totalorder 1, %s13
    %p189 = scmp.lt.s32.totalorder %s13, 3
    %p190 = pnand %p188, %p189
    %p191 = pneg %p190
    // Predicated region
    $region9: #{block_forward.5} parent=5 // pred_check
      _
    $region10: #{block_forward.5} parent=5 // pred_check_branch
      %193 = sbr.rel (%p190) target = $region12
    $region11: #{block_forward.5} parent=5 // pred_region
      %s194 = ssub.s32 %s13, 1
      // Predicated region
      $region13: #{block_forward.5} parent=11 // pred_check
        %p195 = pneg %p60
      $region14: #{block_forward.5} parent=11 // pred_check_branch
        %197 = sbr.rel (%p195) target = $region16
      $region15: #{block_forward.5} parent=11 // pred_region
        _
      $region16: #{block_forward.5} parent=11 // pred_fallthru
        _
      // Predicated region
      $region17: #{block_forward.5} parent=11 // pred_check
        %p198 = pneg %p81
      $region18: #{block_forward.5} parent=11 // pred_check_branch
        %200 = sbr.rel (%p198) target = $region20
      $region19: #{block_forward.5} parent=11 // pred_region
        _
      $region20: #{block_forward.5} parent=11 // pred_fallthru
        _
      // Predicated region
      $region21: #{block_forward.5} parent=11 // pred_check
        %p201 = pneg %p102
      $region22: #{block_forward.5} parent=11 // pred_check_branch
        %203 = sbr.rel (%p201) target = $region24
      $region23: #{block_forward.5} parent=11 // pred_region
        _
      $region24: #{block_forward.5} parent=11 // pred_fallthru
        _
    $region12: #{block_forward.5} parent=5 // pred_fallthru
      _
    %p204 = scmp.lt.s32.totalorder %s13, 2
    // Predicated region
    $region25: #{block_forward.5} parent=5 // pred_check
      %p205 = pneg %p204
    $region26: #{block_forward.5} parent=5 // pred_check_branch
      %207 = sbr.rel (%p205) target = $region28
    $region27: #{block_forward.5} parent=5 // pred_region
      // Predicated region
      $region29: #{block_forward.5} parent=27 // pred_check
        %p208 = pneg %p33
      $region30: #{block_forward.5} parent=27 // pred_check_branch
        %210 = sbr.rel (%p208) target = $region32
      $region31: #{block_forward.5} parent=27 // pred_region
        %p211 = scmp.lt.s32.totalorder %s13, 1
        %s212 = scalar_select %p211, %s13, 1
        %s213 = smul.addr %s212, 32
        %s214 = smul.addr %s213, 4
        %s215 = scalar_lea.vmem %s0, %s214
      $region32: #{block_forward.5} parent=27 // pred_fallthru
        _
    $region28: #{block_forward.5} parent=5 // pred_fallthru
      _
    %p216 = scmp.le.s32.totalorder 1, %s13
    %p217 = scmp.lt.s32.totalorder %s13, 3
    %p218 = pnand %p216, %p217
    %p219 = pneg %p218
    // Predicated region
    $region33: #{block_forward.5} parent=5 // pred_check
      _
    $region34: #{block_forward.5} parent=5 // pred_check_branch
      %221 = sbr.rel (%p218) target = $region36
    $region35: #{block_forward.5} parent=5 // pred_region
      %s222 = ssub.s32 %s13, 1
      %p223 = scmp.lt.s32.totalorder %s18, 1
      %s224 = scalar_select %p223, %s18, 1
      %s225 = smul.addr %s224, 32
      %s226 = smul.addr %s225, 4
      %s227 = scalar_lea.vmem %s0, %s226
      %p228 = pneg %p39
      %p229 = pneg %p36
      %p230 = pneg %p60
      %p231 = pneg %p57
      %p232 = pneg %p81
      %p233 = pneg %p78
      %p234 = pneg %p102
      %p235 = pneg %p99
      %p236 = pneg %p128
      %p237 = pneg %p125
      %p238 = scmp.lt.s32.totalorder %s18, 1
      %s239 = scalar_select %p238, %s18, 1
      %s240 = smul.addr %s239, 32
      %s241 = smul.addr %s240, 4
      %s242 = scalar_lea.vmem %s4, %s241
      %p243 = pneg %p154
      %p244 = pneg %p151
      %p245 = scmp.lt.s32.totalorder %s18, 1
      %s246 = scalar_select %p245, %s18, 1
      %s247 = scalar_lea.vmem %s5, %s246
      %p248 = pneg %p180
      %p249 = pneg %p177
      %p250 = scmp.lt.s32.totalorder %s18, 1
      %s251 = scalar_select %p250, %s18, 1
      %s252 = scalar_lea.vmem %s6, %s251
      %p253 = scmp.lt.s32.totalorder %s18, 1
      %s254 = scalar_select %p253, %s18, 1
      %s255 = smul.addr %s254, 32
      %s256 = smul.addr %s255, 4
      %s257 = scalar_lea.vmem %s0, %s256
      %p258 = scmp.lt.s32.totalorder %s18, 1
      %s259 = scalar_select %p258, %s18, 1
      %s260 = smul.addr %s259, 32
      %s261 = smul.addr %s260, 4
      %s262 = scalar_lea.vmem %s4, %s261
      %p263 = scmp.lt.s32.totalorder %s18, 1
      %s264 = scalar_select %p263, %s18, 1
      %s265 = scalar_lea.vmem %s5, %s264
      %p266 = scmp.lt.s32.totalorder %s18, 1
      %s267 = scalar_select %p266, %s18, 1
      %s268 = scalar_lea.vmem %s6, %s267
      %v270 = vld [vmem:[%s257] sm:$0xf]
      %v271 = vld [vmem:[%s257 + $0x4] sm:$0xf]
      %v272 = vld [vmem:[%s257 + $0x8] sm:$0xf]
      %v273 = vld [vmem:[%s257 + $0xc] sm:$0xf]
      %v274 = vld [vmem:[%s257 + $0x10] sm:$0xf]
      %v275 = vld [vmem:[%s257 + $0x14] sm:$0xf]
      %v276 = vld [vmem:[%s257 + $0x18] sm:$0xf]
      %v277 = vld [vmem:[%s257 + $0x1c] sm:$0xf]
      %v278 = vld [vmem:[%s257 + $0x20] sm:$0xf]
      %v279 = vld [vmem:[%s257 + $0x24] sm:$0xf]
      %v280 = vld [vmem:[%s257 + $0x28] sm:$0xf]
      %v281 = vld [vmem:[%s257 + $0x2c] sm:$0xf]
      %v282 = vld [vmem:[%s257 + $0x30] sm:$0xf]
      %v283 = vld [vmem:[%s257 + $0x34] sm:$0xf]
      %v284 = vld [vmem:[%s257 + $0x38] sm:$0xf]
      %v285 = vld [vmem:[%s257 + $0x3c] sm:$0xf]
      %v286 = vld [vmem:[%s257 + $0x40] sm:$0xf]
      %v287 = vld [vmem:[%s257 + $0x44] sm:$0xf]
      %v288 = vld [vmem:[%s257 + $0x48] sm:$0xf]
      %v289 = vld [vmem:[%s257 + $0x4c] sm:$0xf]
      %v290 = vld [vmem:[%s257 + $0x50] sm:$0xf]
      %v291 = vld [vmem:[%s257 + $0x54] sm:$0xf]
      %v292 = vld [vmem:[%s257 + $0x58] sm:$0xf]
      %v293 = vld [vmem:[%s257 + $0x5c] sm:$0xf]
      %v294 = vld [vmem:[%s257 + $0x60] sm:$0xf]
      %v295 = vld [vmem:[%s257 + $0x64] sm:$0xf]
      %v296 = vld [vmem:[%s257 + $0x68] sm:$0xf]
      %v297 = vld [vmem:[%s257 + $0x6c] sm:$0xf]
      %v298 = vld [vmem:[%s257 + $0x70] sm:$0xf]
      %v299 = vld [vmem:[%s257 + $0x74] sm:$0xf]
      %v300 = vld [vmem:[%s257 + $0x78] sm:$0xf]
      %v301 = vld [vmem:[%s257 + $0x7c] sm:$0xf]
      %v302 = vunpack.c.l.bf16 %v270
      %v303 = vunpack.c.l.bf16 %v271
      %v304 = vunpack.c.l.bf16 %v272
      %v305 = vunpack.c.l.bf16 %v273
      %v306 = vunpack.c.l.bf16 %v274
      %v307 = vunpack.c.l.bf16 %v275
      %v308 = vunpack.c.l.bf16 %v276
      %v309 = vunpack.c.l.bf16 %v277
      %v310 = vunpack.c.l.bf16 %v278
      %v311 = vunpack.c.l.bf16 %v279
      %v312 = vunpack.c.l.bf16 %v280
      %v313 = vunpack.c.l.bf16 %v281
      %v314 = vunpack.c.l.bf16 %v282
      %v315 = vunpack.c.l.bf16 %v283
      %v316 = vunpack.c.l.bf16 %v284
      %v317 = vunpack.c.l.bf16 %v285
      %v318 = vunpack.c.l.bf16 %v286
      %v319 = vunpack.c.l.bf16 %v287
      %v320 = vunpack.c.l.bf16 %v288
      %v321 = vunpack.c.l.bf16 %v289
      %v322 = vunpack.c.l.bf16 %v290
      %v323 = vunpack.c.l.bf16 %v291
      %v324 = vunpack.c.l.bf16 %v292
      %v325 = vunpack.c.l.bf16 %v293
      %v326 = vunpack.c.l.bf16 %v294
      %v327 = vunpack.c.l.bf16 %v295
      %v328 = vunpack.c.l.bf16 %v296
      %v329 = vunpack.c.l.bf16 %v297
      %v330 = vunpack.c.l.bf16 %v298
      %v331 = vunpack.c.l.bf16 %v299
      %v332 = vunpack.c.l.bf16 %v300
      %v333 = vunpack.c.l.bf16 %v301
      %v334 = vld [vmem:[%s2] sm:$0x1]
      %v336 = vperm.slane %v334, 0
      %v338 = vmul.f32 %v302, %v336
      %v339 = vmul.f32 %v303, %v336
      %v340 = vmul.f32 %v304, %v336
      %v341 = vmul.f32 %v305, %v336
      %v342 = vmul.f32 %v306, %v336
      %v343 = vmul.f32 %v307, %v336
      %v344 = vmul.f32 %v308, %v336
      %v345 = vmul.f32 %v309, %v336
      %v346 = vmul.f32 %v310, %v336
      %v347 = vmul.f32 %v311, %v336
      %v348 = vmul.f32 %v312, %v336
      %v349 = vmul.f32 %v313, %v336
      %v350 = vmul.f32 %v314, %v336
      %v351 = vmul.f32 %v315, %v336
      %v352 = vmul.f32 %v316, %v336
      %v353 = vmul.f32 %v317, %v336
      %v354 = vmul.f32 %v318, %v336
      %v355 = vmul.f32 %v319, %v336
      %v356 = vmul.f32 %v320, %v336
      %v357 = vmul.f32 %v321, %v336
      %v358 = vmul.f32 %v322, %v336
      %v359 = vmul.f32 %v323, %v336
      %v360 = vmul.f32 %v324, %v336
      %v361 = vmul.f32 %v325, %v336
      %v362 = vmul.f32 %v326, %v336
      %v363 = vmul.f32 %v327, %v336
      %v364 = vmul.f32 %v328, %v336
      %v365 = vmul.f32 %v329, %v336
      %v366 = vmul.f32 %v330, %v336
      %v367 = vmul.f32 %v331, %v336
      %v368 = vmul.f32 %v332, %v336
      %v369 = vmul.f32 %v333, %v336
      %v370 = vld [vmem:[%s3] sm:$0x1]
      %v372 = vperm.slane %v370, 0
      %v374 = vadd.f32 %v338, %v372
      %v375 = vadd.f32 %v339, %v372
      %v376 = vadd.f32 %v340, %v372
      %v377 = vadd.f32 %v341, %v372
      %v378 = vadd.f32 %v342, %v372
      %v379 = vadd.f32 %v343, %v372
      %v380 = vadd.f32 %v344, %v372
      %v381 = vadd.f32 %v345, %v372
      %v382 = vadd.f32 %v346, %v372
      %v383 = vadd.f32 %v347, %v372
      %v384 = vadd.f32 %v348, %v372
      %v385 = vadd.f32 %v349, %v372
      %v386 = vadd.f32 %v350, %v372
      %v387 = vadd.f32 %v351, %v372
      %v388 = vadd.f32 %v352, %v372
      %v389 = vadd.f32 %v353, %v372
      %v390 = vadd.f32 %v354, %v372
      %v391 = vadd.f32 %v355, %v372
      %v392 = vadd.f32 %v356, %v372
      %v393 = vadd.f32 %v357, %v372
      %v394 = vadd.f32 %v358, %v372
      %v395 = vadd.f32 %v359, %v372
      %v396 = vadd.f32 %v360, %v372
      %v397 = vadd.f32 %v361, %v372
      %v398 = vadd.f32 %v362, %v372
      %v399 = vadd.f32 %v363, %v372
      %v400 = vadd.f32 %v364, %v372
      %v401 = vadd.f32 %v365, %v372
      %v402 = vadd.f32 %v366, %v372
      %v403 = vadd.f32 %v367, %v372
      %v404 = vadd.f32 %v368, %v372
      %v405 = vadd.f32 %v369, %v372
      %vm406 = vcmp.ge.f32.partialorder %v374, 0.0
      %vm407 = vcmp.ge.f32.partialorder %v375, 0.0
      %vm408 = vcmp.ge.f32.partialorder %v376, 0.0
      %vm409 = vcmp.ge.f32.partialorder %v377, 0.0
      %vm410 = vcmp.ge.f32.partialorder %v378, 0.0
      %vm411 = vcmp.ge.f32.partialorder %v379, 0.0
      %vm412 = vcmp.ge.f32.partialorder %v380, 0.0
      %vm413 = vcmp.ge.f32.partialorder %v381, 0.0
      %vm414 = vcmp.ge.f32.partialorder %v382, 0.0
      %vm415 = vcmp.ge.f32.partialorder %v383, 0.0
      %vm416 = vcmp.ge.f32.partialorder %v384, 0.0
      %vm417 = vcmp.ge.f32.partialorder %v385, 0.0
      %vm418 = vcmp.ge.f32.partialorder %v386, 0.0
      %vm419 = vcmp.ge.f32.partialorder %v387, 0.0
      %vm420 = vcmp.ge.f32.partialorder %v388, 0.0
      %vm421 = vcmp.ge.f32.partialorder %v389, 0.0
      %vm422 = vcmp.ge.f32.partialorder %v390, 0.0
      %vm423 = vcmp.ge.f32.partialorder %v391, 0.0
      %vm424 = vcmp.ge.f32.partialorder %v392, 0.0
      %vm425 = vcmp.ge.f32.partialorder %v393, 0.0
      %vm426 = vcmp.ge.f32.partialorder %v394, 0.0
      %vm427 = vcmp.ge.f32.partialorder %v395, 0.0
      %vm428 = vcmp.ge.f32.partialorder %v396, 0.0
      %vm429 = vcmp.ge.f32.partialorder %v397, 0.0
      %vm430 = vcmp.ge.f32.partialorder %v398, 0.0
      %vm431 = vcmp.ge.f32.partialorder %v399, 0.0
      %vm432 = vcmp.ge.f32.partialorder %v400, 0.0
      %vm433 = vcmp.ge.f32.partialorder %v401, 0.0
      %vm434 = vcmp.ge.f32.partialorder %v402, 0.0
      %vm435 = vcmp.ge.f32.partialorder %v403, 0.0
      %vm436 = vcmp.ge.f32.partialorder %v404, 0.0
      %vm437 = vcmp.ge.f32.partialorder %v405, 0.0
      %v438 = vmul.f32 %v374, 0.1
      %v439 = vmul.f32 %v375, 0.1
      %v440 = vmul.f32 %v376, 0.1
      %v441 = vmul.f32 %v377, 0.1
      %v442 = vmul.f32 %v378, 0.1
      %v443 = vmul.f32 %v379, 0.1
      %v444 = vmul.f32 %v380, 0.1
      %v445 = vmul.f32 %v381, 0.1
      %v446 = vmul.f32 %v382, 0.1
      %v447 = vmul.f32 %v383, 0.1
      %v448 = vmul.f32 %v384, 0.1
      %v449 = vmul.f32 %v385, 0.1
      %v450 = vmul.f32 %v386, 0.1
      %v451 = vmul.f32 %v387, 0.1
      %v452 = vmul.f32 %v388, 0.1
      %v453 = vmul.f32 %v389, 0.1
      %v454 = vmul.f32 %v390, 0.1
      %v455 = vmul.f32 %v391, 0.1
      %v456 = vmul.f32 %v392, 0.1
      %v457 = vmul.f32 %v393, 0.1
      %v458 = vmul.f32 %v394, 0.1
      %v459 = vmul.f32 %v395, 0.1
      %v460 = vmul.f32 %v396, 0.1
      %v461 = vmul.f32 %v397, 0.1
      %v462 = vmul.f32 %v398, 0.1
      %v463 = vmul.f32 %v399, 0.1
      %v464 = vmul.f32 %v400, 0.1
      %v465 = vmul.f32 %v401, 0.1
      %v466 = vmul.f32 %v402, 0.1
      %v467 = vmul.f32 %v403, 0.1
      %v468 = vmul.f32 %v404, 0.1
      %v469 = vmul.f32 %v405, 0.1
      %v470 = vsel %vm406, %v374, %v438
      %v471 = vsel %vm407, %v375, %v439
      %v472 = vsel %vm408, %v376, %v440
      %v473 = vsel %vm409, %v377, %v441
      %v474 = vsel %vm410, %v378, %v442
      %v475 = vsel %vm411, %v379, %v443
      %v476 = vsel %vm412, %v380, %v444
      %v477 = vsel %vm413, %v381, %v445
      %v478 = vsel %vm414, %v382, %v446
      %v479 = vsel %vm415, %v383, %v447
      %v480 = vsel %vm416, %v384, %v448
      %v481 = vsel %vm417, %v385, %v449
      %v482 = vsel %vm418, %v386, %v450
      %v483 = vsel %vm419, %v387, %v451
      %v484 = vsel %vm420, %v388, %v452
      %v485 = vsel %vm421, %v389, %v453
      %v486 = vsel %vm422, %v390, %v454
      %v487 = vsel %vm423, %v391, %v455
      %v488 = vsel %vm424, %v392, %v456
      %v489 = vsel %vm425, %v393, %v457
      %v490 = vsel %vm426, %v394, %v458
      %v491 = vsel %vm427, %v395, %v459
      %v492 = vsel %vm428, %v396, %v460
      %v493 = vsel %vm429, %v397, %v461
      %v494 = vsel %vm430, %v398, %v462
      %v495 = vsel %vm431, %v399, %v463
      %v496 = vsel %vm432, %v400, %v464
      %v497 = vsel %vm433, %v401, %v465
      %v498 = vsel %vm434, %v402, %v466
      %v499 = vsel %vm435, %v403, %v467
      %v500 = vsel %vm436, %v404, %v468
      %v501 = vsel %vm437, %v405, %v469
      %v502 = vpack.c.bf16 %v470, %v470
      %v503 = vpack.c.bf16 %v471, %v471
      %v504 = vpack.c.bf16 %v472, %v472
      %v505 = vpack.c.bf16 %v473, %v473
      %v506 = vpack.c.bf16 %v474, %v474
      %v507 = vpack.c.bf16 %v475, %v475
      %v508 = vpack.c.bf16 %v476, %v476
      %v509 = vpack.c.bf16 %v477, %v477
      %v510 = vpack.c.bf16 %v478, %v478
      %v511 = vpack.c.bf16 %v479, %v479
      %v512 = vpack.c.bf16 %v480, %v480
      %v513 = vpack.c.bf16 %v481, %v481
      %v514 = vpack.c.bf16 %v482, %v482
      %v515 = vpack.c.bf16 %v483, %v483
      %v516 = vpack.c.bf16 %v484, %v484
      %v517 = vpack.c.bf16 %v485, %v485
      %v518 = vpack.c.bf16 %v486, %v486
      %v519 = vpack.c.bf16 %v487, %v487
      %v520 = vpack.c.bf16 %v488, %v488
      %v521 = vpack.c.bf16 %v489, %v489
      %v522 = vpack.c.bf16 %v490, %v490
      %v523 = vpack.c.bf16 %v491, %v491
      %v524 = vpack.c.bf16 %v492, %v492
      %v525 = vpack.c.bf16 %v493, %v493
      %v526 = vpack.c.bf16 %v494, %v494
      %v527 = vpack.c.bf16 %v495, %v495
      %v528 = vpack.c.bf16 %v496, %v496
      %v529 = vpack.c.bf16 %v497, %v497
      %v530 = vpack.c.bf16 %v498, %v498
      %v531 = vpack.c.bf16 %v499, %v499
      %v532 = vpack.c.bf16 %v500, %v500
      %v533 = vpack.c.bf16 %v501, %v501
      %534 = vst [vmem:[#allocation2 + $0x1c] sm:$0xf] %v502
      %535 = vst [vmem:[#allocation2 + $0x28] sm:$0xf] %v503
      %536 = vst [vmem:[#allocation2 + $0x34] sm:$0xf] %v504
      %537 = vst [vmem:[#allocation2 + $0x40] sm:$0xf] %v505
      %538 = vst [vmem:[#allocation2 + $0x4c] sm:$0xf] %v506
      %539 = vst [vmem:[#allocation2 + $0x58] sm:$0xf] %v507
      %540 = vst [vmem:[#allocation2 + $0x64] sm:$0xf] %v508
      %541 = vst [vmem:[#allocation2 + $0x70] sm:$0xf] %v509
      %542 = vst [vmem:[#allocation2 + $0x7c] sm:$0xf] %v510
      %543 = vst [vmem:[#allocation2 + $0x88] sm:$0xf] %v511
      %544 = vst [vmem:[#allocation2 + $0x94] sm:$0xf] %v512
      %545 = vst [vmem:[#allocation2 + $0xa0] sm:$0xf] %v513
      %546 = vst [vmem:[#allocation2 + $0xac] sm:$0xf] %v514
      %547 = vst [vmem:[#allocation2 + $0xb8] sm:$0xf] %v515
      %548 = vst [vmem:[#allocation2 + $0xc4] sm:$0xf] %v516
      %549 = vst [vmem:[#allocation2 + $0xd0] sm:$0xf] %v517
      %550 = vst [vmem:[#allocation2 + $0xdc] sm:$0xf] %v518
      %551 = vst [vmem:[#allocation2 + $0xe8] sm:$0xf] %v519
      %552 = vst [vmem:[#allocation2 + $0xf4] sm:$0xf] %v520
      %553 = vst [vmem:[#allocation2 + $0x100] sm:$0xf] %v521
      %554 = vst [vmem:[#allocation2 + $0x10c] sm:$0xf] %v522
      %555 = vst [vmem:[#allocation2 + $0x118] sm:$0xf] %v523
      %556 = vst [vmem:[#allocation2 + $0x124] sm:$0xf] %v524
      %557 = vst [vmem:[#allocation2 + $0x130] sm:$0xf] %v525
      %558 = vst [vmem:[#allocation2 + $0x13c] sm:$0xf] %v526
      %559 = vst [vmem:[#allocation2 + $0x148] sm:$0xf] %v527
      %560 = vst [vmem:[#allocation2 + $0x154] sm:$0xf] %v528
      %561 = vst [vmem:[#allocation2 + $0x160] sm:$0xf] %v529
      %562 = vst [vmem:[#allocation2 + $0x16c] sm:$0xf] %v530
      %563 = vst [vmem:[#allocation2 + $0x178] sm:$0xf] %v531
      %564 = vst [vmem:[#allocation2 + $0x184] sm:$0xf] %v532
      %565 = vst [vmem:[#allocation2 + $0x190] sm:$0xf] %v533
      %vm566 = vsmask.f32 256
      %vm567 = vsmask.f32 4368
      %vm568 = vmor %vm566, %vm567
      %v570 = vshrl.u32 %v502, 16
      %v572 = vrot.slane %v570, 7
      %v573 = vshll.u32 %v502, 16
      %v575 = vor.u32 %v572, %v573
      %v576 = vrot.slane %v572, 4
      %v578 = vshrl.u32 %v503, 16
      %v580 = vrot.slane %v578, 7
      %v581 = vshll.u32 %v503, 16
      %v583 = vor.u32 %v580, %v581
      %v584 = vsel %vm568, %v576, %v583
      %v585 = vrot.slane %v580, 4
      %v587 = vshrl.u32 %v504, 16
      %v589 = vrot.slane %v587, 7
      %v590 = vshll.u32 %v504, 16
      %v592 = vor.u32 %v589, %v590
      %v593 = vsel %vm568, %v585, %v592
      %v594 = vrot.slane %v589, 4
      %v596 = vshrl.u32 %v505, 16
      %v598 = vrot.slane %v596, 7
      %v599 = vshll.u32 %v505, 16
      %v601 = vor.u32 %v598, %v599
      %v602 = vsel %vm568, %v594, %v601
      %v603 = vrot.slane %v598, 4
      %v605 = vshrl.u32 %v506, 16
      %v607 = vrot.slane %v605, 7
      %v608 = vshll.u32 %v506, 16
      %v610 = vor.u32 %v607, %v608
      %v611 = vsel %vm568, %v603, %v610
      %v612 = vrot.slane %v607, 4
      %v614 = vshrl.u32 %v507, 16
      %v616 = vrot.slane %v614, 7
      %v617 = vshll.u32 %v507, 16
      %v619 = vor.u32 %v616, %v617
      %v620 = vsel %vm568, %v612, %v619
      %v621 = vrot.slane %v616, 4
      %v623 = vshrl.u32 %v508, 16
      %v625 = vrot.slane %v623, 7
      %v626 = vshll.u32 %v508, 16
      %v628 = vor.u32 %v625, %v626
      %v629 = vsel %vm568, %v621, %v628
      %v630 = vrot.slane %v625, 4
      %v632 = vshrl.u32 %v509, 16
      %v634 = vrot.slane %v632, 7
      %v635 = vshll.u32 %v509, 16
      %v637 = vor.u32 %v634, %v635
      %v638 = vsel %vm568, %v630, %v637
      %v639 = vrot.slane %v634, 4
      %v641 = vshrl.u32 %v510, 16
      %v643 = vrot.slane %v641, 7
      %v644 = vshll.u32 %v510, 16
      %v646 = vor.u32 %v643, %v644
      %v647 = vsel %vm568, %v639, %v646
      %v648 = vrot.slane %v643, 4
      %v650 = vshrl.u32 %v511, 16
      %v652 = vrot.slane %v650, 7
      %v653 = vshll.u32 %v511, 16
      %v655 = vor.u32 %v652, %v653
      %v656 = vsel %vm568, %v648, %v655
      %v657 = vrot.slane %v652, 4
      %v659 = vshrl.u32 %v512, 16
      %v661 = vrot.slane %v659, 7
      %v662 = vshll.u32 %v512, 16
      %v664 = vor.u32 %v661, %v662
      %v665 = vsel %vm568, %v657, %v664
      %v666 = vrot.slane %v661, 4
      %v668 = vshrl.u32 %v513, 16
      %v670 = vrot.slane %v668, 7
      %v671 = vshll.u32 %v513, 16
      %v673 = vor.u32 %v670, %v671
      %v674 = vsel %vm568, %v666, %v673
      %v675 = vrot.slane %v670, 4
      %v677 = vshrl.u32 %v514, 16
      %v679 = vrot.slane %v677, 7
      %v680 = vshll.u32 %v514, 16
      %v682 = vor.u32 %v679, %v680
      %v683 = vsel %vm568, %v675, %v682
      %v684 = vrot.slane %v679, 4
      %v686 = vshrl.u32 %v515, 16
      %v688 = vrot.slane %v686, 7
      %v689 = vshll.u32 %v515, 16
      %v691 = vor.u32 %v688, %v689
      %v692 = vsel %vm568, %v684, %v691
      %v693 = vrot.slane %v688, 4
      %v695 = vshrl.u32 %v516, 16
      %v697 = vrot.slane %v695, 7
      %v698 = vshll.u32 %v516, 16
      %v700 = vor.u32 %v697, %v698
      %v701 = vsel %vm568, %v693, %v700
      %v702 = vrot.slane %v697, 4
      %v704 = vshrl.u32 %v517, 16
      %v706 = vrot.slane %v704, 7
      %v707 = vshll.u32 %v517, 16
      %v709 = vor.u32 %v706, %v707
      %v710 = vsel %vm568, %v702, %v709
      %v711 = vrot.slane %v706, 4
      %v713 = vshrl.u32 %v518, 16
      %v715 = vrot.slane %v713, 7
      %v716 = vshll.u32 %v518, 16
      %v718 = vor.u32 %v715, %v716
      %v719 = vsel %vm568, %v711, %v718
      %v720 = vrot.slane %v715, 4
      %v722 = vshrl.u32 %v519, 16
      %v724 = vrot.slane %v722, 7
      %v725 = vshll.u32 %v519, 16
      %v727 = vor.u32 %v724, %v725
      %v728 = vsel %vm568, %v720, %v727
      %v729 = vrot.slane %v724, 4
      %v731 = vshrl.u32 %v520, 16
      %v733 = vrot.slane %v731, 7
      %v734 = vshll.u32 %v520, 16
      %v736 = vor.u32 %v733, %v734
      %v737 = vsel %vm568, %v729, %v736
      %v738 = vrot.slane %v733, 4
      %v740 = vshrl.u32 %v521, 16
      %v742 = vrot.slane %v740, 7
      %v743 = vshll.u32 %v521, 16
      %v745 = vor.u32 %v742, %v743
      %v746 = vsel %vm568, %v738, %v745
      %v747 = vrot.slane %v742, 4
      %v749 = vshrl.u32 %v522, 16
      %v751 = vrot.slane %v749, 7
      %v752 = vshll.u32 %v522, 16
      %v754 = vor.u32 %v751, %v752
      %v755 = vsel %vm568, %v747, %v754
      %v756 = vrot.slane %v751, 4
      %v758 = vshrl.u32 %v523, 16
      %v760 = vrot.slane %v758, 7
      %v761 = vshll.u32 %v523, 16
      %v763 = vor.u32 %v760, %v761
      %v764 = vsel %vm568, %v756, %v763
      %v765 = vrot.slane %v760, 4
      %v767 = vshrl.u32 %v524, 16
      %v769 = vrot.slane %v767, 7
      %v770 = vshll.u32 %v524, 16
      %v772 = vor.u32 %v769, %v770
      %v773 = vsel %vm568, %v765, %v772
      %v774 = vrot.slane %v769, 4
      %v776 = vshrl.u32 %v525, 16
      %v778 = vrot.slane %v776, 7
      %v779 = vshll.u32 %v525, 16
      %v781 = vor.u32 %v778, %v779
      %v782 = vsel %vm568, %v774, %v781
      %v783 = vrot.slane %v778, 4
      %v785 = vshrl.u32 %v526, 16
      %v787 = vrot.slane %v785, 7
      %v788 = vshll.u32 %v526, 16
      %v790 = vor.u32 %v787, %v788
      %v791 = vsel %vm568, %v783, %v790
      %v792 = vrot.slane %v787, 4
      %v794 = vshrl.u32 %v527, 16
      %v796 = vrot.slane %v794, 7
      %v797 = vshll.u32 %v527, 16
      %v799 = vor.u32 %v796, %v797
      %v800 = vsel %vm568, %v792, %v799
      %v801 = vrot.slane %v796, 4
      %v803 = vshrl.u32 %v528, 16
      %v805 = vrot.slane %v803, 7
      %v806 = vshll.u32 %v528, 16
      %v808 = vor.u32 %v805, %v806
      %v809 = vsel %vm568, %v801, %v808
      %v810 = vrot.slane %v805, 4
      %v812 = vshrl.u32 %v529, 16
      %v814 = vrot.slane %v812, 7
      %v815 = vshll.u32 %v529, 16
      %v817 = vor.u32 %v814, %v815
      %v818 = vsel %vm568, %v810, %v817
      %v819 = vrot.slane %v814, 4
      %v821 = vshrl.u32 %v530, 16
      %v823 = vrot.slane %v821, 7
      %v824 = vshll.u32 %v530, 16
      %v826 = vor.u32 %v823, %v824
      %v827 = vsel %vm568, %v819, %v826
      %v828 = vrot.slane %v823, 4
      %v830 = vshrl.u32 %v531, 16
      %v832 = vrot.slane %v830, 7
      %v833 = vshll.u32 %v531, 16
      %v835 = vor.u32 %v832, %v833
      %v836 = vsel %vm568, %v828, %v835
      %v837 = vrot.slane %v832, 4
      %v839 = vshrl.u32 %v532, 16
      %v841 = vrot.slane %v839, 7
      %v842 = vshll.u32 %v532, 16
      %v844 = vor.u32 %v841, %v842
      %v845 = vsel %vm568, %v837, %v844
      %v846 = vrot.slane %v841, 4
      %v848 = vshrl.u32 %v533, 16
      %v850 = vrot.slane %v848, 7
      %v851 = vshll.u32 %v533, 16
      %v853 = vor.u32 %v850, %v851
      %v854 = vsel %vm568, %v846, %v853
      %v855 = vrot.slane %v850, 4
      %vm889 = vcmask 1043456
      %vm890 = vsmask.f32 7938
      %vm891 = vmand %vm889, %vm890
      %v892 = vld [vmem:[#allocation2 + $0x18] sm:$0xf]
      %v893 = vsel %vm891, %v575, %v892
      %894 = vst [vmem:[#allocation2 + $0x18] sm:$0xf] %v893
      %895 = vst [vmem:[#allocation2 + $0x24] sm:$0xf] %v584
      %896 = vst [vmem:[#allocation2 + $0x30] sm:$0xf] %v593
      %897 = vst [vmem:[#allocation2 + $0x3c] sm:$0xf] %v602
      %898 = vst [vmem:[#allocation2 + $0x48] sm:$0xf] %v611
      %899 = vst [vmem:[#allocation2 + $0x54] sm:$0xf] %v620
      %900 = vst [vmem:[#allocation2 + $0x60] sm:$0xf] %v629
      %901 = vst [vmem:[#allocation2 + $0x6c] sm:$0xf] %v638
      %902 = vst [vmem:[#allocation2 + $0x78] sm:$0xf] %v647
      %903 = vst [vmem:[#allocation2 + $0x84] sm:$0xf] %v656
      %904 = vst [vmem:[#allocation2 + $0x90] sm:$0xf] %v665
      %905 = vst [vmem:[#allocation2 + $0x9c] sm:$0xf] %v674
      %906 = vst [vmem:[#allocation2 + $0xa8] sm:$0xf] %v683
      %907 = vst [vmem:[#allocation2 + $0xb4] sm:$0xf] %v692
      %908 = vst [vmem:[#allocation2 + $0xc0] sm:$0xf] %v701
      %909 = vst [vmem:[#allocation2 + $0xcc] sm:$0xf] %v710
      %910 = vst [vmem:[#allocation2 + $0xd8] sm:$0xf] %v719
      %911 = vst [vmem:[#allocation2 + $0xe4] sm:$0xf] %v728
      %912 = vst [vmem:[#allocation2 + $0xf0] sm:$0xf] %v737
      %913 = vst [vmem:[#allocation2 + $0xfc] sm:$0xf] %v746
      %914 = vst [vmem:[#allocation2 + $0x108] sm:$0xf] %v755
      %915 = vst [vmem:[#allocation2 + $0x114] sm:$0xf] %v764
      %916 = vst [vmem:[#allocation2 + $0x120] sm:$0xf] %v773
      %917 = vst [vmem:[#allocation2 + $0x12c] sm:$0xf] %v782
      %918 = vst [vmem:[#allocation2 + $0x138] sm:$0xf] %v791
      %919 = vst [vmem:[#allocation2 + $0x144] sm:$0xf] %v800
      %920 = vst [vmem:[#allocation2 + $0x150] sm:$0xf] %v809
      %921 = vst [vmem:[#allocation2 + $0x15c] sm:$0xf] %v818
      %922 = vst [vmem:[#allocation2 + $0x168] sm:$0xf] %v827
      %923 = vst [vmem:[#allocation2 + $0x174] sm:$0xf] %v836
      %924 = vst [vmem:[#allocation2 + $0x180] sm:$0xf] %v845
      %925 = vst [vmem:[#allocation2 + $0x18c] sm:$0xf] %v854
      %vm926 = vcmask 1040384
      %vm927 = vmand %vm926, %vm566
      %v928 = vld [vmem:[#allocation2 + $0x198] sm:$0x1]
      %v929 = vsel %vm927, %v855, %v928
      %930 = vst [vmem:[#allocation2 + $0x198] sm:$0x1] %v929
      %vm931 = vsmask.f32 3328
      %vm932 = vsmask.f32 7440
      %vm933 = vmor %vm931, %vm932
      %v934 = vrot.slane %v573, 5
      %v935 = vrot.slane %v570, 4
      %v936 = vor.u32 %v935, %v934
      %v937 = vrot.slane %v936, 4
      %v938 = vrot.slane %v581, 5
      %v939 = vsel %vm933, %v937, %v938
      %v940 = vrot.slane %v578, 4
      %v941 = vor.u32 %v940, %v938
      %v942 = vrot.slane %v941, 4
      %v943 = vrot.slane %v590, 5
      %v944 = vsel %vm933, %v942, %v943
      %v945 = vrot.slane %v587, 4
      %v946 = vor.u32 %v945, %v943
      %v947 = vrot.slane %v946, 4
      %v948 = vrot.slane %v599, 5
      %v949 = vsel %vm933, %v947, %v948
      %v950 = vrot.slane %v596, 4
      %v951 = vor.u32 %v950, %v948
      %v952 = vrot.slane %v951, 4
      %v953 = vrot.slane %v608, 5
      %v954 = vsel %vm933, %v952, %v953
      %v955 = vrot.slane %v605, 4
      %v956 = vor.u32 %v955, %v953
      %v957 = vrot.slane %v956, 4
      %v958 = vrot.slane %v617, 5
      %v959 = vsel %vm933, %v957, %v958
      %v960 = vrot.slane %v614, 4
      %v961 = vor.u32 %v960, %v958
      %v962 = vrot.slane %v961, 4
      %v963 = vrot.slane %v626, 5
      %v964 = vsel %vm933, %v962, %v963
      %v965 = vrot.slane %v623, 4
      %v966 = vor.u32 %v965, %v963
      %v967 = vrot.slane %v966, 4
      %v968 = vrot.slane %v635, 5
      %v969 = vsel %vm933, %v967, %v968
      %v970 = vrot.slane %v632, 4
      %v971 = vor.u32 %v970, %v968
      %v972 = vrot.slane %v971, 4
      %v973 = vrot.slane %v644, 5
      %v974 = vsel %vm933, %v972, %v973
      %v975 = vrot.slane %v641, 4
      %v976 = vor.u32 %v975, %v973
      %v977 = vrot.slane %v976, 4
      %v978 = vrot.slane %v653, 5
      %v979 = vsel %vm933, %v977, %v978
      %v980 = vrot.slane %v650, 4
      %v981 = vor.u32 %v980, %v978
      %v982 = vrot.slane %v981, 4
      %v983 = vrot.slane %v662, 5
      %v984 = vsel %vm933, %v982, %v983
      %v985 = vrot.slane %v659, 4
      %v986 = vor.u32 %v985, %v983
      %v987 = vrot.slane %v986, 4
      %v988 = vrot.slane %v671, 5
      %v989 = vsel %vm933, %v987, %v988
      %v990 = vrot.slane %v668, 4
      %v991 = vor.u32 %v990, %v988
      %v992 = vrot.slane %v991, 4
      %v993 = vrot.slane %v680, 5
      %v994 = vsel %vm933, %v992, %v993
      %v995 = vrot.slane %v677, 4
      %v996 = vor.u32 %v995, %v993
      %v997 = vrot.slane %v996, 4
      %v998 = vrot.slane %v689, 5
      %v999 = vsel %vm933, %v997, %v998
      %v1000 = vrot.slane %v686, 4
      %v1001 = vor.u32 %v1000, %v998
      %v1002 = vrot.slane %v1001, 4
      %v1003 = vrot.slane %v698, 5
      %v1004 = vsel %vm933, %v1002, %v1003
      %v1005 = vrot.slane %v695, 4
      %v1006 = vor.u32 %v1005, %v1003
      %v1007 = vrot.slane %v1006, 4
      %v1008 = vrot.slane %v707, 5
      %v1009 = vsel %vm933, %v1007, %v1008
      %v1010 = vrot.slane %v704, 4
      %v1011 = vor.u32 %v1010, %v1008
      %v1012 = vrot.slane %v1011, 4
      %v1013 = vrot.slane %v716, 5
      %v1014 = vsel %vm933, %v1012, %v1013
      %v1015 = vrot.slane %v713, 4
      %v1016 = vor.u32 %v1015, %v1013
      %v1017 = vrot.slane %v1016, 4
      %v1018 = vrot.slane %v725, 5
      %v1019 = vsel %vm933, %v1017, %v1018
      %v1020 = vrot.slane %v722, 4
      %v1021 = vor.u32 %v1020, %v1018
      %v1022 = vrot.slane %v1021, 4
      %v1023 = vrot.slane %v734, 5
      %v1024 = vsel %vm933, %v1022, %v1023
      %v1025 = vrot.slane %v731, 4
      %v1026 = vor.u32 %v1025, %v1023
      %v1027 = vrot.slane %v1026, 4
      %v1028 = vrot.slane %v743, 5
      %v1029 = vsel %vm933, %v1027, %v1028
      %v1030 = vrot.slane %v740, 4
      %v1031 = vor.u32 %v1030, %v1028
      %v1032 = vrot.slane %v1031, 4
      %v1033 = vrot.slane %v752, 5
      %v1034 = vsel %vm933, %v1032, %v1033
      %v1035 = vrot.slane %v749, 4
      %v1036 = vor.u32 %v1035, %v1033
      %v1037 = vrot.slane %v1036, 4
      %v1038 = vrot.slane %v761, 5
      %v1039 = vsel %vm933, %v1037, %v1038
      %v1040 = vrot.slane %v758, 4
      %v1041 = vor.u32 %v1040, %v1038
      %v1042 = vrot.slane %v1041, 4
      %v1043 = vrot.slane %v770, 5
      %v1044 = vsel %vm933, %v1042, %v1043
      %v1045 = vrot.slane %v767, 4
      %v1046 = vor.u32 %v1045, %v1043
      %v1047 = vrot.slane %v1046, 4
      %v1048 = vrot.slane %v779, 5
      %v1049 = vsel %vm933, %v1047, %v1048
      %v1050 = vrot.slane %v776, 4
      %v1051 = vor.u32 %v1050, %v1048
      %v1052 = vrot.slane %v1051, 4
      %v1053 = vrot.slane %v788, 5
      %v1054 = vsel %vm933, %v1052, %v1053
      %v1055 = vrot.slane %v785, 4
      %v1056 = vor.u32 %v1055, %v1053
      %v1057 = vrot.slane %v1056, 4
      %v1058 = vrot.slane %v797, 5
      %v1059 = vsel %vm933, %v1057, %v1058
      %v1060 = vrot.slane %v794, 4
      %v1061 = vor.u32 %v1060, %v1058
      %v1062 = vrot.slane %v1061, 4
      %v1063 = vrot.slane %v806, 5
      %v1064 = vsel %vm933, %v1062, %v1063
      %v1065 = vrot.slane %v803, 4
      %v1066 = vor.u32 %v1065, %v1063
      %v1067 = vrot.slane %v1066, 4
      %v1068 = vrot.slane %v815, 5
      %v1069 = vsel %vm933, %v1067, %v1068
      %v1070 = vrot.slane %v812, 4
      %v1071 = vor.u32 %v1070, %v1068
      %v1072 = vrot.slane %v1071, 4
      %v1073 = vrot.slane %v824, 5
      %v1074 = vsel %vm933, %v1072, %v1073
      %v1075 = vrot.slane %v821, 4
      %v1076 = vor.u32 %v1075, %v1073
      %v1077 = vrot.slane %v1076, 4
      %v1078 = vrot.slane %v833, 5
      %v1079 = vsel %vm933, %v1077, %v1078
      %v1080 = vrot.slane %v830, 4
      %v1081 = vor.u32 %v1080, %v1078
      %v1082 = vrot.slane %v1081, 4
      %v1083 = vrot.slane %v842, 5
      %v1084 = vsel %vm933, %v1082, %v1083
      %v1085 = vrot.slane %v839, 4
      %v1086 = vor.u32 %v1085, %v1083
      %v1087 = vrot.slane %v1086, 4
      %v1088 = vrot.slane %v851, 5
      %v1089 = vsel %vm933, %v1087, %v1088
      %v1090 = vrot.slane %v848, 4
      %v1091 = vor.u32 %v1090, %v1088
      %v1092 = vrot.slane %v1091, 4
      %vm1126 = vcmask 1043459
      %vm1127 = vsmask.f32 7950
      %vm1128 = vmand %vm1126, %vm1127
      %v1129 = vld [vmem:[#allocation2 + $0x14] sm:$0x8]
      %v1130 = vsel %vm1128, %v934, %v1129
      %1131 = vst [vmem:[#allocation2 + $0x14] sm:$0x8] %v1130
      %1132 = vst [vmem:[#allocation2 + $0x20] sm:$0xf] %v939
      %1133 = vst [vmem:[#allocation2 + $0x2c] sm:$0xf] %v944
      %1134 = vst [vmem:[#allocation2 + $0x38] sm:$0xf] %v949
      %1135 = vst [vmem:[#allocation2 + $0x44] sm:$0xf] %v954
      %1136 = vst [vmem:[#allocation2 + $0x50] sm:$0xf] %v959
      %1137 = vst [vmem:[#allocation2 + $0x5c] sm:$0xf] %v964
      %1138 = vst [vmem:[#allocation2 + $0x68] sm:$0xf] %v969
      %1139 = vst [vmem:[#allocation2 + $0x74] sm:$0xf] %v974
      %1140 = vst [vmem:[#allocation2 + $0x80] sm:$0xf] %v979
      %1141 = vst [vmem:[#allocation2 + $0x8c] sm:$0xf] %v984
      %1142 = vst [vmem:[#allocation2 + $0x98] sm:$0xf] %v989
      %1143 = vst [vmem:[#allocation2 + $0xa4] sm:$0xf] %v994
      %1144 = vst [vmem:[#allocation2 + $0xb0] sm:$0xf] %v999
      %1145 = vst [vmem:[#allocation2 + $0xbc] sm:$0xf] %v1004
      %1146 = vst [vmem:[#allocation2 + $0xc8] sm:$0xf] %v1009
      %1147 = vst [vmem:[#allocation2 + $0xd4] sm:$0xf] %v1014
      %1148 = vst [vmem:[#allocation2 + $0xe0] sm:$0xf] %v1019
      %1149 = vst [vmem:[#allocation2 + $0xec] sm:$0xf] %v1024
      %1150 = vst [vmem:[#allocation2 + $0xf8] sm:$0xf] %v1029
      %1151 = vst [vmem:[#allocation2 + $0x104] sm:$0xf] %v1034
      %1152 = vst [vmem:[#allocation2 + $0x110] sm:$0xf] %v1039
      %1153 = vst [vmem:[#allocation2 + $0x11c] sm:$0xf] %v1044
      %1154 = vst [vmem:[#allocation2 + $0x128] sm:$0xf] %v1049
      %1155 = vst [vmem:[#allocation2 + $0x134] sm:$0xf] %v1054
      %1156 = vst [vmem:[#allocation2 + $0x140] sm:$0xf] %v1059
      %1157 = vst [vmem:[#allocation2 + $0x14c] sm:$0xf] %v1064
      %1158 = vst [vmem:[#allocation2 + $0x158] sm:$0xf] %v1069
      %1159 = vst [vmem:[#allocation2 + $0x164] sm:$0xf] %v1074
      %1160 = vst [vmem:[#allocation2 + $0x170] sm:$0xf] %v1079
      %1161 = vst [vmem:[#allocation2 + $0x17c] sm:$0xf] %v1084
      %1162 = vst [vmem:[#allocation2 + $0x188] sm:$0xf] %v1089
      %vm1163 = vmand %vm889, %vm931
      %v1164 = vld [vmem:[#allocation2 + $0x194] sm:$0xf]
      %v1165 = vsel %vm1163, %v1092, %v1164
      %1166 = vst [vmem:[#allocation2 + $0x194] sm:$0xf] %v1165
      %1167 = vst [vmem:[#allocation2] sm:$0xff] 0
      %1168 = vst [vmem:[#allocation2 + $0x8] sm:$0xf] 0
      %1169 = vst [vmem:[#allocation2 + $0xc] sm:$0xff] 0
      %1170 = vst [vmem:[#allocation2 + $0x14] sm:$0xf] 0
      %1171 = vst [vmem:[#allocation2 + $0x198] sm:$0xff] 0
      %1172 = vst [vmem:[#allocation2 + $0x1a0] sm:$0xf] 0
      %1173 = vst [vmem:[#allocation2 + $0x1a4] sm:$0xff] 0
      %1174 = vst [vmem:[#allocation2 + $0x1ac] sm:$0xf] 0
      %v1175 = vld [vmem:[#allocation2 + $0x18] sm:$0x1]
      %v1176 = vsel %vm927, 0, %v1175
      %1177 = vst [vmem:[#allocation2 + $0x18] sm:$0x1] %v1176
      %v1178 = vld [vmem:[#allocation2 + $0x2c] sm:$0x8]
      %v1179 = vsel %vm1128, 0, %v1178
      %1180 = vst [vmem:[#allocation2 + $0x2c] sm:$0x8] %v1179
      %v1181 = vld [vmem:[#allocation2 + $0x30] sm:$0x1]
      %v1182 = vsel %vm927, 0, %v1181
      %1183 = vst [vmem:[#allocation2 + $0x30] sm:$0x1] %v1182
      %v1184 = vld [vmem:[#allocation2 + $0x44] sm:$0x8]
      %v1185 = vsel %vm1128, 0, %v1184
      %1186 = vst [vmem:[#allocation2 + $0x44] sm:$0x8] %v1185
      %v1187 = vld [vmem:[#allocation2 + $0x48] sm:$0x1]
      %v1188 = vsel %vm927, 0, %v1187
      %1189 = vst [vmem:[#allocation2 + $0x48] sm:$0x1] %v1188
      %v1190 = vld [vmem:[#allocation2 + $0x5c] sm:$0x8]
      %v1191 = vsel %vm1128, 0, %v1190
      %1192 = vst [vmem:[#allocation2 + $0x5c] sm:$0x8] %v1191
      %v1193 = vld [vmem:[#allocation2 + $0x60] sm:$0x1]
      %v1194 = vsel %vm927, 0, %v1193
      %1195 = vst [vmem:[#allocation2 + $0x60] sm:$0x1] %v1194
      %v1196 = vld [vmem:[#allocation2 + $0x74] sm:$0x8]
      %v1197 = vsel %vm1128, 0, %v1196
      %1198 = vst [vmem:[#allocation2 + $0x74] sm:$0x8] %v1197
      %v1199 = vld [vmem:[#allocation2 + $0x78] sm:$0x1]
      %v1200 = vsel %vm927, 0, %v1199
      %1201 = vst [vmem:[#allocation2 + $0x78] sm:$0x1] %v1200
      %v1202 = vld [vmem:[#allocation2 + $0x8c] sm:$0x8]
      %v1203 = vsel %vm1128, 0, %v1202
      %1204 = vst [vmem:[#allocation2 + $0x8c] sm:$0x8] %v1203
      %v1205 = vld [vmem:[#allocation2 + $0x90] sm:$0x1]
      %v1206 = vsel %vm927, 0, %v1205
      %1207 = vst [vmem:[#allocation2 + $0x90] sm:$0x1] %v1206
      %v1208 = vld [vmem:[#allocation2 + $0xa4] sm:$0x8]
      %v1209 = vsel %vm1128, 0, %v1208
      %1210 = vst [vmem:[#allocation2 + $0xa4] sm:$0x8] %v1209
      %v1211 = vld [vmem:[#allocation2 + $0xa8] sm:$0x1]
      %v1212 = vsel %vm927, 0, %v1211
      %1213 = vst [vmem:[#allocation2 + $0xa8] sm:$0x1] %v1212
      %v1214 = vld [vmem:[#allocation2 + $0xbc] sm:$0x8]
      %v1215 = vsel %vm1128, 0, %v1214
      %1216 = vst [vmem:[#allocation2 + $0xbc] sm:$0x8] %v1215
      %v1217 = vld [vmem:[#allocation2 + $0xc0] sm:$0x1]
      %v1218 = vsel %vm927, 0, %v1217
      %1219 = vst [vmem:[#allocation2 + $0xc0] sm:$0x1] %v1218
      %v1220 = vld [vmem:[#allocation2 + $0xd4] sm:$0x8]
      %v1221 = vsel %vm1128, 0, %v1220
      %1222 = vst [vmem:[#allocation2 + $0xd4] sm:$0x8] %v1221
      %v1223 = vld [vmem:[#allocation2 + $0xd8] sm:$0x1]
      %v1224 = vsel %vm927, 0, %v1223
      %1225 = vst [vmem:[#allocation2 + $0xd8] sm:$0x1] %v1224
      %v1226 = vld [vmem:[#allocation2 + $0xec] sm:$0x8]
      %v1227 = vsel %vm1128, 0, %v1226
      %1228 = vst [vmem:[#allocation2 + $0xec] sm:$0x8] %v1227
      %v1229 = vld [vmem:[#allocation2 + $0xf0] sm:$0x1]
      %v1230 = vsel %vm927, 0, %v1229
      %1231 = vst [vmem:[#allocation2 + $0xf0] sm:$0x1] %v1230
      %v1232 = vld [vmem:[#allocation2 + $0x104] sm:$0x8]
      %v1233 = vsel %vm1128, 0, %v1232
      %1234 = vst [vmem:[#allocation2 + $0x104] sm:$0x8] %v1233
      %v1235 = vld [vmem:[#allocation2 + $0x108] sm:$0x1]
      %v1236 = vsel %vm927, 0, %v1235
      %1237 = vst [vmem:[#allocation2 + $0x108] sm:$0x1] %v1236
      %v1238 = vld [vmem:[#allocation2 + $0x11c] sm:$0x8]
      %v1239 = vsel %vm1128, 0, %v1238
      %1240 = vst [vmem:[#allocation2 + $0x11c] sm:$0x8] %v1239
      %v1241 = vld [vmem:[#allocation2 + $0x120] sm:$0x1]
      %v1242 = vsel %vm927, 0, %v1241
      %1243 = vst [vmem:[#allocation2 + $0x120] sm:$0x1] %v1242
      %v1244 = vld [vmem:[#allocation2 + $0x134] sm:$0x8]
      %v1245 = vsel %vm1128, 0, %v1244
      %1246 = vst [vmem:[#allocation2 + $0x134] sm:$0x8] %v1245
      %v1247 = vld [vmem:[#allocation2 + $0x138] sm:$0x1]
      %v1248 = vsel %vm927, 0, %v1247
      %1249 = vst [vmem:[#allocation2 + $0x138] sm:$0x1] %v1248
      %v1250 = vld [vmem:[#allocation2 + $0x14c] sm:$0x8]
      %v1251 = vsel %vm1128, 0, %v1250
      %1252 = vst [vmem:[#allocation2 + $0x14c] sm:$0x8] %v1251
      %v1253 = vld [vmem:[#allocation2 + $0x150] sm:$0x1]
      %v1254 = vsel %vm927, 0, %v1253
      %1255 = vst [vmem:[#allocation2 + $0x150] sm:$0x1] %v1254
      %v1256 = vld [vmem:[#allocation2 + $0x164] sm:$0x8]
      %v1257 = vsel %vm1128, 0, %v1256
      %1258 = vst [vmem:[#allocation2 + $0x164] sm:$0x8] %v1257
      %v1259 = vld [vmem:[#allocation2 + $0x168] sm:$0x1]
      %v1260 = vsel %vm927, 0, %v1259
      %1261 = vst [vmem:[#allocation2 + $0x168] sm:$0x1] %v1260
      %v1262 = vld [vmem:[#allocation2 + $0x17c] sm:$0x8]
      %v1263 = vsel %vm1128, 0, %v1262
      %1264 = vst [vmem:[#allocation2 + $0x17c] sm:$0x8] %v1263
      %v1265 = vld [vmem:[#allocation2 + $0x180] sm:$0x1]
      %v1266 = vsel %vm927, 0, %v1265
      %1267 = vst [vmem:[#allocation2 + $0x180] sm:$0x1] %v1266
      %v1268 = vld [vmem:[#allocation2 + $0x194] sm:$0x8]
      %v1269 = vsel %vm1128, 0, %v1268
      %1270 = vst [vmem:[#allocation2 + $0x194] sm:$0x8] %v1269
      %v1271 = vld [vmem:[#allocation2] sm:$0xff]
      %v1272 = vld [vmem:[#allocation2 + $0x8] sm:$0xf]
      %v1273 = vld [vmem:[#allocation2 + $0xc] sm:$0xff]
      %v1274 = vld [vmem:[#allocation2 + $0x14] sm:$0xf]
      %v1275 = vld [vmem:[#allocation2 + $0x18] sm:$0xff]
      %v1276 = vld [vmem:[#allocation2 + $0x20] sm:$0xf]
      %v1277 = vld [vmem:[#allocation2 + $0x24] sm:$0xff]
      %v1278 = vld [vmem:[#allocation2 + $0x2c] sm:$0xf]
      %v1279 = vld [vmem:[#allocation2 + $0x30] sm:$0xff]
      %v1280 = vld [vmem:[#allocation2 + $0x38] sm:$0xf]
      %v1281 = vld [vmem:[#allocation2 + $0x3c] sm:$0xff]
      %v1282 = vld [vmem:[#allocation2 + $0x44] sm:$0xf]
      %v1283 = vld [vmem:[#allocation2 + $0x48] sm:$0xff]
      %v1284 = vld [vmem:[#allocation2 + $0x50] sm:$0xf]
      %v1285 = vld [vmem:[#allocation2 + $0x54] sm:$0xff]
      %v1286 = vld [vmem:[#allocation2 + $0x5c] sm:$0xf]
      %v1287 = vld [vmem:[#allocation2 + $0x60] sm:$0xff]
      %v1288 = vld [vmem:[#allocation2 + $0x68] sm:$0xf]
      %v1289 = vld [vmem:[#allocation2 + $0x6c] sm:$0xff]
      %v1290 = vld [vmem:[#allocation2 + $0x74] sm:$0xf]
      %v1291 = vld [vmem:[#allocation2 + $0x78] sm:$0xff]
      %v1292 = vld [vmem:[#allocation2 + $0x80] sm:$0xf]
      %v1293 = vld [vmem:[#allocation2 + $0x84] sm:$0xff]
      %v1294 = vld [vmem:[#allocation2 + $0x8c] sm:$0xf]
      %v1295 = vld [vmem:[#allocation2 + $0x90] sm:$0xff]
      %v1296 = vld [vmem:[#allocation2 + $0x98] sm:$0xf]
      %v1297 = vld [vmem:[#allocation2 + $0x9c] sm:$0xff]
      %v1298 = vld [vmem:[#allocation2 + $0xa4] sm:$0xf]
      %v1299 = vld [vmem:[#allocation2 + $0xa8] sm:$0xff]
      %v1300 = vld [vmem:[#allocation2 + $0xb0] sm:$0xf]
      %v1301 = vld [vmem:[#allocation2 + $0xb4] sm:$0xff]
      %v1302 = vld [vmem:[#allocation2 + $0xbc] sm:$0xf]
      %v1303 = vld [vmem:[#allocation2 + $0xc0] sm:$0xff]
      %v1304 = vld [vmem:[#allocation2 + $0xc8] sm:$0xf]
      %v1305 = vld [vmem:[#allocation2 + $0xcc] sm:$0xff]
      %v1306 = vld [vmem:[#allocation2 + $0xd4] sm:$0xf]
      %v1307 = vld [vmem:[#allocation2 + $0xd8] sm:$0xff]
      %v1308 = vld [vmem:[#allocation2 + $0xe0] sm:$0xf]
      %v1309 = vld [vmem:[#allocation2 + $0xe4] sm:$0xff]
      %v1310 = vld [vmem:[#allocation2 + $0xec] sm:$0xf]
      %v1311 = vld [vmem:[#allocation2 + $0xf0] sm:$0xff]
      %v1312 = vld [vmem:[#allocation2 + $0xf8] sm:$0xf]
      %v1313 = vld [vmem:[#allocation2 + $0xfc] sm:$0xff]
      %v1314 = vld [vmem:[#allocation2 + $0x104] sm:$0xf]
      %v1315 = vld [vmem:[#allocation2 + $0x108] sm:$0xff]
      %v1316 = vld [vmem:[#allocation2 + $0x110] sm:$0xf]
      %v1317 = vld [vmem:[#allocation2 + $0x114] sm:$0xff]
      %v1318 = vld [vmem:[#allocation2 + $0x11c] sm:$0xf]
      %v1319 = vld [vmem:[#allocation2 + $0x120] sm:$0xff]
      %v1320 = vld [vmem:[#allocation2 + $0x128] sm:$0xf]
      %v1321 = vld [vmem:[#allocation2 + $0x12c] sm:$0xff]
      %v1322 = vld [vmem:[#allocation2 + $0x134] sm:$0xf]
      %v1323 = vld [vmem:[#allocation2 + $0x138] sm:$0xff]
      %v1324 = vld [vmem:[#allocation2 + $0x140] sm:$0xf]
      %v1325 = vld [vmem:[#allocation2 + $0x144] sm:$0xff]
      %v1326 = vld [vmem:[#allocation2 + $0x14c] sm:$0xf]
      %v1327 = vld [vmem:[#allocation2 + $0x150] sm:$0xff]
      %v1328 = vld [vmem:[#allocation2 + $0x158] sm:$0xf]
      %v1329 = vld [vmem:[#allocation2 + $0x15c] sm:$0xff]
      %v1330 = vld [vmem:[#allocation2 + $0x164] sm:$0xf]
      %v1331 = vld [vmem:[#allocation2 + $0x168] sm:$0xff]
      %v1332 = vld [vmem:[#allocation2 + $0x170] sm:$0xf]
      %v1333 = vld [vmem:[#allocation2 + $0x174] sm:$0xff]
      %v1334 = vld [vmem:[#allocation2 + $0x17c] sm:$0xf]
      %v1335 = vld [vmem:[%s1] sm:$0xf]
      %v1336 = vld [vmem:[%s1 + $0x4] sm:$0xf]
      %v1337 = vld [vmem:[%s1 + $0x8] sm:$0xf]
      %v1338 = vld [vmem:[%s1 + $0xc] sm:$0xf]
      %v1339 = vld [vmem:[%s1 + $0x10] sm:$0xf]
      %v1340 = vld [vmem:[%s1 + $0x14] sm:$0xf]
      %v1341 = vld [vmem:[%s1 + $0x18] sm:$0xf]
      %v1342 = vld [vmem:[%s1 + $0x1c] sm:$0xf]
      %v1343 = vld [vmem:[%s1 + $0x20] sm:$0xf]
      %v1344 = vld [vmem:[%s1 + $0x24] sm:$0xf]
      %v1345 = vld [vmem:[%s1 + $0x28] sm:$0xf]
      %v1346 = vld [vmem:[%s1 + $0x2c] sm:$0xf]
      %v1347 = vld [vmem:[%s1 + $0x30] sm:$0xf]
      %v1348 = vld [vmem:[%s1 + $0x34] sm:$0xf]
      %v1349 = vld [vmem:[%s1 + $0x38] sm:$0xf]
      %v1350 = vld [vmem:[%s1 + $0x3c] sm:$0xf]
      %v1351 = vld [vmem:[%s1 + $0x40] sm:$0xf]
      %v1352 = vld [vmem:[%s1 + $0x44] sm:$0xf]
      %v1353 = vld [vmem:[%s1 + $0x48] sm:$0xf]
      %v1354 = vld [vmem:[%s1 + $0x4c] sm:$0xf]
      %v1355 = vld [vmem:[%s1 + $0x50] sm:$0xf]
      %v1356 = vld [vmem:[%s1 + $0x54] sm:$0xf]
      %v1357 = vld [vmem:[%s1 + $0x58] sm:$0xf]
      %v1358 = vld [vmem:[%s1 + $0x5c] sm:$0xf]
      %v1359 = vld [vmem:[%s1 + $0x60] sm:$0xf]
      %v1360 = vld [vmem:[%s1 + $0x64] sm:$0xf]
      %v1361 = vld [vmem:[%s1 + $0x68] sm:$0xf]
      %v1362 = vld [vmem:[%s1 + $0x6c] sm:$0xf]
      %v1363 = vld [vmem:[%s1 + $0x70] sm:$0xf]
      %v1364 = vld [vmem:[%s1 + $0x74] sm:$0xf]
      %v1365 = vld [vmem:[%s1 + $0x78] sm:$0xf]
      %v1366 = vld [vmem:[%s1 + $0x7c] sm:$0xf]
      %v1367 = vld [vmem:[%s1 + $0x80] sm:$0xf]
      %v1368 = vld [vmem:[%s1 + $0x84] sm:$0xf]
      %v1369 = vld [vmem:[%s1 + $0x88] sm:$0xf]
      %v1370 = vld [vmem:[%s1 + $0x8c] sm:$0xf]
      %v1371 = vld [vmem:[%s1 + $0x90] sm:$0xf]
      %v1372 = vld [vmem:[%s1 + $0x94] sm:$0xf]
      %v1373 = vld [vmem:[%s1 + $0x98] sm:$0xf]
      %v1374 = vld [vmem:[%s1 + $0x9c] sm:$0xf]
      %v1375 = vld [vmem:[%s1 + $0xa0] sm:$0xf]
      %v1376 = vld [vmem:[%s1 + $0xa4] sm:$0xf]
      %v1377 = vld [vmem:[%s1 + $0xa8] sm:$0xf]
      %v1378 = vld [vmem:[%s1 + $0xac] sm:$0xf]
      %v1379 = vld [vmem:[%s1 + $0xb0] sm:$0xf]
      %v1380 = vld [vmem:[%s1 + $0xb4] sm:$0xf]
      %v1381 = vld [vmem:[%s1 + $0xb8] sm:$0xf]
      %v1382 = vld [vmem:[%s1 + $0xbc] sm:$0xf]
      %v1383 = vld [vmem:[#allocation2 + $0x180] sm:$0xff]
      %v1384 = vld [vmem:[#allocation2 + $0x188] sm:$0xf]
      %v1385 = vld [vmem:[#allocation2 + $0x18c] sm:$0xff]
      %v1386 = vld [vmem:[#allocation2 + $0x194] sm:$0xf]
      %s1387 = scalar_lea.vmem %s1, 192
      %v1388 = vld [vmem:[%s1387] sm:$0xf]
      %v1389 = vld [vmem:[%s1387 + $0x4] sm:$0xf]
      %v1390 = vld [vmem:[%s1387 + $0x8] sm:$0xf]
      %v1391 = vld [vmem:[%s1387 + $0xc] sm:$0xf]
      %v1392 = vld [vmem:[%s1387 + $0x10] sm:$0xf]
      %v1393 = vld [vmem:[%s1387 + $0x14] sm:$0xf]
      %v1394 = vld [vmem:[%s1387 + $0x18] sm:$0xf]
      %v1395 = vld [vmem:[%s1387 + $0x1c] sm:$0xf]
      %v1396 = vld [vmem:[%s1387 + $0x20] sm:$0xf]
      %v1397 = vld [vmem:[%s1387 + $0x24] sm:$0xf]
      %v1398 = vld [vmem:[%s1387 + $0x28] sm:$0xf]
      %v1399 = vld [vmem:[%s1387 + $0x2c] sm:$0xf]
      %v1400 = vld [vmem:[%s1387 + $0x30] sm:$0xf]
      %v1401 = vld [vmem:[%s1387 + $0x34] sm:$0xf]
      %v1402 = vld [vmem:[%s1387 + $0x38] sm:$0xf]
      %v1403 = vld [vmem:[%s1387 + $0x3c] sm:$0xf]
      %v1404 = vld [vmem:[%s1387 + $0x40] sm:$0xf]
      %v1405 = vld [vmem:[%s1387 + $0x44] sm:$0xf]
      %v1406 = vld [vmem:[%s1387 + $0x48] sm:$0xf]
      %v1407 = vld [vmem:[%s1387 + $0x4c] sm:$0xf]
      %v1408 = vld [vmem:[%s1387 + $0x50] sm:$0xf]
      %v1409 = vld [vmem:[%s1387 + $0x54] sm:$0xf]
      %v1410 = vld [vmem:[%s1387 + $0x58] sm:$0xf]
      %v1411 = vld [vmem:[%s1387 + $0x5c] sm:$0xf]
      %v1412 = vld [vmem:[%s1387 + $0x60] sm:$0xf]
      %v1413 = vld [vmem:[%s1387 + $0x64] sm:$0xf]
      %v1414 = vld [vmem:[%s1387 + $0x68] sm:$0xf]
      %v1415 = vld [vmem:[%s1387 + $0x6c] sm:$0xf]
      %v1416 = vld [vmem:[%s1387 + $0x70] sm:$0xf]
      %v1417 = vld [vmem:[%s1387 + $0x74] sm:$0xf]
      %v1418 = vld [vmem:[%s1387 + $0x78] sm:$0xf]
      %v1419 = vld [vmem:[%s1387 + $0x7c] sm:$0xf]
      %v1420 = vld [vmem:[%s1387 + $0x80] sm:$0xf]
      %v1421 = vld [vmem:[%s1387 + $0x84] sm:$0xf]
      %v1422 = vld [vmem:[%s1387 + $0x88] sm:$0xf]
      %v1423 = vld [vmem:[%s1387 + $0x8c] sm:$0xf]
      %v1424 = vld [vmem:[%s1387 + $0x90] sm:$0xf]
      %v1425 = vld [vmem:[%s1387 + $0x94] sm:$0xf]
      %v1426 = vld [vmem:[%s1387 + $0x98] sm:$0xf]
      %v1427 = vld [vmem:[%s1387 + $0x9c] sm:$0xf]
      %v1428 = vld [vmem:[%s1387 + $0xa0] sm:$0xf]
      %v1429 = vld [vmem:[%s1387 + $0xa4] sm:$0xf]
      %v1430 = vld [vmem:[%s1387 + $0xa8] sm:$0xf]
      %v1431 = vld [vmem:[%s1387 + $0xac] sm:$0xf]
      %v1432 = vld [vmem:[%s1387 + $0xb0] sm:$0xf]
      %v1433 = vld [vmem:[%s1387 + $0xb4] sm:$0xf]
      %v1434 = vld [vmem:[%s1387 + $0xb8] sm:$0xf]
      %v1435 = vld [vmem:[%s1387 + $0xbc] sm:$0xf]
      %v1500 = vunpack.c.l.b16 %v1275
      %v1501 = vunpack.c.h.b16 %v1275
      %v1502 = vunpack.c.l.b16 %v1276
      %v1503 = vunpack.c.l.b16 %v1277
      %v1504 = vunpack.c.h.b16 %v1277
      %v1505 = vunpack.c.l.b16 %v1278
      %v1506 = vunpack.c.l.b16 %v1279
      %v1507 = vunpack.c.h.b16 %v1279
      %v1508 = vunpack.c.l.b16 %v1280
      %v1509 = vunpack.c.l.b16 %v1281
      %v1510 = vunpack.c.h.b16 %v1281
      %v1511 = vunpack.c.l.b16 %v1282
      %v1512 = vunpack.c.l.b16 %v1283
      %v1513 = vunpack.c.h.b16 %v1283
      %v1514 = vunpack.c.l.b16 %v1284
      %v1515 = vunpack.c.l.b16 %v1285
      %v1516 = vunpack.c.h.b16 %v1285
      %v1517 = vunpack.c.l.b16 %v1286
      %v1518 = vunpack.c.l.b16 %v1287
      %v1519 = vunpack.c.h.b16 %v1287
      %v1520 = vunpack.c.l.b16 %v1288
      %v1521 = vunpack.c.l.b16 %v1289
      %v1522 = vunpack.c.h.b16 %v1289
      %v1523 = vunpack.c.l.b16 %v1290
      %v1524 = vunpack.c.l.b16 %v1291
      %v1525 = vunpack.c.h.b16 %v1291
      %v1526 = vunpack.c.l.b16 %v1292
      %v1527 = vunpack.c.l.b16 %v1293
      %v1528 = vunpack.c.h.b16 %v1293
      %v1529 = vunpack.c.l.b16 %v1294
      %v1530 = vunpack.c.l.b16 %v1295
      %v1531 = vunpack.c.h.b16 %v1295
      %v1532 = vunpack.c.l.b16 %v1296
      %v1533 = vunpack.c.l.b16 %v1297
      %v1534 = vunpack.c.h.b16 %v1297
      %v1535 = vunpack.c.l.b16 %v1298
      %v1536 = vunpack.c.l.b16 %v1299
      %v1537 = vunpack.c.h.b16 %v1299
      %v1538 = vunpack.c.l.b16 %v1300
      %v1539 = vunpack.c.l.b16 %v1301
      %v1540 = vunpack.c.h.b16 %v1301
      %v1541 = vunpack.c.l.b16 %v1302
      %v1542 = vunpack.c.l.b16 %v1303
      %v1543 = vunpack.c.h.b16 %v1303
      %v1544 = vunpack.c.l.b16 %v1304
      %v1545 = vunpack.c.l.b16 %v1305
      %v1546 = vunpack.c.h.b16 %v1305
      %v1547 = vunpack.c.l.b16 %v1306
      %v1548 = vunpack.c.l.b16 %v1307
      %v1549 = vunpack.c.h.b16 %v1307
      %v1550 = vunpack.c.l.b16 %v1308
      %v1551 = vunpack.c.l.b16 %v1309
      %v1552 = vunpack.c.h.b16 %v1309
      %v1553 = vunpack.c.l.b16 %v1310
      %v1554 = vunpack.c.l.b16 %v1311
      %v1555 = vunpack.c.h.b16 %v1311
      %v1556 = vunpack.c.l.b16 %v1312
      %v1557 = vunpack.c.l.b16 %v1313
      %v1558 = vunpack.c.h.b16 %v1313
      %v1559 = vunpack.c.l.b16 %v1314
      %v1560 = vunpack.c.l.b16 %v1315
      %v1561 = vunpack.c.h.b16 %v1315
      %v1562 = vunpack.c.l.b16 %v1316
      %v1563 = vunpack.c.l.b16 %v1317
      %v1564 = vunpack.c.h.b16 %v1317
      %v1565 = vunpack.c.l.b16 %v1318
      %v1566 = vunpack.c.l.b16 %v1319
      %v1567 = vunpack.c.h.b16 %v1319
      %v1568 = vunpack.c.l.b16 %v1320
      %v1569 = vunpack.c.l.b16 %v1321
      %v1570 = vunpack.c.h.b16 %v1321
      %v1571 = vunpack.c.l.b16 %v1322
      %v1572 = vunpack.c.l.b16 %v1323
      %v1573 = vunpack.c.h.b16 %v1323
      %v1574 = vunpack.c.l.b16 %v1324
      %v1575 = vunpack.c.l.b16 %v1325
      %v1576 = vunpack.c.h.b16 %v1325
      %v1577 = vunpack.c.l.b16 %v1326
      %v1578 = vunpack.c.l.b16 %v1327
      %v1579 = vunpack.c.h.b16 %v1327
      %v1580 = vunpack.c.l.b16 %v1328
      %v1581 = vunpack.c.l.b16 %v1329
      %v1582 = vunpack.c.h.b16 %v1329
      %v1583 = vunpack.c.l.b16 %v1330
      %v1584 = vunpack.c.l.b16 %v1331
      %v1585 = vunpack.c.h.b16 %v1331
      %v1586 = vunpack.c.l.b16 %v1332
      %v1587 = vunpack.c.l.b16 %v1333
      %v1588 = vunpack.c.h.b16 %v1333
      %v1589 = vunpack.c.l.b16 %v1334
      %v1590 = vunpack.c.l.b16 %v1383
      %v1591 = vunpack.c.h.b16 %v1383
      %v1592 = vunpack.c.l.b16 %v1384
      %v1593 = vunpack.c.l.b16 %v1385
      %v1594 = vunpack.c.h.b16 %v1385
      %v1595 = vunpack.c.l.b16 %v1386
      %v1596 = vpack.c.b16 %v1503, %v1500
      %v1597 = vpack.c.b16 %v1504, %v1501
      %v1598 = vpack.c.b16 %v1505, %v1502
      %v1599 = vpack.c.b16 %v1509, %v1506
      %v1600 = vpack.c.b16 %v1510, %v1507
      %v1601 = vpack.c.b16 %v1511, %v1508
      %v1602 = vpack.c.b16 %v1515, %v1512
      %v1603 = vpack.c.b16 %v1516, %v1513
      %v1604 = vpack.c.b16 %v1517, %v1514
      %v1605 = vpack.c.b16 %v1521, %v1518
      %v1606 = vpack.c.b16 %v1522, %v1519
      %v1607 = vpack.c.b16 %v1523, %v1520
      %v1608 = vpack.c.b16 %v1527, %v1524
      %v1609 = vpack.c.b16 %v1528, %v1525
      %v1610 = vpack.c.b16 %v1529, %v1526
      %v1611 = vpack.c.b16 %v1533, %v1530
      %v1612 = vpack.c.b16 %v1534, %v1531
      %v1613 = vpack.c.b16 %v1535, %v1532
      %v1614 = vpack.c.b16 %v1539, %v1536
      %v1615 = vpack.c.b16 %v1540, %v1537
      %v1616 = vpack.c.b16 %v1541, %v1538
      %v1617 = vpack.c.b16 %v1545, %v1542
      %v1618 = vpack.c.b16 %v1546, %v1543
      %v1619 = vpack.c.b16 %v1547, %v1544
      %v1620 = vpack.c.b16 %v1551, %v1548
      %v1621 = vpack.c.b16 %v1552, %v1549
      %v1622 = vpack.c.b16 %v1553, %v1550
      %v1623 = vpack.c.b16 %v1557, %v1554
      %v1624 = vpack.c.b16 %v1558, %v1555
      %v1625 = vpack.c.b16 %v1559, %v1556
      %v1626 = vpack.c.b16 %v1563, %v1560
      %v1627 = vpack.c.b16 %v1564, %v1561
      %v1628 = vpack.c.b16 %v1565, %v1562
      %v1629 = vpack.c.b16 %v1569, %v1566
      %v1630 = vpack.c.b16 %v1570, %v1567
      %v1631 = vpack.c.b16 %v1571, %v1568
      %v1632 = vpack.c.b16 %v1575, %v1572
      %v1633 = vpack.c.b16 %v1576, %v1573
      %v1634 = vpack.c.b16 %v1577, %v1574
      %v1635 = vpack.c.b16 %v1581, %v1578
      %v1636 = vpack.c.b16 %v1582, %v1579
      %v1637 = vpack.c.b16 %v1583, %v1580
      %v1638 = vpack.c.b16 %v1587, %v1584
      %v1639 = vpack.c.b16 %v1588, %v1585
      %v1640 = vpack.c.b16 %v1589, %v1586
      %v1641 = vpack.c.b16 %v1593, %v1590
      %v1642 = vpack.c.b16 %v1594, %v1591
      %v1643 = vpack.c.b16 %v1595, %v1592
      %v1740 = vunpack.c.l.b16 %v1388
      %v1741 = vunpack.c.l.b16 %v1389
      %v1742 = vunpack.c.l.b16 %v1390
      %v1743 = vunpack.c.l.b16 %v1391
      %v1744 = vunpack.c.l.b16 %v1392
      %v1745 = vunpack.c.l.b16 %v1393
      %v1746 = vunpack.c.l.b16 %v1394
      %v1747 = vunpack.c.l.b16 %v1395
      %v1748 = vunpack.c.l.b16 %v1396
      %v1749 = vunpack.c.l.b16 %v1397
      %v1750 = vunpack.c.l.b16 %v1398
      %v1751 = vunpack.c.l.b16 %v1399
      %v1752 = vunpack.c.l.b16 %v1400
      %v1753 = vunpack.c.l.b16 %v1401
      %v1754 = vunpack.c.l.b16 %v1402
      %v1755 = vunpack.c.l.b16 %v1403
      %v1756 = vunpack.c.l.b16 %v1404
      %v1757 = vunpack.c.l.b16 %v1405
      %v1758 = vunpack.c.l.b16 %v1406
      %v1759 = vunpack.c.l.b16 %v1407
      %v1760 = vunpack.c.l.b16 %v1408
      %v1761 = vunpack.c.l.b16 %v1409
      %v1762 = vunpack.c.l.b16 %v1410
      %v1763 = vunpack.c.l.b16 %v1411
      %v1764 = vunpack.c.l.b16 %v1412
      %v1765 = vunpack.c.l.b16 %v1413
      %v1766 = vunpack.c.l.b16 %v1414
      %v1767 = vunpack.c.l.b16 %v1415
      %v1768 = vunpack.c.l.b16 %v1416
      %v1769 = vunpack.c.l.b16 %v1417
      %v1770 = vunpack.c.l.b16 %v1418
      %v1771 = vunpack.c.l.b16 %v1419
      %v1772 = vunpack.c.l.b16 %v1420
      %v1773 = vunpack.c.l.b16 %v1421
      %v1774 = vunpack.c.l.b16 %v1422
      %v1775 = vunpack.c.l.b16 %v1423
      %v1776 = vunpack.c.l.b16 %v1424
      %v1777 = vunpack.c.l.b16 %v1425
      %v1778 = vunpack.c.l.b16 %v1426
      %v1779 = vunpack.c.l.b16 %v1427
      %v1780 = vunpack.c.l.b16 %v1428
      %v1781 = vunpack.c.l.b16 %v1429
      %v1782 = vunpack.c.l.b16 %v1430
      %v1783 = vunpack.c.l.b16 %v1431
      %v1784 = vunpack.c.l.b16 %v1432
      %v1785 = vunpack.c.l.b16 %v1433
      %v1786 = vunpack.c.l.b16 %v1434
      %v1787 = vunpack.c.l.b16 %v1435
      %v1788 = vpack.c.b16 %v1741, %v1740
      %v1789 = vpack.c.b16 %v1743, %v1742
      %v1790 = vpack.c.b16 %v1745, %v1744
      %v1791 = vpack.c.b16 %v1747, %v1746
      %v1792 = vpack.c.b16 %v1749, %v1748
      %v1793 = vpack.c.b16 %v1751, %v1750
      %v1794 = vpack.c.b16 %v1753, %v1752
      %v1795 = vpack.c.b16 %v1755, %v1754
      %v1796 = vpack.c.b16 %v1757, %v1756
      %v1797 = vpack.c.b16 %v1759, %v1758
      %v1798 = vpack.c.b16 %v1761, %v1760
      %v1799 = vpack.c.b16 %v1763, %v1762
      %v1800 = vpack.c.b16 %v1765, %v1764
      %v1801 = vpack.c.b16 %v1767, %v1766
      %v1802 = vpack.c.b16 %v1769, %v1768
      %v1803 = vpack.c.b16 %v1771, %v1770
      %v1804 = vpack.c.b16 %v1773, %v1772
      %v1805 = vpack.c.b16 %v1775, %v1774
      %v1806 = vpack.c.b16 %v1777, %v1776
      %v1807 = vpack.c.b16 %v1779, %v1778
      %v1808 = vpack.c.b16 %v1781, %v1780
      %v1809 = vpack.c.b16 %v1783, %v1782
      %v1810 = vpack.c.b16 %v1785, %v1784
      %v1811 = vpack.c.b16 %v1787, %v1786
      %1836 = vmatpush.bf16.msra.mxu0 %v1795
      %1837 = vmatpush.bf16.msra.mxu0 %v1794
      %1838 = vmatpush.bf16.msra.mxu0 %v1793
      %1839 = vmatpush.bf16.msra.mxu0 %v1792
      %1840 = vmatpush.bf16.msra.mxu0 %v1791
      %1841 = vmatpush.bf16.msra.mxu0 %v1790
      %1842 = vmatpush.bf16.msra.mxu0 %v1789
      %1843 = vmatpush.bf16.msra.mxu0 %v1788
      %1844 = vmatmul.bf16.gmra.mxu0 %v1596
      %v1845 = vpop.f32.mrf.mxu0
      %v1846 = vadd.f32 0.0, %v1845
      %v1847 = vpop.f32.mrf.mxu0
      %v1848 = vadd.f32 0.0, %v1847
      %1849 = vmatmul.bf16.gmra.mxu0 %v1599
      %v1850 = vpop.f32.mrf.mxu0
      %v1851 = vadd.f32 0.0, %v1850
      %v1852 = vpop.f32.mrf.mxu0
      %v1853 = vadd.f32 0.0, %v1852
      %1854 = vmatmul.bf16.gmra.mxu0 %v1602
      %v1855 = vpop.f32.mrf.mxu0
      %v1856 = vadd.f32 0.0, %v1855
      %v1857 = vpop.f32.mrf.mxu0
      %v1858 = vadd.f32 0.0, %v1857
      %1859 = vmatmul.bf16.gmra.mxu0 %v1605
      %v1860 = vpop.f32.mrf.mxu0
      %v1861 = vadd.f32 0.0, %v1860
      %v1862 = vpop.f32.mrf.mxu0
      %v1863 = vadd.f32 0.0, %v1862
      %1864 = vmatmul.bf16.gmra.mxu0 %v1608
      %v1865 = vpop.f32.mrf.mxu0
      %v1866 = vadd.f32 0.0, %v1865
      %v1867 = vpop.f32.mrf.mxu0
      %v1868 = vadd.f32 0.0, %v1867
      %1869 = vmatmul.bf16.gmra.mxu0 %v1611
      %v1870 = vpop.f32.mrf.mxu0
      %v1871 = vadd.f32 0.0, %v1870
      %v1872 = vpop.f32.mrf.mxu0
      %v1873 = vadd.f32 0.0, %v1872
      %1874 = vmatmul.bf16.gmra.mxu0 %v1614
      %v1875 = vpop.f32.mrf.mxu0
      %v1876 = vadd.f32 0.0, %v1875
      %v1877 = vpop.f32.mrf.mxu0
      %v1878 = vadd.f32 0.0, %v1877
      %1879 = vmatmul.bf16.gmra.mxu0 %v1617
      %v1880 = vpop.f32.mrf.mxu0
      %v1881 = vadd.f32 0.0, %v1880
      %v1882 = vpop.f32.mrf.mxu0
      %v1883 = vadd.f32 0.0, %v1882
      %1884 = vmatmul.bf16.gmra.mxu0 %v1620
      %v1885 = vpop.f32.mrf.mxu0
      %v1886 = vadd.f32 0.0, %v1885
      %v1887 = vpop.f32.mrf.mxu0
      %v1888 = vadd.f32 0.0, %v1887
      %1889 = vmatmul.bf16.gmra.mxu0 %v1623
      %v1890 = vpop.f32.mrf.mxu0
      %v1891 = vadd.f32 0.0, %v1890
      %v1892 = vpop.f32.mrf.mxu0
      %v1893 = vadd.f32 0.0, %v1892
      %1894 = vmatmul.bf16.gmra.mxu0 %v1626
      %v1895 = vpop.f32.mrf.mxu0
      %v1896 = vadd.f32 0.0, %v1895
      %v1897 = vpop.f32.mrf.mxu0
      %v1898 = vadd.f32 0.0, %v1897
      %1899 = vmatmul.bf16.gmra.mxu0 %v1629
      %v1900 = vpop.f32.mrf.mxu0
      %v1901 = vadd.f32 0.0, %v1900
      %v1902 = vpop.f32.mrf.mxu0
      %v1903 = vadd.f32 0.0, %v1902
      %1904 = vmatmul.bf16.gmra.mxu0 %v1632
      %v1905 = vpop.f32.mrf.mxu0
      %v1906 = vadd.f32 0.0, %v1905
      %v1907 = vpop.f32.mrf.mxu0
      %v1908 = vadd.f32 0.0, %v1907
      %1909 = vmatmul.bf16.gmra.mxu0 %v1635
      %v1910 = vpop.f32.mrf.mxu0
      %v1911 = vadd.f32 0.0, %v1910
      %v1912 = vpop.f32.mrf.mxu0
      %v1913 = vadd.f32 0.0, %v1912
      %1914 = vmatmul.bf16.gmra.mxu0 %v1638
      %v1915 = vpop.f32.mrf.mxu0
      %v1916 = vadd.f32 0.0, %v1915
      %v1917 = vpop.f32.mrf.mxu0
      %v1918 = vadd.f32 0.0, %v1917
      %1919 = vmatmul.bf16.gmra.mxu0 %v1641
      %v1920 = vpop.f32.mrf.mxu0
      %v1921 = vadd.f32 0.0, %v1920
      %v1922 = vpop.f32.mrf.mxu0
      %v1923 = vadd.f32 0.0, %v1922
      %1924 = vdwg.mxu0
      %1925 = vmatpush.bf16.msra.mxu0 %v1803
      %1926 = vmatpush.bf16.msra.mxu0 %v1802
      %1927 = vmatpush.bf16.msra.mxu0 %v1801
      %1928 = vmatpush.bf16.msra.mxu0 %v1800
      %1929 = vmatpush.bf16.msra.mxu0 %v1799
      %1930 = vmatpush.bf16.msra.mxu0 %v1798
      %1931 = vmatpush.bf16.msra.mxu0 %v1797
      %1932 = vmatpush.bf16.msra.mxu0 %v1796
      %1933 = vmatmul.bf16.gmra.mxu0 %v1597
      %v1934 = vpop.f32.mrf.mxu0
      %v1935 = vadd.f32 %v1846, %v1934
      %v1936 = vpop.f32.mrf.mxu0
      %v1937 = vadd.f32 %v1848, %v1936
      %1938 = vmatmul.bf16.gmra.mxu0 %v1600
      %v1939 = vpop.f32.mrf.mxu0
      %v1940 = vadd.f32 %v1851, %v1939
      %v1941 = vpop.f32.mrf.mxu0
      %v1942 = vadd.f32 %v1853, %v1941
      %1943 = vmatmul.bf16.gmra.mxu0 %v1603
      %v1944 = vpop.f32.mrf.mxu0
      %v1945 = vadd.f32 %v1856, %v1944
      %v1946 = vpop.f32.mrf.mxu0
      %v1947 = vadd.f32 %v1858, %v1946
      %1948 = vmatmul.bf16.gmra.mxu0 %v1606
      %v1949 = vpop.f32.mrf.mxu0
      %v1950 = vadd.f32 %v1861, %v1949
      %v1951 = vpop.f32.mrf.mxu0
      %v1952 = vadd.f32 %v1863, %v1951
      %1953 = vmatmul.bf16.gmra.mxu0 %v1609
      %v1954 = vpop.f32.mrf.mxu0
      %v1955 = vadd.f32 %v1866, %v1954
      %v1956 = vpop.f32.mrf.mxu0
      %v1957 = vadd.f32 %v1868, %v1956
      %1958 = vmatmul.bf16.gmra.mxu0 %v1612
      %v1959 = vpop.f32.mrf.mxu0
      %v1960 = vadd.f32 %v1871, %v1959
      %v1961 = vpop.f32.mrf.mxu0
      %v1962 = vadd.f32 %v1873, %v1961
      %1963 = vmatmul.bf16.gmra.mxu0 %v1615
      %v1964 = vpop.f32.mrf.mxu0
      %v1965 = vadd.f32 %v1876, %v1964
      %v1966 = vpop.f32.mrf.mxu0
      %v1967 = vadd.f32 %v1878, %v1966
      %1968 = vmatmul.bf16.gmra.mxu0 %v1618
      %v1969 = vpop.f32.mrf.mxu0
      %v1970 = vadd.f32 %v1881, %v1969
      %v1971 = vpop.f32.mrf.mxu0
      %v1972 = vadd.f32 %v1883, %v1971
      %1973 = vmatmul.bf16.gmra.mxu0 %v1621
      %v1974 = vpop.f32.mrf.mxu0
      %v1975 = vadd.f32 %v1886, %v1974
      %v1976 = vpop.f32.mrf.mxu0
      %v1977 = vadd.f32 %v1888, %v1976
      %1978 = vmatmul.bf16.gmra.mxu0 %v1624
      %v1979 = vpop.f32.mrf.mxu0
      %v1980 = vadd.f32 %v1891, %v1979
      %v1981 = vpop.f32.mrf.mxu0
      %v1982 = vadd.f32 %v1893, %v1981
      %1983 = vmatmul.bf16.gmra.mxu0 %v1627
      %v1984 = vpop.f32.mrf.mxu0
      %v1985 = vadd.f32 %v1896, %v1984
      %v1986 = vpop.f32.mrf.mxu0
      %v1987 = vadd.f32 %v1898, %v1986
      %1988 = vmatmul.bf16.gmra.mxu0 %v1630
      %v1989 = vpop.f32.mrf.mxu0
      %v1990 = vadd.f32 %v1901, %v1989
      %v1991 = vpop.f32.mrf.mxu0
      %v1992 = vadd.f32 %v1903, %v1991
      %1993 = vmatmul.bf16.gmra.mxu0 %v1633
      %v1994 = vpop.f32.mrf.mxu0
      %v1995 = vadd.f32 %v1906, %v1994
      %v1996 = vpop.f32.mrf.mxu0
      %v1997 = vadd.f32 %v1908, %v1996
      %1998 = vmatmul.bf16.gmra.mxu0 %v1636
      %v1999 = vpop.f32.mrf.mxu0
      %v2000 = vadd.f32 %v1911, %v1999
      %v2001 = vpop.f32.mrf.mxu0
      %v2002 = vadd.f32 %v1913, %v2001
      %2003 = vmatmul.bf16.gmra.mxu0 %v1639
      %v2004 = vpop.f32.mrf.mxu0
      %v2005 = vadd.f32 %v1916, %v2004
      %v2006 = vpop.f32.mrf.mxu0
      %v2007 = vadd.f32 %v1918, %v2006
      %2008 = vmatmul.bf16.gmra.mxu0 %v1642
      %v2009 = vpop.f32.mrf.mxu0
      %v2010 = vadd.f32 %v1921, %v2009
      %v2011 = vpop.f32.mrf.mxu0
      %v2012 = vadd.f32 %v1923, %v2011
      %2013 = vdwg.mxu0
      %2014 = vmatpush.bf16.msra.mxu0 %v1811
      %2015 = vmatpush.bf16.msra.mxu0 %v1810
      %2016 = vmatpush.bf16.msra.mxu0 %v1809
      %2017 = vmatpush.bf16.msra.mxu0 %v1808
      %2018 = vmatpush.bf16.msra.mxu0 %v1807
      %2019 = vmatpush.bf16.msra.mxu0 %v1806
      %2020 = vmatpush.bf16.msra.mxu0 %v1805
      %2021 = vmatpush.bf16.msra.mxu0 %v1804
      %2022 = vmatmul.bf16.gmra.mxu0 %v1598
      %v2023 = vpop.f32.mrf.mxu0
      %v2024 = vadd.f32 %v1935, %v2023
      %v2025 = vpop.f32.mrf.mxu0
      %v2026 = vadd.f32 %v1937, %v2025
      %2027 = vmatmul.bf16.gmra.mxu0 %v1601
      %v2028 = vpop.f32.mrf.mxu0
      %v2029 = vadd.f32 %v1940, %v2028
      %v2030 = vpop.f32.mrf.mxu0
      %v2031 = vadd.f32 %v1942, %v2030
      %2032 = vmatmul.bf16.gmra.mxu0 %v1604
      %v2033 = vpop.f32.mrf.mxu0
      %v2034 = vadd.f32 %v1945, %v2033
      %v2035 = vpop.f32.mrf.mxu0
      %v2036 = vadd.f32 %v1947, %v2035
      %2037 = vmatmul.bf16.gmra.mxu0 %v1607
      %v2038 = vpop.f32.mrf.mxu0
      %v2039 = vadd.f32 %v1950, %v2038
      %v2040 = vpop.f32.mrf.mxu0
      %v2041 = vadd.f32 %v1952, %v2040
      %2042 = vmatmul.bf16.gmra.mxu0 %v1610
      %v2043 = vpop.f32.mrf.mxu0
      %v2044 = vadd.f32 %v1955, %v2043
      %v2045 = vpop.f32.mrf.mxu0
      %v2046 = vadd.f32 %v1957, %v2045
      %2047 = vmatmul.bf16.gmra.mxu0 %v1613
      %v2048 = vpop.f32.mrf.mxu0
      %v2049 = vadd.f32 %v1960, %v2048
      %v2050 = vpop.f32.mrf.mxu0
      %v2051 = vadd.f32 %v1962, %v2050
      %2052 = vmatmul.bf16.gmra.mxu0 %v1616
      %v2053 = vpop.f32.mrf.mxu0
      %v2054 = vadd.f32 %v1965, %v2053
      %v2055 = vpop.f32.mrf.mxu0
      %v2056 = vadd.f32 %v1967, %v2055
      %2057 = vmatmul.bf16.gmra.mxu0 %v1619
      %v2058 = vpop.f32.mrf.mxu0
      %v2059 = vadd.f32 %v1970, %v2058
      %v2060 = vpop.f32.mrf.mxu0
      %v2061 = vadd.f32 %v1972, %v2060
      %2062 = vmatmul.bf16.gmra.mxu0 %v1622
      %v2063 = vpop.f32.mrf.mxu0
      %v2064 = vadd.f32 %v1975, %v2063
      %v2065 = vpop.f32.mrf.mxu0
      %v2066 = vadd.f32 %v1977, %v2065
      %2067 = vmatmul.bf16.gmra.mxu0 %v1625
      %v2068 = vpop.f32.mrf.mxu0
      %v2069 = vadd.f32 %v1980, %v2068
      %v2070 = vpop.f32.mrf.mxu0
      %v2071 = vadd.f32 %v1982, %v2070
      %2072 = vmatmul.bf16.gmra.mxu0 %v1628
      %v2073 = vpop.f32.mrf.mxu0
      %v2074 = vadd.f32 %v1985, %v2073
      %v2075 = vpop.f32.mrf.mxu0
      %v2076 = vadd.f32 %v1987, %v2075
      %2077 = vmatmul.bf16.gmra.mxu0 %v1631
      %v2078 = vpop.f32.mrf.mxu0
      %v2079 = vadd.f32 %v1990, %v2078
      %v2080 = vpop.f32.mrf.mxu0
      %v2081 = vadd.f32 %v1992, %v2080
      %2082 = vmatmul.bf16.gmra.mxu0 %v1634
      %v2083 = vpop.f32.mrf.mxu0
      %v2084 = vadd.f32 %v1995, %v2083
      %v2085 = vpop.f32.mrf.mxu0
      %v2086 = vadd.f32 %v1997, %v2085
      %2087 = vmatmul.bf16.gmra.mxu0 %v1637
      %v2088 = vpop.f32.mrf.mxu0
      %v2089 = vadd.f32 %v2000, %v2088
      %v2090 = vpop.f32.mrf.mxu0
      %v2091 = vadd.f32 %v2002, %v2090
      %2092 = vmatmul.bf16.gmra.mxu0 %v1640
      %v2093 = vpop.f32.mrf.mxu0
      %v2094 = vadd.f32 %v2005, %v2093
      %v2095 = vpop.f32.mrf.mxu0
      %v2096 = vadd.f32 %v2007, %v2095
      %2097 = vmatmul.bf16.gmra.mxu0 %v1643
      %v2098 = vpop.f32.mrf.mxu0
      %v2099 = vadd.f32 %v2010, %v2098
      %v2100 = vpop.f32.mrf.mxu0
      %v2101 = vadd.f32 %v2012, %v2100
      %2102 = vdwg.mxu0
      %v2107 = vunpack.c.l.b16 %v1271
      %v2108 = vunpack.c.h.b16 %v1271
      %v2109 = vunpack.c.l.b16 %v1272
      %v2110 = vunpack.c.l.b16 %v1273
      %v2111 = vunpack.c.h.b16 %v1273
      %v2112 = vunpack.c.l.b16 %v1274
      %v2113 = vpack.c.b16 %v2110, %v2107
      %v2114 = vpack.c.b16 %v2111, %v2108
      %v2115 = vpack.c.b16 %v2112, %v2109
      %v2167 = vunpack.c.l.b16 %v1335
      %v2168 = vunpack.c.l.b16 %v1336
      %v2169 = vunpack.c.l.b16 %v1337
      %v2170 = vunpack.c.l.b16 %v1338
      %v2171 = vunpack.c.l.b16 %v1339
      %v2172 = vunpack.c.l.b16 %v1340
      %v2173 = vunpack.c.l.b16 %v1341
      %v2174 = vunpack.c.l.b16 %v1342
      %v2175 = vunpack.c.l.b16 %v1343
      %v2176 = vunpack.c.l.b16 %v1344
      %v2177 = vunpack.c.l.b16 %v1345
      %v2178 = vunpack.c.l.b16 %v1346
      %v2179 = vunpack.c.l.b16 %v1347
      %v2180 = vunpack.c.l.b16 %v1348
      %v2181 = vunpack.c.l.b16 %v1349
      %v2182 = vunpack.c.l.b16 %v1350
      %v2183 = vunpack.c.l.b16 %v1351
      %v2184 = vunpack.c.l.b16 %v1352
      %v2185 = vunpack.c.l.b16 %v1353
      %v2186 = vunpack.c.l.b16 %v1354
      %v2187 = vunpack.c.l.b16 %v1355
      %v2188 = vunpack.c.l.b16 %v1356
      %v2189 = vunpack.c.l.b16 %v1357
      %v2190 = vunpack.c.l.b16 %v1358
      %v2191 = vunpack.c.l.b16 %v1359
      %v2192 = vunpack.c.l.b16 %v1360
      %v2193 = vunpack.c.l.b16 %v1361
      %v2194 = vunpack.c.l.b16 %v1362
      %v2195 = vunpack.c.l.b16 %v1363
      %v2196 = vunpack.c.l.b16 %v1364
      %v2197 = vunpack.c.l.b16 %v1365
      %v2198 = vunpack.c.l.b16 %v1366
      %v2199 = vunpack.c.l.b16 %v1367
      %v2200 = vunpack.c.l.b16 %v1368
      %v2201 = vunpack.c.l.b16 %v1369
      %v2202 = vunpack.c.l.b16 %v1370
      %v2203 = vunpack.c.l.b16 %v1371
      %v2204 = vunpack.c.l.b16 %v1372
      %v2205 = vunpack.c.l.b16 %v1373
      %v2206 = vunpack.c.l.b16 %v1374
      %v2207 = vunpack.c.l.b16 %v1375
      %v2208 = vunpack.c.l.b16 %v1376
      %v2209 = vunpack.c.l.b16 %v1377
      %v2210 = vunpack.c.l.b16 %v1378
      %v2211 = vunpack.c.l.b16 %v1379
      %v2212 = vunpack.c.l.b16 %v1380
      %v2213 = vunpack.c.l.b16 %v1381
      %v2214 = vunpack.c.l.b16 %v1382
      %v2215 = vpack.c.b16 %v2168, %v2167
      %v2216 = vpack.c.b16 %v2170, %v2169
      %v2217 = vpack.c.b16 %v2172, %v2171
      %v2218 = vpack.c.b16 %v2174, %v2173
      %v2219 = vpack.c.b16 %v2176, %v2175
      %v2220 = vpack.c.b16 %v2178, %v2177
      %v2221 = vpack.c.b16 %v2180, %v2179
      %v2222 = vpack.c.b16 %v2182, %v2181
      %v2223 = vpack.c.b16 %v2184, %v2183
      %v2224 = vpack.c.b16 %v2186, %v2185
      %v2225 = vpack.c.b16 %v2188, %v2187
      %v2226 = vpack.c.b16 %v2190, %v2189
      %v2227 = vpack.c.b16 %v2192, %v2191
      %v2228 = vpack.c.b16 %v2194, %v2193
      %v2229 = vpack.c.b16 %v2196, %v2195
      %v2230 = vpack.c.b16 %v2198, %v2197
      %v2231 = vpack.c.b16 %v2200, %v2199
      %v2232 = vpack.c.b16 %v2202, %v2201
      %v2233 = vpack.c.b16 %v2204, %v2203
      %v2234 = vpack.c.b16 %v2206, %v2205
      %v2235 = vpack.c.b16 %v2208, %v2207
      %v2236 = vpack.c.b16 %v2210, %v2209
      %v2237 = vpack.c.b16 %v2212, %v2211
      %v2238 = vpack.c.b16 %v2214, %v2213
      %2263 = vmatpush.bf16.msra.mxu0 %v2222
      %2264 = vmatpush.bf16.msra.mxu0 %v2221
      %2265 = vmatpush.bf16.msra.mxu0 %v2220
      %2266 = vmatpush.bf16.msra.mxu0 %v2219
      %2267 = vmatpush.bf16.msra.mxu0 %v2218
      %2268 = vmatpush.bf16.msra.mxu0 %v2217
      %2269 = vmatpush.bf16.msra.mxu0 %v2216
      %2270 = vmatpush.bf16.msra.mxu0 %v2215
      %2271 = vmatmul.bf16.gmra.mxu0 %v2113
      %v2272 = vpop.f32.mrf.mxu0
      %v2273 = vadd.f32 %v2024, %v2272
      %v2274 = vpop.f32.mrf.mxu0
      %v2275 = vadd.f32 %v2026, %v2274
      %2276 = vmatmul.bf16.gmra.mxu0 %v1596
      %v2277 = vpop.f32.mrf.mxu0
      %v2278 = vadd.f32 %v2029, %v2277
      %v2279 = vpop.f32.mrf.mxu0
      %v2280 = vadd.f32 %v2031, %v2279
      %2281 = vmatmul.bf16.gmra.mxu0 %v1599
      %v2282 = vpop.f32.mrf.mxu0
      %v2283 = vadd.f32 %v2034, %v2282
      %v2284 = vpop.f32.mrf.mxu0
      %v2285 = vadd.f32 %v2036, %v2284
      %2286 = vmatmul.bf16.gmra.mxu0 %v1602
      %v2287 = vpop.f32.mrf.mxu0
      %v2288 = vadd.f32 %v2039, %v2287
      %v2289 = vpop.f32.mrf.mxu0
      %v2290 = vadd.f32 %v2041, %v2289
      %2291 = vmatmul.bf16.gmra.mxu0 %v1605
      %v2292 = vpop.f32.mrf.mxu0
      %v2293 = vadd.f32 %v2044, %v2292
      %v2294 = vpop.f32.mrf.mxu0
      %v2295 = vadd.f32 %v2046, %v2294
      %2296 = vmatmul.bf16.gmra.mxu0 %v1608
      %v2297 = vpop.f32.mrf.mxu0
      %v2298 = vadd.f32 %v2049, %v2297
      %v2299 = vpop.f32.mrf.mxu0
      %v2300 = vadd.f32 %v2051, %v2299
      %2301 = vmatmul.bf16.gmra.mxu0 %v1611
      %v2302 = vpop.f32.mrf.mxu0
      %v2303 = vadd.f32 %v2054, %v2302
      %v2304 = vpop.f32.mrf.mxu0
      %v2305 = vadd.f32 %v2056, %v2304
      %2306 = vmatmul.bf16.gmra.mxu0 %v1614
      %v2307 = vpop.f32.mrf.mxu0
      %v2308 = vadd.f32 %v2059, %v2307
      %v2309 = vpop.f32.mrf.mxu0
      %v2310 = vadd.f32 %v2061, %v2309
      %2311 = vmatmul.bf16.gmra.mxu0 %v1617
      %v2312 = vpop.f32.mrf.mxu0
      %v2313 = vadd.f32 %v2064, %v2312
      %v2314 = vpop.f32.mrf.mxu0
      %v2315 = vadd.f32 %v2066, %v2314
      %2316 = vmatmul.bf16.gmra.mxu0 %v1620
      %v2317 = vpop.f32.mrf.mxu0
      %v2318 = vadd.f32 %v2069, %v2317
      %v2319 = vpop.f32.mrf.mxu0
      %v2320 = vadd.f32 %v2071, %v2319
      %2321 = vmatmul.bf16.gmra.mxu0 %v1623
      %v2322 = vpop.f32.mrf.mxu0
      %v2323 = vadd.f32 %v2074, %v2322
      %v2324 = vpop.f32.mrf.mxu0
      %v2325 = vadd.f32 %v2076, %v2324
      %2326 = vmatmul.bf16.gmra.mxu0 %v1626
      %v2327 = vpop.f32.mrf.mxu0
      %v2328 = vadd.f32 %v2079, %v2327
      %v2329 = vpop.f32.mrf.mxu0
      %v2330 = vadd.f32 %v2081, %v2329
      %2331 = vmatmul.bf16.gmra.mxu0 %v1629
      %v2332 = vpop.f32.mrf.mxu0
      %v2333 = vadd.f32 %v2084, %v2332
      %v2334 = vpop.f32.mrf.mxu0
      %v2335 = vadd.f32 %v2086, %v2334
      %2336 = vmatmul.bf16.gmra.mxu0 %v1632
      %v2337 = vpop.f32.mrf.mxu0
      %v2338 = vadd.f32 %v2089, %v2337
      %v2339 = vpop.f32.mrf.mxu0
      %v2340 = vadd.f32 %v2091, %v2339
      %2341 = vmatmul.bf16.gmra.mxu0 %v1635
      %v2342 = vpop.f32.mrf.mxu0
      %v2343 = vadd.f32 %v2094, %v2342
      %v2344 = vpop.f32.mrf.mxu0
      %v2345 = vadd.f32 %v2096, %v2344
      %2346 = vmatmul.bf16.gmra.mxu0 %v1638
      %v2347 = vpop.f32.mrf.mxu0
      %v2348 = vadd.f32 %v2099, %v2347
      %v2349 = vpop.f32.mrf.mxu0
      %v2350 = vadd.f32 %v2101, %v2349
      %2351 = vdwg.mxu0
      %2352 = vmatpush.bf16.msra.mxu0 %v2230
      %2353 = vmatpush.bf16.msra.mxu0 %v2229
      %2354 = vmatpush.bf16.msra.mxu0 %v2228
      %2355 = vmatpush.bf16.msra.mxu0 %v2227
      %2356 = vmatpush.bf16.msra.mxu0 %v2226
      %2357 = vmatpush.bf16.msra.mxu0 %v2225
      %2358 = vmatpush.bf16.msra.mxu0 %v2224
      %2359 = vmatpush.bf16.msra.mxu0 %v2223
      %2360 = vmatmul.bf16.gmra.mxu0 %v2114
      %v2361 = vpop.f32.mrf.mxu0
      %v2362 = vadd.f32 %v2273, %v2361
      %v2363 = vpop.f32.mrf.mxu0
      %v2364 = vadd.f32 %v2275, %v2363
      %2365 = vmatmul.bf16.gmra.mxu0 %v1597
      %v2366 = vpop.f32.mrf.mxu0
      %v2367 = vadd.f32 %v2278, %v2366
      %v2368 = vpop.f32.mrf.mxu0
      %v2369 = vadd.f32 %v2280, %v2368
      %2370 = vmatmul.bf16.gmra.mxu0 %v1600
      %v2371 = vpop.f32.mrf.mxu0
      %v2372 = vadd.f32 %v2283, %v2371
      %v2373 = vpop.f32.mrf.mxu0
      %v2374 = vadd.f32 %v2285, %v2373
      %2375 = vmatmul.bf16.gmra.mxu0 %v1603
      %v2376 = vpop.f32.mrf.mxu0
      %v2377 = vadd.f32 %v2288, %v2376
      %v2378 = vpop.f32.mrf.mxu0
      %v2379 = vadd.f32 %v2290, %v2378
      %2380 = vmatmul.bf16.gmra.mxu0 %v1606
      %v2381 = vpop.f32.mrf.mxu0
      %v2382 = vadd.f32 %v2293, %v2381
      %v2383 = vpop.f32.mrf.mxu0
      %v2384 = vadd.f32 %v2295, %v2383
      %2385 = vmatmul.bf16.gmra.mxu0 %v1609
      %v2386 = vpop.f32.mrf.mxu0
      %v2387 = vadd.f32 %v2298, %v2386
      %v2388 = vpop.f32.mrf.mxu0
      %v2389 = vadd.f32 %v2300, %v2388
      %2390 = vmatmul.bf16.gmra.mxu0 %v1612
      %v2391 = vpop.f32.mrf.mxu0
      %v2392 = vadd.f32 %v2303, %v2391
      %v2393 = vpop.f32.mrf.mxu0
      %v2394 = vadd.f32 %v2305, %v2393
      %2395 = vmatmul.bf16.gmra.mxu0 %v1615
      %v2396 = vpop.f32.mrf.mxu0
      %v2397 = vadd.f32 %v2308, %v2396
      %v2398 = vpop.f32.mrf.mxu0
      %v2399 = vadd.f32 %v2310, %v2398
      %2400 = vmatmul.bf16.gmra.mxu0 %v1618
      %v2401 = vpop.f32.mrf.mxu0
      %v2402 = vadd.f32 %v2313, %v2401
      %v2403 = vpop.f32.mrf.mxu0
      %v2404 = vadd.f32 %v2315, %v2403
      %2405 = vmatmul.bf16.gmra.mxu0 %v1621
      %v2406 = vpop.f32.mrf.mxu0
      %v2407 = vadd.f32 %v2318, %v2406
      %v2408 = vpop.f32.mrf.mxu0
      %v2409 = vadd.f32 %v2320, %v2408
      %2410 = vmatmul.bf16.gmra.mxu0 %v1624
      %v2411 = vpop.f32.mrf.mxu0
      %v2412 = vadd.f32 %v2323, %v2411
      %v2413 = vpop.f32.mrf.mxu0
      %v2414 = vadd.f32 %v2325, %v2413
      %2415 = vmatmul.bf16.gmra.mxu0 %v1627
      %v2416 = vpop.f32.mrf.mxu0
      %v2417 = vadd.f32 %v2328, %v2416
      %v2418 = vpop.f32.mrf.mxu0
      %v2419 = vadd.f32 %v2330, %v2418
      %2420 = vmatmul.bf16.gmra.mxu0 %v1630
      %v2421 = vpop.f32.mrf.mxu0
      %v2422 = vadd.f32 %v2333, %v2421
      %v2423 = vpop.f32.mrf.mxu0
      %v2424 = vadd.f32 %v2335, %v2423
      %2425 = vmatmul.bf16.gmra.mxu0 %v1633
      %v2426 = vpop.f32.mrf.mxu0
      %v2427 = vadd.f32 %v2338, %v2426
      %v2428 = vpop.f32.mrf.mxu0
      %v2429 = vadd.f32 %v2340, %v2428
      %2430 = vmatmul.bf16.gmra.mxu0 %v1636
      %v2431 = vpop.f32.mrf.mxu0
      %v2432 = vadd.f32 %v2343, %v2431
      %v2433 = vpop.f32.mrf.mxu0
      %v2434 = vadd.f32 %v2345, %v2433
      %2435 = vmatmul.bf16.gmra.mxu0 %v1639
      %v2436 = vpop.f32.mrf.mxu0
      %v2437 = vadd.f32 %v2348, %v2436
      %v2438 = vpop.f32.mrf.mxu0
      %v2439 = vadd.f32 %v2350, %v2438
      %2440 = vdwg.mxu0
      %2441 = vmatpush.bf16.msra.mxu0 %v2238
      %2442 = vmatpush.bf16.msra.mxu0 %v2237
      %2443 = vmatpush.bf16.msra.mxu0 %v2236
      %2444 = vmatpush.bf16.msra.mxu0 %v2235
      %2445 = vmatpush.bf16.msra.mxu0 %v2234
      %2446 = vmatpush.bf16.msra.mxu0 %v2233
      %2447 = vmatpush.bf16.msra.mxu0 %v2232
      %2448 = vmatpush.bf16.msra.mxu0 %v2231
      %2449 = vmatmul.bf16.gmra.mxu0 %v2115
      %v2450 = vpop.f32.mrf.mxu0
      %v2451 = vadd.f32 %v2362, %v2450
      %v2452 = vpop.f32.mrf.mxu0
      %v2453 = vadd.f32 %v2364, %v2452
      %2454 = vmatmul.bf16.gmra.mxu0 %v1598
      %v2455 = vpop.f32.mrf.mxu0
      %v2456 = vadd.f32 %v2367, %v2455
      %v2457 = vpop.f32.mrf.mxu0
      %v2458 = vadd.f32 %v2369, %v2457
      %2459 = vmatmul.bf16.gmra.mxu0 %v1601
      %v2460 = vpop.f32.mrf.mxu0
      %v2461 = vadd.f32 %v2372, %v2460
      %v2462 = vpop.f32.mrf.mxu0
      %v2463 = vadd.f32 %v2374, %v2462
      %2464 = vmatmul.bf16.gmra.mxu0 %v1604
      %v2465 = vpop.f32.mrf.mxu0
      %v2466 = vadd.f32 %v2377, %v2465
      %v2467 = vpop.f32.mrf.mxu0
      %v2468 = vadd.f32 %v2379, %v2467
      %2469 = vmatmul.bf16.gmra.mxu0 %v1607
      %v2470 = vpop.f32.mrf.mxu0
      %v2471 = vadd.f32 %v2382, %v2470
      %v2472 = vpop.f32.mrf.mxu0
      %v2473 = vadd.f32 %v2384, %v2472
      %2474 = vmatmul.bf16.gmra.mxu0 %v1610
      %v2475 = vpop.f32.mrf.mxu0
      %v2476 = vadd.f32 %v2387, %v2475
      %v2477 = vpop.f32.mrf.mxu0
      %v2478 = vadd.f32 %v2389, %v2477
      %2479 = vmatmul.bf16.gmra.mxu0 %v1613
      %v2480 = vpop.f32.mrf.mxu0
      %v2481 = vadd.f32 %v2392, %v2480
      %v2482 = vpop.f32.mrf.mxu0
      %v2483 = vadd.f32 %v2394, %v2482
      %2484 = vmatmul.bf16.gmra.mxu0 %v1616
      %v2485 = vpop.f32.mrf.mxu0
      %v2486 = vadd.f32 %v2397, %v2485
      %v2487 = vpop.f32.mrf.mxu0
      %v2488 = vadd.f32 %v2399, %v2487
      %2489 = vmatmul.bf16.gmra.mxu0 %v1619
      %v2490 = vpop.f32.mrf.mxu0
      %v2491 = vadd.f32 %v2402, %v2490
      %v2492 = vpop.f32.mrf.mxu0
      %v2493 = vadd.f32 %v2404, %v2492
      %2494 = vmatmul.bf16.gmra.mxu0 %v1622
      %v2495 = vpop.f32.mrf.mxu0
      %v2496 = vadd.f32 %v2407, %v2495
      %v2497 = vpop.f32.mrf.mxu0
      %v2498 = vadd.f32 %v2409, %v2497
      %2499 = vmatmul.bf16.gmra.mxu0 %v1625
      %v2500 = vpop.f32.mrf.mxu0
      %v2501 = vadd.f32 %v2412, %v2500
      %v2502 = vpop.f32.mrf.mxu0
      %v2503 = vadd.f32 %v2414, %v2502
      %2504 = vmatmul.bf16.gmra.mxu0 %v1628
      %v2505 = vpop.f32.mrf.mxu0
      %v2506 = vadd.f32 %v2417, %v2505
      %v2507 = vpop.f32.mrf.mxu0
      %v2508 = vadd.f32 %v2419, %v2507
      %2509 = vmatmul.bf16.gmra.mxu0 %v1631
      %v2510 = vpop.f32.mrf.mxu0
      %v2511 = vadd.f32 %v2422, %v2510
      %v2512 = vpop.f32.mrf.mxu0
      %v2513 = vadd.f32 %v2424, %v2512
      %2514 = vmatmul.bf16.gmra.mxu0 %v1634
      %v2515 = vpop.f32.mrf.mxu0
      %v2516 = vadd.f32 %v2427, %v2515
      %v2517 = vpop.f32.mrf.mxu0
      %v2518 = vadd.f32 %v2429, %v2517
      %2519 = vmatmul.bf16.gmra.mxu0 %v1637
      %v2520 = vpop.f32.mrf.mxu0
      %v2521 = vadd.f32 %v2432, %v2520
      %v2522 = vpop.f32.mrf.mxu0
      %v2523 = vadd.f32 %v2434, %v2522
      %2524 = vmatmul.bf16.gmra.mxu0 %v1640
      %v2525 = vpop.f32.mrf.mxu0
      %v2526 = vadd.f32 %v2437, %v2525
      %v2527 = vpop.f32.mrf.mxu0
      %v2528 = vadd.f32 %v2439, %v2527
      %2529 = vdwg.mxu0
      %v2530 = vld [vmem:[#allocation2 + $0x30] sm:$0xff]
      %v2531 = vld [vmem:[#allocation2 + $0x38] sm:$0xf]
      %v2532 = vld [vmem:[#allocation2 + $0x3c] sm:$0xff]
      %v2533 = vld [vmem:[#allocation2 + $0x44] sm:$0xf]
      %v2534 = vld [vmem:[#allocation2 + $0x48] sm:$0xff]
      %v2535 = vld [vmem:[#allocation2 + $0x50] sm:$0xf]
      %v2536 = vld [vmem:[#allocation2 + $0x54] sm:$0xff]
      %v2537 = vld [vmem:[#allocation2 + $0x5c] sm:$0xf]
      %v2538 = vld [vmem:[#allocation2 + $0x60] sm:$0xff]
      %v2539 = vld [vmem:[#allocation2 + $0x68] sm:$0xf]
      %v2540 = vld [vmem:[#allocation2 + $0x6c] sm:$0xff]
      %v2541 = vld [vmem:[#allocation2 + $0x74] sm:$0xf]
      %v2542 = vld [vmem:[#allocation2 + $0x78] sm:$0xff]
      %v2543 = vld [vmem:[#allocation2 + $0x80] sm:$0xf]
      %v2544 = vld [vmem:[#allocation2 + $0x84] sm:$0xff]
      %v2545 = vld [vmem:[#allocation2 + $0x8c] sm:$0xf]
      %v2546 = vld [vmem:[#allocation2 + $0x90] sm:$0xff]
      %v2547 = vld [vmem:[#allocation2 + $0x98] sm:$0xf]
      %v2548 = vld [vmem:[#allocation2 + $0x9c] sm:$0xff]
      %v2549 = vld [vmem:[#allocation2 + $0xa4] sm:$0xf]
      %v2550 = vld [vmem:[#allocation2 + $0xa8] sm:$0xff]
      %v2551 = vld [vmem:[#allocation2 + $0xb0] sm:$0xf]
      %v2552 = vld [vmem:[#allocation2 + $0xb4] sm:$0xff]
      %v2553 = vld [vmem:[#allocation2 + $0xbc] sm:$0xf]
      %v2554 = vld [vmem:[#allocation2 + $0xc0] sm:$0xff]
      %v2555 = vld [vmem:[#allocation2 + $0xc8] sm:$0xf]
      %v2556 = vld [vmem:[#allocation2 + $0xcc] sm:$0xff]
      %v2557 = vld [vmem:[#allocation2 + $0xd4] sm:$0xf]
      %v2558 = vld [vmem:[#allocation2 + $0xd8] sm:$0xff]
      %v2559 = vld [vmem:[#allocation2 + $0xe0] sm:$0xf]
      %v2560 = vld [vmem:[#allocation2 + $0xe4] sm:$0xff]
      %v2561 = vld [vmem:[#allocation2 + $0xec] sm:$0xf]
      %v2562 = vld [vmem:[#allocation2 + $0xf0] sm:$0xff]
      %v2563 = vld [vmem:[#allocation2 + $0xf8] sm:$0xf]
      %v2564 = vld [vmem:[#allocation2 + $0xfc] sm:$0xff]
      %v2565 = vld [vmem:[#allocation2 + $0x104] sm:$0xf]
      %v2566 = vld [vmem:[#allocation2 + $0x108] sm:$0xff]
      %v2567 = vld [vmem:[#allocation2 + $0x110] sm:$0xf]
      %v2568 = vld [vmem:[#allocation2 + $0x114] sm:$0xff]
      %v2569 = vld [vmem:[#allocation2 + $0x11c] sm:$0xf]
      %v2570 = vld [vmem:[#allocation2 + $0x120] sm:$0xff]
      %v2571 = vld [vmem:[#allocation2 + $0x128] sm:$0xf]
      %v2572 = vld [vmem:[#allocation2 + $0x12c] sm:$0xff]
      %v2573 = vld [vmem:[#allocation2 + $0x134] sm:$0xf]
      %v2574 = vld [vmem:[#allocation2 + $0x138] sm:$0xff]
      %v2575 = vld [vmem:[#allocation2 + $0x140] sm:$0xf]
      %v2576 = vld [vmem:[#allocation2 + $0x144] sm:$0xff]
      %v2577 = vld [vmem:[#allocation2 + $0x14c] sm:$0xf]
      %v2578 = vld [vmem:[#allocation2 + $0x150] sm:$0xff]
      %v2579 = vld [vmem:[#allocation2 + $0x158] sm:$0xf]
      %v2580 = vld [vmem:[#allocation2 + $0x15c] sm:$0xff]
      %v2581 = vld [vmem:[#allocation2 + $0x164] sm:$0xf]
      %v2582 = vld [vmem:[#allocation2 + $0x168] sm:$0xff]
      %v2583 = vld [vmem:[#allocation2 + $0x170] sm:$0xf]
      %v2584 = vld [vmem:[#allocation2 + $0x174] sm:$0xff]
      %v2585 = vld [vmem:[#allocation2 + $0x17c] sm:$0xf]
      %v2586 = vld [vmem:[#allocation2 + $0x180] sm:$0xff]
      %v2587 = vld [vmem:[#allocation2 + $0x188] sm:$0xf]
      %v2588 = vld [vmem:[#allocation2 + $0x18c] sm:$0xff]
      %v2589 = vld [vmem:[#allocation2 + $0x194] sm:$0xf]
      %v2590 = vld [vmem:[#allocation2 + $0x198] sm:$0xff]
      %v2591 = vld [vmem:[#allocation2 + $0x1a0] sm:$0xf]
      %v2592 = vld [vmem:[#allocation2 + $0x1a4] sm:$0xff]
      %v2593 = vld [vmem:[#allocation2 + $0x1ac] sm:$0xf]
      %s2594 = scalar_lea.vmem %s1, 384
      %v2595 = vld [vmem:[%s2594] sm:$0xf]
      %v2596 = vld [vmem:[%s2594 + $0x4] sm:$0xf]
      %v2597 = vld [vmem:[%s2594 + $0x8] sm:$0xf]
      %v2598 = vld [vmem:[%s2594 + $0xc] sm:$0xf]
      %v2599 = vld [vmem:[%s2594 + $0x10] sm:$0xf]
      %v2600 = vld [vmem:[%s2594 + $0x14] sm:$0xf]
      %v2601 = vld [vmem:[%s2594 + $0x18] sm:$0xf]
      %v2602 = vld [vmem:[%s2594 + $0x1c] sm:$0xf]
      %v2603 = vld [vmem:[%s2594 + $0x20] sm:$0xf]
      %v2604 = vld [vmem:[%s2594 + $0x24] sm:$0xf]
      %v2605 = vld [vmem:[%s2594 + $0x28] sm:$0xf]
      %v2606 = vld [vmem:[%s2594 + $0x2c] sm:$0xf]
      %v2607 = vld [vmem:[%s2594 + $0x30] sm:$0xf]
      %v2608 = vld [vmem:[%s2594 + $0x34] sm:$0xf]
      %v2609 = vld [vmem:[%s2594 + $0x38] sm:$0xf]
      %v2610 = vld [vmem:[%s2594 + $0x3c] sm:$0xf]
      %v2611 = vld [vmem:[%s2594 + $0x40] sm:$0xf]
      %v2612 = vld [vmem:[%s2594 + $0x44] sm:$0xf]
      %v2613 = vld [vmem:[%s2594 + $0x48] sm:$0xf]
      %v2614 = vld [vmem:[%s2594 + $0x4c] sm:$0xf]
      %v2615 = vld [vmem:[%s2594 + $0x50] sm:$0xf]
      %v2616 = vld [vmem:[%s2594 + $0x54] sm:$0xf]
      %v2617 = vld [vmem:[%s2594 + $0x58] sm:$0xf]
      %v2618 = vld [vmem:[%s2594 + $0x5c] sm:$0xf]
      %v2619 = vld [vmem:[%s2594 + $0x60] sm:$0xf]
      %v2620 = vld [vmem:[%s2594 + $0x64] sm:$0xf]
      %v2621 = vld [vmem:[%s2594 + $0x68] sm:$0xf]
      %v2622 = vld [vmem:[%s2594 + $0x6c] sm:$0xf]
      %v2623 = vld [vmem:[%s2594 + $0x70] sm:$0xf]
      %v2624 = vld [vmem:[%s2594 + $0x74] sm:$0xf]
      %v2625 = vld [vmem:[%s2594 + $0x78] sm:$0xf]
      %v2626 = vld [vmem:[%s2594 + $0x7c] sm:$0xf]
      %v2627 = vld [vmem:[%s2594 + $0x80] sm:$0xf]
      %v2628 = vld [vmem:[%s2594 + $0x84] sm:$0xf]
      %v2629 = vld [vmem:[%s2594 + $0x88] sm:$0xf]
      %v2630 = vld [vmem:[%s2594 + $0x8c] sm:$0xf]
      %v2631 = vld [vmem:[%s2594 + $0x90] sm:$0xf]
      %v2632 = vld [vmem:[%s2594 + $0x94] sm:$0xf]
      %v2633 = vld [vmem:[%s2594 + $0x98] sm:$0xf]
      %v2634 = vld [vmem:[%s2594 + $0x9c] sm:$0xf]
      %v2635 = vld [vmem:[%s2594 + $0xa0] sm:$0xf]
      %v2636 = vld [vmem:[%s2594 + $0xa4] sm:$0xf]
      %v2637 = vld [vmem:[%s2594 + $0xa8] sm:$0xf]
      %v2638 = vld [vmem:[%s2594 + $0xac] sm:$0xf]
      %v2639 = vld [vmem:[%s2594 + $0xb0] sm:$0xf]
      %v2640 = vld [vmem:[%s2594 + $0xb4] sm:$0xf]
      %v2641 = vld [vmem:[%s2594 + $0xb8] sm:$0xf]
      %v2642 = vld [vmem:[%s2594 + $0xbc] sm:$0xf]
      %v2707 = vunpack.c.l.b16 %v2530
      %v2708 = vunpack.c.h.b16 %v2530
      %v2709 = vunpack.c.l.b16 %v2531
      %v2710 = vunpack.c.l.b16 %v2532
      %v2711 = vunpack.c.h.b16 %v2532
      %v2712 = vunpack.c.l.b16 %v2533
      %v2713 = vunpack.c.l.b16 %v2534
      %v2714 = vunpack.c.h.b16 %v2534
      %v2715 = vunpack.c.l.b16 %v2535
      %v2716 = vunpack.c.l.b16 %v2536
      %v2717 = vunpack.c.h.b16 %v2536
      %v2718 = vunpack.c.l.b16 %v2537
      %v2719 = vunpack.c.l.b16 %v2538
      %v2720 = vunpack.c.h.b16 %v2538
      %v2721 = vunpack.c.l.b16 %v2539
      %v2722 = vunpack.c.l.b16 %v2540
      %v2723 = vunpack.c.h.b16 %v2540
      %v2724 = vunpack.c.l.b16 %v2541
      %v2725 = vunpack.c.l.b16 %v2542
      %v2726 = vunpack.c.h.b16 %v2542
      %v2727 = vunpack.c.l.b16 %v2543
      %v2728 = vunpack.c.l.b16 %v2544
      %v2729 = vunpack.c.h.b16 %v2544
      %v2730 = vunpack.c.l.b16 %v2545
      %v2731 = vunpack.c.l.b16 %v2546
      %v2732 = vunpack.c.h.b16 %v2546
      %v2733 = vunpack.c.l.b16 %v2547
      %v2734 = vunpack.c.l.b16 %v2548
      %v2735 = vunpack.c.h.b16 %v2548
      %v2736 = vunpack.c.l.b16 %v2549
      %v2737 = vunpack.c.l.b16 %v2550
      %v2738 = vunpack.c.h.b16 %v2550
      %v2739 = vunpack.c.l.b16 %v2551
      %v2740 = vunpack.c.l.b16 %v2552
      %v2741 = vunpack.c.h.b16 %v2552
      %v2742 = vunpack.c.l.b16 %v2553
      %v2743 = vunpack.c.l.b16 %v2554
      %v2744 = vunpack.c.h.b16 %v2554
      %v2745 = vunpack.c.l.b16 %v2555
      %v2746 = vunpack.c.l.b16 %v2556
      %v2747 = vunpack.c.h.b16 %v2556
      %v2748 = vunpack.c.l.b16 %v2557
      %v2749 = vunpack.c.l.b16 %v2558
      %v2750 = vunpack.c.h.b16 %v2558
      %v2751 = vunpack.c.l.b16 %v2559
      %v2752 = vunpack.c.l.b16 %v2560
      %v2753 = vunpack.c.h.b16 %v2560
      %v2754 = vunpack.c.l.b16 %v2561
      %v2755 = vunpack.c.l.b16 %v2562
      %v2756 = vunpack.c.h.b16 %v2562
      %v2757 = vunpack.c.l.b16 %v2563
      %v2758 = vunpack.c.l.b16 %v2564
      %v2759 = vunpack.c.h.b16 %v2564
      %v2760 = vunpack.c.l.b16 %v2565
      %v2761 = vunpack.c.l.b16 %v2566
      %v2762 = vunpack.c.h.b16 %v2566
      %v2763 = vunpack.c.l.b16 %v2567
      %v2764 = vunpack.c.l.b16 %v2568
      %v2765 = vunpack.c.h.b16 %v2568
      %v2766 = vunpack.c.l.b16 %v2569
      %v2767 = vunpack.c.l.b16 %v2570
      %v2768 = vunpack.c.h.b16 %v2570
      %v2769 = vunpack.c.l.b16 %v2571
      %v2770 = vunpack.c.l.b16 %v2572
      %v2771 = vunpack.c.h.b16 %v2572
      %v2772 = vunpack.c.l.b16 %v2573
      %v2773 = vunpack.c.l.b16 %v2574
      %v2774 = vunpack.c.h.b16 %v2574
      %v2775 = vunpack.c.l.b16 %v2575
      %v2776 = vunpack.c.l.b16 %v2576
      %v2777 = vunpack.c.h.b16 %v2576
      %v2778 = vunpack.c.l.b16 %v2577
      %v2779 = vunpack.c.l.b16 %v2578
      %v2780 = vunpack.c.h.b16 %v2578
      %v2781 = vunpack.c.l.b16 %v2579
      %v2782 = vunpack.c.l.b16 %v2580
      %v2783 = vunpack.c.h.b16 %v2580
      %v2784 = vunpack.c.l.b16 %v2581
      %v2785 = vunpack.c.l.b16 %v2582
      %v2786 = vunpack.c.h.b16 %v2582
      %v2787 = vunpack.c.l.b16 %v2583
      %v2788 = vunpack.c.l.b16 %v2584
      %v2789 = vunpack.c.h.b16 %v2584
      %v2790 = vunpack.c.l.b16 %v2585
      %v2791 = vunpack.c.l.b16 %v2586
      %v2792 = vunpack.c.h.b16 %v2586
      %v2793 = vunpack.c.l.b16 %v2587
      %v2794 = vunpack.c.l.b16 %v2588
      %v2795 = vunpack.c.h.b16 %v2588
      %v2796 = vunpack.c.l.b16 %v2589
      %v2797 = vunpack.c.l.b16 %v2590
      %v2798 = vunpack.c.h.b16 %v2590
      %v2799 = vunpack.c.l.b16 %v2591
      %v2800 = vunpack.c.l.b16 %v2592
      %v2801 = vunpack.c.h.b16 %v2592
      %v2802 = vunpack.c.l.b16 %v2593
      %v2803 = vpack.c.b16 %v2710, %v2707
      %v2804 = vpack.c.b16 %v2711, %v2708
      %v2805 = vpack.c.b16 %v2712, %v2709
      %v2806 = vpack.c.b16 %v2716, %v2713
      %v2807 = vpack.c.b16 %v2717, %v2714
      %v2808 = vpack.c.b16 %v2718, %v2715
      %v2809 = vpack.c.b16 %v2722, %v2719
      %v2810 = vpack.c.b16 %v2723, %v2720
      %v2811 = vpack.c.b16 %v2724, %v2721
      %v2812 = vpack.c.b16 %v2728, %v2725
      %v2813 = vpack.c.b16 %v2729, %v2726
      %v2814 = vpack.c.b16 %v2730, %v2727
      %v2815 = vpack.c.b16 %v2734, %v2731
      %v2816 = vpack.c.b16 %v2735, %v2732
      %v2817 = vpack.c.b16 %v2736, %v2733
      %v2818 = vpack.c.b16 %v2740, %v2737
      %v2819 = vpack.c.b16 %v2741, %v2738
      %v2820 = vpack.c.b16 %v2742, %v2739
      %v2821 = vpack.c.b16 %v2746, %v2743
      %v2822 = vpack.c.b16 %v2747, %v2744
      %v2823 = vpack.c.b16 %v2748, %v2745
      %v2824 = vpack.c.b16 %v2752, %v2749
      %v2825 = vpack.c.b16 %v2753, %v2750
      %v2826 = vpack.c.b16 %v2754, %v2751
      %v2827 = vpack.c.b16 %v2758, %v2755
      %v2828 = vpack.c.b16 %v2759, %v2756
      %v2829 = vpack.c.b16 %v2760, %v2757
      %v2830 = vpack.c.b16 %v2764, %v2761
      %v2831 = vpack.c.b16 %v2765, %v2762
      %v2832 = vpack.c.b16 %v2766, %v2763
      %v2833 = vpack.c.b16 %v2770, %v2767
      %v2834 = vpack.c.b16 %v2771, %v2768
      %v2835 = vpack.c.b16 %v2772, %v2769
      %v2836 = vpack.c.b16 %v2776, %v2773
      %v2837 = vpack.c.b16 %v2777, %v2774
      %v2838 = vpack.c.b16 %v2778, %v2775
      %v2839 = vpack.c.b16 %v2782, %v2779
      %v2840 = vpack.c.b16 %v2783, %v2780
      %v2841 = vpack.c.b16 %v2784, %v2781
      %v2842 = vpack.c.b16 %v2788, %v2785
      %v2843 = vpack.c.b16 %v2789, %v2786
      %v2844 = vpack.c.b16 %v2790, %v2787
      %v2845 = vpack.c.b16 %v2794, %v2791
      %v2846 = vpack.c.b16 %v2795, %v2792
      %v2847 = vpack.c.b16 %v2796, %v2793
      %v2848 = vpack.c.b16 %v2800, %v2797
      %v2849 = vpack.c.b16 %v2801, %v2798
      %v2850 = vpack.c.b16 %v2802, %v2799
      %v2947 = vunpack.c.l.b16 %v2595
      %v2948 = vunpack.c.l.b16 %v2596
      %v2949 = vunpack.c.l.b16 %v2597
      %v2950 = vunpack.c.l.b16 %v2598
      %v2951 = vunpack.c.l.b16 %v2599
      %v2952 = vunpack.c.l.b16 %v2600
      %v2953 = vunpack.c.l.b16 %v2601
      %v2954 = vunpack.c.l.b16 %v2602
      %v2955 = vunpack.c.l.b16 %v2603
      %v2956 = vunpack.c.l.b16 %v2604
      %v2957 = vunpack.c.l.b16 %v2605
      %v2958 = vunpack.c.l.b16 %v2606
      %v2959 = vunpack.c.l.b16 %v2607
      %v2960 = vunpack.c.l.b16 %v2608
      %v2961 = vunpack.c.l.b16 %v2609
      %v2962 = vunpack.c.l.b16 %v2610
      %v2963 = vunpack.c.l.b16 %v2611
      %v2964 = vunpack.c.l.b16 %v2612
      %v2965 = vunpack.c.l.b16 %v2613
      %v2966 = vunpack.c.l.b16 %v2614
      %v2967 = vunpack.c.l.b16 %v2615
      %v2968 = vunpack.c.l.b16 %v2616
      %v2969 = vunpack.c.l.b16 %v2617
      %v2970 = vunpack.c.l.b16 %v2618
      %v2971 = vunpack.c.l.b16 %v2619
      %v2972 = vunpack.c.l.b16 %v2620
      %v2973 = vunpack.c.l.b16 %v2621
      %v2974 = vunpack.c.l.b16 %v2622
      %v2975 = vunpack.c.l.b16 %v2623
      %v2976 = vunpack.c.l.b16 %v2624
      %v2977 = vunpack.c.l.b16 %v2625
      %v2978 = vunpack.c.l.b16 %v2626
      %v2979 = vunpack.c.l.b16 %v2627
      %v2980 = vunpack.c.l.b16 %v2628
      %v2981 = vunpack.c.l.b16 %v2629
      %v2982 = vunpack.c.l.b16 %v2630
      %v2983 = vunpack.c.l.b16 %v2631
      %v2984 = vunpack.c.l.b16 %v2632
      %v2985 = vunpack.c.l.b16 %v2633
      %v2986 = vunpack.c.l.b16 %v2634
      %v2987 = vunpack.c.l.b16 %v2635
      %v2988 = vunpack.c.l.b16 %v2636
      %v2989 = vunpack.c.l.b16 %v2637
      %v2990 = vunpack.c.l.b16 %v2638
      %v2991 = vunpack.c.l.b16 %v2639
      %v2992 = vunpack.c.l.b16 %v2640
      %v2993 = vunpack.c.l.b16 %v2641
      %v2994 = vunpack.c.l.b16 %v2642
      %v2995 = vpack.c.b16 %v2948, %v2947
      %v2996 = vpack.c.b16 %v2950, %v2949
      %v2997 = vpack.c.b16 %v2952, %v2951
      %v2998 = vpack.c.b16 %v2954, %v2953
      %v2999 = vpack.c.b16 %v2956, %v2955
      %v3000 = vpack.c.b16 %v2958, %v2957
      %v3001 = vpack.c.b16 %v2960, %v2959
      %v3002 = vpack.c.b16 %v2962, %v2961
      %v3003 = vpack.c.b16 %v2964, %v2963
      %v3004 = vpack.c.b16 %v2966, %v2965
      %v3005 = vpack.c.b16 %v2968, %v2967
      %v3006 = vpack.c.b16 %v2970, %v2969
      %v3007 = vpack.c.b16 %v2972, %v2971
      %v3008 = vpack.c.b16 %v2974, %v2973
      %v3009 = vpack.c.b16 %v2976, %v2975
      %v3010 = vpack.c.b16 %v2978, %v2977
      %v3011 = vpack.c.b16 %v2980, %v2979
      %v3012 = vpack.c.b16 %v2982, %v2981
      %v3013 = vpack.c.b16 %v2984, %v2983
      %v3014 = vpack.c.b16 %v2986, %v2985
      %v3015 = vpack.c.b16 %v2988, %v2987
      %v3016 = vpack.c.b16 %v2990, %v2989
      %v3017 = vpack.c.b16 %v2992, %v2991
      %v3018 = vpack.c.b16 %v2994, %v2993
      %3043 = vmatpush.bf16.msra.mxu0 %v3002
      %3044 = vmatpush.bf16.msra.mxu0 %v3001
      %3045 = vmatpush.bf16.msra.mxu0 %v3000
      %3046 = vmatpush.bf16.msra.mxu0 %v2999
      %3047 = vmatpush.bf16.msra.mxu0 %v2998
      %3048 = vmatpush.bf16.msra.mxu0 %v2997
      %3049 = vmatpush.bf16.msra.mxu0 %v2996
      %3050 = vmatpush.bf16.msra.mxu0 %v2995
      %3051 = vmatmul.bf16.gmra.mxu0 %v2803
      %v3052 = vpop.f32.mrf.mxu0
      %v3053 = vadd.f32 0.0, %v3052
      %v3054 = vpop.f32.mrf.mxu0
      %v3055 = vadd.f32 0.0, %v3054
      %3056 = vmatmul.bf16.gmra.mxu0 %v2806
      %v3057 = vpop.f32.mrf.mxu0
      %v3058 = vadd.f32 0.0, %v3057
      %v3059 = vpop.f32.mrf.mxu0
      %v3060 = vadd.f32 0.0, %v3059
      %3061 = vmatmul.bf16.gmra.mxu0 %v2809
      %v3062 = vpop.f32.mrf.mxu0
      %v3063 = vadd.f32 0.0, %v3062
      %v3064 = vpop.f32.mrf.mxu0
      %v3065 = vadd.f32 0.0, %v3064
      %3066 = vmatmul.bf16.gmra.mxu0 %v2812
      %v3067 = vpop.f32.mrf.mxu0
      %v3068 = vadd.f32 0.0, %v3067
      %v3069 = vpop.f32.mrf.mxu0
      %v3070 = vadd.f32 0.0, %v3069
      %3071 = vmatmul.bf16.gmra.mxu0 %v2815
      %v3072 = vpop.f32.mrf.mxu0
      %v3073 = vadd.f32 0.0, %v3072
      %v3074 = vpop.f32.mrf.mxu0
      %v3075 = vadd.f32 0.0, %v3074
      %3076 = vmatmul.bf16.gmra.mxu0 %v2818
      %v3077 = vpop.f32.mrf.mxu0
      %v3078 = vadd.f32 0.0, %v3077
      %v3079 = vpop.f32.mrf.mxu0
      %v3080 = vadd.f32 0.0, %v3079
      %3081 = vmatmul.bf16.gmra.mxu0 %v2821
      %v3082 = vpop.f32.mrf.mxu0
      %v3083 = vadd.f32 0.0, %v3082
      %v3084 = vpop.f32.mrf.mxu0
      %v3085 = vadd.f32 0.0, %v3084
      %3086 = vmatmul.bf16.gmra.mxu0 %v2824
      %v3087 = vpop.f32.mrf.mxu0
      %v3088 = vadd.f32 0.0, %v3087
      %v3089 = vpop.f32.mrf.mxu0
      %v3090 = vadd.f32 0.0, %v3089
      %3091 = vmatmul.bf16.gmra.mxu0 %v2827
      %v3092 = vpop.f32.mrf.mxu0
      %v3093 = vadd.f32 0.0, %v3092
      %v3094 = vpop.f32.mrf.mxu0
      %v3095 = vadd.f32 0.0, %v3094
      %3096 = vmatmul.bf16.gmra.mxu0 %v2830
      %v3097 = vpop.f32.mrf.mxu0
      %v3098 = vadd.f32 0.0, %v3097
      %v3099 = vpop.f32.mrf.mxu0
      %v3100 = vadd.f32 0.0, %v3099
      %3101 = vmatmul.bf16.gmra.mxu0 %v2833
      %v3102 = vpop.f32.mrf.mxu0
      %v3103 = vadd.f32 0.0, %v3102
      %v3104 = vpop.f32.mrf.mxu0
      %v3105 = vadd.f32 0.0, %v3104
      %3106 = vmatmul.bf16.gmra.mxu0 %v2836
      %v3107 = vpop.f32.mrf.mxu0
      %v3108 = vadd.f32 0.0, %v3107
      %v3109 = vpop.f32.mrf.mxu0
      %v3110 = vadd.f32 0.0, %v3109
      %3111 = vmatmul.bf16.gmra.mxu0 %v2839
      %v3112 = vpop.f32.mrf.mxu0
      %v3113 = vadd.f32 0.0, %v3112
      %v3114 = vpop.f32.mrf.mxu0
      %v3115 = vadd.f32 0.0, %v3114
      %3116 = vmatmul.bf16.gmra.mxu0 %v2842
      %v3117 = vpop.f32.mrf.mxu0
      %v3118 = vadd.f32 0.0, %v3117
      %v3119 = vpop.f32.mrf.mxu0
      %v3120 = vadd.f32 0.0, %v3119
      %3121 = vmatmul.bf16.gmra.mxu0 %v2845
      %v3122 = vpop.f32.mrf.mxu0
      %v3123 = vadd.f32 0.0, %v3122
      %v3124 = vpop.f32.mrf.mxu0
      %v3125 = vadd.f32 0.0, %v3124
      %3126 = vmatmul.bf16.gmra.mxu0 %v2848
      %v3127 = vpop.f32.mrf.mxu0
      %v3128 = vadd.f32 0.0, %v3127
      %v3129 = vpop.f32.mrf.mxu0
      %v3130 = vadd.f32 0.0, %v3129
      %3131 = vdwg.mxu0
      %3132 = vmatpush.bf16.msra.mxu0 %v3010
      %3133 = vmatpush.bf16.msra.mxu0 %v3009
      %3134 = vmatpush.bf16.msra.mxu0 %v3008
      %3135 = vmatpush.bf16.msra.mxu0 %v3007
      %3136 = vmatpush.bf16.msra.mxu0 %v3006
      %3137 = vmatpush.bf16.msra.mxu0 %v3005
      %3138 = vmatpush.bf16.msra.mxu0 %v3004
      %3139 = vmatpush.bf16.msra.mxu0 %v3003
      %3140 = vmatmul.bf16.gmra.mxu0 %v2804
      %v3141 = vpop.f32.mrf.mxu0
      %v3142 = vadd.f32 %v3053, %v3141
      %v3143 = vpop.f32.mrf.mxu0
      %v3144 = vadd.f32 %v3055, %v3143
      %3145 = vmatmul.bf16.gmra.mxu0 %v2807
      %v3146 = vpop.f32.mrf.mxu0
      %v3147 = vadd.f32 %v3058, %v3146
      %v3148 = vpop.f32.mrf.mxu0
      %v3149 = vadd.f32 %v3060, %v3148
      %3150 = vmatmul.bf16.gmra.mxu0 %v2810
      %v3151 = vpop.f32.mrf.mxu0
      %v3152 = vadd.f32 %v3063, %v3151
      %v3153 = vpop.f32.mrf.mxu0
      %v3154 = vadd.f32 %v3065, %v3153
      %3155 = vmatmul.bf16.gmra.mxu0 %v2813
      %v3156 = vpop.f32.mrf.mxu0
      %v3157 = vadd.f32 %v3068, %v3156
      %v3158 = vpop.f32.mrf.mxu0
      %v3159 = vadd.f32 %v3070, %v3158
      %3160 = vmatmul.bf16.gmra.mxu0 %v2816
      %v3161 = vpop.f32.mrf.mxu0
      %v3162 = vadd.f32 %v3073, %v3161
      %v3163 = vpop.f32.mrf.mxu0
      %v3164 = vadd.f32 %v3075, %v3163
      %3165 = vmatmul.bf16.gmra.mxu0 %v2819
      %v3166 = vpop.f32.mrf.mxu0
      %v3167 = vadd.f32 %v3078, %v3166
      %v3168 = vpop.f32.mrf.mxu0
      %v3169 = vadd.f32 %v3080, %v3168
      %3170 = vmatmul.bf16.gmra.mxu0 %v2822
      %v3171 = vpop.f32.mrf.mxu0
      %v3172 = vadd.f32 %v3083, %v3171
      %v3173 = vpop.f32.mrf.mxu0
      %v3174 = vadd.f32 %v3085, %v3173
      %3175 = vmatmul.bf16.gmra.mxu0 %v2825
      %v3176 = vpop.f32.mrf.mxu0
      %v3177 = vadd.f32 %v3088, %v3176
      %v3178 = vpop.f32.mrf.mxu0
      %v3179 = vadd.f32 %v3090, %v3178
      %3180 = vmatmul.bf16.gmra.mxu0 %v2828
      %v3181 = vpop.f32.mrf.mxu0
      %v3182 = vadd.f32 %v3093, %v3181
      %v3183 = vpop.f32.mrf.mxu0
      %v3184 = vadd.f32 %v3095, %v3183
      %3185 = vmatmul.bf16.gmra.mxu0 %v2831
      %v3186 = vpop.f32.mrf.mxu0
      %v3187 = vadd.f32 %v3098, %v3186
      %v3188 = vpop.f32.mrf.mxu0
      %v3189 = vadd.f32 %v3100, %v3188
      %3190 = vmatmul.bf16.gmra.mxu0 %v2834
      %v3191 = vpop.f32.mrf.mxu0
      %v3192 = vadd.f32 %v3103, %v3191
      %v3193 = vpop.f32.mrf.mxu0
      %v3194 = vadd.f32 %v3105, %v3193
      %3195 = vmatmul.bf16.gmra.mxu0 %v2837
      %v3196 = vpop.f32.mrf.mxu0
      %v3197 = vadd.f32 %v3108, %v3196
      %v3198 = vpop.f32.mrf.mxu0
      %v3199 = vadd.f32 %v3110, %v3198
      %3200 = vmatmul.bf16.gmra.mxu0 %v2840
      %v3201 = vpop.f32.mrf.mxu0
      %v3202 = vadd.f32 %v3113, %v3201
      %v3203 = vpop.f32.mrf.mxu0
      %v3204 = vadd.f32 %v3115, %v3203
      %3205 = vmatmul.bf16.gmra.mxu0 %v2843
      %v3206 = vpop.f32.mrf.mxu0
      %v3207 = vadd.f32 %v3118, %v3206
      %v3208 = vpop.f32.mrf.mxu0
      %v3209 = vadd.f32 %v3120, %v3208
      %3210 = vmatmul.bf16.gmra.mxu0 %v2846
      %v3211 = vpop.f32.mrf.mxu0
      %v3212 = vadd.f32 %v3123, %v3211
      %v3213 = vpop.f32.mrf.mxu0
      %v3214 = vadd.f32 %v3125, %v3213
      %3215 = vmatmul.bf16.gmra.mxu0 %v2849
      %v3216 = vpop.f32.mrf.mxu0
      %v3217 = vadd.f32 %v3128, %v3216
      %v3218 = vpop.f32.mrf.mxu0
      %v3219 = vadd.f32 %v3130, %v3218
      %3220 = vdwg.mxu0
      %3221 = vmatpush.bf16.msra.mxu0 %v3018
      %3222 = vmatpush.bf16.msra.mxu0 %v3017
      %3223 = vmatpush.bf16.msra.mxu0 %v3016
      %3224 = vmatpush.bf16.msra.mxu0 %v3015
      %3225 = vmatpush.bf16.msra.mxu0 %v3014
      %3226 = vmatpush.bf16.msra.mxu0 %v3013
      %3227 = vmatpush.bf16.msra.mxu0 %v3012
      %3228 = vmatpush.bf16.msra.mxu0 %v3011
      %3229 = vmatmul.bf16.gmra.mxu0 %v2805
      %v3230 = vpop.f32.mrf.mxu0
      %v3231 = vadd.f32 %v3142, %v3230
      %v3232 = vpop.f32.mrf.mxu0
      %v3233 = vadd.f32 %v3144, %v3232
      %3234 = vmatmul.bf16.gmra.mxu0 %v2808
      %v3235 = vpop.f32.mrf.mxu0
      %v3236 = vadd.f32 %v3147, %v3235
      %v3237 = vpop.f32.mrf.mxu0
      %v3238 = vadd.f32 %v3149, %v3237
      %3239 = vmatmul.bf16.gmra.mxu0 %v2811
      %v3240 = vpop.f32.mrf.mxu0
      %v3241 = vadd.f32 %v3152, %v3240
      %v3242 = vpop.f32.mrf.mxu0
      %v3243 = vadd.f32 %v3154, %v3242
      %3244 = vmatmul.bf16.gmra.mxu0 %v2814
      %v3245 = vpop.f32.mrf.mxu0
      %v3246 = vadd.f32 %v3157, %v3245
      %v3247 = vpop.f32.mrf.mxu0
      %v3248 = vadd.f32 %v3159, %v3247
      %3249 = vmatmul.bf16.gmra.mxu0 %v2817
      %v3250 = vpop.f32.mrf.mxu0
      %v3251 = vadd.f32 %v3162, %v3250
      %v3252 = vpop.f32.mrf.mxu0
      %v3253 = vadd.f32 %v3164, %v3252
      %3254 = vmatmul.bf16.gmra.mxu0 %v2820
      %v3255 = vpop.f32.mrf.mxu0
      %v3256 = vadd.f32 %v3167, %v3255
      %v3257 = vpop.f32.mrf.mxu0
      %v3258 = vadd.f32 %v3169, %v3257
      %3259 = vmatmul.bf16.gmra.mxu0 %v2823
      %v3260 = vpop.f32.mrf.mxu0
      %v3261 = vadd.f32 %v3172, %v3260
      %v3262 = vpop.f32.mrf.mxu0
      %v3263 = vadd.f32 %v3174, %v3262
      %3264 = vmatmul.bf16.gmra.mxu0 %v2826
      %v3265 = vpop.f32.mrf.mxu0
      %v3266 = vadd.f32 %v3177, %v3265
      %v3267 = vpop.f32.mrf.mxu0
      %v3268 = vadd.f32 %v3179, %v3267
      %3269 = vmatmul.bf16.gmra.mxu0 %v2829
      %v3270 = vpop.f32.mrf.mxu0
      %v3271 = vadd.f32 %v3182, %v3270
      %v3272 = vpop.f32.mrf.mxu0
      %v3273 = vadd.f32 %v3184, %v3272
      %3274 = vmatmul.bf16.gmra.mxu0 %v2832
      %v3275 = vpop.f32.mrf.mxu0
      %v3276 = vadd.f32 %v3187, %v3275
      %v3277 = vpop.f32.mrf.mxu0
      %v3278 = vadd.f32 %v3189, %v3277
      %3279 = vmatmul.bf16.gmra.mxu0 %v2835
      %v3280 = vpop.f32.mrf.mxu0
      %v3281 = vadd.f32 %v3192, %v3280
      %v3282 = vpop.f32.mrf.mxu0
      %v3283 = vadd.f32 %v3194, %v3282
      %3284 = vmatmul.bf16.gmra.mxu0 %v2838
      %v3285 = vpop.f32.mrf.mxu0
      %v3286 = vadd.f32 %v3197, %v3285
      %v3287 = vpop.f32.mrf.mxu0
      %v3288 = vadd.f32 %v3199, %v3287
      %3289 = vmatmul.bf16.gmra.mxu0 %v2841
      %v3290 = vpop.f32.mrf.mxu0
      %v3291 = vadd.f32 %v3202, %v3290
      %v3292 = vpop.f32.mrf.mxu0
      %v3293 = vadd.f32 %v3204, %v3292
      %3294 = vmatmul.bf16.gmra.mxu0 %v2844
      %v3295 = vpop.f32.mrf.mxu0
      %v3296 = vadd.f32 %v3207, %v3295
      %v3297 = vpop.f32.mrf.mxu0
      %v3298 = vadd.f32 %v3209, %v3297
      %3299 = vmatmul.bf16.gmra.mxu0 %v2847
      %v3300 = vpop.f32.mrf.mxu0
      %v3301 = vadd.f32 %v3212, %v3300
      %v3302 = vpop.f32.mrf.mxu0
      %v3303 = vadd.f32 %v3214, %v3302
      %3304 = vmatmul.bf16.gmra.mxu0 %v2850
      %v3305 = vpop.f32.mrf.mxu0
      %v3306 = vadd.f32 %v3217, %v3305
      %v3307 = vpop.f32.mrf.mxu0
      %v3308 = vadd.f32 %v3219, %v3307
      %3309 = vdwg.mxu0
      %v3310 = vadd.f32 %v2451, %v3231
      %v3311 = vadd.f32 %v2453, %v3233
      %v3312 = vadd.f32 %v2456, %v3236
      %v3313 = vadd.f32 %v2458, %v3238
      %v3314 = vadd.f32 %v2461, %v3241
      %v3315 = vadd.f32 %v2463, %v3243
      %v3316 = vadd.f32 %v2466, %v3246
      %v3317 = vadd.f32 %v2468, %v3248
      %v3318 = vadd.f32 %v2471, %v3251
      %v3319 = vadd.f32 %v2473, %v3253
      %v3320 = vadd.f32 %v2476, %v3256
      %v3321 = vadd.f32 %v2478, %v3258
      %v3322 = vadd.f32 %v2481, %v3261
      %v3323 = vadd.f32 %v2483, %v3263
      %v3324 = vadd.f32 %v2486, %v3266
      %v3325 = vadd.f32 %v2488, %v3268
      %v3326 = vadd.f32 %v2491, %v3271
      %v3327 = vadd.f32 %v2493, %v3273
      %v3328 = vadd.f32 %v2496, %v3276
      %v3329 = vadd.f32 %v2498, %v3278
      %v3330 = vadd.f32 %v2501, %v3281
      %v3331 = vadd.f32 %v2503, %v3283
      %v3332 = vadd.f32 %v2506, %v3286
      %v3333 = vadd.f32 %v2508, %v3288
      %v3334 = vadd.f32 %v2511, %v3291
      %v3335 = vadd.f32 %v2513, %v3293
      %v3336 = vadd.f32 %v2516, %v3296
      %v3337 = vadd.f32 %v2518, %v3298
      %v3338 = vadd.f32 %v2521, %v3301
      %v3339 = vadd.f32 %v2523, %v3303
      %v3340 = vadd.f32 %v2526, %v3306
      %v3341 = vadd.f32 %v2528, %v3308
      %v3342 = vadd.f32 %v3310, %v3311
      %v3343 = vadd.f32 %v3342, %v3312
      %v3344 = vadd.f32 %v3343, %v3313
      %v3345 = vadd.f32 %v3344, %v3314
      %v3346 = vadd.f32 %v3345, %v3315
      %v3347 = vadd.f32 %v3346, %v3316
      %v3348 = vadd.f32 %v3347, %v3317
      %v3349 = vadd.f32 %v3348, %v3318
      %v3350 = vadd.f32 %v3349, %v3319
      %v3351 = vadd.f32 %v3350, %v3320
      %v3352 = vadd.f32 %v3351, %v3321
      %v3353 = vadd.f32 %v3352, %v3322
      %v3354 = vadd.f32 %v3353, %v3323
      %v3355 = vadd.f32 %v3354, %v3324
      %v3356 = vadd.f32 %v3355, %v3325
      %v3357 = vadd.f32 %v3356, %v3326
      %v3358 = vadd.f32 %v3357, %v3327
      %v3359 = vadd.f32 %v3358, %v3328
      %v3360 = vadd.f32 %v3359, %v3329
      %v3361 = vadd.f32 %v3360, %v3330
      %v3362 = vadd.f32 %v3361, %v3331
      %v3363 = vadd.f32 %v3362, %v3332
      %v3364 = vadd.f32 %v3363, %v3333
      %v3365 = vadd.f32 %v3364, %v3334
      %v3366 = vadd.f32 %v3365, %v3335
      %v3367 = vadd.f32 %v3366, %v3336
      %v3368 = vadd.f32 %v3367, %v3337
      %v3369 = vadd.f32 %v3368, %v3338
      %v3370 = vadd.f32 %v3369, %v3339
      %v3371 = vadd.f32 %v3370, %v3340
      %v3372 = vadd.f32 %v3371, %v3341
      %v3373 = vrot.slane %v3372, 4
      %v3374 = vadd.f32 %v3372, %v3373
      %v3375 = vrot.slane %v3374, 2
      %v3376 = vadd.f32 %v3374, %v3375
      %v3377 = vrot.slane %v3376, 1
      %v3378 = vadd.f32 %v3376, %v3377
      %3379 = vst [vmem:[%s265] sm:$0x1] %v3378
      %v3380 = vmul.f32 %v3310, %v3310
      %v3381 = vmul.f32 %v3311, %v3311
      %v3382 = vmul.f32 %v3312, %v3312
      %v3383 = vmul.f32 %v3313, %v3313
      %v3384 = vmul.f32 %v3314, %v3314
      %v3385 = vmul.f32 %v3315, %v3315
      %v3386 = vmul.f32 %v3316, %v3316
      %v3387 = vmul.f32 %v3317, %v3317
      %v3388 = vmul.f32 %v3318, %v3318
      %v3389 = vmul.f32 %v3319, %v3319
      %v3390 = vmul.f32 %v3320, %v3320
      %v3391 = vmul.f32 %v3321, %v3321
      %v3392 = vmul.f32 %v3322, %v3322
      %v3393 = vmul.f32 %v3323, %v3323
      %v3394 = vmul.f32 %v3324, %v3324
      %v3395 = vmul.f32 %v3325, %v3325
      %v3396 = vmul.f32 %v3326, %v3326
      %v3397 = vmul.f32 %v3327, %v3327
      %v3398 = vmul.f32 %v3328, %v3328
      %v3399 = vmul.f32 %v3329, %v3329
      %v3400 = vmul.f32 %v3330, %v3330
      %v3401 = vmul.f32 %v3331, %v3331
      %v3402 = vmul.f32 %v3332, %v3332
      %v3403 = vmul.f32 %v3333, %v3333
      %v3404 = vmul.f32 %v3334, %v3334
      %v3405 = vmul.f32 %v3335, %v3335
      %v3406 = vmul.f32 %v3336, %v3336
      %v3407 = vmul.f32 %v3337, %v3337
      %v3408 = vmul.f32 %v3338, %v3338
      %v3409 = vmul.f32 %v3339, %v3339
      %v3410 = vmul.f32 %v3340, %v3340
      %v3411 = vmul.f32 %v3341, %v3341
      %v3412 = vadd.f32 %v3380, %v3381
      %v3413 = vadd.f32 %v3412, %v3382
      %v3414 = vadd.f32 %v3413, %v3383
      %v3415 = vadd.f32 %v3414, %v3384
      %v3416 = vadd.f32 %v3415, %v3385
      %v3417 = vadd.f32 %v3416, %v3386
      %v3418 = vadd.f32 %v3417, %v3387
      %v3419 = vadd.f32 %v3418, %v3388
      %v3420 = vadd.f32 %v3419, %v3389
      %v3421 = vadd.f32 %v3420, %v3390
      %v3422 = vadd.f32 %v3421, %v3391
      %v3423 = vadd.f32 %v3422, %v3392
      %v3424 = vadd.f32 %v3423, %v3393
      %v3425 = vadd.f32 %v3424, %v3394
      %v3426 = vadd.f32 %v3425, %v3395
      %v3427 = vadd.f32 %v3426, %v3396
      %v3428 = vadd.f32 %v3427, %v3397
      %v3429 = vadd.f32 %v3428, %v3398
      %v3430 = vadd.f32 %v3429, %v3399
      %v3431 = vadd.f32 %v3430, %v3400
      %v3432 = vadd.f32 %v3431, %v3401
      %v3433 = vadd.f32 %v3432, %v3402
      %v3434 = vadd.f32 %v3433, %v3403
      %v3435 = vadd.f32 %v3434, %v3404
      %v3436 = vadd.f32 %v3435, %v3405
      %v3437 = vadd.f32 %v3436, %v3406
      %v3438 = vadd.f32 %v3437, %v3407
      %v3439 = vadd.f32 %v3438, %v3408
      %v3440 = vadd.f32 %v3439, %v3409
      %v3441 = vadd.f32 %v3440, %v3410
      %v3442 = vadd.f32 %v3441, %v3411
      %v3443 = vrot.slane %v3442, 4
      %v3444 = vadd.f32 %v3442, %v3443
      %v3445 = vrot.slane %v3444, 2
      %v3446 = vadd.f32 %v3444, %v3445
      %v3447 = vrot.slane %v3446, 1
      %v3448 = vadd.f32 %v3446, %v3447
      %3449 = vst [vmem:[%s268] sm:$0x1] %v3448
      %v3450 = vpack.c.bf16 %v3310, %v3310
      %v3451 = vpack.c.bf16 %v3311, %v3311
      %v3452 = vpack.c.bf16 %v3312, %v3312
      %v3453 = vpack.c.bf16 %v3313, %v3313
      %v3454 = vpack.c.bf16 %v3314, %v3314
      %v3455 = vpack.c.bf16 %v3315, %v3315
      %v3456 = vpack.c.bf16 %v3316, %v3316
      %v3457 = vpack.c.bf16 %v3317, %v3317
      %v3458 = vpack.c.bf16 %v3318, %v3318
      %v3459 = vpack.c.bf16 %v3319, %v3319
      %v3460 = vpack.c.bf16 %v3320, %v3320
      %v3461 = vpack.c.bf16 %v3321, %v3321
      %v3462 = vpack.c.bf16 %v3322, %v3322
      %v3463 = vpack.c.bf16 %v3323, %v3323
      %v3464 = vpack.c.bf16 %v3324, %v3324
      %v3465 = vpack.c.bf16 %v3325, %v3325
      %v3466 = vpack.c.bf16 %v3326, %v3326
      %v3467 = vpack.c.bf16 %v3327, %v3327
      %v3468 = vpack.c.bf16 %v3328, %v3328
      %v3469 = vpack.c.bf16 %v3329, %v3329
      %v3470 = vpack.c.bf16 %v3330, %v3330
      %v3471 = vpack.c.bf16 %v3331, %v3331
      %v3472 = vpack.c.bf16 %v3332, %v3332
      %v3473 = vpack.c.bf16 %v3333, %v3333
      %v3474 = vpack.c.bf16 %v3334, %v3334
      %v3475 = vpack.c.bf16 %v3335, %v3335
      %v3476 = vpack.c.bf16 %v3336, %v3336
      %v3477 = vpack.c.bf16 %v3337, %v3337
      %v3478 = vpack.c.bf16 %v3338, %v3338
      %v3479 = vpack.c.bf16 %v3339, %v3339
      %v3480 = vpack.c.bf16 %v3340, %v3340
      %v3481 = vpack.c.bf16 %v3341, %v3341
      %3482 = vst [vmem:[%s262] sm:$0xf] %v3450
      %3483 = vst [vmem:[%s262 + $0x4] sm:$0xf] %v3451
      %3484 = vst [vmem:[%s262 + $0x8] sm:$0xf] %v3452
      %3485 = vst [vmem:[%s262 + $0xc] sm:$0xf] %v3453
      %3486 = vst [vmem:[%s262 + $0x10] sm:$0xf] %v3454
      %3487 = vst [vmem:[%s262 + $0x14] sm:$0xf] %v3455
      %3488 = vst [vmem:[%s262 + $0x18] sm:$0xf] %v3456
      %3489 = vst [vmem:[%s262 + $0x1c] sm:$0xf] %v3457
      %3490 = vst [vmem:[%s262 + $0x20] sm:$0xf] %v3458
      %3491 = vst [vmem:[%s262 + $0x24] sm:$0xf] %v3459
      %3492 = vst [vmem:[%s262 + $0x28] sm:$0xf] %v3460
      %3493 = vst [vmem:[%s262 + $0x2c] sm:$0xf] %v3461
      %3494 = vst [vmem:[%s262 + $0x30] sm:$0xf] %v3462
      %3495 = vst [vmem:[%s262 + $0x34] sm:$0xf] %v3463
      %3496 = vst [vmem:[%s262 + $0x38] sm:$0xf] %v3464
      %3497 = vst [vmem:[%s262 + $0x3c] sm:$0xf] %v3465
      %3498 = vst [vmem:[%s262 + $0x40] sm:$0xf] %v3466
      %3499 = vst [vmem:[%s262 + $0x44] sm:$0xf] %v3467
      %3500 = vst [vmem:[%s262 + $0x48] sm:$0xf] %v3468
      %3501 = vst [vmem:[%s262 + $0x4c] sm:$0xf] %v3469
      %3502 = vst [vmem:[%s262 + $0x50] sm:$0xf] %v3470
      %3503 = vst [vmem:[%s262 + $0x54] sm:$0xf] %v3471
      %3504 = vst [vmem:[%s262 + $0x58] sm:$0xf] %v3472
      %3505 = vst [vmem:[%s262 + $0x5c] sm:$0xf] %v3473
      %3506 = vst [vmem:[%s262 + $0x60] sm:$0xf] %v3474
      %3507 = vst [vmem:[%s262 + $0x64] sm:$0xf] %v3475
      %3508 = vst [vmem:[%s262 + $0x68] sm:$0xf] %v3476
      %3509 = vst [vmem:[%s262 + $0x6c] sm:$0xf] %v3477
      %3510 = vst [vmem:[%s262 + $0x70] sm:$0xf] %v3478
      %3511 = vst [vmem:[%s262 + $0x74] sm:$0xf] %v3479
      %3512 = vst [vmem:[%s262 + $0x78] sm:$0xf] %v3480
      %3513 = vst [vmem:[%s262 + $0x7c] sm:$0xf] %v3481
      %p3514 = scmp.lt.s32.totalorder %s18, 1
      %s3515 = scalar_select %p3514, %s18, 1
      %s3516 = smul.addr %s3515, 32
      %s3517 = smul.addr %s3516, 4
      %s3518 = scalar_lea.vmem %s4, %s3517
      %p3519 = scmp.lt.s32.totalorder %s18, 1
      %s3520 = scalar_select %p3519, %s18, 1
      %s3521 = scalar_lea.vmem %s5, %s3520
      %p3522 = scmp.lt.s32.totalorder %s18, 1
      %s3523 = scalar_select %p3522, %s18, 1
      %s3524 = scalar_lea.vmem %s6, %s3523
      // Predicated region
      $region37: #{block_forward.5} parent=35 // pred_check
        %p3525 = pneg %p125
      $region38: #{block_forward.5} parent=35 // pred_check_branch
        %3527 = sbr.rel (%p3525) target = $region40
      $region39: #{block_forward.5} parent=35 // pred_region
        _
      $region40: #{block_forward.5} parent=35 // pred_fallthru
        _
      // Predicated region
      $region41: #{block_forward.5} parent=35 // pred_check
        %p3528 = pneg %p151
      $region42: #{block_forward.5} parent=35 // pred_check_branch
        %3530 = sbr.rel (%p3528) target = $region44
      $region43: #{block_forward.5} parent=35 // pred_region
        _
      $region44: #{block_forward.5} parent=35 // pred_fallthru
        _
      // Predicated region
      $region45: #{block_forward.5} parent=35 // pred_check
        %p3531 = pneg %p177
      $region46: #{block_forward.5} parent=35 // pred_check_branch
        %3533 = sbr.rel (%p3531) target = $region48
      $region47: #{block_forward.5} parent=35 // pred_region
        _
      $region48: #{block_forward.5} parent=35 // pred_fallthru
        _
    $region36: #{block_forward.5} parent=5 // pred_fallthru
      _
    %p3534 = scmp.le.s32.totalorder 2, %s13
    // Predicated region
    $region49: #{block_forward.5} parent=5 // pred_check
      %p3535 = pneg %p3534
    $region50: #{block_forward.5} parent=5 // pred_check_branch
      %3537 = sbr.rel (%p3535) target = $region52
    $region51: #{block_forward.5} parent=5 // pred_region
      %s3538 = ssub.s32 %s13, 2
      // Predicated region
      $region53: #{block_forward.5} parent=51 // pred_check
        %p3539 = pneg %p131
      $region54: #{block_forward.5} parent=51 // pred_check_branch
        %3541 = sbr.rel (%p3539) target = $region56
      $region55: #{block_forward.5} parent=51 // pred_region
        %p3542 = scmp.lt.s32.totalorder %s19, 1
        %s3543 = scalar_select %p3542, %s19, 1
        %s3544 = smul.addr %s3543, 32
        %s3545 = smul.addr %s3544, 4
        %s3546 = scalar_lea.vmem %s4, %s3545
      $region56: #{block_forward.5} parent=51 // pred_fallthru
        _
      // Predicated region
      $region57: #{block_forward.5} parent=51 // pred_check
        %p3547 = pneg %p157
      $region58: #{block_forward.5} parent=51 // pred_check_branch
        %3549 = sbr.rel (%p3547) target = $region60
      $region59: #{block_forward.5} parent=51 // pred_region
        %p3550 = scmp.lt.s32.totalorder %s19, 1
        %s3551 = scalar_select %p3550, %s19, 1
        %s3552 = scalar_lea.vmem %s5, %s3551
      $region60: #{block_forward.5} parent=51 // pred_fallthru
        _
      // Predicated region
      $region61: #{block_forward.5} parent=51 // pred_check
        %p3553 = pneg %p183
      $region62: #{block_forward.5} parent=51 // pred_check_branch
        %3555 = sbr.rel (%p3553) target = $region64
      $region63: #{block_forward.5} parent=51 // pred_region
        %p3556 = scmp.lt.s32.totalorder %s19, 1
        %s3557 = scalar_select %p3556, %s19, 1
        %s3558 = scalar_lea.vmem %s6, %s3557
      $region64: #{block_forward.5} parent=51 // pred_fallthru
        _
    $region52: #{block_forward.5} parent=5 // pred_fallthru
      _
  $region6: #{block_forward.5} parent=0 // loop_footer
    %s17 = sadd.s32 1, %s13
  $region7: #{block_forward.5} parent=0 // loop_footer_branch
    %12 = sbr.rel target = $region3
  $region8: #{block_forward.5} parent=0 // loop_exit
    _

// kernel: block_forward.4
$region0: #{block_forward.4}
  #allocation0 [shape = 'u32[]', space=smem, size = 0x4, offset = 0x4, fixed_abs, tag = 'smem constant byte address 0x4 - core index']
  #allocation1 [shape = 'u32[72,128]{1,0:T(1,128)}', space=vmem, size = 0x9000, scoped, tag = 'internal scratch']
  #allocation2 [shape = 'bf16[288,384]{1,0:T(8,128)(2,1)}', space=vmem, size = 0x36000, scoped, tag = 'scratch operand']
  %s0 = inlined_call_operand.vmem [shape: bf16[2,256,128], index: 0, kind: input, shape index: {}]
  %s1 = inlined_call_operand.vmem [shape: bf16[3,384,128], index: 1, kind: input, shape index: {}]
  %s2 = inlined_call_operand.vmem [shape: bf16[128,128], index: 2, kind: input, shape index: {}]
  %s3 = inlined_call_operand.vmem [shape: bf16[2,256,128], index: 3, kind: output, shape index: {0}]
  %s4 = inlined_call_operand.vmem [shape: bf16[2,256,128], index: 4, kind: output, shape index: {1}]
  %s5 = inlined_call_operand.vmem [shape: f32[2,1,128], index: 5, kind: output, shape index: {2}]
  %s6 = inlined_call_operand.vmem [shape: f32[2,1,128], index: 6, kind: output, shape index: {3}]
  %s7 = inlined_call_operand.vmem [shape: f32[2,1,128], index: 7, kind: output, shape index: {4}]
  %s8 = inlined_call_operand.vmem [shape: f32[2,1,128], index: 8, kind: output, shape index: {5}]
  %9 = xla_tuple %s3, %s4, %s5, %s6, %s7, %s8
  %s10 = sld [smem:[#allocation0]]
  $region85: #{block_forward.4} parent=0
    _
  %s12 = ssub.s32 1, %s10
  %s13 = scalar_select 0, %s12, %s10
  loop: start=0, step=1, limit=4
  $region2: #{block_forward.4} parent=0 // loop_pre_header
    _
  $region3: #{block_forward.4} parent=0 // loop_header
    %s15 = sphi 0, %s19
    %p16 = scmp.ge.s32.totalorder %s15, 4
    %s25 = sphi 0, %s27
    %s28 = sphi 0, %s25
    %s29 = sphi 0, %s28
    %s45 = sphi 0, %s29
    %s49 = sphi 0, %s49
    %s51 = sphi 0, %s49
    %s52 = sphi 0, %s51
    %s66 = sphi 0, %s52
    %s70 = sphi 0, %s70
    %s72 = sphi 0, %s70
    %s73 = sphi 0, %s72
    %s87 = sphi 0, %s73
    %s93 = sphi 0, %s95
    %s96 = sphi 0, %s93
    %s97 = sphi 0, %s96
    %s113 = sphi 0, %s97
    %s119 = sphi 0, %s121
    %s122 = sphi 0, %s119
    %s123 = sphi 0, %s122
    %s139 = sphi 0, %s123
    %s145 = sphi 0, %s147
    %s148 = sphi 0, %s145
    %s149 = sphi 0, %s148
    %s165 = sphi 0, %s149
    %s171 = sphi 0, %s173
    %s174 = sphi 0, %s171
    %s175 = sphi 0, %s174
    %s191 = sphi 0, %s175
    %s197 = sphi 0, %s199
    %s200 = sphi 0, %s197
    %s201 = sphi 0, %s200
    %s217 = sphi 0, %s201
    %s223 = sphi 0, %s225
    %s226 = sphi 0, %s223
    %s227 = sphi 0, %s226
    %s243 = sphi 0, %s227
  $region4: #{block_forward.4} parent=0 // loop_header_branch
    %18 = sbr.rel (%p16) target = $region8
  $region5: #{block_forward.4} parent=0 // loop_body
    %s20 = ssub.s32 %s15, 1
    %s21 = ssub.s32 %s15, 2
    %s22 = sadd.s32 %s15, 1
    %s23 = ssub.s32 %s15, %s22
    %p24 = scmp.eq.s32.totalorder %s23, 0
    %s26 = sadd.s32 %s25, 1
    %s27 = scalar_select %p24, %s25, %s26
    %p30 = pneg %p24
    %p31 = scmp.eq.s32.totalorder %s15, 1
    %p32 = por %p30, %p31
    %p33 = scmp.ne.s32.totalorder %s25, %s28
    %p34 = scmp.eq.s32.totalorder %s15, 0
    %p35 = por %p33, %p34
    %p36 = scmp.ne.s32.totalorder %s25, %s28
    %p37 = scmp.eq.s32.totalorder %s20, 1
    %p38 = por %p36, %p37
    %p39 = scmp.ne.s32.totalorder %s28, %s29
    %p40 = scmp.eq.s32.totalorder %s20, 0
    %p41 = por %p39, %p40
    %p42 = scmp.ne.s32.totalorder %s28, %s29
    %p43 = scmp.eq.s32.totalorder %s21, 1
    %p44 = por %p42, %p43
    %p46 = scmp.ne.s32.totalorder %s29, %s45
    %p47 = scmp.eq.s32.totalorder %s21, 0
    %p48 = por %p46, %p47
    %s50 = sadd.s32 %s49, 1
    %p53 = scmp.eq.s32.totalorder %s15, 1
    %p54 = scmp.ne.s32.totalorder %s49, %s51
    %p55 = scmp.eq.s32.totalorder %s15, 0
    %p56 = por %p54, %p55
    %p57 = scmp.ne.s32.totalorder %s49, %s51
    %p58 = scmp.eq.s32.totalorder %s20, 1
    %p59 = por %p57, %p58
    %p60 = scmp.ne.s32.totalorder %s51, %s52
    %p61 = scmp.eq.s32.totalorder %s20, 0
    %p62 = por %p60, %p61
    %p63 = scmp.ne.s32.totalorder %s51, %s52
    %p64 = scmp.eq.s32.totalorder %s21, 1
    %p65 = por %p63, %p64
    %p67 = scmp.ne.s32.totalorder %s52, %s66
    %p68 = scmp.eq.s32.totalorder %s21, 0
    %p69 = por %p67, %p68
    %s71 = sadd.s32 %s70, 1
    %p74 = scmp.eq.s32.totalorder %s15, 1
    %p75 = scmp.ne.s32.totalorder %s70, %s72
    %p76 = scmp.eq.s32.totalorder %s15, 0
    %p77 = por %p75, %p76
    %p78 = scmp.ne.s32.totalorder %s70, %s72
    %p79 = scmp.eq.s32.totalorder %s20, 1
    %p80 = por %p78, %p79
    %p81 = scmp.ne.s32.totalorder %s72, %s73
    %p82 = scmp.eq.s32.totalorder %s20, 0
    %p83 = por %p81, %p82
    %p84 = scmp.ne.s32.totalorder %s72, %s73
    %p85 = scmp.eq.s32.totalorder %s21, 1
    %p86 = por %p84, %p85
    %p88 = scmp.ne.s32.totalorder %s73, %s87
    %p89 = scmp.eq.s32.totalorder %s21, 0
    %p90 = por %p88, %p89
    %s91 = ssub.s32 %s15, %s22
    %p92 = scmp.eq.s32.totalorder %s91, 0
    %s94 = sadd.s32 %s93, 1
    %s95 = scalar_select %p92, %s93, %s94
    %p98 = pneg %p92
    %p99 = scmp.eq.s32.totalorder %s15, 1
    %p100 = por %p98, %p99
    %p101 = scmp.ne.s32.totalorder %s93, %s96
    %p102 = scmp.eq.s32.totalorder %s15, 0
    %p103 = por %p101, %p102
    %p104 = scmp.ne.s32.totalorder %s93, %s96
    %p105 = scmp.eq.s32.totalorder %s20, 1
    %p106 = por %p104, %p105
    %p107 = scmp.ne.s32.totalorder %s96, %s97
    %p108 = scmp.eq.s32.totalorder %s20, 0
    %p109 = por %p107, %p108
    %p110 = scmp.ne.s32.totalorder %s96, %s97
    %p111 = scmp.eq.s32.totalorder %s21, 1
    %p112 = por %p110, %p111
    %p114 = scmp.ne.s32.totalorder %s97, %s113
    %p115 = scmp.eq.s32.totalorder %s21, 0
    %p116 = por %p114, %p115
    %s117 = ssub.s32 %s15, %s22
    %p118 = scmp.eq.s32.totalorder %s117, 0
    %s120 = sadd.s32 %s119, 1
    %s121 = scalar_select %p118, %s119, %s120
    %p124 = pneg %p118
    %p125 = scmp.eq.s32.totalorder %s15, 1
    %p126 = por %p124, %p125
    %p127 = scmp.ne.s32.totalorder %s119, %s122
    %p128 = scmp.eq.s32.totalorder %s15, 0
    %p129 = por %p127, %p128
    %p130 = scmp.ne.s32.totalorder %s119, %s122
    %p131 = scmp.eq.s32.totalorder %s20, 1
    %p132 = por %p130, %p131
    %p133 = scmp.ne.s32.totalorder %s122, %s123
    %p134 = scmp.eq.s32.totalorder %s20, 0
    %p135 = por %p133, %p134
    %p136 = scmp.ne.s32.totalorder %s122, %s123
    %p137 = scmp.eq.s32.totalorder %s21, 1
    %p138 = por %p136, %p137
    %p140 = scmp.ne.s32.totalorder %s123, %s139
    %p141 = scmp.eq.s32.totalorder %s21, 0
    %p142 = por %p140, %p141
    %s143 = ssub.s32 %s15, %s22
    %p144 = scmp.eq.s32.totalorder %s143, 0
    %s146 = sadd.s32 %s145, 1
    %s147 = scalar_select %p144, %s145, %s146
    %p150 = pneg %p144
    %p151 = scmp.eq.s32.totalorder %s15, 1
    %p152 = por %p150, %p151
    %p153 = scmp.ne.s32.totalorder %s145, %s148
    %p154 = scmp.eq.s32.totalorder %s15, 0
    %p155 = por %p153, %p154
    %p156 = scmp.ne.s32.totalorder %s145, %s148
    %p157 = scmp.eq.s32.totalorder %s20, 1
    %p158 = por %p156, %p157
    %p159 = scmp.ne.s32.totalorder %s148, %s149
    %p160 = scmp.eq.s32.totalorder %s20, 0
    %p161 = por %p159, %p160
    %p162 = scmp.ne.s32.totalorder %s148, %s149
    %p163 = scmp.eq.s32.totalorder %s21, 1
    %p164 = por %p162, %p163
    %p166 = scmp.ne.s32.totalorder %s149, %s165
    %p167 = scmp.eq.s32.totalorder %s21, 0
    %p168 = por %p166, %p167
    %s169 = ssub.s32 %s15, %s22
    %p170 = scmp.eq.s32.totalorder %s169, 0
    %s172 = sadd.s32 %s171, 1
    %s173 = scalar_select %p170, %s171, %s172
    %p176 = pneg %p170
    %p177 = scmp.eq.s32.totalorder %s15, 1
    %p178 = por %p176, %p177
    %p179 = scmp.ne.s32.totalorder %s171, %s174
    %p180 = scmp.eq.s32.totalorder %s15, 0
    %p181 = por %p179, %p180
    %p182 = scmp.ne.s32.totalorder %s171, %s174
    %p183 = scmp.eq.s32.totalorder %s20, 1
    %p184 = por %p182, %p183
    %p185 = scmp.ne.s32.totalorder %s174, %s175
    %p186 = scmp.eq.s32.totalorder %s20, 0
    %p187 = por %p185, %p186
    %p188 = scmp.ne.s32.totalorder %s174, %s175
    %p189 = scmp.eq.s32.totalorder %s21, 1
    %p190 = por %p188, %p189
    %p192 = scmp.ne.s32.totalorder %s175, %s191
    %p193 = scmp.eq.s32.totalorder %s21, 0
    %p194 = por %p192, %p193
    %s195 = ssub.s32 %s15, %s22
    %p196 = scmp.eq.s32.totalorder %s195, 0
    %s198 = sadd.s32 %s197, 1
    %s199 = scalar_select %p196, %s197, %s198
    %p202 = pneg %p196
    %p203 = scmp.eq.s32.totalorder %s15, 1
    %p204 = por %p202, %p203
    %p205 = scmp.ne.s32.totalorder %s197, %s200
    %p206 = scmp.eq.s32.totalorder %s15, 0
    %p207 = por %p205, %p206
    %p208 = scmp.ne.s32.totalorder %s197, %s200
    %p209 = scmp.eq.s32.totalorder %s20, 1
    %p210 = por %p208, %p209
    %p211 = scmp.ne.s32.totalorder %s200, %s201
    %p212 = scmp.eq.s32.totalorder %s20, 0
    %p213 = por %p211, %p212
    %p214 = scmp.ne.s32.totalorder %s200, %s201
    %p215 = scmp.eq.s32.totalorder %s21, 1
    %p216 = por %p214, %p215
    %p218 = scmp.ne.s32.totalorder %s201, %s217
    %p219 = scmp.eq.s32.totalorder %s21, 0
    %p220 = por %p218, %p219
    %s221 = ssub.s32 %s15, %s22
    %p222 = scmp.eq.s32.totalorder %s221, 0
    %s224 = sadd.s32 %s223, 1
    %s225 = scalar_select %p222, %s223, %s224
    %p228 = pneg %p222
    %p229 = scmp.eq.s32.totalorder %s15, 1
    %p230 = por %p228, %p229
    %p231 = scmp.ne.s32.totalorder %s223, %s226
    %p232 = scmp.eq.s32.totalorder %s15, 0
    %p233 = por %p231, %p232
    %p234 = scmp.ne.s32.totalorder %s223, %s226
    %p235 = scmp.eq.s32.totalorder %s20, 1
    %p236 = por %p234, %p235
    %p237 = scmp.ne.s32.totalorder %s226, %s227
    %p238 = scmp.eq.s32.totalorder %s20, 0
    %p239 = por %p237, %p238
    %p240 = scmp.ne.s32.totalorder %s226, %s227
    %p241 = scmp.eq.s32.totalorder %s21, 1
    %p242 = por %p240, %p241
    %p244 = scmp.ne.s32.totalorder %s227, %s243
    %p245 = scmp.eq.s32.totalorder %s21, 0
    %p246 = por %p244, %p245
    %p247 = scmp.le.s32.totalorder 1, %s15
    %p248 = scmp.lt.s32.totalorder %s15, 3
    %p249 = pnand %p247, %p248
    %p250 = pneg %p249
    // Predicated region
    $region9: #{block_forward.4} parent=5 // pred_check
      _
    $region10: #{block_forward.4} parent=5 // pred_check_branch
      %252 = sbr.rel (%p249) target = $region12
    $region11: #{block_forward.4} parent=5 // pred_region
      %s253 = ssub.s32 %s15, 1
      // Predicated region
      $region13: #{block_forward.4} parent=11 // pred_check
        %p254 = pneg %p62
      $region14: #{block_forward.4} parent=11 // pred_check_branch
        %256 = sbr.rel (%p254) target = $region16
      $region15: #{block_forward.4} parent=11 // pred_region
        _
      $region16: #{block_forward.4} parent=11 // pred_fallthru
        _
      // Predicated region
      $region17: #{block_forward.4} parent=11 // pred_check
        %p257 = pneg %p83
      $region18: #{block_forward.4} parent=11 // pred_check_branch
        %259 = sbr.rel (%p257) target = $region20
      $region19: #{block_forward.4} parent=11 // pred_region
        _
      $region20: #{block_forward.4} parent=11 // pred_fallthru
        _
    $region12: #{block_forward.4} parent=5 // pred_fallthru
      _
    %p260 = scmp.lt.s32.totalorder %s15, 2
    // Predicated region
    $region21: #{block_forward.4} parent=5 // pred_check
      %p261 = pneg %p260
    $region22: #{block_forward.4} parent=5 // pred_check_branch
      %263 = sbr.rel (%p261) target = $region24
    $region23: #{block_forward.4} parent=5 // pred_region
      // Predicated region
      $region25: #{block_forward.4} parent=23 // pred_check
        %p264 = pneg %p35
      $region26: #{block_forward.4} parent=23 // pred_check_branch
        %266 = sbr.rel (%p264) target = $region28
      $region27: #{block_forward.4} parent=23 // pred_region
        %p267 = scmp.lt.s32.totalorder %s15, 1
        %s268 = scalar_select %p267, %s15, 1
        %s269 = smul.addr %s268, 32
        %s270 = smul.addr %s269, 4
        %s271 = scalar_lea.vmem %s0, %s270
      $region28: #{block_forward.4} parent=23 // pred_fallthru
        _
    $region24: #{block_forward.4} parent=5 // pred_fallthru
      _
    %p272 = scmp.le.s32.totalorder 1, %s15
    %p273 = scmp.lt.s32.totalorder %s15, 3
    %p274 = pnand %p272, %p273
    %p275 = pneg %p274
    // Predicated region
    $region29: #{block_forward.4} parent=5 // pred_check
      _
    $region30: #{block_forward.4} parent=5 // pred_check_branch
      %277 = sbr.rel (%p274) target = $region32
    $region31: #{block_forward.4} parent=5 // pred_region
      %s278 = ssub.s32 %s15, 1
      %p279 = scmp.lt.s32.totalorder %s20, 1
      %s280 = scalar_select %p279, %s20, 1
      %s281 = smul.addr %s280, 32
      %s282 = smul.addr %s281, 4
      %s283 = scalar_lea.vmem %s0, %s282
      %p284 = pneg %p41
      %p285 = pneg %p38
      %p286 = pneg %p62
      %p287 = pneg %p59
      %p288 = pneg %p83
      %p289 = pneg %p80
      %p290 = pneg %p109
      %p291 = pneg %p106
      %p292 = scmp.lt.s32.totalorder %s20, 1
      %s293 = scalar_select %p292, %s20, 1
      %s294 = smul.addr %s293, 32
      %s295 = smul.addr %s294, 4
      %s296 = scalar_lea.vmem %s3, %s295
      %p297 = pneg %p135
      %p298 = pneg %p132
      %p299 = scmp.lt.s32.totalorder %s20, 1
      %s300 = scalar_select %p299, %s20, 1
      %s301 = smul.addr %s300, 32
      %s302 = smul.addr %s301, 4
      %s303 = scalar_lea.vmem %s4, %s302
      %p304 = pneg %p161
      %p305 = pneg %p158
      %p306 = scmp.lt.s32.totalorder %s20, 1
      %s307 = scalar_select %p306, %s20, 1
      %s308 = scalar_lea.vmem %s5, %s307
      %p309 = pneg %p187
      %p310 = pneg %p184
      %p311 = scmp.lt.s32.totalorder %s20, 1
      %s312 = scalar_select %p311, %s20, 1
      %s313 = scalar_lea.vmem %s6, %s312
      %p314 = pneg %p213
      %p315 = pneg %p210
      %p316 = scmp.lt.s32.totalorder %s20, 1
      %s317 = scalar_select %p316, %s20, 1
      %s318 = scalar_lea.vmem %s7, %s317
      %p319 = pneg %p239
      %p320 = pneg %p236
      %p321 = scmp.lt.s32.totalorder %s20, 1
      %s322 = scalar_select %p321, %s20, 1
      %s323 = scalar_lea.vmem %s8, %s322
      %p324 = scmp.lt.s32.totalorder %s20, 1
      %s325 = scalar_select %p324, %s20, 1
      %s326 = smul.addr %s325, 32
      %s327 = smul.addr %s326, 4
      %s328 = scalar_lea.vmem %s0, %s327
      %p329 = scmp.lt.s32.totalorder %s20, 1
      %s330 = scalar_select %p329, %s20, 1
      %s331 = smul.addr %s330, 32
      %s332 = smul.addr %s331, 4
      %s333 = scalar_lea.vmem %s3, %s332
      %p334 = scmp.lt.s32.totalorder %s20, 1
      %s335 = scalar_select %p334, %s20, 1
      %s336 = smul.addr %s335, 32
      %s337 = smul.addr %s336, 4
      %s338 = scalar_lea.vmem %s4, %s337
      %p339 = scmp.lt.s32.totalorder %s20, 1
      %s340 = scalar_select %p339, %s20, 1
      %s341 = scalar_lea.vmem %s5, %s340
      %p342 = scmp.lt.s32.totalorder %s20, 1
      %s343 = scalar_select %p342, %s20, 1
      %s344 = scalar_lea.vmem %s6, %s343
      %p345 = scmp.lt.s32.totalorder %s20, 1
      %s346 = scalar_select %p345, %s20, 1
      %s347 = scalar_lea.vmem %s7, %s346
      %p348 = scmp.lt.s32.totalorder %s20, 1
      %s349 = scalar_select %p348, %s20, 1
      %s350 = scalar_lea.vmem %s8, %s349
      %v352 = vld [vmem:[%s328] sm:$0xf]
      %v353 = vld [vmem:[%s328 + $0x4] sm:$0xf]
      %v354 = vld [vmem:[%s328 + $0x8] sm:$0xf]
      %v355 = vld [vmem:[%s328 + $0xc] sm:$0xf]
      %v356 = vld [vmem:[%s328 + $0x10] sm:$0xf]
      %v357 = vld [vmem:[%s328 + $0x14] sm:$0xf]
      %v358 = vld [vmem:[%s328 + $0x18] sm:$0xf]
      %v359 = vld [vmem:[%s328 + $0x1c] sm:$0xf]
      %v360 = vld [vmem:[%s328 + $0x20] sm:$0xf]
      %v361 = vld [vmem:[%s328 + $0x24] sm:$0xf]
      %v362 = vld [vmem:[%s328 + $0x28] sm:$0xf]
      %v363 = vld [vmem:[%s328 + $0x2c] sm:$0xf]
      %v364 = vld [vmem:[%s328 + $0x30] sm:$0xf]
      %v365 = vld [vmem:[%s328 + $0x34] sm:$0xf]
      %v366 = vld [vmem:[%s328 + $0x38] sm:$0xf]
      %v367 = vld [vmem:[%s328 + $0x3c] sm:$0xf]
      %v368 = vld [vmem:[%s328 + $0x40] sm:$0xf]
      %v369 = vld [vmem:[%s328 + $0x44] sm:$0xf]
      %v370 = vld [vmem:[%s328 + $0x48] sm:$0xf]
      %v371 = vld [vmem:[%s328 + $0x4c] sm:$0xf]
      %v372 = vld [vmem:[%s328 + $0x50] sm:$0xf]
      %v373 = vld [vmem:[%s328 + $0x54] sm:$0xf]
      %v374 = vld [vmem:[%s328 + $0x58] sm:$0xf]
      %v375 = vld [vmem:[%s328 + $0x5c] sm:$0xf]
      %v376 = vld [vmem:[%s328 + $0x60] sm:$0xf]
      %v377 = vld [vmem:[%s328 + $0x64] sm:$0xf]
      %v378 = vld [vmem:[%s328 + $0x68] sm:$0xf]
      %v379 = vld [vmem:[%s328 + $0x6c] sm:$0xf]
      %v380 = vld [vmem:[%s328 + $0x70] sm:$0xf]
      %v381 = vld [vmem:[%s328 + $0x74] sm:$0xf]
      %v382 = vld [vmem:[%s328 + $0x78] sm:$0xf]
      %v383 = vld [vmem:[%s328 + $0x7c] sm:$0xf]
      %384 = vst [vmem:[#allocation2 + $0x1c] sm:$0xf] %v352
      %385 = vst [vmem:[#allocation2 + $0x28] sm:$0xf] %v353
      %386 = vst [vmem:[#allocation2 + $0x34] sm:$0xf] %v354
      %387 = vst [vmem:[#allocation2 + $0x40] sm:$0xf] %v355
      %388 = vst [vmem:[#allocation2 + $0x4c] sm:$0xf] %v356
      %389 = vst [vmem:[#allocation2 + $0x58] sm:$0xf] %v357
      %390 = vst [vmem:[#allocation2 + $0x64] sm:$0xf] %v358
      %391 = vst [vmem:[#allocation2 + $0x70] sm:$0xf] %v359
      %392 = vst [vmem:[#allocation2 + $0x7c] sm:$0xf] %v360
      %393 = vst [vmem:[#allocation2 + $0x88] sm:$0xf] %v361
      %394 = vst [vmem:[#allocation2 + $0x94] sm:$0xf] %v362
      %395 = vst [vmem:[#allocation2 + $0xa0] sm:$0xf] %v363
      %396 = vst [vmem:[#allocation2 + $0xac] sm:$0xf] %v364
      %397 = vst [vmem:[#allocation2 + $0xb8] sm:$0xf] %v365
      %398 = vst [vmem:[#allocation2 + $0xc4] sm:$0xf] %v366
      %399 = vst [vmem:[#allocation2 + $0xd0] sm:$0xf] %v367
      %400 = vst [vmem:[#allocation2 + $0xdc] sm:$0xf] %v368
      %401 = vst [vmem:[#allocation2 + $0xe8] sm:$0xf] %v369
      %402 = vst [vmem:[#allocation2 + $0xf4] sm:$0xf] %v370
      %403 = vst [vmem:[#allocation2 + $0x100] sm:$0xf] %v371
      %404 = vst [vmem:[#allocation2 + $0x10c] sm:$0xf] %v372
      %405 = vst [vmem:[#allocation2 + $0x118] sm:$0xf] %v373
      %406 = vst [vmem:[#allocation2 + $0x124] sm:$0xf] %v374
      %407 = vst [vmem:[#allocation2 + $0x130] sm:$0xf] %v375
      %408 = vst [vmem:[#allocation2 + $0x13c] sm:$0xf] %v376
      %409 = vst [vmem:[#allocation2 + $0x148] sm:$0xf] %v377
      %410 = vst [vmem:[#allocation2 + $0x154] sm:$0xf] %v378
      %411 = vst [vmem:[#allocation2 + $0x160] sm:$0xf] %v379
      %412 = vst [vmem:[#allocation2 + $0x16c] sm:$0xf] %v380
      %413 = vst [vmem:[#allocation2 + $0x178] sm:$0xf] %v381
      %414 = vst [vmem:[#allocation2 + $0x184] sm:$0xf] %v382
      %415 = vst [vmem:[#allocation2 + $0x190] sm:$0xf] %v383
      %vm416 = vsmask.f32 256
      %vm417 = vsmask.f32 4368
      %vm418 = vmor %vm416, %vm417
      %v420 = vshrl.u32 %v352, 16
      %v422 = vrot.slane %v420, 7
      %v423 = vshll.u32 %v352, 16
      %v425 = vor.u32 %v422, %v423
      %v426 = vrot.slane %v422, 4
      %v428 = vshrl.u32 %v353, 16
      %v430 = vrot.slane %v428, 7
      %v431 = vshll.u32 %v353, 16
      %v433 = vor.u32 %v430, %v431
      %v434 = vsel %vm418, %v426, %v433
      %v435 = vrot.slane %v430, 4
      %v437 = vshrl.u32 %v354, 16
      %v439 = vrot.slane %v437, 7
      %v440 = vshll.u32 %v354, 16
      %v442 = vor.u32 %v439, %v440
      %v443 = vsel %vm418, %v435, %v442
      %v444 = vrot.slane %v439, 4
      %v446 = vshrl.u32 %v355, 16
      %v448 = vrot.slane %v446, 7
      %v449 = vshll.u32 %v355, 16
      %v451 = vor.u32 %v448, %v449
      %v452 = vsel %vm418, %v444, %v451
      %v453 = vrot.slane %v448, 4
      %v455 = vshrl.u32 %v356, 16
      %v457 = vrot.slane %v455, 7
      %v458 = vshll.u32 %v356, 16
      %v460 = vor.u32 %v457, %v458
      %v461 = vsel %vm418, %v453, %v460
      %v462 = vrot.slane %v457, 4
      %v464 = vshrl.u32 %v357, 16
      %v466 = vrot.slane %v464, 7
      %v467 = vshll.u32 %v357, 16
      %v469 = vor.u32 %v466, %v467
      %v470 = vsel %vm418, %v462, %v469
      %v471 = vrot.slane %v466, 4
      %v473 = vshrl.u32 %v358, 16
      %v475 = vrot.slane %v473, 7
      %v476 = vshll.u32 %v358, 16
      %v478 = vor.u32 %v475, %v476
      %v479 = vsel %vm418, %v471, %v478
      %v480 = vrot.slane %v475, 4
      %v482 = vshrl.u32 %v359, 16
      %v484 = vrot.slane %v482, 7
      %v485 = vshll.u32 %v359, 16
      %v487 = vor.u32 %v484, %v485
      %v488 = vsel %vm418, %v480, %v487
      %v489 = vrot.slane %v484, 4
      %v491 = vshrl.u32 %v360, 16
      %v493 = vrot.slane %v491, 7
      %v494 = vshll.u32 %v360, 16
      %v496 = vor.u32 %v493, %v494
      %v497 = vsel %vm418, %v489, %v496
      %v498 = vrot.slane %v493, 4
      %v500 = vshrl.u32 %v361, 16
      %v502 = vrot.slane %v500, 7
      %v503 = vshll.u32 %v361, 16
      %v505 = vor.u32 %v502, %v503
      %v506 = vsel %vm418, %v498, %v505
      %v507 = vrot.slane %v502, 4
      %v509 = vshrl.u32 %v362, 16
      %v511 = vrot.slane %v509, 7
      %v512 = vshll.u32 %v362, 16
      %v514 = vor.u32 %v511, %v512
      %v515 = vsel %vm418, %v507, %v514
      %v516 = vrot.slane %v511, 4
      %v518 = vshrl.u32 %v363, 16
      %v520 = vrot.slane %v518, 7
      %v521 = vshll.u32 %v363, 16
      %v523 = vor.u32 %v520, %v521
      %v524 = vsel %vm418, %v516, %v523
      %v525 = vrot.slane %v520, 4
      %v527 = vshrl.u32 %v364, 16
      %v529 = vrot.slane %v527, 7
      %v530 = vshll.u32 %v364, 16
      %v532 = vor.u32 %v529, %v530
      %v533 = vsel %vm418, %v525, %v532
      %v534 = vrot.slane %v529, 4
      %v536 = vshrl.u32 %v365, 16
      %v538 = vrot.slane %v536, 7
      %v539 = vshll.u32 %v365, 16
      %v541 = vor.u32 %v538, %v539
      %v542 = vsel %vm418, %v534, %v541
      %v543 = vrot.slane %v538, 4
      %v545 = vshrl.u32 %v366, 16
      %v547 = vrot.slane %v545, 7
      %v548 = vshll.u32 %v366, 16
      %v550 = vor.u32 %v547, %v548
      %v551 = vsel %vm418, %v543, %v550
      %v552 = vrot.slane %v547, 4
      %v554 = vshrl.u32 %v367, 16
      %v556 = vrot.slane %v554, 7
      %v557 = vshll.u32 %v367, 16
      %v559 = vor.u32 %v556, %v557
      %v560 = vsel %vm418, %v552, %v559
      %v561 = vrot.slane %v556, 4
      %v563 = vshrl.u32 %v368, 16
      %v565 = vrot.slane %v563, 7
      %v566 = vshll.u32 %v368, 16
      %v568 = vor.u32 %v565, %v566
      %v569 = vsel %vm418, %v561, %v568
      %v570 = vrot.slane %v565, 4
      %v572 = vshrl.u32 %v369, 16
      %v574 = vrot.slane %v572, 7
      %v575 = vshll.u32 %v369, 16
      %v577 = vor.u32 %v574, %v575
      %v578 = vsel %vm418, %v570, %v577
      %v579 = vrot.slane %v574, 4
      %v581 = vshrl.u32 %v370, 16
      %v583 = vrot.slane %v581, 7
      %v584 = vshll.u32 %v370, 16
      %v586 = vor.u32 %v583, %v584
      %v587 = vsel %vm418, %v579, %v586
      %v588 = vrot.slane %v583, 4
      %v590 = vshrl.u32 %v371, 16
      %v592 = vrot.slane %v590, 7
      %v593 = vshll.u32 %v371, 16
      %v595 = vor.u32 %v592, %v593
      %v596 = vsel %vm418, %v588, %v595
      %v597 = vrot.slane %v592, 4
      %v599 = vshrl.u32 %v372, 16
      %v601 = vrot.slane %v599, 7
      %v602 = vshll.u32 %v372, 16
      %v604 = vor.u32 %v601, %v602
      %v605 = vsel %vm418, %v597, %v604
      %v606 = vrot.slane %v601, 4
      %v608 = vshrl.u32 %v373, 16
      %v610 = vrot.slane %v608, 7
      %v611 = vshll.u32 %v373, 16
      %v613 = vor.u32 %v610, %v611
      %v614 = vsel %vm418, %v606, %v613
      %v615 = vrot.slane %v610, 4
      %v617 = vshrl.u32 %v374, 16
      %v619 = vrot.slane %v617, 7
      %v620 = vshll.u32 %v374, 16
      %v622 = vor.u32 %v619, %v620
      %v623 = vsel %vm418, %v615, %v622
      %v624 = vrot.slane %v619, 4
      %v626 = vshrl.u32 %v375, 16
      %v628 = vrot.slane %v626, 7
      %v629 = vshll.u32 %v375, 16
      %v631 = vor.u32 %v628, %v629
      %v632 = vsel %vm418, %v624, %v631
      %v633 = vrot.slane %v628, 4
      %v635 = vshrl.u32 %v376, 16
      %v637 = vrot.slane %v635, 7
      %v638 = vshll.u32 %v376, 16
      %v640 = vor.u32 %v637, %v638
      %v641 = vsel %vm418, %v633, %v640
      %v642 = vrot.slane %v637, 4
      %v644 = vshrl.u32 %v377, 16
      %v646 = vrot.slane %v644, 7
      %v647 = vshll.u32 %v377, 16
      %v649 = vor.u32 %v646, %v647
      %v650 = vsel %vm418, %v642, %v649
      %v651 = vrot.slane %v646, 4
      %v653 = vshrl.u32 %v378, 16
      %v655 = vrot.slane %v653, 7
      %v656 = vshll.u32 %v378, 16
      %v658 = vor.u32 %v655, %v656
      %v659 = vsel %vm418, %v651, %v658
      %v660 = vrot.slane %v655, 4
      %v662 = vshrl.u32 %v379, 16
      %v664 = vrot.slane %v662, 7
      %v665 = vshll.u32 %v379, 16
      %v667 = vor.u32 %v664, %v665
      %v668 = vsel %vm418, %v660, %v667
      %v669 = vrot.slane %v664, 4
      %v671 = vshrl.u32 %v380, 16
      %v673 = vrot.slane %v671, 7
      %v674 = vshll.u32 %v380, 16
      %v676 = vor.u32 %v673, %v674
      %v677 = vsel %vm418, %v669, %v676
      %v678 = vrot.slane %v673, 4
      %v680 = vshrl.u32 %v381, 16
      %v682 = vrot.slane %v680, 7
      %v683 = vshll.u32 %v381, 16
      %v685 = vor.u32 %v682, %v683
      %v686 = vsel %vm418, %v678, %v685
      %v687 = vrot.slane %v682, 4
      %v689 = vshrl.u32 %v382, 16
      %v691 = vrot.slane %v689, 7
      %v692 = vshll.u32 %v382, 16
      %v694 = vor.u32 %v691, %v692
      %v695 = vsel %vm418, %v687, %v694
      %v696 = vrot.slane %v691, 4
      %v698 = vshrl.u32 %v383, 16
      %v700 = vrot.slane %v698, 7
      %v701 = vshll.u32 %v383, 16
      %v703 = vor.u32 %v700, %v701
      %v704 = vsel %vm418, %v696, %v703
      %v705 = vrot.slane %v700, 4
      %vm739 = vcmask 1043456
      %vm740 = vsmask.f32 7938
      %vm741 = vmand %vm739, %vm740
      %v742 = vld [vmem:[#allocation2 + $0x18] sm:$0xf]
      %v743 = vsel %vm741, %v425, %v742
      %744 = vst [vmem:[#allocation2 + $0x18] sm:$0xf] %v743
      %745 = vst [vmem:[#allocation2 + $0x24] sm:$0xf] %v434
      %746 = vst [vmem:[#allocation2 + $0x30] sm:$0xf] %v443
      %747 = vst [vmem:[#allocation2 + $0x3c] sm:$0xf] %v452
      %748 = vst [vmem:[#allocation2 + $0x48] sm:$0xf] %v461
      %749 = vst [vmem:[#allocation2 + $0x54] sm:$0xf] %v470
      %750 = vst [vmem:[#allocation2 + $0x60] sm:$0xf] %v479
      %751 = vst [vmem:[#allocation2 + $0x6c] sm:$0xf] %v488
      %752 = vst [vmem:[#allocation2 + $0x78] sm:$0xf] %v497
      %753 = vst [vmem:[#allocation2 + $0x84] sm:$0xf] %v506
      %754 = vst [vmem:[#allocation2 + $0x90] sm:$0xf] %v515
      %755 = vst [vmem:[#allocation2 + $0x9c] sm:$0xf] %v524
      %756 = vst [vmem:[#allocation2 + $0xa8] sm:$0xf] %v533
      %757 = vst [vmem:[#allocation2 + $0xb4] sm:$0xf] %v542
      %758 = vst [vmem:[#allocation2 + $0xc0] sm:$0xf] %v551
      %759 = vst [vmem:[#allocation2 + $0xcc] sm:$0xf] %v560
      %760 = vst [vmem:[#allocation2 + $0xd8] sm:$0xf] %v569
      %761 = vst [vmem:[#allocation2 + $0xe4] sm:$0xf] %v578
      %762 = vst [vmem:[#allocation2 + $0xf0] sm:$0xf] %v587
      %763 = vst [vmem:[#allocation2 + $0xfc] sm:$0xf] %v596
      %764 = vst [vmem:[#allocation2 + $0x108] sm:$0xf] %v605
      %765 = vst [vmem:[#allocation2 + $0x114] sm:$0xf] %v614
      %766 = vst [vmem:[#allocation2 + $0x120] sm:$0xf] %v623
      %767 = vst [vmem:[#allocation2 + $0x12c] sm:$0xf] %v632
      %768 = vst [vmem:[#allocation2 + $0x138] sm:$0xf] %v641
      %769 = vst [vmem:[#allocation2 + $0x144] sm:$0xf] %v650
      %770 = vst [vmem:[#allocation2 + $0x150] sm:$0xf] %v659
      %771 = vst [vmem:[#allocation2 + $0x15c] sm:$0xf] %v668
      %772 = vst [vmem:[#allocation2 + $0x168] sm:$0xf] %v677
      %773 = vst [vmem:[#allocation2 + $0x174] sm:$0xf] %v686
      %774 = vst [vmem:[#allocation2 + $0x180] sm:$0xf] %v695
      %775 = vst [vmem:[#allocation2 + $0x18c] sm:$0xf] %v704
      %vm776 = vcmask 1040384
      %vm777 = vmand %vm776, %vm416
      %v778 = vld [vmem:[#allocation2 + $0x198] sm:$0x1]
      %v779 = vsel %vm777, %v705, %v778
      %780 = vst [vmem:[#allocation2 + $0x198] sm:$0x1] %v779
      %vm781 = vsmask.f32 3328
      %vm782 = vsmask.f32 7440
      %vm783 = vmor %vm781, %vm782
      %v784 = vrot.slane %v423, 5
      %v785 = vrot.slane %v420, 4
      %v786 = vor.u32 %v785, %v784
      %v787 = vrot.slane %v786, 4
      %v788 = vrot.slane %v431, 5
      %v789 = vsel %vm783, %v787, %v788
      %v790 = vrot.slane %v428, 4
      %v791 = vor.u32 %v790, %v788
      %v792 = vrot.slane %v791, 4
      %v793 = vrot.slane %v440, 5
      %v794 = vsel %vm783, %v792, %v793
      %v795 = vrot.slane %v437, 4
      %v796 = vor.u32 %v795, %v793
      %v797 = vrot.slane %v796, 4
      %v798 = vrot.slane %v449, 5
      %v799 = vsel %vm783, %v797, %v798
      %v800 = vrot.slane %v446, 4
      %v801 = vor.u32 %v800, %v798
      %v802 = vrot.slane %v801, 4
      %v803 = vrot.slane %v458, 5
      %v804 = vsel %vm783, %v802, %v803
      %v805 = vrot.slane %v455, 4
      %v806 = vor.u32 %v805, %v803
      %v807 = vrot.slane %v806, 4
      %v808 = vrot.slane %v467, 5
      %v809 = vsel %vm783, %v807, %v808
      %v810 = vrot.slane %v464, 4
      %v811 = vor.u32 %v810, %v808
      %v812 = vrot.slane %v811, 4
      %v813 = vrot.slane %v476, 5
      %v814 = vsel %vm783, %v812, %v813
      %v815 = vrot.slane %v473, 4
      %v816 = vor.u32 %v815, %v813
      %v817 = vrot.slane %v816, 4
      %v818 = vrot.slane %v485, 5
      %v819 = vsel %vm783, %v817, %v818
      %v820 = vrot.slane %v482, 4
      %v821 = vor.u32 %v820, %v818
      %v822 = vrot.slane %v821, 4
      %v823 = vrot.slane %v494, 5
      %v824 = vsel %vm783, %v822, %v823
      %v825 = vrot.slane %v491, 4
      %v826 = vor.u32 %v825, %v823
      %v827 = vrot.slane %v826, 4
      %v828 = vrot.slane %v503, 5
      %v829 = vsel %vm783, %v827, %v828
      %v830 = vrot.slane %v500, 4
      %v831 = vor.u32 %v830, %v828
      %v832 = vrot.slane %v831, 4
      %v833 = vrot.slane %v512, 5
      %v834 = vsel %vm783, %v832, %v833
      %v835 = vrot.slane %v509, 4
      %v836 = vor.u32 %v835, %v833
      %v837 = vrot.slane %v836, 4
      %v838 = vrot.slane %v521, 5
      %v839 = vsel %vm783, %v837, %v838
      %v840 = vrot.slane %v518, 4
      %v841 = vor.u32 %v840, %v838
      %v842 = vrot.slane %v841, 4
      %v843 = vrot.slane %v530, 5
      %v844 = vsel %vm783, %v842, %v843
      %v845 = vrot.slane %v527, 4
      %v846 = vor.u32 %v845, %v843
      %v847 = vrot.slane %v846, 4
      %v848 = vrot.slane %v539, 5
      %v849 = vsel %vm783, %v847, %v848
      %v850 = vrot.slane %v536, 4
      %v851 = vor.u32 %v850, %v848
      %v852 = vrot.slane %v851, 4
      %v853 = vrot.slane %v548, 5
      %v854 = vsel %vm783, %v852, %v853
      %v855 = vrot.slane %v545, 4
      %v856 = vor.u32 %v855, %v853
      %v857 = vrot.slane %v856, 4
      %v858 = vrot.slane %v557, 5
      %v859 = vsel %vm783, %v857, %v858
      %v860 = vrot.slane %v554, 4
      %v861 = vor.u32 %v860, %v858
      %v862 = vrot.slane %v861, 4
      %v863 = vrot.slane %v566, 5
      %v864 = vsel %vm783, %v862, %v863
      %v865 = vrot.slane %v563, 4
      %v866 = vor.u32 %v865, %v863
      %v867 = vrot.slane %v866, 4
      %v868 = vrot.slane %v575, 5
      %v869 = vsel %vm783, %v867, %v868
      %v870 = vrot.slane %v572, 4
      %v871 = vor.u32 %v870, %v868
      %v872 = vrot.slane %v871, 4
      %v873 = vrot.slane %v584, 5
      %v874 = vsel %vm783, %v872, %v873
      %v875 = vrot.slane %v581, 4
      %v876 = vor.u32 %v875, %v873
      %v877 = vrot.slane %v876, 4
      %v878 = vrot.slane %v593, 5
      %v879 = vsel %vm783, %v877, %v878
      %v880 = vrot.slane %v590, 4
      %v881 = vor.u32 %v880, %v878
      %v882 = vrot.slane %v881, 4
      %v883 = vrot.slane %v602, 5
      %v884 = vsel %vm783, %v882, %v883
      %v885 = vrot.slane %v599, 4
      %v886 = vor.u32 %v885, %v883
      %v887 = vrot.slane %v886, 4
      %v888 = vrot.slane %v611, 5
      %v889 = vsel %vm783, %v887, %v888
      %v890 = vrot.slane %v608, 4
      %v891 = vor.u32 %v890, %v888
      %v892 = vrot.slane %v891, 4
      %v893 = vrot.slane %v620, 5
      %v894 = vsel %vm783, %v892, %v893
      %v895 = vrot.slane %v617, 4
      %v896 = vor.u32 %v895, %v893
      %v897 = vrot.slane %v896, 4
      %v898 = vrot.slane %v629, 5
      %v899 = vsel %vm783, %v897, %v898
      %v900 = vrot.slane %v626, 4
      %v901 = vor.u32 %v900, %v898
      %v902 = vrot.slane %v901, 4
      %v903 = vrot.slane %v638, 5
      %v904 = vsel %vm783, %v902, %v903
      %v905 = vrot.slane %v635, 4
      %v906 = vor.u32 %v905, %v903
      %v907 = vrot.slane %v906, 4
      %v908 = vrot.slane %v647, 5
      %v909 = vsel %vm783, %v907, %v908
      %v910 = vrot.slane %v644, 4
      %v911 = vor.u32 %v910, %v908
      %v912 = vrot.slane %v911, 4
      %v913 = vrot.slane %v656, 5
      %v914 = vsel %vm783, %v912, %v913
      %v915 = vrot.slane %v653, 4
      %v916 = vor.u32 %v915, %v913
      %v917 = vrot.slane %v916, 4
      %v918 = vrot.slane %v665, 5
      %v919 = vsel %vm783, %v917, %v918
      %v920 = vrot.slane %v662, 4
      %v921 = vor.u32 %v920, %v918
      %v922 = vrot.slane %v921, 4
      %v923 = vrot.slane %v674, 5
      %v924 = vsel %vm783, %v922, %v923
      %v925 = vrot.slane %v671, 4
      %v926 = vor.u32 %v925, %v923
      %v927 = vrot.slane %v926, 4
      %v928 = vrot.slane %v683, 5
      %v929 = vsel %vm783, %v927, %v928
      %v930 = vrot.slane %v680, 4
      %v931 = vor.u32 %v930, %v928
      %v932 = vrot.slane %v931, 4
      %v933 = vrot.slane %v692, 5
      %v934 = vsel %vm783, %v932, %v933
      %v935 = vrot.slane %v689, 4
      %v936 = vor.u32 %v935, %v933
      %v937 = vrot.slane %v936, 4
      %v938 = vrot.slane %v701, 5
      %v939 = vsel %vm783, %v937, %v938
      %v940 = vrot.slane %v698, 4
      %v941 = vor.u32 %v940, %v938
      %v942 = vrot.slane %v941, 4
      %vm976 = vcmask 1043459
      %vm977 = vsmask.f32 7950
      %vm978 = vmand %vm976, %vm977
      %v979 = vld [vmem:[#allocation2 + $0x14] sm:$0x8]
      %v980 = vsel %vm978, %v784, %v979
      %981 = vst [vmem:[#allocation2 + $0x14] sm:$0x8] %v980
      %982 = vst [vmem:[#allocation2 + $0x20] sm:$0xf] %v789
      %983 = vst [vmem:[#allocation2 + $0x2c] sm:$0xf] %v794
      %984 = vst [vmem:[#allocation2 + $0x38] sm:$0xf] %v799
      %985 = vst [vmem:[#allocation2 + $0x44] sm:$0xf] %v804
      %986 = vst [vmem:[#allocation2 + $0x50] sm:$0xf] %v809
      %987 = vst [vmem:[#allocation2 + $0x5c] sm:$0xf] %v814
      %988 = vst [vmem:[#allocation2 + $0x68] sm:$0xf] %v819
      %989 = vst [vmem:[#allocation2 + $0x74] sm:$0xf] %v824
      %990 = vst [vmem:[#allocation2 + $0x80] sm:$0xf] %v829
      %991 = vst [vmem:[#allocation2 + $0x8c] sm:$0xf] %v834
      %992 = vst [vmem:[#allocation2 + $0x98] sm:$0xf] %v839
      %993 = vst [vmem:[#allocation2 + $0xa4] sm:$0xf] %v844
      %994 = vst [vmem:[#allocation2 + $0xb0] sm:$0xf] %v849
      %995 = vst [vmem:[#allocation2 + $0xbc] sm:$0xf] %v854
      %996 = vst [vmem:[#allocation2 + $0xc8] sm:$0xf] %v859
      %997 = vst [vmem:[#allocation2 + $0xd4] sm:$0xf] %v864
      %998 = vst [vmem:[#allocation2 + $0xe0] sm:$0xf] %v869
      %999 = vst [vmem:[#allocation2 + $0xec] sm:$0xf] %v874
      %1000 = vst [vmem:[#allocation2 + $0xf8] sm:$0xf] %v879
      %1001 = vst [vmem:[#allocation2 + $0x104] sm:$0xf] %v884
      %1002 = vst [vmem:[#allocation2 + $0x110] sm:$0xf] %v889
      %1003 = vst [vmem:[#allocation2 + $0x11c] sm:$0xf] %v894
      %1004 = vst [vmem:[#allocation2 + $0x128] sm:$0xf] %v899
      %1005 = vst [vmem:[#allocation2 + $0x134] sm:$0xf] %v904
      %1006 = vst [vmem:[#allocation2 + $0x140] sm:$0xf] %v909
      %1007 = vst [vmem:[#allocation2 + $0x14c] sm:$0xf] %v914
      %1008 = vst [vmem:[#allocation2 + $0x158] sm:$0xf] %v919
      %1009 = vst [vmem:[#allocation2 + $0x164] sm:$0xf] %v924
      %1010 = vst [vmem:[#allocation2 + $0x170] sm:$0xf] %v929
      %1011 = vst [vmem:[#allocation2 + $0x17c] sm:$0xf] %v934
      %1012 = vst [vmem:[#allocation2 + $0x188] sm:$0xf] %v939
      %vm1013 = vmand %vm739, %vm781
      %v1014 = vld [vmem:[#allocation2 + $0x194] sm:$0xf]
      %v1015 = vsel %vm1013, %v942, %v1014
      %1016 = vst [vmem:[#allocation2 + $0x194] sm:$0xf] %v1015
      %1017 = vst [vmem:[#allocation2] sm:$0xff] 0
      %1018 = vst [vmem:[#allocation2 + $0x8] sm:$0xf] 0
      %1019 = vst [vmem:[#allocation2 + $0xc] sm:$0xff] 0
      %1020 = vst [vmem:[#allocation2 + $0x14] sm:$0xf] 0
      %1021 = vst [vmem:[#allocation2 + $0x198] sm:$0xff] 0
      %1022 = vst [vmem:[#allocation2 + $0x1a0] sm:$0xf] 0
      %1023 = vst [vmem:[#allocation2 + $0x1a4] sm:$0xff] 0
      %1024 = vst [vmem:[#allocation2 + $0x1ac] sm:$0xf] 0
      %v1025 = vld [vmem:[#allocation2 + $0x18] sm:$0x1]
      %v1026 = vsel %vm777, 0, %v1025
      %1027 = vst [vmem:[#allocation2 + $0x18] sm:$0x1] %v1026
      %v1028 = vld [vmem:[#allocation2 + $0x2c] sm:$0x8]
      %v1029 = vsel %vm978, 0, %v1028
      %1030 = vst [vmem:[#allocation2 + $0x2c] sm:$0x8] %v1029
      %v1031 = vld [vmem:[#allocation2 + $0x30] sm:$0x1]
      %v1032 = vsel %vm777, 0, %v1031
      %1033 = vst [vmem:[#allocation2 + $0x30] sm:$0x1] %v1032
      %v1034 = vld [vmem:[#allocation2 + $0x44] sm:$0x8]
      %v1035 = vsel %vm978, 0, %v1034
      %1036 = vst [vmem:[#allocation2 + $0x44] sm:$0x8] %v1035
      %v1037 = vld [vmem:[#allocation2 + $0x48] sm:$0x1]
      %v1038 = vsel %vm777, 0, %v1037
      %1039 = vst [vmem:[#allocation2 + $0x48] sm:$0x1] %v1038
      %v1040 = vld [vmem:[#allocation2 + $0x5c] sm:$0x8]
      %v1041 = vsel %vm978, 0, %v1040
      %1042 = vst [vmem:[#allocation2 + $0x5c] sm:$0x8] %v1041
      %v1043 = vld [vmem:[#allocation2 + $0x60] sm:$0x1]
      %v1044 = vsel %vm777, 0, %v1043
      %1045 = vst [vmem:[#allocation2 + $0x60] sm:$0x1] %v1044
      %v1046 = vld [vmem:[#allocation2 + $0x74] sm:$0x8]
      %v1047 = vsel %vm978, 0, %v1046
      %1048 = vst [vmem:[#allocation2 + $0x74] sm:$0x8] %v1047
      %v1049 = vld [vmem:[#allocation2 + $0x78] sm:$0x1]
      %v1050 = vsel %vm777, 0, %v1049
      %1051 = vst [vmem:[#allocation2 + $0x78] sm:$0x1] %v1050
      %v1052 = vld [vmem:[#allocation2 + $0x8c] sm:$0x8]
      %v1053 = vsel %vm978, 0, %v1052
      %1054 = vst [vmem:[#allocation2 + $0x8c] sm:$0x8] %v1053
      %v1055 = vld [vmem:[#allocation2 + $0x90] sm:$0x1]
      %v1056 = vsel %vm777, 0, %v1055
      %1057 = vst [vmem:[#allocation2 + $0x90] sm:$0x1] %v1056
      %v1058 = vld [vmem:[#allocation2 + $0xa4] sm:$0x8]
      %v1059 = vsel %vm978, 0, %v1058
      %1060 = vst [vmem:[#allocation2 + $0xa4] sm:$0x8] %v1059
      %v1061 = vld [vmem:[#allocation2 + $0xa8] sm:$0x1]
      %v1062 = vsel %vm777, 0, %v1061
      %1063 = vst [vmem:[#allocation2 + $0xa8] sm:$0x1] %v1062
      %v1064 = vld [vmem:[#allocation2 + $0xbc] sm:$0x8]
      %v1065 = vsel %vm978, 0, %v1064
      %1066 = vst [vmem:[#allocation2 + $0xbc] sm:$0x8] %v1065
      %v1067 = vld [vmem:[#allocation2 + $0xc0] sm:$0x1]
      %v1068 = vsel %vm777, 0, %v1067
      %1069 = vst [vmem:[#allocation2 + $0xc0] sm:$0x1] %v1068
      %v1070 = vld [vmem:[#allocation2 + $0xd4] sm:$0x8]
      %v1071 = vsel %vm978, 0, %v1070
      %1072 = vst [vmem:[#allocation2 + $0xd4] sm:$0x8] %v1071
      %v1073 = vld [vmem:[#allocation2 + $0xd8] sm:$0x1]
      %v1074 = vsel %vm777, 0, %v1073
      %1075 = vst [vmem:[#allocation2 + $0xd8] sm:$0x1] %v1074
      %v1076 = vld [vmem:[#allocation2 + $0xec] sm:$0x8]
      %v1077 = vsel %vm978, 0, %v1076
      %1078 = vst [vmem:[#allocation2 + $0xec] sm:$0x8] %v1077
      %v1079 = vld [vmem:[#allocation2 + $0xf0] sm:$0x1]
      %v1080 = vsel %vm777, 0, %v1079
      %1081 = vst [vmem:[#allocation2 + $0xf0] sm:$0x1] %v1080
      %v1082 = vld [vmem:[#allocation2 + $0x104] sm:$0x8]
      %v1083 = vsel %vm978, 0, %v1082
      %1084 = vst [vmem:[#allocation2 + $0x104] sm:$0x8] %v1083
      %v1085 = vld [vmem:[#allocation2 + $0x108] sm:$0x1]
      %v1086 = vsel %vm777, 0, %v1085
      %1087 = vst [vmem:[#allocation2 + $0x108] sm:$0x1] %v1086
      %v1088 = vld [vmem:[#allocation2 + $0x11c] sm:$0x8]
      %v1089 = vsel %vm978, 0, %v1088
      %1090 = vst [vmem:[#allocation2 + $0x11c] sm:$0x8] %v1089
      %v1091 = vld [vmem:[#allocation2 + $0x120] sm:$0x1]
      %v1092 = vsel %vm777, 0, %v1091
      %1093 = vst [vmem:[#allocation2 + $0x120] sm:$0x1] %v1092
      %v1094 = vld [vmem:[#allocation2 + $0x134] sm:$0x8]
      %v1095 = vsel %vm978, 0, %v1094
      %1096 = vst [vmem:[#allocation2 + $0x134] sm:$0x8] %v1095
      %v1097 = vld [vmem:[#allocation2 + $0x138] sm:$0x1]
      %v1098 = vsel %vm777, 0, %v1097
      %1099 = vst [vmem:[#allocation2 + $0x138] sm:$0x1] %v1098
      %v1100 = vld [vmem:[#allocation2 + $0x14c] sm:$0x8]
      %v1101 = vsel %vm978, 0, %v1100
      %1102 = vst [vmem:[#allocation2 + $0x14c] sm:$0x8] %v1101
      %v1103 = vld [vmem:[#allocation2 + $0x150] sm:$0x1]
      %v1104 = vsel %vm777, 0, %v1103
      %1105 = vst [vmem:[#allocation2 + $0x150] sm:$0x1] %v1104
      %v1106 = vld [vmem:[#allocation2 + $0x164] sm:$0x8]
      %v1107 = vsel %vm978, 0, %v1106
      %1108 = vst [vmem:[#allocation2 + $0x164] sm:$0x8] %v1107
      %v1109 = vld [vmem:[#allocation2 + $0x168] sm:$0x1]
      %v1110 = vsel %vm777, 0, %v1109
      %1111 = vst [vmem:[#allocation2 + $0x168] sm:$0x1] %v1110
      %v1112 = vld [vmem:[#allocation2 + $0x17c] sm:$0x8]
      %v1113 = vsel %vm978, 0, %v1112
      %1114 = vst [vmem:[#allocation2 + $0x17c] sm:$0x8] %v1113
      %v1115 = vld [vmem:[#allocation2 + $0x180] sm:$0x1]
      %v1116 = vsel %vm777, 0, %v1115
      %1117 = vst [vmem:[#allocation2 + $0x180] sm:$0x1] %v1116
      %v1118 = vld [vmem:[#allocation2 + $0x194] sm:$0x8]
      %v1119 = vsel %vm978, 0, %v1118
      %1120 = vst [vmem:[#allocation2 + $0x194] sm:$0x8] %v1119
      %v1121 = vld [vmem:[#allocation2] sm:$0xff]
      %v1122 = vld [vmem:[#allocation2 + $0x8] sm:$0xf]
      %v1123 = vld [vmem:[#allocation2 + $0xc] sm:$0xff]
      %v1124 = vld [vmem:[#allocation2 + $0x14] sm:$0xf]
      %v1125 = vld [vmem:[#allocation2 + $0x18] sm:$0xff]
      %v1126 = vld [vmem:[#allocation2 + $0x20] sm:$0xf]
      %v1127 = vld [vmem:[#allocation2 + $0x24] sm:$0xff]
      %v1128 = vld [vmem:[#allocation2 + $0x2c] sm:$0xf]
      %v1129 = vld [vmem:[#allocation2 + $0x30] sm:$0xff]
      %v1130 = vld [vmem:[#allocation2 + $0x38] sm:$0xf]
      %v1131 = vld [vmem:[#allocation2 + $0x3c] sm:$0xff]
      %v1132 = vld [vmem:[#allocation2 + $0x44] sm:$0xf]
      %v1133 = vld [vmem:[#allocation2 + $0x48] sm:$0xff]
      %v1134 = vld [vmem:[#allocation2 + $0x50] sm:$0xf]
      %v1135 = vld [vmem:[#allocation2 + $0x54] sm:$0xff]
      %v1136 = vld [vmem:[#allocation2 + $0x5c] sm:$0xf]
      %v1137 = vld [vmem:[#allocation2 + $0x60] sm:$0xff]
      %v1138 = vld [vmem:[#allocation2 + $0x68] sm:$0xf]
      %v1139 = vld [vmem:[#allocation2 + $0x6c] sm:$0xff]
      %v1140 = vld [vmem:[#allocation2 + $0x74] sm:$0xf]
      %v1141 = vld [vmem:[#allocation2 + $0x78] sm:$0xff]
      %v1142 = vld [vmem:[#allocation2 + $0x80] sm:$0xf]
      %v1143 = vld [vmem:[#allocation2 + $0x84] sm:$0xff]
      %v1144 = vld [vmem:[#allocation2 + $0x8c] sm:$0xf]
      %v1145 = vld [vmem:[#allocation2 + $0x90] sm:$0xff]
      %v1146 = vld [vmem:[#allocation2 + $0x98] sm:$0xf]
      %v1147 = vld [vmem:[#allocation2 + $0x9c] sm:$0xff]
      %v1148 = vld [vmem:[#allocation2 + $0xa4] sm:$0xf]
      %v1149 = vld [vmem:[#allocation2 + $0xa8] sm:$0xff]
      %v1150 = vld [vmem:[#allocation2 + $0xb0] sm:$0xf]
      %v1151 = vld [vmem:[#allocation2 + $0xb4] sm:$0xff]
      %v1152 = vld [vmem:[#allocation2 + $0xbc] sm:$0xf]
      %v1153 = vld [vmem:[#allocation2 + $0xc0] sm:$0xff]
      %v1154 = vld [vmem:[#allocation2 + $0xc8] sm:$0xf]
      %v1155 = vld [vmem:[#allocation2 + $0xcc] sm:$0xff]
      %v1156 = vld [vmem:[#allocation2 + $0xd4] sm:$0xf]
      %v1157 = vld [vmem:[#allocation2 + $0xd8] sm:$0xff]
      %v1158 = vld [vmem:[#allocation2 + $0xe0] sm:$0xf]
      %v1159 = vld [vmem:[#allocation2 + $0xe4] sm:$0xff]
      %v1160 = vld [vmem:[#allocation2 + $0xec] sm:$0xf]
      %v1161 = vld [vmem:[#allocation2 + $0xf0] sm:$0xff]
      %v1162 = vld [vmem:[#allocation2 + $0xf8] sm:$0xf]
      %v1163 = vld [vmem:[#allocation2 + $0xfc] sm:$0xff]
      %v1164 = vld [vmem:[#allocation2 + $0x104] sm:$0xf]
      %v1165 = vld [vmem:[#allocation2 + $0x108] sm:$0xff]
      %v1166 = vld [vmem:[#allocation2 + $0x110] sm:$0xf]
      %v1167 = vld [vmem:[#allocation2 + $0x114] sm:$0xff]
      %v1168 = vld [vmem:[#allocation2 + $0x11c] sm:$0xf]
      %v1169 = vld [vmem:[#allocation2 + $0x120] sm:$0xff]
      %v1170 = vld [vmem:[#allocation2 + $0x128] sm:$0xf]
      %v1171 = vld [vmem:[#allocation2 + $0x12c] sm:$0xff]
      %v1172 = vld [vmem:[#allocation2 + $0x134] sm:$0xf]
      %v1173 = vld [vmem:[#allocation2 + $0x138] sm:$0xff]
      %v1174 = vld [vmem:[#allocation2 + $0x140] sm:$0xf]
      %v1175 = vld [vmem:[#allocation2 + $0x144] sm:$0xff]
      %v1176 = vld [vmem:[#allocation2 + $0x14c] sm:$0xf]
      %v1177 = vld [vmem:[#allocation2 + $0x150] sm:$0xff]
      %v1178 = vld [vmem:[#allocation2 + $0x158] sm:$0xf]
      %v1179 = vld [vmem:[#allocation2 + $0x15c] sm:$0xff]
      %v1180 = vld [vmem:[#allocation2 + $0x164] sm:$0xf]
      %v1181 = vld [vmem:[#allocation2 + $0x168] sm:$0xff]
      %v1182 = vld [vmem:[#allocation2 + $0x170] sm:$0xf]
      %v1183 = vld [vmem:[#allocation2 + $0x174] sm:$0xff]
      %v1184 = vld [vmem:[#allocation2 + $0x17c] sm:$0xf]
      %v1185 = vld [vmem:[%s1] sm:$0xf]
      %v1186 = vld [vmem:[%s1 + $0x4] sm:$0xf]
      %v1187 = vld [vmem:[%s1 + $0x8] sm:$0xf]
      %v1188 = vld [vmem:[%s1 + $0xc] sm:$0xf]
      %v1189 = vld [vmem:[%s1 + $0x10] sm:$0xf]
      %v1190 = vld [vmem:[%s1 + $0x14] sm:$0xf]
      %v1191 = vld [vmem:[%s1 + $0x18] sm:$0xf]
      %v1192 = vld [vmem:[%s1 + $0x1c] sm:$0xf]
      %v1193 = vld [vmem:[%s1 + $0x20] sm:$0xf]
      %v1194 = vld [vmem:[%s1 + $0x24] sm:$0xf]
      %v1195 = vld [vmem:[%s1 + $0x28] sm:$0xf]
      %v1196 = vld [vmem:[%s1 + $0x2c] sm:$0xf]
      %v1197 = vld [vmem:[%s1 + $0x30] sm:$0xf]
      %v1198 = vld [vmem:[%s1 + $0x34] sm:$0xf]
      %v1199 = vld [vmem:[%s1 + $0x38] sm:$0xf]
      %v1200 = vld [vmem:[%s1 + $0x3c] sm:$0xf]
      %v1201 = vld [vmem:[%s1 + $0x40] sm:$0xf]
      %v1202 = vld [vmem:[%s1 + $0x44] sm:$0xf]
      %v1203 = vld [vmem:[%s1 + $0x48] sm:$0xf]
      %v1204 = vld [vmem:[%s1 + $0x4c] sm:$0xf]
      %v1205 = vld [vmem:[%s1 + $0x50] sm:$0xf]
      %v1206 = vld [vmem:[%s1 + $0x54] sm:$0xf]
      %v1207 = vld [vmem:[%s1 + $0x58] sm:$0xf]
      %v1208 = vld [vmem:[%s1 + $0x5c] sm:$0xf]
      %v1209 = vld [vmem:[%s1 + $0x60] sm:$0xf]
      %v1210 = vld [vmem:[%s1 + $0x64] sm:$0xf]
      %v1211 = vld [vmem:[%s1 + $0x68] sm:$0xf]
      %v1212 = vld [vmem:[%s1 + $0x6c] sm:$0xf]
      %v1213 = vld [vmem:[%s1 + $0x70] sm:$0xf]
      %v1214 = vld [vmem:[%s1 + $0x74] sm:$0xf]
      %v1215 = vld [vmem:[%s1 + $0x78] sm:$0xf]
      %v1216 = vld [vmem:[%s1 + $0x7c] sm:$0xf]
      %v1217 = vld [vmem:[%s1 + $0x80] sm:$0xf]
      %v1218 = vld [vmem:[%s1 + $0x84] sm:$0xf]
      %v1219 = vld [vmem:[%s1 + $0x88] sm:$0xf]
      %v1220 = vld [vmem:[%s1 + $0x8c] sm:$0xf]
      %v1221 = vld [vmem:[%s1 + $0x90] sm:$0xf]
      %v1222 = vld [vmem:[%s1 + $0x94] sm:$0xf]
      %v1223 = vld [vmem:[%s1 + $0x98] sm:$0xf]
      %v1224 = vld [vmem:[%s1 + $0x9c] sm:$0xf]
      %v1225 = vld [vmem:[%s1 + $0xa0] sm:$0xf]
      %v1226 = vld [vmem:[%s1 + $0xa4] sm:$0xf]
      %v1227 = vld [vmem:[%s1 + $0xa8] sm:$0xf]
      %v1228 = vld [vmem:[%s1 + $0xac] sm:$0xf]
      %v1229 = vld [vmem:[%s1 + $0xb0] sm:$0xf]
      %v1230 = vld [vmem:[%s1 + $0xb4] sm:$0xf]
      %v1231 = vld [vmem:[%s1 + $0xb8] sm:$0xf]
      %v1232 = vld [vmem:[%s1 + $0xbc] sm:$0xf]
      %v1233 = vld [vmem:[#allocation2 + $0x180] sm:$0xff]
      %v1234 = vld [vmem:[#allocation2 + $0x188] sm:$0xf]
      %v1235 = vld [vmem:[#allocation2 + $0x18c] sm:$0xff]
      %v1236 = vld [vmem:[#allocation2 + $0x194] sm:$0xf]
      %s1237 = scalar_lea.vmem %s1, 192
      %v1238 = vld [vmem:[%s1237] sm:$0xf]
      %v1239 = vld [vmem:[%s1237 + $0x4] sm:$0xf]
      %v1240 = vld [vmem:[%s1237 + $0x8] sm:$0xf]
      %v1241 = vld [vmem:[%s1237 + $0xc] sm:$0xf]
      %v1242 = vld [vmem:[%s1237 + $0x10] sm:$0xf]
      %v1243 = vld [vmem:[%s1237 + $0x14] sm:$0xf]
      %v1244 = vld [vmem:[%s1237 + $0x18] sm:$0xf]
      %v1245 = vld [vmem:[%s1237 + $0x1c] sm:$0xf]
      %v1246 = vld [vmem:[%s1237 + $0x20] sm:$0xf]
      %v1247 = vld [vmem:[%s1237 + $0x24] sm:$0xf]
      %v1248 = vld [vmem:[%s1237 + $0x28] sm:$0xf]
      %v1249 = vld [vmem:[%s1237 + $0x2c] sm:$0xf]
      %v1250 = vld [vmem:[%s1237 + $0x30] sm:$0xf]
      %v1251 = vld [vmem:[%s1237 + $0x34] sm:$0xf]
      %v1252 = vld [vmem:[%s1237 + $0x38] sm:$0xf]
      %v1253 = vld [vmem:[%s1237 + $0x3c] sm:$0xf]
      %v1254 = vld [vmem:[%s1237 + $0x40] sm:$0xf]
      %v1255 = vld [vmem:[%s1237 + $0x44] sm:$0xf]
      %v1256 = vld [vmem:[%s1237 + $0x48] sm:$0xf]
      %v1257 = vld [vmem:[%s1237 + $0x4c] sm:$0xf]
      %v1258 = vld [vmem:[%s1237 + $0x50] sm:$0xf]
      %v1259 = vld [vmem:[%s1237 + $0x54] sm:$0xf]
      %v1260 = vld [vmem:[%s1237 + $0x58] sm:$0xf]
      %v1261 = vld [vmem:[%s1237 + $0x5c] sm:$0xf]
      %v1262 = vld [vmem:[%s1237 + $0x60] sm:$0xf]
      %v1263 = vld [vmem:[%s1237 + $0x64] sm:$0xf]
      %v1264 = vld [vmem:[%s1237 + $0x68] sm:$0xf]
      %v1265 = vld [vmem:[%s1237 + $0x6c] sm:$0xf]
      %v1266 = vld [vmem:[%s1237 + $0x70] sm:$0xf]
      %v1267 = vld [vmem:[%s1237 + $0x74] sm:$0xf]
      %v1268 = vld [vmem:[%s1237 + $0x78] sm:$0xf]
      %v1269 = vld [vmem:[%s1237 + $0x7c] sm:$0xf]
      %v1270 = vld [vmem:[%s1237 + $0x80] sm:$0xf]
      %v1271 = vld [vmem:[%s1237 + $0x84] sm:$0xf]
      %v1272 = vld [vmem:[%s1237 + $0x88] sm:$0xf]
      %v1273 = vld [vmem:[%s1237 + $0x8c] sm:$0xf]
      %v1274 = vld [vmem:[%s1237 + $0x90] sm:$0xf]
      %v1275 = vld [vmem:[%s1237 + $0x94] sm:$0xf]
      %v1276 = vld [vmem:[%s1237 + $0x98] sm:$0xf]
      %v1277 = vld [vmem:[%s1237 + $0x9c] sm:$0xf]
      %v1278 = vld [vmem:[%s1237 + $0xa0] sm:$0xf]
      %v1279 = vld [vmem:[%s1237 + $0xa4] sm:$0xf]
      %v1280 = vld [vmem:[%s1237 + $0xa8] sm:$0xf]
      %v1281 = vld [vmem:[%s1237 + $0xac] sm:$0xf]
      %v1282 = vld [vmem:[%s1237 + $0xb0] sm:$0xf]
      %v1283 = vld [vmem:[%s1237 + $0xb4] sm:$0xf]
      %v1284 = vld [vmem:[%s1237 + $0xb8] sm:$0xf]
      %v1285 = vld [vmem:[%s1237 + $0xbc] sm:$0xf]
      %v1350 = vunpack.c.l.b16 %v1125
      %v1351 = vunpack.c.h.b16 %v1125
      %v1352 = vunpack.c.l.b16 %v1126
      %v1353 = vunpack.c.l.b16 %v1127
      %v1354 = vunpack.c.h.b16 %v1127
      %v1355 = vunpack.c.l.b16 %v1128
      %v1356 = vunpack.c.l.b16 %v1129
      %v1357 = vunpack.c.h.b16 %v1129
      %v1358 = vunpack.c.l.b16 %v1130
      %v1359 = vunpack.c.l.b16 %v1131
      %v1360 = vunpack.c.h.b16 %v1131
      %v1361 = vunpack.c.l.b16 %v1132
      %v1362 = vunpack.c.l.b16 %v1133
      %v1363 = vunpack.c.h.b16 %v1133
      %v1364 = vunpack.c.l.b16 %v1134
      %v1365 = vunpack.c.l.b16 %v1135
      %v1366 = vunpack.c.h.b16 %v1135
      %v1367 = vunpack.c.l.b16 %v1136
      %v1368 = vunpack.c.l.b16 %v1137
      %v1369 = vunpack.c.h.b16 %v1137
      %v1370 = vunpack.c.l.b16 %v1138
      %v1371 = vunpack.c.l.b16 %v1139
      %v1372 = vunpack.c.h.b16 %v1139
      %v1373 = vunpack.c.l.b16 %v1140
      %v1374 = vunpack.c.l.b16 %v1141
      %v1375 = vunpack.c.h.b16 %v1141
      %v1376 = vunpack.c.l.b16 %v1142
      %v1377 = vunpack.c.l.b16 %v1143
      %v1378 = vunpack.c.h.b16 %v1143
      %v1379 = vunpack.c.l.b16 %v1144
      %v1380 = vunpack.c.l.b16 %v1145
      %v1381 = vunpack.c.h.b16 %v1145
      %v1382 = vunpack.c.l.b16 %v1146
      %v1383 = vunpack.c.l.b16 %v1147
      %v1384 = vunpack.c.h.b16 %v1147
      %v1385 = vunpack.c.l.b16 %v1148
      %v1386 = vunpack.c.l.b16 %v1149
      %v1387 = vunpack.c.h.b16 %v1149
      %v1388 = vunpack.c.l.b16 %v1150
      %v1389 = vunpack.c.l.b16 %v1151
      %v1390 = vunpack.c.h.b16 %v1151
      %v1391 = vunpack.c.l.b16 %v1152
      %v1392 = vunpack.c.l.b16 %v1153
      %v1393 = vunpack.c.h.b16 %v1153
      %v1394 = vunpack.c.l.b16 %v1154
      %v1395 = vunpack.c.l.b16 %v1155
      %v1396 = vunpack.c.h.b16 %v1155
      %v1397 = vunpack.c.l.b16 %v1156
      %v1398 = vunpack.c.l.b16 %v1157
      %v1399 = vunpack.c.h.b16 %v1157
      %v1400 = vunpack.c.l.b16 %v1158
      %v1401 = vunpack.c.l.b16 %v1159
      %v1402 = vunpack.c.h.b16 %v1159
      %v1403 = vunpack.c.l.b16 %v1160
      %v1404 = vunpack.c.l.b16 %v1161
      %v1405 = vunpack.c.h.b16 %v1161
      %v1406 = vunpack.c.l.b16 %v1162
      %v1407 = vunpack.c.l.b16 %v1163
      %v1408 = vunpack.c.h.b16 %v1163
      %v1409 = vunpack.c.l.b16 %v1164
      %v1410 = vunpack.c.l.b16 %v1165
      %v1411 = vunpack.c.h.b16 %v1165
      %v1412 = vunpack.c.l.b16 %v1166
      %v1413 = vunpack.c.l.b16 %v1167
      %v1414 = vunpack.c.h.b16 %v1167
      %v1415 = vunpack.c.l.b16 %v1168
      %v1416 = vunpack.c.l.b16 %v1169
      %v1417 = vunpack.c.h.b16 %v1169
      %v1418 = vunpack.c.l.b16 %v1170
      %v1419 = vunpack.c.l.b16 %v1171
      %v1420 = vunpack.c.h.b16 %v1171
      %v1421 = vunpack.c.l.b16 %v1172
      %v1422 = vunpack.c.l.b16 %v1173
      %v1423 = vunpack.c.h.b16 %v1173
      %v1424 = vunpack.c.l.b16 %v1174
      %v1425 = vunpack.c.l.b16 %v1175
      %v1426 = vunpack.c.h.b16 %v1175
      %v1427 = vunpack.c.l.b16 %v1176
      %v1428 = vunpack.c.l.b16 %v1177
      %v1429 = vunpack.c.h.b16 %v1177
      %v1430 = vunpack.c.l.b16 %v1178
      %v1431 = vunpack.c.l.b16 %v1179
      %v1432 = vunpack.c.h.b16 %v1179
      %v1433 = vunpack.c.l.b16 %v1180
      %v1434 = vunpack.c.l.b16 %v1181
      %v1435 = vunpack.c.h.b16 %v1181
      %v1436 = vunpack.c.l.b16 %v1182
      %v1437 = vunpack.c.l.b16 %v1183
      %v1438 = vunpack.c.h.b16 %v1183
      %v1439 = vunpack.c.l.b16 %v1184
      %v1440 = vunpack.c.l.b16 %v1233
      %v1441 = vunpack.c.h.b16 %v1233
      %v1442 = vunpack.c.l.b16 %v1234
      %v1443 = vunpack.c.l.b16 %v1235
      %v1444 = vunpack.c.h.b16 %v1235
      %v1445 = vunpack.c.l.b16 %v1236
      %v1446 = vpack.c.b16 %v1353, %v1350
      %v1447 = vpack.c.b16 %v1354, %v1351
      %v1448 = vpack.c.b16 %v1355, %v1352
      %v1449 = vpack.c.b16 %v1359, %v1356
      %v1450 = vpack.c.b16 %v1360, %v1357
      %v1451 = vpack.c.b16 %v1361, %v1358
      %v1452 = vpack.c.b16 %v1365, %v1362
      %v1453 = vpack.c.b16 %v1366, %v1363
      %v1454 = vpack.c.b16 %v1367, %v1364
      %v1455 = vpack.c.b16 %v1371, %v1368
      %v1456 = vpack.c.b16 %v1372, %v1369
      %v1457 = vpack.c.b16 %v1373, %v1370
      %v1458 = vpack.c.b16 %v1377, %v1374
      %v1459 = vpack.c.b16 %v1378, %v1375
      %v1460 = vpack.c.b16 %v1379, %v1376
      %v1461 = vpack.c.b16 %v1383, %v1380
      %v1462 = vpack.c.b16 %v1384, %v1381
      %v1463 = vpack.c.b16 %v1385, %v1382
      %v1464 = vpack.c.b16 %v1389, %v1386
      %v1465 = vpack.c.b16 %v1390, %v1387
      %v1466 = vpack.c.b16 %v1391, %v1388
      %v1467 = vpack.c.b16 %v1395, %v1392
      %v1468 = vpack.c.b16 %v1396, %v1393
      %v1469 = vpack.c.b16 %v1397, %v1394
      %v1470 = vpack.c.b16 %v1401, %v1398
      %v1471 = vpack.c.b16 %v1402, %v1399
      %v1472 = vpack.c.b16 %v1403, %v1400
      %v1473 = vpack.c.b16 %v1407, %v1404
      %v1474 = vpack.c.b16 %v1408, %v1405
      %v1475 = vpack.c.b16 %v1409, %v1406
      %v1476 = vpack.c.b16 %v1413, %v1410
      %v1477 = vpack.c.b16 %v1414, %v1411
      %v1478 = vpack.c.b16 %v1415, %v1412
      %v1479 = vpack.c.b16 %v1419, %v1416
      %v1480 = vpack.c.b16 %v1420, %v1417
      %v1481 = vpack.c.b16 %v1421, %v1418
      %v1482 = vpack.c.b16 %v1425, %v1422
      %v1483 = vpack.c.b16 %v1426, %v1423
      %v1484 = vpack.c.b16 %v1427, %v1424
      %v1485 = vpack.c.b16 %v1431, %v1428
      %v1486 = vpack.c.b16 %v1432, %v1429
      %v1487 = vpack.c.b16 %v1433, %v1430
      %v1488 = vpack.c.b16 %v1437, %v1434
      %v1489 = vpack.c.b16 %v1438, %v1435
      %v1490 = vpack.c.b16 %v1439, %v1436
      %v1491 = vpack.c.b16 %v1443, %v1440
      %v1492 = vpack.c.b16 %v1444, %v1441
      %v1493 = vpack.c.b16 %v1445, %v1442
      %v1590 = vunpack.c.l.b16 %v1238
      %v1591 = vunpack.c.l.b16 %v1239
      %v1592 = vunpack.c.l.b16 %v1240
      %v1593 = vunpack.c.l.b16 %v1241
      %v1594 = vunpack.c.l.b16 %v1242
      %v1595 = vunpack.c.l.b16 %v1243
      %v1596 = vunpack.c.l.b16 %v1244
      %v1597 = vunpack.c.l.b16 %v1245
      %v1598 = vunpack.c.l.b16 %v1246
      %v1599 = vunpack.c.l.b16 %v1247
      %v1600 = vunpack.c.l.b16 %v1248
      %v1601 = vunpack.c.l.b16 %v1249
      %v1602 = vunpack.c.l.b16 %v1250
      %v1603 = vunpack.c.l.b16 %v1251
      %v1604 = vunpack.c.l.b16 %v1252
      %v1605 = vunpack.c.l.b16 %v1253
      %v1606 = vunpack.c.l.b16 %v1254
      %v1607 = vunpack.c.l.b16 %v1255
      %v1608 = vunpack.c.l.b16 %v1256
      %v1609 = vunpack.c.l.b16 %v1257
      %v1610 = vunpack.c.l.b16 %v1258
      %v1611 = vunpack.c.l.b16 %v1259
      %v1612 = vunpack.c.l.b16 %v1260
      %v1613 = vunpack.c.l.b16 %v1261
      %v1614 = vunpack.c.l.b16 %v1262
      %v1615 = vunpack.c.l.b16 %v1263
      %v1616 = vunpack.c.l.b16 %v1264
      %v1617 = vunpack.c.l.b16 %v1265
      %v1618 = vunpack.c.l.b16 %v1266
      %v1619 = vunpack.c.l.b16 %v1267
      %v1620 = vunpack.c.l.b16 %v1268
      %v1621 = vunpack.c.l.b16 %v1269
      %v1622 = vunpack.c.l.b16 %v1270
      %v1623 = vunpack.c.l.b16 %v1271
      %v1624 = vunpack.c.l.b16 %v1272
      %v1625 = vunpack.c.l.b16 %v1273
      %v1626 = vunpack.c.l.b16 %v1274
      %v1627 = vunpack.c.l.b16 %v1275
      %v1628 = vunpack.c.l.b16 %v1276
      %v1629 = vunpack.c.l.b16 %v1277
      %v1630 = vunpack.c.l.b16 %v1278
      %v1631 = vunpack.c.l.b16 %v1279
      %v1632 = vunpack.c.l.b16 %v1280
      %v1633 = vunpack.c.l.b16 %v1281
      %v1634 = vunpack.c.l.b16 %v1282
      %v1635 = vunpack.c.l.b16 %v1283
      %v1636 = vunpack.c.l.b16 %v1284
      %v1637 = vunpack.c.l.b16 %v1285
      %v1638 = vpack.c.b16 %v1591, %v1590
      %v1639 = vpack.c.b16 %v1593, %v1592
      %v1640 = vpack.c.b16 %v1595, %v1594
      %v1641 = vpack.c.b16 %v1597, %v1596
      %v1642 = vpack.c.b16 %v1599, %v1598
      %v1643 = vpack.c.b16 %v1601, %v1600
      %v1644 = vpack.c.b16 %v1603, %v1602
      %v1645 = vpack.c.b16 %v1605, %v1604
      %v1646 = vpack.c.b16 %v1607, %v1606
      %v1647 = vpack.c.b16 %v1609, %v1608
      %v1648 = vpack.c.b16 %v1611, %v1610
      %v1649 = vpack.c.b16 %v1613, %v1612
      %v1650 = vpack.c.b16 %v1615, %v1614
      %v1651 = vpack.c.b16 %v1617, %v1616
      %v1652 = vpack.c.b16 %v1619, %v1618
      %v1653 = vpack.c.b16 %v1621, %v1620
      %v1654 = vpack.c.b16 %v1623, %v1622
      %v1655 = vpack.c.b16 %v1625, %v1624
      %v1656 = vpack.c.b16 %v1627, %v1626
      %v1657 = vpack.c.b16 %v1629, %v1628
      %v1658 = vpack.c.b16 %v1631, %v1630
      %v1659 = vpack.c.b16 %v1633, %v1632
      %v1660 = vpack.c.b16 %v1635, %v1634
      %v1661 = vpack.c.b16 %v1637, %v1636
      %1686 = vmatpush.bf16.msra.mxu0 %v1645
      %1687 = vmatpush.bf16.msra.mxu0 %v1644
      %1688 = vmatpush.bf16.msra.mxu0 %v1643
      %1689 = vmatpush.bf16.msra.mxu0 %v1642
      %1690 = vmatpush.bf16.msra.mxu0 %v1641
      %1691 = vmatpush.bf16.msra.mxu0 %v1640
      %1692 = vmatpush.bf16.msra.mxu0 %v1639
      %1693 = vmatpush.bf16.msra.mxu0 %v1638
      %1694 = vmatmul.bf16.gmra.mxu0 %v1446
      %v1695 = vpop.f32.mrf.mxu0
      %v1696 = vadd.f32 0.0, %v1695
      %v1697 = vpop.f32.mrf.mxu0
      %v1698 = vadd.f32 0.0, %v1697
      %1699 = vmatmul.bf16.gmra.mxu0 %v1449
      %v1700 = vpop.f32.mrf.mxu0
      %v1701 = vadd.f32 0.0, %v1700
      %v1702 = vpop.f32.mrf.mxu0
      %v1703 = vadd.f32 0.0, %v1702
      %1704 = vmatmul.bf16.gmra.mxu0 %v1452
      %v1705 = vpop.f32.mrf.mxu0
      %v1706 = vadd.f32 0.0, %v1705
      %v1707 = vpop.f32.mrf.mxu0
      %v1708 = vadd.f32 0.0, %v1707
      %1709 = vmatmul.bf16.gmra.mxu0 %v1455
      %v1710 = vpop.f32.mrf.mxu0
      %v1711 = vadd.f32 0.0, %v1710
      %v1712 = vpop.f32.mrf.mxu0
      %v1713 = vadd.f32 0.0, %v1712
      %1714 = vmatmul.bf16.gmra.mxu0 %v1458
      %v1715 = vpop.f32.mrf.mxu0
      %v1716 = vadd.f32 0.0, %v1715
      %v1717 = vpop.f32.mrf.mxu0
      %v1718 = vadd.f32 0.0, %v1717
      %1719 = vmatmul.bf16.gmra.mxu0 %v1461
      %v1720 = vpop.f32.mrf.mxu0
      %v1721 = vadd.f32 0.0, %v1720
      %v1722 = vpop.f32.mrf.mxu0
      %v1723 = vadd.f32 0.0, %v1722
      %1724 = vmatmul.bf16.gmra.mxu0 %v1464
      %v1725 = vpop.f32.mrf.mxu0
      %v1726 = vadd.f32 0.0, %v1725
      %v1727 = vpop.f32.mrf.mxu0
      %v1728 = vadd.f32 0.0, %v1727
      %1729 = vmatmul.bf16.gmra.mxu0 %v1467
      %v1730 = vpop.f32.mrf.mxu0
      %v1731 = vadd.f32 0.0, %v1730
      %v1732 = vpop.f32.mrf.mxu0
      %v1733 = vadd.f32 0.0, %v1732
      %1734 = vmatmul.bf16.gmra.mxu0 %v1470
      %v1735 = vpop.f32.mrf.mxu0
      %v1736 = vadd.f32 0.0, %v1735
      %v1737 = vpop.f32.mrf.mxu0
      %v1738 = vadd.f32 0.0, %v1737
      %1739 = vmatmul.bf16.gmra.mxu0 %v1473
      %v1740 = vpop.f32.mrf.mxu0
      %v1741 = vadd.f32 0.0, %v1740
      %v1742 = vpop.f32.mrf.mxu0
      %v1743 = vadd.f32 0.0, %v1742
      %1744 = vmatmul.bf16.gmra.mxu0 %v1476
      %v1745 = vpop.f32.mrf.mxu0
      %v1746 = vadd.f32 0.0, %v1745
      %v1747 = vpop.f32.mrf.mxu0
      %v1748 = vadd.f32 0.0, %v1747
      %1749 = vmatmul.bf16.gmra.mxu0 %v1479
      %v1750 = vpop.f32.mrf.mxu0
      %v1751 = vadd.f32 0.0, %v1750
      %v1752 = vpop.f32.mrf.mxu0
      %v1753 = vadd.f32 0.0, %v1752
      %1754 = vmatmul.bf16.gmra.mxu0 %v1482
      %v1755 = vpop.f32.mrf.mxu0
      %v1756 = vadd.f32 0.0, %v1755
      %v1757 = vpop.f32.mrf.mxu0
      %v1758 = vadd.f32 0.0, %v1757
      %1759 = vmatmul.bf16.gmra.mxu0 %v1485
      %v1760 = vpop.f32.mrf.mxu0
      %v1761 = vadd.f32 0.0, %v1760
      %v1762 = vpop.f32.mrf.mxu0
      %v1763 = vadd.f32 0.0, %v1762
      %1764 = vmatmul.bf16.gmra.mxu0 %v1488
      %v1765 = vpop.f32.mrf.mxu0
      %v1766 = vadd.f32 0.0, %v1765
      %v1767 = vpop.f32.mrf.mxu0
      %v1768 = vadd.f32 0.0, %v1767
      %1769 = vmatmul.bf16.gmra.mxu0 %v1491
      %v1770 = vpop.f32.mrf.mxu0
      %v1771 = vadd.f32 0.0, %v1770
      %v1772 = vpop.f32.mrf.mxu0
      %v1773 = vadd.f32 0.0, %v1772
      %1774 = vdwg.mxu0
      %1775 = vmatpush.bf16.msra.mxu0 %v1653
      %1776 = vmatpush.bf16.msra.mxu0 %v1652
      %1777 = vmatpush.bf16.msra.mxu0 %v1651
      %1778 = vmatpush.bf16.msra.mxu0 %v1650
      %1779 = vmatpush.bf16.msra.mxu0 %v1649
      %1780 = vmatpush.bf16.msra.mxu0 %v1648
      %1781 = vmatpush.bf16.msra.mxu0 %v1647
      %1782 = vmatpush.bf16.msra.mxu0 %v1646
      %1783 = vmatmul.bf16.gmra.mxu0 %v1447
      %v1784 = vpop.f32.mrf.mxu0
      %v1785 = vadd.f32 %v1696, %v1784
      %v1786 = vpop.f32.mrf.mxu0
      %v1787 = vadd.f32 %v1698, %v1786
      %1788 = vmatmul.bf16.gmra.mxu0 %v1450
      %v1789 = vpop.f32.mrf.mxu0
      %v1790 = vadd.f32 %v1701, %v1789
      %v1791 = vpop.f32.mrf.mxu0
      %v1792 = vadd.f32 %v1703, %v1791
      %1793 = vmatmul.bf16.gmra.mxu0 %v1453
      %v1794 = vpop.f32.mrf.mxu0
      %v1795 = vadd.f32 %v1706, %v1794
      %v1796 = vpop.f32.mrf.mxu0
      %v1797 = vadd.f32 %v1708, %v1796
      %1798 = vmatmul.bf16.gmra.mxu0 %v1456
      %v1799 = vpop.f32.mrf.mxu0
      %v1800 = vadd.f32 %v1711, %v1799
      %v1801 = vpop.f32.mrf.mxu0
      %v1802 = vadd.f32 %v1713, %v1801
      %1803 = vmatmul.bf16.gmra.mxu0 %v1459
      %v1804 = vpop.f32.mrf.mxu0
      %v1805 = vadd.f32 %v1716, %v1804
      %v1806 = vpop.f32.mrf.mxu0
      %v1807 = vadd.f32 %v1718, %v1806
      %1808 = vmatmul.bf16.gmra.mxu0 %v1462
      %v1809 = vpop.f32.mrf.mxu0
      %v1810 = vadd.f32 %v1721, %v1809
      %v1811 = vpop.f32.mrf.mxu0
      %v1812 = vadd.f32 %v1723, %v1811
      %1813 = vmatmul.bf16.gmra.mxu0 %v1465
      %v1814 = vpop.f32.mrf.mxu0
      %v1815 = vadd.f32 %v1726, %v1814
      %v1816 = vpop.f32.mrf.mxu0
      %v1817 = vadd.f32 %v1728, %v1816
      %1818 = vmatmul.bf16.gmra.mxu0 %v1468
      %v1819 = vpop.f32.mrf.mxu0
      %v1820 = vadd.f32 %v1731, %v1819
      %v1821 = vpop.f32.mrf.mxu0
      %v1822 = vadd.f32 %v1733, %v1821
      %1823 = vmatmul.bf16.gmra.mxu0 %v1471
      %v1824 = vpop.f32.mrf.mxu0
      %v1825 = vadd.f32 %v1736, %v1824
      %v1826 = vpop.f32.mrf.mxu0
      %v1827 = vadd.f32 %v1738, %v1826
      %1828 = vmatmul.bf16.gmra.mxu0 %v1474
      %v1829 = vpop.f32.mrf.mxu0
      %v1830 = vadd.f32 %v1741, %v1829
      %v1831 = vpop.f32.mrf.mxu0
      %v1832 = vadd.f32 %v1743, %v1831
      %1833 = vmatmul.bf16.gmra.mxu0 %v1477
      %v1834 = vpop.f32.mrf.mxu0
      %v1835 = vadd.f32 %v1746, %v1834
      %v1836 = vpop.f32.mrf.mxu0
      %v1837 = vadd.f32 %v1748, %v1836
      %1838 = vmatmul.bf16.gmra.mxu0 %v1480
      %v1839 = vpop.f32.mrf.mxu0
      %v1840 = vadd.f32 %v1751, %v1839
      %v1841 = vpop.f32.mrf.mxu0
      %v1842 = vadd.f32 %v1753, %v1841
      %1843 = vmatmul.bf16.gmra.mxu0 %v1483
      %v1844 = vpop.f32.mrf.mxu0
      %v1845 = vadd.f32 %v1756, %v1844
      %v1846 = vpop.f32.mrf.mxu0
      %v1847 = vadd.f32 %v1758, %v1846
      %1848 = vmatmul.bf16.gmra.mxu0 %v1486
      %v1849 = vpop.f32.mrf.mxu0
      %v1850 = vadd.f32 %v1761, %v1849
      %v1851 = vpop.f32.mrf.mxu0
      %v1852 = vadd.f32 %v1763, %v1851
      %1853 = vmatmul.bf16.gmra.mxu0 %v1489
      %v1854 = vpop.f32.mrf.mxu0
      %v1855 = vadd.f32 %v1766, %v1854
      %v1856 = vpop.f32.mrf.mxu0
      %v1857 = vadd.f32 %v1768, %v1856
      %1858 = vmatmul.bf16.gmra.mxu0 %v1492
      %v1859 = vpop.f32.mrf.mxu0
      %v1860 = vadd.f32 %v1771, %v1859
      %v1861 = vpop.f32.mrf.mxu0
      %v1862 = vadd.f32 %v1773, %v1861
      %1863 = vdwg.mxu0
      %1864 = vmatpush.bf16.msra.mxu0 %v1661
      %1865 = vmatpush.bf16.msra.mxu0 %v1660
      %1866 = vmatpush.bf16.msra.mxu0 %v1659
      %1867 = vmatpush.bf16.msra.mxu0 %v1658
      %1868 = vmatpush.bf16.msra.mxu0 %v1657
      %1869 = vmatpush.bf16.msra.mxu0 %v1656
      %1870 = vmatpush.bf16.msra.mxu0 %v1655
      %1871 = vmatpush.bf16.msra.mxu0 %v1654
      %1872 = vmatmul.bf16.gmra.mxu0 %v1448
      %v1873 = vpop.f32.mrf.mxu0
      %v1874 = vadd.f32 %v1785, %v1873
      %v1875 = vpop.f32.mrf.mxu0
      %v1876 = vadd.f32 %v1787, %v1875
      %1877 = vmatmul.bf16.gmra.mxu0 %v1451
      %v1878 = vpop.f32.mrf.mxu0
      %v1879 = vadd.f32 %v1790, %v1878
      %v1880 = vpop.f32.mrf.mxu0
      %v1881 = vadd.f32 %v1792, %v1880
      %1882 = vmatmul.bf16.gmra.mxu0 %v1454
      %v1883 = vpop.f32.mrf.mxu0
      %v1884 = vadd.f32 %v1795, %v1883
      %v1885 = vpop.f32.mrf.mxu0
      %v1886 = vadd.f32 %v1797, %v1885
      %1887 = vmatmul.bf16.gmra.mxu0 %v1457
      %v1888 = vpop.f32.mrf.mxu0
      %v1889 = vadd.f32 %v1800, %v1888
      %v1890 = vpop.f32.mrf.mxu0
      %v1891 = vadd.f32 %v1802, %v1890
      %1892 = vmatmul.bf16.gmra.mxu0 %v1460
      %v1893 = vpop.f32.mrf.mxu0
      %v1894 = vadd.f32 %v1805, %v1893
      %v1895 = vpop.f32.mrf.mxu0
      %v1896 = vadd.f32 %v1807, %v1895
      %1897 = vmatmul.bf16.gmra.mxu0 %v1463
      %v1898 = vpop.f32.mrf.mxu0
      %v1899 = vadd.f32 %v1810, %v1898
      %v1900 = vpop.f32.mrf.mxu0
      %v1901 = vadd.f32 %v1812, %v1900
      %1902 = vmatmul.bf16.gmra.mxu0 %v1466
      %v1903 = vpop.f32.mrf.mxu0
      %v1904 = vadd.f32 %v1815, %v1903
      %v1905 = vpop.f32.mrf.mxu0
      %v1906 = vadd.f32 %v1817, %v1905
      %1907 = vmatmul.bf16.gmra.mxu0 %v1469
      %v1908 = vpop.f32.mrf.mxu0
      %v1909 = vadd.f32 %v1820, %v1908
      %v1910 = vpop.f32.mrf.mxu0
      %v1911 = vadd.f32 %v1822, %v1910
      %1912 = vmatmul.bf16.gmra.mxu0 %v1472
      %v1913 = vpop.f32.mrf.mxu0
      %v1914 = vadd.f32 %v1825, %v1913
      %v1915 = vpop.f32.mrf.mxu0
      %v1916 = vadd.f32 %v1827, %v1915
      %1917 = vmatmul.bf16.gmra.mxu0 %v1475
      %v1918 = vpop.f32.mrf.mxu0
      %v1919 = vadd.f32 %v1830, %v1918
      %v1920 = vpop.f32.mrf.mxu0
      %v1921 = vadd.f32 %v1832, %v1920
      %1922 = vmatmul.bf16.gmra.mxu0 %v1478
      %v1923 = vpop.f32.mrf.mxu0
      %v1924 = vadd.f32 %v1835, %v1923
      %v1925 = vpop.f32.mrf.mxu0
      %v1926 = vadd.f32 %v1837, %v1925
      %1927 = vmatmul.bf16.gmra.mxu0 %v1481
      %v1928 = vpop.f32.mrf.mxu0
      %v1929 = vadd.f32 %v1840, %v1928
      %v1930 = vpop.f32.mrf.mxu0
      %v1931 = vadd.f32 %v1842, %v1930
      %1932 = vmatmul.bf16.gmra.mxu0 %v1484
      %v1933 = vpop.f32.mrf.mxu0
      %v1934 = vadd.f32 %v1845, %v1933
      %v1935 = vpop.f32.mrf.mxu0
      %v1936 = vadd.f32 %v1847, %v1935
      %1937 = vmatmul.bf16.gmra.mxu0 %v1487
      %v1938 = vpop.f32.mrf.mxu0
      %v1939 = vadd.f32 %v1850, %v1938
      %v1940 = vpop.f32.mrf.mxu0
      %v1941 = vadd.f32 %v1852, %v1940
      %1942 = vmatmul.bf16.gmra.mxu0 %v1490
      %v1943 = vpop.f32.mrf.mxu0
      %v1944 = vadd.f32 %v1855, %v1943
      %v1945 = vpop.f32.mrf.mxu0
      %v1946 = vadd.f32 %v1857, %v1945
      %1947 = vmatmul.bf16.gmra.mxu0 %v1493
      %v1948 = vpop.f32.mrf.mxu0
      %v1949 = vadd.f32 %v1860, %v1948
      %v1950 = vpop.f32.mrf.mxu0
      %v1951 = vadd.f32 %v1862, %v1950
      %1952 = vdwg.mxu0
      %v1957 = vunpack.c.l.b16 %v1121
      %v1958 = vunpack.c.h.b16 %v1121
      %v1959 = vunpack.c.l.b16 %v1122
      %v1960 = vunpack.c.l.b16 %v1123
      %v1961 = vunpack.c.h.b16 %v1123
      %v1962 = vunpack.c.l.b16 %v1124
      %v1963 = vpack.c.b16 %v1960, %v1957
      %v1964 = vpack.c.b16 %v1961, %v1958
      %v1965 = vpack.c.b16 %v1962, %v1959
      %v2017 = vunpack.c.l.b16 %v1185
      %v2018 = vunpack.c.l.b16 %v1186
      %v2019 = vunpack.c.l.b16 %v1187
      %v2020 = vunpack.c.l.b16 %v1188
      %v2021 = vunpack.c.l.b16 %v1189
      %v2022 = vunpack.c.l.b16 %v1190
      %v2023 = vunpack.c.l.b16 %v1191
      %v2024 = vunpack.c.l.b16 %v1192
      %v2025 = vunpack.c.l.b16 %v1193
      %v2026 = vunpack.c.l.b16 %v1194
      %v2027 = vunpack.c.l.b16 %v1195
      %v2028 = vunpack.c.l.b16 %v1196
      %v2029 = vunpack.c.l.b16 %v1197
      %v2030 = vunpack.c.l.b16 %v1198
      %v2031 = vunpack.c.l.b16 %v1199
      %v2032 = vunpack.c.l.b16 %v1200
      %v2033 = vunpack.c.l.b16 %v1201
      %v2034 = vunpack.c.l.b16 %v1202
      %v2035 = vunpack.c.l.b16 %v1203
      %v2036 = vunpack.c.l.b16 %v1204
      %v2037 = vunpack.c.l.b16 %v1205
      %v2038 = vunpack.c.l.b16 %v1206
      %v2039 = vunpack.c.l.b16 %v1207
      %v2040 = vunpack.c.l.b16 %v1208
      %v2041 = vunpack.c.l.b16 %v1209
      %v2042 = vunpack.c.l.b16 %v1210
      %v2043 = vunpack.c.l.b16 %v1211
      %v2044 = vunpack.c.l.b16 %v1212
      %v2045 = vunpack.c.l.b16 %v1213
      %v2046 = vunpack.c.l.b16 %v1214
      %v2047 = vunpack.c.l.b16 %v1215
      %v2048 = vunpack.c.l.b16 %v1216
      %v2049 = vunpack.c.l.b16 %v1217
      %v2050 = vunpack.c.l.b16 %v1218
      %v2051 = vunpack.c.l.b16 %v1219
      %v2052 = vunpack.c.l.b16 %v1220
      %v2053 = vunpack.c.l.b16 %v1221
      %v2054 = vunpack.c.l.b16 %v1222
      %v2055 = vunpack.c.l.b16 %v1223
      %v2056 = vunpack.c.l.b16 %v1224
      %v2057 = vunpack.c.l.b16 %v1225
      %v2058 = vunpack.c.l.b16 %v1226
      %v2059 = vunpack.c.l.b16 %v1227
      %v2060 = vunpack.c.l.b16 %v1228
      %v2061 = vunpack.c.l.b16 %v1229
      %v2062 = vunpack.c.l.b16 %v1230
      %v2063 = vunpack.c.l.b16 %v1231
      %v2064 = vunpack.c.l.b16 %v1232
      %v2065 = vpack.c.b16 %v2018, %v2017
      %v2066 = vpack.c.b16 %v2020, %v2019
      %v2067 = vpack.c.b16 %v2022, %v2021
      %v2068 = vpack.c.b16 %v2024, %v2023
      %v2069 = vpack.c.b16 %v2026, %v2025
      %v2070 = vpack.c.b16 %v2028, %v2027
      %v2071 = vpack.c.b16 %v2030, %v2029
      %v2072 = vpack.c.b16 %v2032, %v2031
      %v2073 = vpack.c.b16 %v2034, %v2033
      %v2074 = vpack.c.b16 %v2036, %v2035
      %v2075 = vpack.c.b16 %v2038, %v2037
      %v2076 = vpack.c.b16 %v2040, %v2039
      %v2077 = vpack.c.b16 %v2042, %v2041
      %v2078 = vpack.c.b16 %v2044, %v2043
      %v2079 = vpack.c.b16 %v2046, %v2045
      %v2080 = vpack.c.b16 %v2048, %v2047
      %v2081 = vpack.c.b16 %v2050, %v2049
      %v2082 = vpack.c.b16 %v2052, %v2051
      %v2083 = vpack.c.b16 %v2054, %v2053
      %v2084 = vpack.c.b16 %v2056, %v2055
      %v2085 = vpack.c.b16 %v2058, %v2057
      %v2086 = vpack.c.b16 %v2060, %v2059
      %v2087 = vpack.c.b16 %v2062, %v2061
      %v2088 = vpack.c.b16 %v2064, %v2063
      %2113 = vmatpush.bf16.msra.mxu0 %v2072
      %2114 = vmatpush.bf16.msra.mxu0 %v2071
      %2115 = vmatpush.bf16.msra.mxu0 %v2070
      %2116 = vmatpush.bf16.msra.mxu0 %v2069
      %2117 = vmatpush.bf16.msra.mxu0 %v2068
      %2118 = vmatpush.bf16.msra.mxu0 %v2067
      %2119 = vmatpush.bf16.msra.mxu0 %v2066
      %2120 = vmatpush.bf16.msra.mxu0 %v2065
      %2121 = vmatmul.bf16.gmra.mxu0 %v1963
      %v2122 = vpop.f32.mrf.mxu0
      %v2123 = vadd.f32 %v1874, %v2122
      %v2124 = vpop.f32.mrf.mxu0
      %v2125 = vadd.f32 %v1876, %v2124
      %2126 = vmatmul.bf16.gmra.mxu0 %v1446
      %v2127 = vpop.f32.mrf.mxu0
      %v2128 = vadd.f32 %v1879, %v2127
      %v2129 = vpop.f32.mrf.mxu0
      %v2130 = vadd.f32 %v1881, %v2129
      %2131 = vmatmul.bf16.gmra.mxu0 %v1449
      %v2132 = vpop.f32.mrf.mxu0
      %v2133 = vadd.f32 %v1884, %v2132
      %v2134 = vpop.f32.mrf.mxu0
      %v2135 = vadd.f32 %v1886, %v2134
      %2136 = vmatmul.bf16.gmra.mxu0 %v1452
      %v2137 = vpop.f32.mrf.mxu0
      %v2138 = vadd.f32 %v1889, %v2137
      %v2139 = vpop.f32.mrf.mxu0
      %v2140 = vadd.f32 %v1891, %v2139
      %2141 = vmatmul.bf16.gmra.mxu0 %v1455
      %v2142 = vpop.f32.mrf.mxu0
      %v2143 = vadd.f32 %v1894, %v2142
      %v2144 = vpop.f32.mrf.mxu0
      %v2145 = vadd.f32 %v1896, %v2144
      %2146 = vmatmul.bf16.gmra.mxu0 %v1458
      %v2147 = vpop.f32.mrf.mxu0
      %v2148 = vadd.f32 %v1899, %v2147
      %v2149 = vpop.f32.mrf.mxu0
      %v2150 = vadd.f32 %v1901, %v2149
      %2151 = vmatmul.bf16.gmra.mxu0 %v1461
      %v2152 = vpop.f32.mrf.mxu0
      %v2153 = vadd.f32 %v1904, %v2152
      %v2154 = vpop.f32.mrf.mxu0
      %v2155 = vadd.f32 %v1906, %v2154
      %2156 = vmatmul.bf16.gmra.mxu0 %v1464
      %v2157 = vpop.f32.mrf.mxu0
      %v2158 = vadd.f32 %v1909, %v2157
      %v2159 = vpop.f32.mrf.mxu0
      %v2160 = vadd.f32 %v1911, %v2159
      %2161 = vmatmul.bf16.gmra.mxu0 %v1467
      %v2162 = vpop.f32.mrf.mxu0
      %v2163 = vadd.f32 %v1914, %v2162
      %v2164 = vpop.f32.mrf.mxu0
      %v2165 = vadd.f32 %v1916, %v2164
      %2166 = vmatmul.bf16.gmra.mxu0 %v1470
      %v2167 = vpop.f32.mrf.mxu0
      %v2168 = vadd.f32 %v1919, %v2167
      %v2169 = vpop.f32.mrf.mxu0
      %v2170 = vadd.f32 %v1921, %v2169
      %2171 = vmatmul.bf16.gmra.mxu0 %v1473
      %v2172 = vpop.f32.mrf.mxu0
      %v2173 = vadd.f32 %v1924, %v2172
      %v2174 = vpop.f32.mrf.mxu0
      %v2175 = vadd.f32 %v1926, %v2174
      %2176 = vmatmul.bf16.gmra.mxu0 %v1476
      %v2177 = vpop.f32.mrf.mxu0
      %v2178 = vadd.f32 %v1929, %v2177
      %v2179 = vpop.f32.mrf.mxu0
      %v2180 = vadd.f32 %v1931, %v2179
      %2181 = vmatmul.bf16.gmra.mxu0 %v1479
      %v2182 = vpop.f32.mrf.mxu0
      %v2183 = vadd.f32 %v1934, %v2182
      %v2184 = vpop.f32.mrf.mxu0
      %v2185 = vadd.f32 %v1936, %v2184
      %2186 = vmatmul.bf16.gmra.mxu0 %v1482
      %v2187 = vpop.f32.mrf.mxu0
      %v2188 = vadd.f32 %v1939, %v2187
      %v2189 = vpop.f32.mrf.mxu0
      %v2190 = vadd.f32 %v1941, %v2189
      %2191 = vmatmul.bf16.gmra.mxu0 %v1485
      %v2192 = vpop.f32.mrf.mxu0
      %v2193 = vadd.f32 %v1944, %v2192
      %v2194 = vpop.f32.mrf.mxu0
      %v2195 = vadd.f32 %v1946, %v2194
      %2196 = vmatmul.bf16.gmra.mxu0 %v1488
      %v2197 = vpop.f32.mrf.mxu0
      %v2198 = vadd.f32 %v1949, %v2197
      %v2199 = vpop.f32.mrf.mxu0
      %v2200 = vadd.f32 %v1951, %v2199
      %2201 = vdwg.mxu0
      %2202 = vmatpush.bf16.msra.mxu0 %v2080
      %2203 = vmatpush.bf16.msra.mxu0 %v2079
      %2204 = vmatpush.bf16.msra.mxu0 %v2078
      %2205 = vmatpush.bf16.msra.mxu0 %v2077
      %2206 = vmatpush.bf16.msra.mxu0 %v2076
      %2207 = vmatpush.bf16.msra.mxu0 %v2075
      %2208 = vmatpush.bf16.msra.mxu0 %v2074
      %2209 = vmatpush.bf16.msra.mxu0 %v2073
      %2210 = vmatmul.bf16.gmra.mxu0 %v1964
      %v2211 = vpop.f32.mrf.mxu0
      %v2212 = vadd.f32 %v2123, %v2211
      %v2213 = vpop.f32.mrf.mxu0
      %v2214 = vadd.f32 %v2125, %v2213
      %2215 = vmatmul.bf16.gmra.mxu0 %v1447
      %v2216 = vpop.f32.mrf.mxu0
      %v2217 = vadd.f32 %v2128, %v2216
      %v2218 = vpop.f32.mrf.mxu0
      %v2219 = vadd.f32 %v2130, %v2218
      %2220 = vmatmul.bf16.gmra.mxu0 %v1450
      %v2221 = vpop.f32.mrf.mxu0
      %v2222 = vadd.f32 %v2133, %v2221
      %v2223 = vpop.f32.mrf.mxu0
      %v2224 = vadd.f32 %v2135, %v2223
      %2225 = vmatmul.bf16.gmra.mxu0 %v1453
      %v2226 = vpop.f32.mrf.mxu0
      %v2227 = vadd.f32 %v2138, %v2226
      %v2228 = vpop.f32.mrf.mxu0
      %v2229 = vadd.f32 %v2140, %v2228
      %2230 = vmatmul.bf16.gmra.mxu0 %v1456
      %v2231 = vpop.f32.mrf.mxu0
      %v2232 = vadd.f32 %v2143, %v2231
      %v2233 = vpop.f32.mrf.mxu0
      %v2234 = vadd.f32 %v2145, %v2233
      %2235 = vmatmul.bf16.gmra.mxu0 %v1459
      %v2236 = vpop.f32.mrf.mxu0
      %v2237 = vadd.f32 %v2148, %v2236
      %v2238 = vpop.f32.mrf.mxu0
      %v2239 = vadd.f32 %v2150, %v2238
      %2240 = vmatmul.bf16.gmra.mxu0 %v1462
      %v2241 = vpop.f32.mrf.mxu0
      %v2242 = vadd.f32 %v2153, %v2241
      %v2243 = vpop.f32.mrf.mxu0
      %v2244 = vadd.f32 %v2155, %v2243
      %2245 = vmatmul.bf16.gmra.mxu0 %v1465
      %v2246 = vpop.f32.mrf.mxu0
      %v2247 = vadd.f32 %v2158, %v2246
      %v2248 = vpop.f32.mrf.mxu0
      %v2249 = vadd.f32 %v2160, %v2248
      %2250 = vmatmul.bf16.gmra.mxu0 %v1468
      %v2251 = vpop.f32.mrf.mxu0
      %v2252 = vadd.f32 %v2163, %v2251
      %v2253 = vpop.f32.mrf.mxu0
      %v2254 = vadd.f32 %v2165, %v2253
      %2255 = vmatmul.bf16.gmra.mxu0 %v1471
      %v2256 = vpop.f32.mrf.mxu0
      %v2257 = vadd.f32 %v2168, %v2256
      %v2258 = vpop.f32.mrf.mxu0
      %v2259 = vadd.f32 %v2170, %v2258
      %2260 = vmatmul.bf16.gmra.mxu0 %v1474
      %v2261 = vpop.f32.mrf.mxu0
      %v2262 = vadd.f32 %v2173, %v2261
      %v2263 = vpop.f32.mrf.mxu0
      %v2264 = vadd.f32 %v2175, %v2263
      %2265 = vmatmul.bf16.gmra.mxu0 %v1477
      %v2266 = vpop.f32.mrf.mxu0
      %v2267 = vadd.f32 %v2178, %v2266
      %v2268 = vpop.f32.mrf.mxu0
      %v2269 = vadd.f32 %v2180, %v2268
      %2270 = vmatmul.bf16.gmra.mxu0 %v1480
      %v2271 = vpop.f32.mrf.mxu0
      %v2272 = vadd.f32 %v2183, %v2271
      %v2273 = vpop.f32.mrf.mxu0
      %v2274 = vadd.f32 %v2185, %v2273
      %2275 = vmatmul.bf16.gmra.mxu0 %v1483
      %v2276 = vpop.f32.mrf.mxu0
      %v2277 = vadd.f32 %v2188, %v2276
      %v2278 = vpop.f32.mrf.mxu0
      %v2279 = vadd.f32 %v2190, %v2278
      %2280 = vmatmul.bf16.gmra.mxu0 %v1486
      %v2281 = vpop.f32.mrf.mxu0
      %v2282 = vadd.f32 %v2193, %v2281
      %v2283 = vpop.f32.mrf.mxu0
      %v2284 = vadd.f32 %v2195, %v2283
      %2285 = vmatmul.bf16.gmra.mxu0 %v1489
      %v2286 = vpop.f32.mrf.mxu0
      %v2287 = vadd.f32 %v2198, %v2286
      %v2288 = vpop.f32.mrf.mxu0
      %v2289 = vadd.f32 %v2200, %v2288
      %2290 = vdwg.mxu0
      %2291 = vmatpush.bf16.msra.mxu0 %v2088
      %2292 = vmatpush.bf16.msra.mxu0 %v2087
      %2293 = vmatpush.bf16.msra.mxu0 %v2086
      %2294 = vmatpush.bf16.msra.mxu0 %v2085
      %2295 = vmatpush.bf16.msra.mxu0 %v2084
      %2296 = vmatpush.bf16.msra.mxu0 %v2083
      %2297 = vmatpush.bf16.msra.mxu0 %v2082
      %2298 = vmatpush.bf16.msra.mxu0 %v2081
      %2299 = vmatmul.bf16.gmra.mxu0 %v1965
      %v2300 = vpop.f32.mrf.mxu0
      %v2301 = vadd.f32 %v2212, %v2300
      %v2302 = vpop.f32.mrf.mxu0
      %v2303 = vadd.f32 %v2214, %v2302
      %2304 = vmatmul.bf16.gmra.mxu0 %v1448
      %v2305 = vpop.f32.mrf.mxu0
      %v2306 = vadd.f32 %v2217, %v2305
      %v2307 = vpop.f32.mrf.mxu0
      %v2308 = vadd.f32 %v2219, %v2307
      %2309 = vmatmul.bf16.gmra.mxu0 %v1451
      %v2310 = vpop.f32.mrf.mxu0
      %v2311 = vadd.f32 %v2222, %v2310
      %v2312 = vpop.f32.mrf.mxu0
      %v2313 = vadd.f32 %v2224, %v2312
      %2314 = vmatmul.bf16.gmra.mxu0 %v1454
      %v2315 = vpop.f32.mrf.mxu0
      %v2316 = vadd.f32 %v2227, %v2315
      %v2317 = vpop.f32.mrf.mxu0
      %v2318 = vadd.f32 %v2229, %v2317
      %2319 = vmatmul.bf16.gmra.mxu0 %v1457
      %v2320 = vpop.f32.mrf.mxu0
      %v2321 = vadd.f32 %v2232, %v2320
      %v2322 = vpop.f32.mrf.mxu0
      %v2323 = vadd.f32 %v2234, %v2322
      %2324 = vmatmul.bf16.gmra.mxu0 %v1460
      %v2325 = vpop.f32.mrf.mxu0
      %v2326 = vadd.f32 %v2237, %v2325
      %v2327 = vpop.f32.mrf.mxu0
      %v2328 = vadd.f32 %v2239, %v2327
      %2329 = vmatmul.bf16.gmra.mxu0 %v1463
      %v2330 = vpop.f32.mrf.mxu0
      %v2331 = vadd.f32 %v2242, %v2330
      %v2332 = vpop.f32.mrf.mxu0
      %v2333 = vadd.f32 %v2244, %v2332
      %2334 = vmatmul.bf16.gmra.mxu0 %v1466
      %v2335 = vpop.f32.mrf.mxu0
      %v2336 = vadd.f32 %v2247, %v2335
      %v2337 = vpop.f32.mrf.mxu0
      %v2338 = vadd.f32 %v2249, %v2337
      %2339 = vmatmul.bf16.gmra.mxu0 %v1469
      %v2340 = vpop.f32.mrf.mxu0
      %v2341 = vadd.f32 %v2252, %v2340
      %v2342 = vpop.f32.mrf.mxu0
      %v2343 = vadd.f32 %v2254, %v2342
      %2344 = vmatmul.bf16.gmra.mxu0 %v1472
      %v2345 = vpop.f32.mrf.mxu0
      %v2346 = vadd.f32 %v2257, %v2345
      %v2347 = vpop.f32.mrf.mxu0
      %v2348 = vadd.f32 %v2259, %v2347
      %2349 = vmatmul.bf16.gmra.mxu0 %v1475
      %v2350 = vpop.f32.mrf.mxu0
      %v2351 = vadd.f32 %v2262, %v2350
      %v2352 = vpop.f32.mrf.mxu0
      %v2353 = vadd.f32 %v2264, %v2352
      %2354 = vmatmul.bf16.gmra.mxu0 %v1478
      %v2355 = vpop.f32.mrf.mxu0
      %v2356 = vadd.f32 %v2267, %v2355
      %v2357 = vpop.f32.mrf.mxu0
      %v2358 = vadd.f32 %v2269, %v2357
      %2359 = vmatmul.bf16.gmra.mxu0 %v1481
      %v2360 = vpop.f32.mrf.mxu0
      %v2361 = vadd.f32 %v2272, %v2360
      %v2362 = vpop.f32.mrf.mxu0
      %v2363 = vadd.f32 %v2274, %v2362
      %2364 = vmatmul.bf16.gmra.mxu0 %v1484
      %v2365 = vpop.f32.mrf.mxu0
      %v2366 = vadd.f32 %v2277, %v2365
      %v2367 = vpop.f32.mrf.mxu0
      %v2368 = vadd.f32 %v2279, %v2367
      %2369 = vmatmul.bf16.gmra.mxu0 %v1487
      %v2370 = vpop.f32.mrf.mxu0
      %v2371 = vadd.f32 %v2282, %v2370
      %v2372 = vpop.f32.mrf.mxu0
      %v2373 = vadd.f32 %v2284, %v2372
      %2374 = vmatmul.bf16.gmra.mxu0 %v1490
      %v2375 = vpop.f32.mrf.mxu0
      %v2376 = vadd.f32 %v2287, %v2375
      %v2377 = vpop.f32.mrf.mxu0
      %v2378 = vadd.f32 %v2289, %v2377
      %2379 = vdwg.mxu0
      %v2380 = vld [vmem:[#allocation2 + $0x30] sm:$0xff]
      %v2381 = vld [vmem:[#allocation2 + $0x38] sm:$0xf]
      %v2382 = vld [vmem:[#allocation2 + $0x3c] sm:$0xff]
      %v2383 = vld [vmem:[#allocation2 + $0x44] sm:$0xf]
      %v2384 = vld [vmem:[#allocation2 + $0x48] sm:$0xff]
      %v2385 = vld [vmem:[#allocation2 + $0x50] sm:$0xf]
      %v2386 = vld [vmem:[#allocation2 + $0x54] sm:$0xff]
      %v2387 = vld [vmem:[#allocation2 + $0x5c] sm:$0xf]
      %v2388 = vld [vmem:[#allocation2 + $0x60] sm:$0xff]
      %v2389 = vld [vmem:[#allocation2 + $0x68] sm:$0xf]
      %v2390 = vld [vmem:[#allocation2 + $0x6c] sm:$0xff]
      %v2391 = vld [vmem:[#allocation2 + $0x74] sm:$0xf]
      %v2392 = vld [vmem:[#allocation2 + $0x78] sm:$0xff]
      %v2393 = vld [vmem:[#allocation2 + $0x80] sm:$0xf]
      %v2394 = vld [vmem:[#allocation2 + $0x84] sm:$0xff]
      %v2395 = vld [vmem:[#allocation2 + $0x8c] sm:$0xf]
      %v2396 = vld [vmem:[#allocation2 + $0x90] sm:$0xff]
      %v2397 = vld [vmem:[#allocation2 + $0x98] sm:$0xf]
      %v2398 = vld [vmem:[#allocation2 + $0x9c] sm:$0xff]
      %v2399 = vld [vmem:[#allocation2 + $0xa4] sm:$0xf]
      %v2400 = vld [vmem:[#allocation2 + $0xa8] sm:$0xff]
      %v2401 = vld [vmem:[#allocation2 + $0xb0] sm:$0xf]
      %v2402 = vld [vmem:[#allocation2 + $0xb4] sm:$0xff]
      %v2403 = vld [vmem:[#allocation2 + $0xbc] sm:$0xf]
      %v2404 = vld [vmem:[#allocation2 + $0xc0] sm:$0xff]
      %v2405 = vld [vmem:[#allocation2 + $0xc8] sm:$0xf]
      %v2406 = vld [vmem:[#allocation2 + $0xcc] sm:$0xff]
      %v2407 = vld [vmem:[#allocation2 + $0xd4] sm:$0xf]
      %v2408 = vld [vmem:[#allocation2 + $0xd8] sm:$0xff]
      %v2409 = vld [vmem:[#allocation2 + $0xe0] sm:$0xf]
      %v2410 = vld [vmem:[#allocation2 + $0xe4] sm:$0xff]
      %v2411 = vld [vmem:[#allocation2 + $0xec] sm:$0xf]
      %v2412 = vld [vmem:[#allocation2 + $0xf0] sm:$0xff]
      %v2413 = vld [vmem:[#allocation2 + $0xf8] sm:$0xf]
      %v2414 = vld [vmem:[#allocation2 + $0xfc] sm:$0xff]
      %v2415 = vld [vmem:[#allocation2 + $0x104] sm:$0xf]
      %v2416 = vld [vmem:[#allocation2 + $0x108] sm:$0xff]
      %v2417 = vld [vmem:[#allocation2 + $0x110] sm:$0xf]
      %v2418 = vld [vmem:[#allocation2 + $0x114] sm:$0xff]
      %v2419 = vld [vmem:[#allocation2 + $0x11c] sm:$0xf]
      %v2420 = vld [vmem:[#allocation2 + $0x120] sm:$0xff]
      %v2421 = vld [vmem:[#allocation2 + $0x128] sm:$0xf]
      %v2422 = vld [vmem:[#allocation2 + $0x12c] sm:$0xff]
      %v2423 = vld [vmem:[#allocation2 + $0x134] sm:$0xf]
      %v2424 = vld [vmem:[#allocation2 + $0x138] sm:$0xff]
      %v2425 = vld [vmem:[#allocation2 + $0x140] sm:$0xf]
      %v2426 = vld [vmem:[#allocation2 + $0x144] sm:$0xff]
      %v2427 = vld [vmem:[#allocation2 + $0x14c] sm:$0xf]
      %v2428 = vld [vmem:[#allocation2 + $0x150] sm:$0xff]
      %v2429 = vld [vmem:[#allocation2 + $0x158] sm:$0xf]
      %v2430 = vld [vmem:[#allocation2 + $0x15c] sm:$0xff]
      %v2431 = vld [vmem:[#allocation2 + $0x164] sm:$0xf]
      %v2432 = vld [vmem:[#allocation2 + $0x168] sm:$0xff]
      %v2433 = vld [vmem:[#allocation2 + $0x170] sm:$0xf]
      %v2434 = vld [vmem:[#allocation2 + $0x174] sm:$0xff]
      %v2435 = vld [vmem:[#allocation2 + $0x17c] sm:$0xf]
      %v2436 = vld [vmem:[#allocation2 + $0x180] sm:$0xff]
      %v2437 = vld [vmem:[#allocation2 + $0x188] sm:$0xf]
      %v2438 = vld [vmem:[#allocation2 + $0x18c] sm:$0xff]
      %v2439 = vld [vmem:[#allocation2 + $0x194] sm:$0xf]
      %v2440 = vld [vmem:[#allocation2 + $0x198] sm:$0xff]
      %v2441 = vld [vmem:[#allocation2 + $0x1a0] sm:$0xf]
      %v2442 = vld [vmem:[#allocation2 + $0x1a4] sm:$0xff]
      %v2443 = vld [vmem:[#allocation2 + $0x1ac] sm:$0xf]
      %s2444 = scalar_lea.vmem %s1, 384
      %v2445 = vld [vmem:[%s2444] sm:$0xf]
      %v2446 = vld [vmem:[%s2444 + $0x4] sm:$0xf]
      %v2447 = vld [vmem:[%s2444 + $0x8] sm:$0xf]
      %v2448 = vld [vmem:[%s2444 + $0xc] sm:$0xf]
      %v2449 = vld [vmem:[%s2444 + $0x10] sm:$0xf]
      %v2450 = vld [vmem:[%s2444 + $0x14] sm:$0xf]
      %v2451 = vld [vmem:[%s2444 + $0x18] sm:$0xf]
      %v2452 = vld [vmem:[%s2444 + $0x1c] sm:$0xf]
      %v2453 = vld [vmem:[%s2444 + $0x20] sm:$0xf]
      %v2454 = vld [vmem:[%s2444 + $0x24] sm:$0xf]
      %v2455 = vld [vmem:[%s2444 + $0x28] sm:$0xf]
      %v2456 = vld [vmem:[%s2444 + $0x2c] sm:$0xf]
      %v2457 = vld [vmem:[%s2444 + $0x30] sm:$0xf]
      %v2458 = vld [vmem:[%s2444 + $0x34] sm:$0xf]
      %v2459 = vld [vmem:[%s2444 + $0x38] sm:$0xf]
      %v2460 = vld [vmem:[%s2444 + $0x3c] sm:$0xf]
      %v2461 = vld [vmem:[%s2444 + $0x40] sm:$0xf]
      %v2462 = vld [vmem:[%s2444 + $0x44] sm:$0xf]
      %v2463 = vld [vmem:[%s2444 + $0x48] sm:$0xf]
      %v2464 = vld [vmem:[%s2444 + $0x4c] sm:$0xf]
      %v2465 = vld [vmem:[%s2444 + $0x50] sm:$0xf]
      %v2466 = vld [vmem:[%s2444 + $0x54] sm:$0xf]
      %v2467 = vld [vmem:[%s2444 + $0x58] sm:$0xf]
      %v2468 = vld [vmem:[%s2444 + $0x5c] sm:$0xf]
      %v2469 = vld [vmem:[%s2444 + $0x60] sm:$0xf]
      %v2470 = vld [vmem:[%s2444 + $0x64] sm:$0xf]
      %v2471 = vld [vmem:[%s2444 + $0x68] sm:$0xf]
      %v2472 = vld [vmem:[%s2444 + $0x6c] sm:$0xf]
      %v2473 = vld [vmem:[%s2444 + $0x70] sm:$0xf]
      %v2474 = vld [vmem:[%s2444 + $0x74] sm:$0xf]
      %v2475 = vld [vmem:[%s2444 + $0x78] sm:$0xf]
      %v2476 = vld [vmem:[%s2444 + $0x7c] sm:$0xf]
      %v2477 = vld [vmem:[%s2444 + $0x80] sm:$0xf]
      %v2478 = vld [vmem:[%s2444 + $0x84] sm:$0xf]
      %v2479 = vld [vmem:[%s2444 + $0x88] sm:$0xf]
      %v2480 = vld [vmem:[%s2444 + $0x8c] sm:$0xf]
      %v2481 = vld [vmem:[%s2444 + $0x90] sm:$0xf]
      %v2482 = vld [vmem:[%s2444 + $0x94] sm:$0xf]
      %v2483 = vld [vmem:[%s2444 + $0x98] sm:$0xf]
      %v2484 = vld [vmem:[%s2444 + $0x9c] sm:$0xf]
      %v2485 = vld [vmem:[%s2444 + $0xa0] sm:$0xf]
      %v2486 = vld [vmem:[%s2444 + $0xa4] sm:$0xf]
      %v2487 = vld [vmem:[%s2444 + $0xa8] sm:$0xf]
      %v2488 = vld [vmem:[%s2444 + $0xac] sm:$0xf]
      %v2489 = vld [vmem:[%s2444 + $0xb0] sm:$0xf]
      %v2490 = vld [vmem:[%s2444 + $0xb4] sm:$0xf]
      %v2491 = vld [vmem:[%s2444 + $0xb8] sm:$0xf]
      %v2492 = vld [vmem:[%s2444 + $0xbc] sm:$0xf]
      %v2557 = vunpack.c.l.b16 %v2380
      %v2558 = vunpack.c.h.b16 %v2380
      %v2559 = vunpack.c.l.b16 %v2381
      %v2560 = vunpack.c.l.b16 %v2382
      %v2561 = vunpack.c.h.b16 %v2382
      %v2562 = vunpack.c.l.b16 %v2383
      %v2563 = vunpack.c.l.b16 %v2384
      %v2564 = vunpack.c.h.b16 %v2384
      %v2565 = vunpack.c.l.b16 %v2385
      %v2566 = vunpack.c.l.b16 %v2386
      %v2567 = vunpack.c.h.b16 %v2386
      %v2568 = vunpack.c.l.b16 %v2387
      %v2569 = vunpack.c.l.b16 %v2388
      %v2570 = vunpack.c.h.b16 %v2388
      %v2571 = vunpack.c.l.b16 %v2389
      %v2572 = vunpack.c.l.b16 %v2390
      %v2573 = vunpack.c.h.b16 %v2390
      %v2574 = vunpack.c.l.b16 %v2391
      %v2575 = vunpack.c.l.b16 %v2392
      %v2576 = vunpack.c.h.b16 %v2392
      %v2577 = vunpack.c.l.b16 %v2393
      %v2578 = vunpack.c.l.b16 %v2394
      %v2579 = vunpack.c.h.b16 %v2394
      %v2580 = vunpack.c.l.b16 %v2395
      %v2581 = vunpack.c.l.b16 %v2396
      %v2582 = vunpack.c.h.b16 %v2396
      %v2583 = vunpack.c.l.b16 %v2397
      %v2584 = vunpack.c.l.b16 %v2398
      %v2585 = vunpack.c.h.b16 %v2398
      %v2586 = vunpack.c.l.b16 %v2399
      %v2587 = vunpack.c.l.b16 %v2400
      %v2588 = vunpack.c.h.b16 %v2400
      %v2589 = vunpack.c.l.b16 %v2401
      %v2590 = vunpack.c.l.b16 %v2402
      %v2591 = vunpack.c.h.b16 %v2402
      %v2592 = vunpack.c.l.b16 %v2403
      %v2593 = vunpack.c.l.b16 %v2404
      %v2594 = vunpack.c.h.b16 %v2404
      %v2595 = vunpack.c.l.b16 %v2405
      %v2596 = vunpack.c.l.b16 %v2406
      %v2597 = vunpack.c.h.b16 %v2406
      %v2598 = vunpack.c.l.b16 %v2407
      %v2599 = vunpack.c.l.b16 %v2408
      %v2600 = vunpack.c.h.b16 %v2408
      %v2601 = vunpack.c.l.b16 %v2409
      %v2602 = vunpack.c.l.b16 %v2410
      %v2603 = vunpack.c.h.b16 %v2410
      %v2604 = vunpack.c.l.b16 %v2411
      %v2605 = vunpack.c.l.b16 %v2412
      %v2606 = vunpack.c.h.b16 %v2412
      %v2607 = vunpack.c.l.b16 %v2413
      %v2608 = vunpack.c.l.b16 %v2414
      %v2609 = vunpack.c.h.b16 %v2414
      %v2610 = vunpack.c.l.b16 %v2415
      %v2611 = vunpack.c.l.b16 %v2416
      %v2612 = vunpack.c.h.b16 %v2416
      %v2613 = vunpack.c.l.b16 %v2417
      %v2614 = vunpack.c.l.b16 %v2418
      %v2615 = vunpack.c.h.b16 %v2418
      %v2616 = vunpack.c.l.b16 %v2419
      %v2617 = vunpack.c.l.b16 %v2420
      %v2618 = vunpack.c.h.b16 %v2420
      %v2619 = vunpack.c.l.b16 %v2421
      %v2620 = vunpack.c.l.b16 %v2422
      %v2621 = vunpack.c.h.b16 %v2422
      %v2622 = vunpack.c.l.b16 %v2423
      %v2623 = vunpack.c.l.b16 %v2424
      %v2624 = vunpack.c.h.b16 %v2424
      %v2625 = vunpack.c.l.b16 %v2425
      %v2626 = vunpack.c.l.b16 %v2426
      %v2627 = vunpack.c.h.b16 %v2426
      %v2628 = vunpack.c.l.b16 %v2427
      %v2629 = vunpack.c.l.b16 %v2428
      %v2630 = vunpack.c.h.b16 %v2428
      %v2631 = vunpack.c.l.b16 %v2429
      %v2632 = vunpack.c.l.b16 %v2430
      %v2633 = vunpack.c.h.b16 %v2430
      %v2634 = vunpack.c.l.b16 %v2431
      %v2635 = vunpack.c.l.b16 %v2432
      %v2636 = vunpack.c.h.b16 %v2432
      %v2637 = vunpack.c.l.b16 %v2433
      %v2638 = vunpack.c.l.b16 %v2434
      %v2639 = vunpack.c.h.b16 %v2434
      %v2640 = vunpack.c.l.b16 %v2435
      %v2641 = vunpack.c.l.b16 %v2436
      %v2642 = vunpack.c.h.b16 %v2436
      %v2643 = vunpack.c.l.b16 %v2437
      %v2644 = vunpack.c.l.b16 %v2438
      %v2645 = vunpack.c.h.b16 %v2438
      %v2646 = vunpack.c.l.b16 %v2439
      %v2647 = vunpack.c.l.b16 %v2440
      %v2648 = vunpack.c.h.b16 %v2440
      %v2649 = vunpack.c.l.b16 %v2441
      %v2650 = vunpack.c.l.b16 %v2442
      %v2651 = vunpack.c.h.b16 %v2442
      %v2652 = vunpack.c.l.b16 %v2443
      %v2653 = vpack.c.b16 %v2560, %v2557
      %v2654 = vpack.c.b16 %v2561, %v2558
      %v2655 = vpack.c.b16 %v2562, %v2559
      %v2656 = vpack.c.b16 %v2566, %v2563
      %v2657 = vpack.c.b16 %v2567, %v2564
      %v2658 = vpack.c.b16 %v2568, %v2565
      %v2659 = vpack.c.b16 %v2572, %v2569
      %v2660 = vpack.c.b16 %v2573, %v2570
      %v2661 = vpack.c.b16 %v2574, %v2571
      %v2662 = vpack.c.b16 %v2578, %v2575
      %v2663 = vpack.c.b16 %v2579, %v2576
      %v2664 = vpack.c.b16 %v2580, %v2577
      %v2665 = vpack.c.b16 %v2584, %v2581
      %v2666 = vpack.c.b16 %v2585, %v2582
      %v2667 = vpack.c.b16 %v2586, %v2583
      %v2668 = vpack.c.b16 %v2590, %v2587
      %v2669 = vpack.c.b16 %v2591, %v2588
      %v2670 = vpack.c.b16 %v2592, %v2589
      %v2671 = vpack.c.b16 %v2596, %v2593
      %v2672 = vpack.c.b16 %v2597, %v2594
      %v2673 = vpack.c.b16 %v2598, %v2595
      %v2674 = vpack.c.b16 %v2602, %v2599
      %v2675 = vpack.c.b16 %v2603, %v2600
      %v2676 = vpack.c.b16 %v2604, %v2601
      %v2677 = vpack.c.b16 %v2608, %v2605
      %v2678 = vpack.c.b16 %v2609, %v2606
      %v2679 = vpack.c.b16 %v2610, %v2607
      %v2680 = vpack.c.b16 %v2614, %v2611
      %v2681 = vpack.c.b16 %v2615, %v2612
      %v2682 = vpack.c.b16 %v2616, %v2613
      %v2683 = vpack.c.b16 %v2620, %v2617
      %v2684 = vpack.c.b16 %v2621, %v2618
      %v2685 = vpack.c.b16 %v2622, %v2619
      %v2686 = vpack.c.b16 %v2626, %v2623
      %v2687 = vpack.c.b16 %v2627, %v2624
      %v2688 = vpack.c.b16 %v2628, %v2625
      %v2689 = vpack.c.b16 %v2632, %v2629
      %v2690 = vpack.c.b16 %v2633, %v2630
      %v2691 = vpack.c.b16 %v2634, %v2631
      %v2692 = vpack.c.b16 %v2638, %v2635
      %v2693 = vpack.c.b16 %v2639, %v2636
      %v2694 = vpack.c.b16 %v2640, %v2637
      %v2695 = vpack.c.b16 %v2644, %v2641
      %v2696 = vpack.c.b16 %v2645, %v2642
      %v2697 = vpack.c.b16 %v2646, %v2643
      %v2698 = vpack.c.b16 %v2650, %v2647
      %v2699 = vpack.c.b16 %v2651, %v2648
      %v2700 = vpack.c.b16 %v2652, %v2649
      %v2797 = vunpack.c.l.b16 %v2445
      %v2798 = vunpack.c.l.b16 %v2446
      %v2799 = vunpack.c.l.b16 %v2447
      %v2800 = vunpack.c.l.b16 %v2448
      %v2801 = vunpack.c.l.b16 %v2449
      %v2802 = vunpack.c.l.b16 %v2450
      %v2803 = vunpack.c.l.b16 %v2451
      %v2804 = vunpack.c.l.b16 %v2452
      %v2805 = vunpack.c.l.b16 %v2453
      %v2806 = vunpack.c.l.b16 %v2454
      %v2807 = vunpack.c.l.b16 %v2455
      %v2808 = vunpack.c.l.b16 %v2456
      %v2809 = vunpack.c.l.b16 %v2457
      %v2810 = vunpack.c.l.b16 %v2458
      %v2811 = vunpack.c.l.b16 %v2459
      %v2812 = vunpack.c.l.b16 %v2460
      %v2813 = vunpack.c.l.b16 %v2461
      %v2814 = vunpack.c.l.b16 %v2462
      %v2815 = vunpack.c.l.b16 %v2463
      %v2816 = vunpack.c.l.b16 %v2464
      %v2817 = vunpack.c.l.b16 %v2465
      %v2818 = vunpack.c.l.b16 %v2466
      %v2819 = vunpack.c.l.b16 %v2467
      %v2820 = vunpack.c.l.b16 %v2468
      %v2821 = vunpack.c.l.b16 %v2469
      %v2822 = vunpack.c.l.b16 %v2470
      %v2823 = vunpack.c.l.b16 %v2471
      %v2824 = vunpack.c.l.b16 %v2472
      %v2825 = vunpack.c.l.b16 %v2473
      %v2826 = vunpack.c.l.b16 %v2474
      %v2827 = vunpack.c.l.b16 %v2475
      %v2828 = vunpack.c.l.b16 %v2476
      %v2829 = vunpack.c.l.b16 %v2477
      %v2830 = vunpack.c.l.b16 %v2478
      %v2831 = vunpack.c.l.b16 %v2479
      %v2832 = vunpack.c.l.b16 %v2480
      %v2833 = vunpack.c.l.b16 %v2481
      %v2834 = vunpack.c.l.b16 %v2482
      %v2835 = vunpack.c.l.b16 %v2483
      %v2836 = vunpack.c.l.b16 %v2484
      %v2837 = vunpack.c.l.b16 %v2485
      %v2838 = vunpack.c.l.b16 %v2486
      %v2839 = vunpack.c.l.b16 %v2487
      %v2840 = vunpack.c.l.b16 %v2488
      %v2841 = vunpack.c.l.b16 %v2489
      %v2842 = vunpack.c.l.b16 %v2490
      %v2843 = vunpack.c.l.b16 %v2491
      %v2844 = vunpack.c.l.b16 %v2492
      %v2845 = vpack.c.b16 %v2798, %v2797
      %v2846 = vpack.c.b16 %v2800, %v2799
      %v2847 = vpack.c.b16 %v2802, %v2801
      %v2848 = vpack.c.b16 %v2804, %v2803
      %v2849 = vpack.c.b16 %v2806, %v2805
      %v2850 = vpack.c.b16 %v2808, %v2807
      %v2851 = vpack.c.b16 %v2810, %v2809
      %v2852 = vpack.c.b16 %v2812, %v2811
      %v2853 = vpack.c.b16 %v2814, %v2813
      %v2854 = vpack.c.b16 %v2816, %v2815
      %v2855 = vpack.c.b16 %v2818, %v2817
      %v2856 = vpack.c.b16 %v2820, %v2819
      %v2857 = vpack.c.b16 %v2822, %v2821
      %v2858 = vpack.c.b16 %v2824, %v2823
      %v2859 = vpack.c.b16 %v2826, %v2825
      %v2860 = vpack.c.b16 %v2828, %v2827
      %v2861 = vpack.c.b16 %v2830, %v2829
      %v2862 = vpack.c.b16 %v2832, %v2831
      %v2863 = vpack.c.b16 %v2834, %v2833
      %v2864 = vpack.c.b16 %v2836, %v2835
      %v2865 = vpack.c.b16 %v2838, %v2837
      %v2866 = vpack.c.b16 %v2840, %v2839
      %v2867 = vpack.c.b16 %v2842, %v2841
      %v2868 = vpack.c.b16 %v2844, %v2843
      %2893 = vmatpush.bf16.msra.mxu0 %v2852
      %2894 = vmatpush.bf16.msra.mxu0 %v2851
      %2895 = vmatpush.bf16.msra.mxu0 %v2850
      %2896 = vmatpush.bf16.msra.mxu0 %v2849
      %2897 = vmatpush.bf16.msra.mxu0 %v2848
      %2898 = vmatpush.bf16.msra.mxu0 %v2847
      %2899 = vmatpush.bf16.msra.mxu0 %v2846
      %2900 = vmatpush.bf16.msra.mxu0 %v2845
      %2901 = vmatmul.bf16.gmra.mxu0 %v2653
      %v2902 = vpop.f32.mrf.mxu0
      %v2903 = vadd.f32 0.0, %v2902
      %v2904 = vpop.f32.mrf.mxu0
      %v2905 = vadd.f32 0.0, %v2904
      %2906 = vmatmul.bf16.gmra.mxu0 %v2656
      %v2907 = vpop.f32.mrf.mxu0
      %v2908 = vadd.f32 0.0, %v2907
      %v2909 = vpop.f32.mrf.mxu0
      %v2910 = vadd.f32 0.0, %v2909
      %2911 = vmatmul.bf16.gmra.mxu0 %v2659
      %v2912 = vpop.f32.mrf.mxu0
      %v2913 = vadd.f32 0.0, %v2912
      %v2914 = vpop.f32.mrf.mxu0
      %v2915 = vadd.f32 0.0, %v2914
      %2916 = vmatmul.bf16.gmra.mxu0 %v2662
      %v2917 = vpop.f32.mrf.mxu0
      %v2918 = vadd.f32 0.0, %v2917
      %v2919 = vpop.f32.mrf.mxu0
      %v2920 = vadd.f32 0.0, %v2919
      %2921 = vmatmul.bf16.gmra.mxu0 %v2665
      %v2922 = vpop.f32.mrf.mxu0
      %v2923 = vadd.f32 0.0, %v2922
      %v2924 = vpop.f32.mrf.mxu0
      %v2925 = vadd.f32 0.0, %v2924
      %2926 = vmatmul.bf16.gmra.mxu0 %v2668
      %v2927 = vpop.f32.mrf.mxu0
      %v2928 = vadd.f32 0.0, %v2927
      %v2929 = vpop.f32.mrf.mxu0
      %v2930 = vadd.f32 0.0, %v2929
      %2931 = vmatmul.bf16.gmra.mxu0 %v2671
      %v2932 = vpop.f32.mrf.mxu0
      %v2933 = vadd.f32 0.0, %v2932
      %v2934 = vpop.f32.mrf.mxu0
      %v2935 = vadd.f32 0.0, %v2934
      %2936 = vmatmul.bf16.gmra.mxu0 %v2674
      %v2937 = vpop.f32.mrf.mxu0
      %v2938 = vadd.f32 0.0, %v2937
      %v2939 = vpop.f32.mrf.mxu0
      %v2940 = vadd.f32 0.0, %v2939
      %2941 = vmatmul.bf16.gmra.mxu0 %v2677
      %v2942 = vpop.f32.mrf.mxu0
      %v2943 = vadd.f32 0.0, %v2942
      %v2944 = vpop.f32.mrf.mxu0
      %v2945 = vadd.f32 0.0, %v2944
      %2946 = vmatmul.bf16.gmra.mxu0 %v2680
      %v2947 = vpop.f32.mrf.mxu0
      %v2948 = vadd.f32 0.0, %v2947
      %v2949 = vpop.f32.mrf.mxu0
      %v2950 = vadd.f32 0.0, %v2949
      %2951 = vmatmul.bf16.gmra.mxu0 %v2683
      %v2952 = vpop.f32.mrf.mxu0
      %v2953 = vadd.f32 0.0, %v2952
      %v2954 = vpop.f32.mrf.mxu0
      %v2955 = vadd.f32 0.0, %v2954
      %2956 = vmatmul.bf16.gmra.mxu0 %v2686
      %v2957 = vpop.f32.mrf.mxu0
      %v2958 = vadd.f32 0.0, %v2957
      %v2959 = vpop.f32.mrf.mxu0
      %v2960 = vadd.f32 0.0, %v2959
      %2961 = vmatmul.bf16.gmra.mxu0 %v2689
      %v2962 = vpop.f32.mrf.mxu0
      %v2963 = vadd.f32 0.0, %v2962
      %v2964 = vpop.f32.mrf.mxu0
      %v2965 = vadd.f32 0.0, %v2964
      %2966 = vmatmul.bf16.gmra.mxu0 %v2692
      %v2967 = vpop.f32.mrf.mxu0
      %v2968 = vadd.f32 0.0, %v2967
      %v2969 = vpop.f32.mrf.mxu0
      %v2970 = vadd.f32 0.0, %v2969
      %2971 = vmatmul.bf16.gmra.mxu0 %v2695
      %v2972 = vpop.f32.mrf.mxu0
      %v2973 = vadd.f32 0.0, %v2972
      %v2974 = vpop.f32.mrf.mxu0
      %v2975 = vadd.f32 0.0, %v2974
      %2976 = vmatmul.bf16.gmra.mxu0 %v2698
      %v2977 = vpop.f32.mrf.mxu0
      %v2978 = vadd.f32 0.0, %v2977
      %v2979 = vpop.f32.mrf.mxu0
      %v2980 = vadd.f32 0.0, %v2979
      %2981 = vdwg.mxu0
      %2982 = vmatpush.bf16.msra.mxu0 %v2860
      %2983 = vmatpush.bf16.msra.mxu0 %v2859
      %2984 = vmatpush.bf16.msra.mxu0 %v2858
      %2985 = vmatpush.bf16.msra.mxu0 %v2857
      %2986 = vmatpush.bf16.msra.mxu0 %v2856
      %2987 = vmatpush.bf16.msra.mxu0 %v2855
      %2988 = vmatpush.bf16.msra.mxu0 %v2854
      %2989 = vmatpush.bf16.msra.mxu0 %v2853
      %2990 = vmatmul.bf16.gmra.mxu0 %v2654
      %v2991 = vpop.f32.mrf.mxu0
      %v2992 = vadd.f32 %v2903, %v2991
      %v2993 = vpop.f32.mrf.mxu0
      %v2994 = vadd.f32 %v2905, %v2993
      %2995 = vmatmul.bf16.gmra.mxu0 %v2657
      %v2996 = vpop.f32.mrf.mxu0
      %v2997 = vadd.f32 %v2908, %v2996
      %v2998 = vpop.f32.mrf.mxu0
      %v2999 = vadd.f32 %v2910, %v2998
      %3000 = vmatmul.bf16.gmra.mxu0 %v2660
      %v3001 = vpop.f32.mrf.mxu0
      %v3002 = vadd.f32 %v2913, %v3001
      %v3003 = vpop.f32.mrf.mxu0
      %v3004 = vadd.f32 %v2915, %v3003
      %3005 = vmatmul.bf16.gmra.mxu0 %v2663
      %v3006 = vpop.f32.mrf.mxu0
      %v3007 = vadd.f32 %v2918, %v3006
      %v3008 = vpop.f32.mrf.mxu0
      %v3009 = vadd.f32 %v2920, %v3008
      %3010 = vmatmul.bf16.gmra.mxu0 %v2666
      %v3011 = vpop.f32.mrf.mxu0
      %v3012 = vadd.f32 %v2923, %v3011
      %v3013 = vpop.f32.mrf.mxu0
      %v3014 = vadd.f32 %v2925, %v3013
      %3015 = vmatmul.bf16.gmra.mxu0 %v2669
      %v3016 = vpop.f32.mrf.mxu0
      %v3017 = vadd.f32 %v2928, %v3016
      %v3018 = vpop.f32.mrf.mxu0
      %v3019 = vadd.f32 %v2930, %v3018
      %3020 = vmatmul.bf16.gmra.mxu0 %v2672
      %v3021 = vpop.f32.mrf.mxu0
      %v3022 = vadd.f32 %v2933, %v3021
      %v3023 = vpop.f32.mrf.mxu0
      %v3024 = vadd.f32 %v2935, %v3023
      %3025 = vmatmul.bf16.gmra.mxu0 %v2675
      %v3026 = vpop.f32.mrf.mxu0
      %v3027 = vadd.f32 %v2938, %v3026
      %v3028 = vpop.f32.mrf.mxu0
      %v3029 = vadd.f32 %v2940, %v3028
      %3030 = vmatmul.bf16.gmra.mxu0 %v2678
      %v3031 = vpop.f32.mrf.mxu0
      %v3032 = vadd.f32 %v2943, %v3031
      %v3033 = vpop.f32.mrf.mxu0
      %v3034 = vadd.f32 %v2945, %v3033
      %3035 = vmatmul.bf16.gmra.mxu0 %v2681
      %v3036 = vpop.f32.mrf.mxu0
      %v3037 = vadd.f32 %v2948, %v3036
      %v3038 = vpop.f32.mrf.mxu0
      %v3039 = vadd.f32 %v2950, %v3038
      %3040 = vmatmul.bf16.gmra.mxu0 %v2684
      %v3041 = vpop.f32.mrf.mxu0
      %v3042 = vadd.f32 %v2953, %v3041
      %v3043 = vpop.f32.mrf.mxu0
      %v3044 = vadd.f32 %v2955, %v3043
      %3045 = vmatmul.bf16.gmra.mxu0 %v2687
      %v3046 = vpop.f32.mrf.mxu0
      %v3047 = vadd.f32 %v2958, %v3046
      %v3048 = vpop.f32.mrf.mxu0
      %v3049 = vadd.f32 %v2960, %v3048
      %3050 = vmatmul.bf16.gmra.mxu0 %v2690
      %v3051 = vpop.f32.mrf.mxu0
      %v3052 = vadd.f32 %v2963, %v3051
      %v3053 = vpop.f32.mrf.mxu0
      %v3054 = vadd.f32 %v2965, %v3053
      %3055 = vmatmul.bf16.gmra.mxu0 %v2693
      %v3056 = vpop.f32.mrf.mxu0
      %v3057 = vadd.f32 %v2968, %v3056
      %v3058 = vpop.f32.mrf.mxu0
      %v3059 = vadd.f32 %v2970, %v3058
      %3060 = vmatmul.bf16.gmra.mxu0 %v2696
      %v3061 = vpop.f32.mrf.mxu0
      %v3062 = vadd.f32 %v2973, %v3061
      %v3063 = vpop.f32.mrf.mxu0
      %v3064 = vadd.f32 %v2975, %v3063
      %3065 = vmatmul.bf16.gmra.mxu0 %v2699
      %v3066 = vpop.f32.mrf.mxu0
      %v3067 = vadd.f32 %v2978, %v3066
      %v3068 = vpop.f32.mrf.mxu0
      %v3069 = vadd.f32 %v2980, %v3068
      %3070 = vdwg.mxu0
      %3071 = vmatpush.bf16.msra.mxu0 %v2868
      %3072 = vmatpush.bf16.msra.mxu0 %v2867
      %3073 = vmatpush.bf16.msra.mxu0 %v2866
      %3074 = vmatpush.bf16.msra.mxu0 %v2865
      %3075 = vmatpush.bf16.msra.mxu0 %v2864
      %3076 = vmatpush.bf16.msra.mxu0 %v2863
      %3077 = vmatpush.bf16.msra.mxu0 %v2862
      %3078 = vmatpush.bf16.msra.mxu0 %v2861
      %3079 = vmatmul.bf16.gmra.mxu0 %v2655
      %v3080 = vpop.f32.mrf.mxu0
      %v3081 = vadd.f32 %v2992, %v3080
      %v3082 = vpop.f32.mrf.mxu0
      %v3083 = vadd.f32 %v2994, %v3082
      %3084 = vmatmul.bf16.gmra.mxu0 %v2658
      %v3085 = vpop.f32.mrf.mxu0
      %v3086 = vadd.f32 %v2997, %v3085
      %v3087 = vpop.f32.mrf.mxu0
      %v3088 = vadd.f32 %v2999, %v3087
      %3089 = vmatmul.bf16.gmra.mxu0 %v2661
      %v3090 = vpop.f32.mrf.mxu0
      %v3091 = vadd.f32 %v3002, %v3090
      %v3092 = vpop.f32.mrf.mxu0
      %v3093 = vadd.f32 %v3004, %v3092
      %3094 = vmatmul.bf16.gmra.mxu0 %v2664
      %v3095 = vpop.f32.mrf.mxu0
      %v3096 = vadd.f32 %v3007, %v3095
      %v3097 = vpop.f32.mrf.mxu0
      %v3098 = vadd.f32 %v3009, %v3097
      %3099 = vmatmul.bf16.gmra.mxu0 %v2667
      %v3100 = vpop.f32.mrf.mxu0
      %v3101 = vadd.f32 %v3012, %v3100
      %v3102 = vpop.f32.mrf.mxu0
      %v3103 = vadd.f32 %v3014, %v3102
      %3104 = vmatmul.bf16.gmra.mxu0 %v2670
      %v3105 = vpop.f32.mrf.mxu0
      %v3106 = vadd.f32 %v3017, %v3105
      %v3107 = vpop.f32.mrf.mxu0
      %v3108 = vadd.f32 %v3019, %v3107
      %3109 = vmatmul.bf16.gmra.mxu0 %v2673
      %v3110 = vpop.f32.mrf.mxu0
      %v3111 = vadd.f32 %v3022, %v3110
      %v3112 = vpop.f32.mrf.mxu0
      %v3113 = vadd.f32 %v3024, %v3112
      %3114 = vmatmul.bf16.gmra.mxu0 %v2676
      %v3115 = vpop.f32.mrf.mxu0
      %v3116 = vadd.f32 %v3027, %v3115
      %v3117 = vpop.f32.mrf.mxu0
      %v3118 = vadd.f32 %v3029, %v3117
      %3119 = vmatmul.bf16.gmra.mxu0 %v2679
      %v3120 = vpop.f32.mrf.mxu0
      %v3121 = vadd.f32 %v3032, %v3120
      %v3122 = vpop.f32.mrf.mxu0
      %v3123 = vadd.f32 %v3034, %v3122
      %3124 = vmatmul.bf16.gmra.mxu0 %v2682
      %v3125 = vpop.f32.mrf.mxu0
      %v3126 = vadd.f32 %v3037, %v3125
      %v3127 = vpop.f32.mrf.mxu0
      %v3128 = vadd.f32 %v3039, %v3127
      %3129 = vmatmul.bf16.gmra.mxu0 %v2685
      %v3130 = vpop.f32.mrf.mxu0
      %v3131 = vadd.f32 %v3042, %v3130
      %v3132 = vpop.f32.mrf.mxu0
      %v3133 = vadd.f32 %v3044, %v3132
      %3134 = vmatmul.bf16.gmra.mxu0 %v2688
      %v3135 = vpop.f32.mrf.mxu0
      %v3136 = vadd.f32 %v3047, %v3135
      %v3137 = vpop.f32.mrf.mxu0
      %v3138 = vadd.f32 %v3049, %v3137
      %3139 = vmatmul.bf16.gmra.mxu0 %v2691
      %v3140 = vpop.f32.mrf.mxu0
      %v3141 = vadd.f32 %v3052, %v3140
      %v3142 = vpop.f32.mrf.mxu0
      %v3143 = vadd.f32 %v3054, %v3142
      %3144 = vmatmul.bf16.gmra.mxu0 %v2694
      %v3145 = vpop.f32.mrf.mxu0
      %v3146 = vadd.f32 %v3057, %v3145
      %v3147 = vpop.f32.mrf.mxu0
      %v3148 = vadd.f32 %v3059, %v3147
      %3149 = vmatmul.bf16.gmra.mxu0 %v2697
      %v3150 = vpop.f32.mrf.mxu0
      %v3151 = vadd.f32 %v3062, %v3150
      %v3152 = vpop.f32.mrf.mxu0
      %v3153 = vadd.f32 %v3064, %v3152
      %3154 = vmatmul.bf16.gmra.mxu0 %v2700
      %v3155 = vpop.f32.mrf.mxu0
      %v3156 = vadd.f32 %v3067, %v3155
      %v3157 = vpop.f32.mrf.mxu0
      %v3158 = vadd.f32 %v3069, %v3157
      %3159 = vdwg.mxu0
      %v3160 = vadd.f32 %v2301, %v3081
      %v3161 = vadd.f32 %v2303, %v3083
      %v3162 = vadd.f32 %v2306, %v3086
      %v3163 = vadd.f32 %v2308, %v3088
      %v3164 = vadd.f32 %v2311, %v3091
      %v3165 = vadd.f32 %v2313, %v3093
      %v3166 = vadd.f32 %v2316, %v3096
      %v3167 = vadd.f32 %v2318, %v3098
      %v3168 = vadd.f32 %v2321, %v3101
      %v3169 = vadd.f32 %v2323, %v3103
      %v3170 = vadd.f32 %v2326, %v3106
      %v3171 = vadd.f32 %v2328, %v3108
      %v3172 = vadd.f32 %v2331, %v3111
      %v3173 = vadd.f32 %v2333, %v3113
      %v3174 = vadd.f32 %v2336, %v3116
      %v3175 = vadd.f32 %v2338, %v3118
      %v3176 = vadd.f32 %v2341, %v3121
      %v3177 = vadd.f32 %v2343, %v3123
      %v3178 = vadd.f32 %v2346, %v3126
      %v3179 = vadd.f32 %v2348, %v3128
      %v3180 = vadd.f32 %v2351, %v3131
      %v3181 = vadd.f32 %v2353, %v3133
      %v3182 = vadd.f32 %v2356, %v3136
      %v3183 = vadd.f32 %v2358, %v3138
      %v3184 = vadd.f32 %v2361, %v3141
      %v3185 = vadd.f32 %v2363, %v3143
      %v3186 = vadd.f32 %v2366, %v3146
      %v3187 = vadd.f32 %v2368, %v3148
      %v3188 = vadd.f32 %v2371, %v3151
      %v3189 = vadd.f32 %v2373, %v3153
      %v3190 = vadd.f32 %v2376, %v3156
      %v3191 = vadd.f32 %v2378, %v3158
      %v3192 = vadd.f32 %v3160, %v3161
      %v3193 = vadd.f32 %v3192, %v3162
      %v3194 = vadd.f32 %v3193, %v3163
      %v3195 = vadd.f32 %v3194, %v3164
      %v3196 = vadd.f32 %v3195, %v3165
      %v3197 = vadd.f32 %v3196, %v3166
      %v3198 = vadd.f32 %v3197, %v3167
      %v3199 = vadd.f32 %v3198, %v3168
      %v3200 = vadd.f32 %v3199, %v3169
      %v3201 = vadd.f32 %v3200, %v3170
      %v3202 = vadd.f32 %v3201, %v3171
      %v3203 = vadd.f32 %v3202, %v3172
      %v3204 = vadd.f32 %v3203, %v3173
      %v3205 = vadd.f32 %v3204, %v3174
      %v3206 = vadd.f32 %v3205, %v3175
      %v3207 = vadd.f32 %v3206, %v3176
      %v3208 = vadd.f32 %v3207, %v3177
      %v3209 = vadd.f32 %v3208, %v3178
      %v3210 = vadd.f32 %v3209, %v3179
      %v3211 = vadd.f32 %v3210, %v3180
      %v3212 = vadd.f32 %v3211, %v3181
      %v3213 = vadd.f32 %v3212, %v3182
      %v3214 = vadd.f32 %v3213, %v3183
      %v3215 = vadd.f32 %v3214, %v3184
      %v3216 = vadd.f32 %v3215, %v3185
      %v3217 = vadd.f32 %v3216, %v3186
      %v3218 = vadd.f32 %v3217, %v3187
      %v3219 = vadd.f32 %v3218, %v3188
      %v3220 = vadd.f32 %v3219, %v3189
      %v3221 = vadd.f32 %v3220, %v3190
      %v3222 = vadd.f32 %v3221, %v3191
      %v3223 = vrot.slane %v3222, 4
      %v3224 = vadd.f32 %v3222, %v3223
      %v3225 = vrot.slane %v3224, 2
      %v3226 = vadd.f32 %v3224, %v3225
      %v3227 = vrot.slane %v3226, 1
      %v3228 = vadd.f32 %v3226, %v3227
      %3229 = vst [vmem:[%s341] sm:$0x1] %v3228
      %v3230 = vmul.f32 %v3160, %v3160
      %v3231 = vmul.f32 %v3161, %v3161
      %v3232 = vmul.f32 %v3162, %v3162
      %v3233 = vmul.f32 %v3163, %v3163
      %v3234 = vmul.f32 %v3164, %v3164
      %v3235 = vmul.f32 %v3165, %v3165
      %v3236 = vmul.f32 %v3166, %v3166
      %v3237 = vmul.f32 %v3167, %v3167
      %v3238 = vmul.f32 %v3168, %v3168
      %v3239 = vmul.f32 %v3169, %v3169
      %v3240 = vmul.f32 %v3170, %v3170
      %v3241 = vmul.f32 %v3171, %v3171
      %v3242 = vmul.f32 %v3172, %v3172
      %v3243 = vmul.f32 %v3173, %v3173
      %v3244 = vmul.f32 %v3174, %v3174
      %v3245 = vmul.f32 %v3175, %v3175
      %v3246 = vmul.f32 %v3176, %v3176
      %v3247 = vmul.f32 %v3177, %v3177
      %v3248 = vmul.f32 %v3178, %v3178
      %v3249 = vmul.f32 %v3179, %v3179
      %v3250 = vmul.f32 %v3180, %v3180
      %v3251 = vmul.f32 %v3181, %v3181
      %v3252 = vmul.f32 %v3182, %v3182
      %v3253 = vmul.f32 %v3183, %v3183
      %v3254 = vmul.f32 %v3184, %v3184
      %v3255 = vmul.f32 %v3185, %v3185
      %v3256 = vmul.f32 %v3186, %v3186
      %v3257 = vmul.f32 %v3187, %v3187
      %v3258 = vmul.f32 %v3188, %v3188
      %v3259 = vmul.f32 %v3189, %v3189
      %v3260 = vmul.f32 %v3190, %v3190
      %v3261 = vmul.f32 %v3191, %v3191
      %v3262 = vadd.f32 %v3230, %v3231
      %v3263 = vadd.f32 %v3262, %v3232
      %v3264 = vadd.f32 %v3263, %v3233
      %v3265 = vadd.f32 %v3264, %v3234
      %v3266 = vadd.f32 %v3265, %v3235
      %v3267 = vadd.f32 %v3266, %v3236
      %v3268 = vadd.f32 %v3267, %v3237
      %v3269 = vadd.f32 %v3268, %v3238
      %v3270 = vadd.f32 %v3269, %v3239
      %v3271 = vadd.f32 %v3270, %v3240
      %v3272 = vadd.f32 %v3271, %v3241
      %v3273 = vadd.f32 %v3272, %v3242
      %v3274 = vadd.f32 %v3273, %v3243
      %v3275 = vadd.f32 %v3274, %v3244
      %v3276 = vadd.f32 %v3275, %v3245
      %v3277 = vadd.f32 %v3276, %v3246
      %v3278 = vadd.f32 %v3277, %v3247
      %v3279 = vadd.f32 %v3278, %v3248
      %v3280 = vadd.f32 %v3279, %v3249
      %v3281 = vadd.f32 %v3280, %v3250
      %v3282 = vadd.f32 %v3281, %v3251
      %v3283 = vadd.f32 %v3282, %v3252
      %v3284 = vadd.f32 %v3283, %v3253
      %v3285 = vadd.f32 %v3284, %v3254
      %v3286 = vadd.f32 %v3285, %v3255
      %v3287 = vadd.f32 %v3286, %v3256
      %v3288 = vadd.f32 %v3287, %v3257
      %v3289 = vadd.f32 %v3288, %v3258
      %v3290 = vadd.f32 %v3289, %v3259
      %v3291 = vadd.f32 %v3290, %v3260
      %v3292 = vadd.f32 %v3291, %v3261
      %v3293 = vrot.slane %v3292, 4
      %v3294 = vadd.f32 %v3292, %v3293
      %v3295 = vrot.slane %v3294, 2
      %v3296 = vadd.f32 %v3294, %v3295
      %v3297 = vrot.slane %v3296, 1
      %v3298 = vadd.f32 %v3296, %v3297
      %3299 = vst [vmem:[%s344] sm:$0x1] %v3298
      %v3300 = vpack.c.bf16 %v3160, %v3160
      %v3301 = vpack.c.bf16 %v3161, %v3161
      %v3302 = vpack.c.bf16 %v3162, %v3162
      %v3303 = vpack.c.bf16 %v3163, %v3163
      %v3304 = vpack.c.bf16 %v3164, %v3164
      %v3305 = vpack.c.bf16 %v3165, %v3165
      %v3306 = vpack.c.bf16 %v3166, %v3166
      %v3307 = vpack.c.bf16 %v3167, %v3167
      %v3308 = vpack.c.bf16 %v3168, %v3168
      %v3309 = vpack.c.bf16 %v3169, %v3169
      %v3310 = vpack.c.bf16 %v3170, %v3170
      %v3311 = vpack.c.bf16 %v3171, %v3171
      %v3312 = vpack.c.bf16 %v3172, %v3172
      %v3313 = vpack.c.bf16 %v3173, %v3173
      %v3314 = vpack.c.bf16 %v3174, %v3174
      %v3315 = vpack.c.bf16 %v3175, %v3175
      %v3316 = vpack.c.bf16 %v3176, %v3176
      %v3317 = vpack.c.bf16 %v3177, %v3177
      %v3318 = vpack.c.bf16 %v3178, %v3178
      %v3319 = vpack.c.bf16 %v3179, %v3179
      %v3320 = vpack.c.bf16 %v3180, %v3180
      %v3321 = vpack.c.bf16 %v3181, %v3181
      %v3322 = vpack.c.bf16 %v3182, %v3182
      %v3323 = vpack.c.bf16 %v3183, %v3183
      %v3324 = vpack.c.bf16 %v3184, %v3184
      %v3325 = vpack.c.bf16 %v3185, %v3185
      %v3326 = vpack.c.bf16 %v3186, %v3186
      %v3327 = vpack.c.bf16 %v3187, %v3187
      %v3328 = vpack.c.bf16 %v3188, %v3188
      %v3329 = vpack.c.bf16 %v3189, %v3189
      %v3330 = vpack.c.bf16 %v3190, %v3190
      %v3331 = vpack.c.bf16 %v3191, %v3191
      %3332 = vst [vmem:[%s333] sm:$0xf] %v3300
      %3333 = vst [vmem:[%s333 + $0x4] sm:$0xf] %v3301
      %3334 = vst [vmem:[%s333 + $0x8] sm:$0xf] %v3302
      %3335 = vst [vmem:[%s333 + $0xc] sm:$0xf] %v3303
      %3336 = vst [vmem:[%s333 + $0x10] sm:$0xf] %v3304
      %3337 = vst [vmem:[%s333 + $0x14] sm:$0xf] %v3305
      %3338 = vst [vmem:[%s333 + $0x18] sm:$0xf] %v3306
      %3339 = vst [vmem:[%s333 + $0x1c] sm:$0xf] %v3307
      %3340 = vst [vmem:[%s333 + $0x20] sm:$0xf] %v3308
      %3341 = vst [vmem:[%s333 + $0x24] sm:$0xf] %v3309
      %3342 = vst [vmem:[%s333 + $0x28] sm:$0xf] %v3310
      %3343 = vst [vmem:[%s333 + $0x2c] sm:$0xf] %v3311
      %3344 = vst [vmem:[%s333 + $0x30] sm:$0xf] %v3312
      %3345 = vst [vmem:[%s333 + $0x34] sm:$0xf] %v3313
      %3346 = vst [vmem:[%s333 + $0x38] sm:$0xf] %v3314
      %3347 = vst [vmem:[%s333 + $0x3c] sm:$0xf] %v3315
      %3348 = vst [vmem:[%s333 + $0x40] sm:$0xf] %v3316
      %3349 = vst [vmem:[%s333 + $0x44] sm:$0xf] %v3317
      %3350 = vst [vmem:[%s333 + $0x48] sm:$0xf] %v3318
      %3351 = vst [vmem:[%s333 + $0x4c] sm:$0xf] %v3319
      %3352 = vst [vmem:[%s333 + $0x50] sm:$0xf] %v3320
      %3353 = vst [vmem:[%s333 + $0x54] sm:$0xf] %v3321
      %3354 = vst [vmem:[%s333 + $0x58] sm:$0xf] %v3322
      %3355 = vst [vmem:[%s333 + $0x5c] sm:$0xf] %v3323
      %3356 = vst [vmem:[%s333 + $0x60] sm:$0xf] %v3324
      %3357 = vst [vmem:[%s333 + $0x64] sm:$0xf] %v3325
      %3358 = vst [vmem:[%s333 + $0x68] sm:$0xf] %v3326
      %3359 = vst [vmem:[%s333 + $0x6c] sm:$0xf] %v3327
      %3360 = vst [vmem:[%s333 + $0x70] sm:$0xf] %v3328
      %3361 = vst [vmem:[%s333 + $0x74] sm:$0xf] %v3329
      %3362 = vst [vmem:[%s333 + $0x78] sm:$0xf] %v3330
      %3363 = vst [vmem:[%s333 + $0x7c] sm:$0xf] %v3331
      %v3364 = vld [vmem:[%s2] sm:$0xf]
      %v3365 = vld [vmem:[%s2 + $0x4] sm:$0xf]
      %v3366 = vld [vmem:[%s2 + $0x8] sm:$0xf]
      %v3367 = vld [vmem:[%s2 + $0xc] sm:$0xf]
      %v3368 = vld [vmem:[%s2 + $0x10] sm:$0xf]
      %v3369 = vld [vmem:[%s2 + $0x14] sm:$0xf]
      %v3370 = vld [vmem:[%s2 + $0x18] sm:$0xf]
      %v3371 = vld [vmem:[%s2 + $0x1c] sm:$0xf]
      %v3372 = vld [vmem:[%s2 + $0x20] sm:$0xf]
      %v3373 = vld [vmem:[%s2 + $0x24] sm:$0xf]
      %v3374 = vld [vmem:[%s2 + $0x28] sm:$0xf]
      %v3375 = vld [vmem:[%s2 + $0x2c] sm:$0xf]
      %v3376 = vld [vmem:[%s2 + $0x30] sm:$0xf]
      %v3377 = vld [vmem:[%s2 + $0x34] sm:$0xf]
      %v3378 = vld [vmem:[%s2 + $0x38] sm:$0xf]
      %v3379 = vld [vmem:[%s2 + $0x3c] sm:$0xf]
      %v3412 = vunpack.c.l.b16 %v352
      %v3413 = vunpack.c.l.b16 %v353
      %v3414 = vunpack.c.l.b16 %v354
      %v3415 = vunpack.c.l.b16 %v355
      %v3416 = vunpack.c.l.b16 %v356
      %v3417 = vunpack.c.l.b16 %v357
      %v3418 = vunpack.c.l.b16 %v358
      %v3419 = vunpack.c.l.b16 %v359
      %v3420 = vunpack.c.l.b16 %v360
      %v3421 = vunpack.c.l.b16 %v361
      %v3422 = vunpack.c.l.b16 %v362
      %v3423 = vunpack.c.l.b16 %v363
      %v3424 = vunpack.c.l.b16 %v364
      %v3425 = vunpack.c.l.b16 %v365
      %v3426 = vunpack.c.l.b16 %v366
      %v3427 = vunpack.c.l.b16 %v367
      %v3428 = vunpack.c.l.b16 %v368
      %v3429 = vunpack.c.l.b16 %v369
      %v3430 = vunpack.c.l.b16 %v370
      %v3431 = vunpack.c.l.b16 %v371
      %v3432 = vunpack.c.l.b16 %v372
      %v3433 = vunpack.c.l.b16 %v373
      %v3434 = vunpack.c.l.b16 %v374
      %v3435 = vunpack.c.l.b16 %v375
      %v3436 = vunpack.c.l.b16 %v376
      %v3437 = vunpack.c.l.b16 %v377
      %v3438 = vunpack.c.l.b16 %v378
      %v3439 = vunpack.c.l.b16 %v379
      %v3440 = vunpack.c.l.b16 %v380
      %v3441 = vunpack.c.l.b16 %v381
      %v3442 = vunpack.c.l.b16 %v382
      %v3443 = vunpack.c.l.b16 %v383
      %v3444 = vpack.c.b16 %v3413, %v3412
      %v3445 = vpack.c.b16 %v3415, %v3414
      %v3446 = vpack.c.b16 %v3417, %v3416
      %v3447 = vpack.c.b16 %v3419, %v3418
      %v3448 = vpack.c.b16 %v3421, %v3420
      %v3449 = vpack.c.b16 %v3423, %v3422
      %v3450 = vpack.c.b16 %v3425, %v3424
      %v3451 = vpack.c.b16 %v3427, %v3426
      %v3452 = vpack.c.b16 %v3429, %v3428
      %v3453 = vpack.c.b16 %v3431, %v3430
      %v3454 = vpack.c.b16 %v3433, %v3432
      %v3455 = vpack.c.b16 %v3435, %v3434
      %v3456 = vpack.c.b16 %v3437, %v3436
      %v3457 = vpack.c.b16 %v3439, %v3438
      %v3458 = vpack.c.b16 %v3441, %v3440
      %v3459 = vpack.c.b16 %v3443, %v3442
      %v3492 = vunpack.c.l.b16 %v3364
      %v3493 = vunpack.c.l.b16 %v3365
      %v3494 = vunpack.c.l.b16 %v3366
      %v3495 = vunpack.c.l.b16 %v3367
      %v3496 = vunpack.c.l.b16 %v3368
      %v3497 = vunpack.c.l.b16 %v3369
      %v3498 = vunpack.c.l.b16 %v3370
      %v3499 = vunpack.c.l.b16 %v3371
      %v3500 = vunpack.c.l.b16 %v3372
      %v3501 = vunpack.c.l.b16 %v3373
      %v3502 = vunpack.c.l.b16 %v3374
      %v3503 = vunpack.c.l.b16 %v3375
      %v3504 = vunpack.c.l.b16 %v3376
      %v3505 = vunpack.c.l.b16 %v3377
      %v3506 = vunpack.c.l.b16 %v3378
      %v3507 = vunpack.c.l.b16 %v3379
      %v3508 = vpack.c.b16 %v3493, %v3492
      %v3509 = vpack.c.b16 %v3495, %v3494
      %v3510 = vpack.c.b16 %v3497, %v3496
      %v3511 = vpack.c.b16 %v3499, %v3498
      %v3512 = vpack.c.b16 %v3501, %v3500
      %v3513 = vpack.c.b16 %v3503, %v3502
      %v3514 = vpack.c.b16 %v3505, %v3504
      %v3515 = vpack.c.b16 %v3507, %v3506
      %3524 = vmatpush.bf16.msra.mxu0 %v3515
      %3525 = vmatpush.bf16.msra.mxu0 %v3514
      %3526 = vmatpush.bf16.msra.mxu0 %v3513
      %3527 = vmatpush.bf16.msra.mxu0 %v3512
      %3528 = vmatpush.bf16.msra.mxu0 %v3511
      %3529 = vmatpush.bf16.msra.mxu0 %v3510
      %3530 = vmatpush.bf16.msra.mxu0 %v3509
      %3531 = vmatpush.bf16.msra.mxu0 %v3508
      %3532 = vmatmul.bf16.gmra.mxu0 %v3444
      %v3533 = vpop.f32.mrf.mxu0
      %v3534 = vadd.f32 0.0, %v3533
      %v3535 = vpop.f32.mrf.mxu0
      %v3536 = vadd.f32 0.0, %v3535
      %3537 = vmatmul.bf16.gmra.mxu0 %v3445
      %v3538 = vpop.f32.mrf.mxu0
      %v3539 = vadd.f32 0.0, %v3538
      %v3540 = vpop.f32.mrf.mxu0
      %v3541 = vadd.f32 0.0, %v3540
      %3542 = vmatmul.bf16.gmra.mxu0 %v3446
      %v3543 = vpop.f32.mrf.mxu0
      %v3544 = vadd.f32 0.0, %v3543
      %v3545 = vpop.f32.mrf.mxu0
      %v3546 = vadd.f32 0.0, %v3545
      %3547 = vmatmul.bf16.gmra.mxu0 %v3447
      %v3548 = vpop.f32.mrf.mxu0
      %v3549 = vadd.f32 0.0, %v3548
      %v3550 = vpop.f32.mrf.mxu0
      %v3551 = vadd.f32 0.0, %v3550
      %3552 = vmatmul.bf16.gmra.mxu0 %v3448
      %v3553 = vpop.f32.mrf.mxu0
      %v3554 = vadd.f32 0.0, %v3553
      %v3555 = vpop.f32.mrf.mxu0
      %v3556 = vadd.f32 0.0, %v3555
      %3557 = vmatmul.bf16.gmra.mxu0 %v3449
      %v3558 = vpop.f32.mrf.mxu0
      %v3559 = vadd.f32 0.0, %v3558
      %v3560 = vpop.f32.mrf.mxu0
      %v3561 = vadd.f32 0.0, %v3560
      %3562 = vmatmul.bf16.gmra.mxu0 %v3450
      %v3563 = vpop.f32.mrf.mxu0
      %v3564 = vadd.f32 0.0, %v3563
      %v3565 = vpop.f32.mrf.mxu0
      %v3566 = vadd.f32 0.0, %v3565
      %3567 = vmatmul.bf16.gmra.mxu0 %v3451
      %v3568 = vpop.f32.mrf.mxu0
      %v3569 = vadd.f32 0.0, %v3568
      %v3570 = vpop.f32.mrf.mxu0
      %v3571 = vadd.f32 0.0, %v3570
      %3572 = vmatmul.bf16.gmra.mxu0 %v3452
      %v3573 = vpop.f32.mrf.mxu0
      %v3574 = vadd.f32 0.0, %v3573
      %v3575 = vpop.f32.mrf.mxu0
      %v3576 = vadd.f32 0.0, %v3575
      %3577 = vmatmul.bf16.gmra.mxu0 %v3453
      %v3578 = vpop.f32.mrf.mxu0
      %v3579 = vadd.f32 0.0, %v3578
      %v3580 = vpop.f32.mrf.mxu0
      %v3581 = vadd.f32 0.0, %v3580
      %3582 = vmatmul.bf16.gmra.mxu0 %v3454
      %v3583 = vpop.f32.mrf.mxu0
      %v3584 = vadd.f32 0.0, %v3583
      %v3585 = vpop.f32.mrf.mxu0
      %v3586 = vadd.f32 0.0, %v3585
      %3587 = vmatmul.bf16.gmra.mxu0 %v3455
      %v3588 = vpop.f32.mrf.mxu0
      %v3589 = vadd.f32 0.0, %v3588
      %v3590 = vpop.f32.mrf.mxu0
      %v3591 = vadd.f32 0.0, %v3590
      %3592 = vmatmul.bf16.gmra.mxu0 %v3456
      %v3593 = vpop.f32.mrf.mxu0
      %v3594 = vadd.f32 0.0, %v3593
      %v3595 = vpop.f32.mrf.mxu0
      %v3596 = vadd.f32 0.0, %v3595
      %3597 = vmatmul.bf16.gmra.mxu0 %v3457
      %v3598 = vpop.f32.mrf.mxu0
      %v3599 = vadd.f32 0.0, %v3598
      %v3600 = vpop.f32.mrf.mxu0
      %v3601 = vadd.f32 0.0, %v3600
      %3602 = vmatmul.bf16.gmra.mxu0 %v3458
      %v3603 = vpop.f32.mrf.mxu0
      %v3604 = vadd.f32 0.0, %v3603
      %v3605 = vpop.f32.mrf.mxu0
      %v3606 = vadd.f32 0.0, %v3605
      %3607 = vmatmul.bf16.gmra.mxu0 %v3459
      %v3608 = vpop.f32.mrf.mxu0
      %v3609 = vadd.f32 0.0, %v3608
      %v3610 = vpop.f32.mrf.mxu0
      %v3611 = vadd.f32 0.0, %v3610
      %3612 = vdwg.mxu0
      %v3613 = vadd.f32 %v3534, %v3536
      %v3614 = vadd.f32 %v3613, %v3539
      %v3615 = vadd.f32 %v3614, %v3541
      %v3616 = vadd.f32 %v3615, %v3544
      %v3617 = vadd.f32 %v3616, %v3546
      %v3618 = vadd.f32 %v3617, %v3549
      %v3619 = vadd.f32 %v3618, %v3551
      %v3620 = vadd.f32 %v3619, %v3554
      %v3621 = vadd.f32 %v3620, %v3556
      %v3622 = vadd.f32 %v3621, %v3559
      %v3623 = vadd.f32 %v3622, %v3561
      %v3624 = vadd.f32 %v3623, %v3564
      %v3625 = vadd.f32 %v3624, %v3566
      %v3626 = vadd.f32 %v3625, %v3569
      %v3627 = vadd.f32 %v3626, %v3571
      %v3628 = vadd.f32 %v3627, %v3574
      %v3629 = vadd.f32 %v3628, %v3576
      %v3630 = vadd.f32 %v3629, %v3579
      %v3631 = vadd.f32 %v3630, %v3581
      %v3632 = vadd.f32 %v3631, %v3584
      %v3633 = vadd.f32 %v3632, %v3586
      %v3634 = vadd.f32 %v3633, %v3589
      %v3635 = vadd.f32 %v3634, %v3591
      %v3636 = vadd.f32 %v3635, %v3594
      %v3637 = vadd.f32 %v3636, %v3596
      %v3638 = vadd.f32 %v3637, %v3599
      %v3639 = vadd.f32 %v3638, %v3601
      %v3640 = vadd.f32 %v3639, %v3604
      %v3641 = vadd.f32 %v3640, %v3606
      %v3642 = vadd.f32 %v3641, %v3609
      %v3643 = vadd.f32 %v3642, %v3611
      %v3644 = vrot.slane %v3643, 4
      %v3645 = vadd.f32 %v3643, %v3644
      %v3646 = vrot.slane %v3645, 2
      %v3647 = vadd.f32 %v3645, %v3646
      %v3648 = vrot.slane %v3647, 1
      %v3649 = vadd.f32 %v3647, %v3648
      %3650 = vst [vmem:[%s347] sm:$0x1] %v3649
      %v3651 = vmul.f32 %v3534, %v3534
      %v3652 = vmul.f32 %v3536, %v3536
      %v3653 = vmul.f32 %v3539, %v3539
      %v3654 = vmul.f32 %v3541, %v3541
      %v3655 = vmul.f32 %v3544, %v3544
      %v3656 = vmul.f32 %v3546, %v3546
      %v3657 = vmul.f32 %v3549, %v3549
      %v3658 = vmul.f32 %v3551, %v3551
      %v3659 = vmul.f32 %v3554, %v3554
      %v3660 = vmul.f32 %v3556, %v3556
      %v3661 = vmul.f32 %v3559, %v3559
      %v3662 = vmul.f32 %v3561, %v3561
      %v3663 = vmul.f32 %v3564, %v3564
      %v3664 = vmul.f32 %v3566, %v3566
      %v3665 = vmul.f32 %v3569, %v3569
      %v3666 = vmul.f32 %v3571, %v3571
      %v3667 = vmul.f32 %v3574, %v3574
      %v3668 = vmul.f32 %v3576, %v3576
      %v3669 = vmul.f32 %v3579, %v3579
      %v3670 = vmul.f32 %v3581, %v3581
      %v3671 = vmul.f32 %v3584, %v3584
      %v3672 = vmul.f32 %v3586, %v3586
      %v3673 = vmul.f32 %v3589, %v3589
      %v3674 = vmul.f32 %v3591, %v3591
      %v3675 = vmul.f32 %v3594, %v3594
      %v3676 = vmul.f32 %v3596, %v3596
      %v3677 = vmul.f32 %v3599, %v3599
      %v3678 = vmul.f32 %v3601, %v3601
      %v3679 = vmul.f32 %v3604, %v3604
      %v3680 = vmul.f32 %v3606, %v3606
      %v3681 = vmul.f32 %v3609, %v3609
      %v3682 = vmul.f32 %v3611, %v3611
      %v3683 = vadd.f32 %v3651, %v3652
      %v3684 = vadd.f32 %v3683, %v3653
      %v3685 = vadd.f32 %v3684, %v3654
      %v3686 = vadd.f32 %v3685, %v3655
      %v3687 = vadd.f32 %v3686, %v3656
      %v3688 = vadd.f32 %v3687, %v3657
      %v3689 = vadd.f32 %v3688, %v3658
      %v3690 = vadd.f32 %v3689, %v3659
      %v3691 = vadd.f32 %v3690, %v3660
      %v3692 = vadd.f32 %v3691, %v3661
      %v3693 = vadd.f32 %v3692, %v3662
      %v3694 = vadd.f32 %v3693, %v3663
      %v3695 = vadd.f32 %v3694, %v3664
      %v3696 = vadd.f32 %v3695, %v3665
      %v3697 = vadd.f32 %v3696, %v3666
      %v3698 = vadd.f32 %v3697, %v3667
      %v3699 = vadd.f32 %v3698, %v3668
      %v3700 = vadd.f32 %v3699, %v3669
      %v3701 = vadd.f32 %v3700, %v3670
      %v3702 = vadd.f32 %v3701, %v3671
      %v3703 = vadd.f32 %v3702, %v3672
      %v3704 = vadd.f32 %v3703, %v3673
      %v3705 = vadd.f32 %v3704, %v3674
      %v3706 = vadd.f32 %v3705, %v3675
      %v3707 = vadd.f32 %v3706, %v3676
      %v3708 = vadd.f32 %v3707, %v3677
      %v3709 = vadd.f32 %v3708, %v3678
      %v3710 = vadd.f32 %v3709, %v3679
      %v3711 = vadd.f32 %v3710, %v3680
      %v3712 = vadd.f32 %v3711, %v3681
      %v3713 = vadd.f32 %v3712, %v3682
      %v3714 = vrot.slane %v3713, 4
      %v3715 = vadd.f32 %v3713, %v3714
      %v3716 = vrot.slane %v3715, 2
      %v3717 = vadd.f32 %v3715, %v3716
      %v3718 = vrot.slane %v3717, 1
      %v3719 = vadd.f32 %v3717, %v3718
      %3720 = vst [vmem:[%s350] sm:$0x1] %v3719
      %v3721 = vpack.c.bf16 %v3534, %v3534
      %v3722 = vpack.c.bf16 %v3536, %v3536
      %v3723 = vpack.c.bf16 %v3539, %v3539
      %v3724 = vpack.c.bf16 %v3541, %v3541
      %v3725 = vpack.c.bf16 %v3544, %v3544
      %v3726 = vpack.c.bf16 %v3546, %v3546
      %v3727 = vpack.c.bf16 %v3549, %v3549
      %v3728 = vpack.c.bf16 %v3551, %v3551
      %v3729 = vpack.c.bf16 %v3554, %v3554
      %v3730 = vpack.c.bf16 %v3556, %v3556
      %v3731 = vpack.c.bf16 %v3559, %v3559
      %v3732 = vpack.c.bf16 %v3561, %v3561
      %v3733 = vpack.c.bf16 %v3564, %v3564
      %v3734 = vpack.c.bf16 %v3566, %v3566
      %v3735 = vpack.c.bf16 %v3569, %v3569
      %v3736 = vpack.c.bf16 %v3571, %v3571
      %v3737 = vpack.c.bf16 %v3574, %v3574
      %v3738 = vpack.c.bf16 %v3576, %v3576
      %v3739 = vpack.c.bf16 %v3579, %v3579
      %v3740 = vpack.c.bf16 %v3581, %v3581
      %v3741 = vpack.c.bf16 %v3584, %v3584
      %v3742 = vpack.c.bf16 %v3586, %v3586
      %v3743 = vpack.c.bf16 %v3589, %v3589
      %v3744 = vpack.c.bf16 %v3591, %v3591
      %v3745 = vpack.c.bf16 %v3594, %v3594
      %v3746 = vpack.c.bf16 %v3596, %v3596
      %v3747 = vpack.c.bf16 %v3599, %v3599
      %v3748 = vpack.c.bf16 %v3601, %v3601
      %v3749 = vpack.c.bf16 %v3604, %v3604
      %v3750 = vpack.c.bf16 %v3606, %v3606
      %v3751 = vpack.c.bf16 %v3609, %v3609
      %v3752 = vpack.c.bf16 %v3611, %v3611
      %3753 = vst [vmem:[%s338] sm:$0xf] %v3721
      %3754 = vst [vmem:[%s338 + $0x4] sm:$0xf] %v3722
      %3755 = vst [vmem:[%s338 + $0x8] sm:$0xf] %v3723
      %3756 = vst [vmem:[%s338 + $0xc] sm:$0xf] %v3724
      %3757 = vst [vmem:[%s338 + $0x10] sm:$0xf] %v3725
      %3758 = vst [vmem:[%s338 + $0x14] sm:$0xf] %v3726
      %3759 = vst [vmem:[%s338 + $0x18] sm:$0xf] %v3727
      %3760 = vst [vmem:[%s338 + $0x1c] sm:$0xf] %v3728
      %3761 = vst [vmem:[%s338 + $0x20] sm:$0xf] %v3729
      %3762 = vst [vmem:[%s338 + $0x24] sm:$0xf] %v3730
      %3763 = vst [vmem:[%s338 + $0x28] sm:$0xf] %v3731
      %3764 = vst [vmem:[%s338 + $0x2c] sm:$0xf] %v3732
      %3765 = vst [vmem:[%s338 + $0x30] sm:$0xf] %v3733
      %3766 = vst [vmem:[%s338 + $0x34] sm:$0xf] %v3734
      %3767 = vst [vmem:[%s338 + $0x38] sm:$0xf] %v3735
      %3768 = vst [vmem:[%s338 + $0x3c] sm:$0xf] %v3736
      %3769 = vst [vmem:[%s338 + $0x40] sm:$0xf] %v3737
      %3770 = vst [vmem:[%s338 + $0x44] sm:$0xf] %v3738
      %3771 = vst [vmem:[%s338 + $0x48] sm:$0xf] %v3739
      %3772 = vst [vmem:[%s338 + $0x4c] sm:$0xf] %v3740
      %3773 = vst [vmem:[%s338 + $0x50] sm:$0xf] %v3741
      %3774 = vst [vmem:[%s338 + $0x54] sm:$0xf] %v3742
      %3775 = vst [vmem:[%s338 + $0x58] sm:$0xf] %v3743
      %3776 = vst [vmem:[%s338 + $0x5c] sm:$0xf] %v3744
      %3777 = vst [vmem:[%s338 + $0x60] sm:$0xf] %v3745
      %3778 = vst [vmem:[%s338 + $0x64] sm:$0xf] %v3746
      %3779 = vst [vmem:[%s338 + $0x68] sm:$0xf] %v3747
      %3780 = vst [vmem:[%s338 + $0x6c] sm:$0xf] %v3748
      %3781 = vst [vmem:[%s338 + $0x70] sm:$0xf] %v3749
      %3782 = vst [vmem:[%s338 + $0x74] sm:$0xf] %v3750
      %3783 = vst [vmem:[%s338 + $0x78] sm:$0xf] %v3751
      %3784 = vst [vmem:[%s338 + $0x7c] sm:$0xf] %v3752
      %p3785 = scmp.lt.s32.totalorder %s20, 1
      %s3786 = scalar_select %p3785, %s20, 1
      %s3787 = smul.addr %s3786, 32
      %s3788 = smul.addr %s3787, 4
      %s3789 = scalar_lea.vmem %s3, %s3788
      %p3790 = scmp.lt.s32.totalorder %s20, 1
      %s3791 = scalar_select %p3790, %s20, 1
      %s3792 = smul.addr %s3791, 32
      %s3793 = smul.addr %s3792, 4
      %s3794 = scalar_lea.vmem %s4, %s3793
      %p3795 = scmp.lt.s32.totalorder %s20, 1
      %s3796 = scalar_select %p3795, %s20, 1
      %s3797 = scalar_lea.vmem %s5, %s3796
      %p3798 = scmp.lt.s32.totalorder %s20, 1
      %s3799 = scalar_select %p3798, %s20, 1
      %s3800 = scalar_lea.vmem %s6, %s3799
      %p3801 = scmp.lt.s32.totalorder %s20, 1
      %s3802 = scalar_select %p3801, %s20, 1
      %s3803 = scalar_lea.vmem %s7, %s3802
      %p3804 = scmp.lt.s32.totalorder %s20, 1
      %s3805 = scalar_select %p3804, %s20, 1
      %s3806 = scalar_lea.vmem %s8, %s3805
      // Predicated region
      $region33: #{block_forward.4} parent=31 // pred_check
        %p3807 = pneg %p106
      $region34: #{block_forward.4} parent=31 // pred_check_branch
        %3809 = sbr.rel (%p3807) target = $region36
      $region35: #{block_forward.4} parent=31 // pred_region
        _
      $region36: #{block_forward.4} parent=31 // pred_fallthru
        _
      // Predicated region
      $region37: #{block_forward.4} parent=31 // pred_check
        %p3810 = pneg %p132
      $region38: #{block_forward.4} parent=31 // pred_check_branch
        %3812 = sbr.rel (%p3810) target = $region40
      $region39: #{block_forward.4} parent=31 // pred_region
        _
      $region40: #{block_forward.4} parent=31 // pred_fallthru
        _
      // Predicated region
      $region41: #{block_forward.4} parent=31 // pred_check
        %p3813 = pneg %p158
      $region42: #{block_forward.4} parent=31 // pred_check_branch
        %3815 = sbr.rel (%p3813) target = $region44
      $region43: #{block_forward.4} parent=31 // pred_region
        _
      $region44: #{block_forward.4} parent=31 // pred_fallthru
        _
      // Predicated region
      $region45: #{block_forward.4} parent=31 // pred_check
        %p3816 = pneg %p184
      $region46: #{block_forward.4} parent=31 // pred_check_branch
        %3818 = sbr.rel (%p3816) target = $region48
      $region47: #{block_forward.4} parent=31 // pred_region
        _
      $region48: #{block_forward.4} parent=31 // pred_fallthru
        _
      // Predicated region
      $region49: #{block_forward.4} parent=31 // pred_check
        %p3819 = pneg %p210
      $region50: #{block_forward.4} parent=31 // pred_check_branch
        %3821 = sbr.rel (%p3819) target = $region52
      $region51: #{block_forward.4} parent=31 // pred_region
        _
      $region52: #{block_forward.4} parent=31 // pred_fallthru
        _
      // Predicated region
      $region53: #{block_forward.4} parent=31 // pred_check
        %p3822 = pneg %p236
      $region54: #{block_forward.4} parent=31 // pred_check_branch
        %3824 = sbr.rel (%p3822) target = $region56
      $region55: #{block_forward.4} parent=31 // pred_region
        _
      $region56: #{block_forward.4} parent=31 // pred_fallthru
        _
    $region32: #{block_forward.4} parent=5 // pred_fallthru
      _
    %p3825 = scmp.le.s32.totalorder 2, %s15
    // Predicated region
    $region57: #{block_forward.4} parent=5 // pred_check
      %p3826 = pneg %p3825
    $region58: #{block_forward.4} parent=5 // pred_check_branch
      %3828 = sbr.rel (%p3826) target = $region60
    $region59: #{block_forward.4} parent=5 // pred_region
      %s3829 = ssub.s32 %s15, 2
      // Predicated region
      $region61: #{block_forward.4} parent=59 // pred_check
        %p3830 = pneg %p112
      $region62: #{block_forward.4} parent=59 // pred_check_branch
        %3832 = sbr.rel (%p3830) target = $region64
      $region63: #{block_forward.4} parent=59 // pred_region
        %p3833 = scmp.lt.s32.totalorder %s21, 1
        %s3834 = scalar_select %p3833, %s21, 1
        %s3835 = smul.addr %s3834, 32
        %s3836 = smul.addr %s3835, 4
        %s3837 = scalar_lea.vmem %s3, %s3836
      $region64: #{block_forward.4} parent=59 // pred_fallthru
        _
      // Predicated region
      $region65: #{block_forward.4} parent=59 // pred_check
        %p3838 = pneg %p138
      $region66: #{block_forward.4} parent=59 // pred_check_branch
        %3840 = sbr.rel (%p3838) target = $region68
      $region67: #{block_forward.4} parent=59 // pred_region
        %p3841 = scmp.lt.s32.totalorder %s21, 1
        %s3842 = scalar_select %p3841, %s21, 1
        %s3843 = smul.addr %s3842, 32
        %s3844 = smul.addr %s3843, 4
        %s3845 = scalar_lea.vmem %s4, %s3844
      $region68: #{block_forward.4} parent=59 // pred_fallthru
        _
      // Predicated region
      $region69: #{block_forward.4} parent=59 // pred_check
        %p3846 = pneg %p164
      $region70: #{block_forward.4} parent=59 // pred_check_branch
        %3848 = sbr.rel (%p3846) target = $region72
      $region71: #{block_forward.4} parent=59 // pred_region
        %p3849 = scmp.lt.s32.totalorder %s21, 1
        %s3850 = scalar_select %p3849, %s21, 1
        %s3851 = scalar_lea.vmem %s5, %s3850
      $region72: #{block_forward.4} parent=59 // pred_fallthru
        _
      // Predicated region
      $region73: #{block_forward.4} parent=59 // pred_check
        %p3852 = pneg %p190
      $region74: #{block_forward.4} parent=59 // pred_check_branch
        %3854 = sbr.rel (%p3852) target = $region76
      $region75: #{block_forward.4} parent=59 // pred_region
        %p3855 = scmp.lt.s32.totalorder %s21, 1
        %s3856 = scalar_select %p3855, %s21, 1
        %s3857 = scalar_lea.vmem %s6, %s3856
      $region76: #{block_forward.4} parent=59 // pred_fallthru
        _
      // Predicated region
      $region77: #{block_forward.4} parent=59 // pred_check
        %p3858 = pneg %p216
      $region78: #{block_forward.4} parent=59 // pred_check_branch
        %3860 = sbr.rel (%p3858) target = $region80
      $region79: #{block_forward.4} parent=59 // pred_region
        %p3861 = scmp.lt.s32.totalorder %s21, 1
        %s3862 = scalar_select %p3861, %s21, 1
        %s3863 = scalar_lea.vmem %s7, %s3862
      $region80: #{block_forward.4} parent=59 // pred_fallthru
        _
      // Predicated region
      $region81: #{block_forward.4} parent=59 // pred_check
        %p3864 = pneg %p242
      $region82: #{block_forward.4} parent=59 // pred_check_branch
        %3866 = sbr.rel (%p3864) target = $region84
      $region83: #{block_forward.4} parent=59 // pred_region
        %p3867 = scmp.lt.s32.totalorder %s21, 1
        %s3868 = scalar_select %p3867, %s21, 1
        %s3869 = scalar_lea.vmem %s8, %s3868
      $region84: #{block_forward.4} parent=59 // pred_fallthru
        _
    $region60: #{block_forward.4} parent=5 // pred_fallthru
      _
  $region6: #{block_forward.4} parent=0 // loop_footer
    %s19 = sadd.s32 1, %s15
  $region7: #{block_forward.4} parent=0 // loop_footer_branch
    %14 = sbr.rel target = $region3
  $region8: #{block_forward.4} parent=0 // loop_exit
    _

</llo_original>
